<compile_context>
chip_gen: v5e
topology: v5e:2x2
jax: 0.10.0
libtpu: 0.0.40
codegen_flags: <defaults>
</compile_context>

<pallas_src>
import jax
import jax.numpy as jnp
from jax.experimental import pallas as pl
from jax.experimental.pallas import tpu as pltpu

L = 1024            # sequence length implied by fc1 (64 * (L // 8) == 64 * 128)
FC1_TK = 2048       # K tile for fc1 (K = 8192) -> 4 reduction steps
FC1_TN = 1024       # N tile for fc1 (N = 2048) -> parallel axis (v7x megacore)
FC2_TN = 512        # N tile for fc2 (N = 1024) -> parallel axis


# --------------------------------------------------------------------------
# Kernel A: conv1+relu+pool -> conv2+relu+pool -> conv3+relu+pool
# One grid step per batch element (independent => "parallel" axis).
# --------------------------------------------------------------------------
def _store_with_zero_border(pad_ref, data):
    """Write data (n, c) into rows [2, 2+n) of pad_ref ((n+8, c)); keep the
    2-row borders on each side zero, touching only 2 x 8 border rows."""
    n, c = data.shape
    zeros8 = jnp.zeros((8, c), jnp.float32)
    pad_ref[pl.ds(0, 8), :] = zeros8      # rows 0..7   (rows 2..7 overwritten below)
    pad_ref[pl.ds(n, 8), :] = zeros8      # rows n..n+7 (rows n, n+1 overwritten below)
    pad_ref[pl.ds(2, n), :] = data        # data rows 2..n+1 (written last => wins)


def _feature_kernel(x_ref, w1_ref, b1_ref, w2_ref, b2_ref, w3_ref, b3_ref,
                    out_ref, pad0, act1, pad1, act2, pad2, act3):
    # ---- conv1: Conv1d(1, 16, k=5, pad=2) + ReLU (tiny; VPU tap loop) -----
    _store_with_zero_border(pad0, x_ref[...])               # (L, 1) data
    a1 = jnp.zeros((L, 16), jnp.float32)
    for k in range(5):                                      # (L,1)*(1,16) broadcast
        a1 = a1 + pad0[pl.ds(k, L), :] * w1_ref[k]
    a1 = jnp.maximum(a1 + b1_ref[...], 0.0)
    act1[...] = a1

    # ---- maxpool(2): (1024,16) -> (512,16), into padded scratch -----------
    _store_with_zero_border(pad1, jnp.maximum(
        act1[pl.ds(0, L // 2, stride=2), :],
        act1[pl.ds(1, L // 2, stride=2), :]))

    # ---- conv2: Conv1d(16, 32, k=5, pad=2) + ReLU (MXU per-tap dots) ------
    a2 = jnp.zeros((L // 2, 32), jnp.float32)
    for k in range(5):                                      # (512,16) @ (16,32)
        a2 = a2 + jnp.dot(pad1[pl.ds(k, L // 2), :], w2_ref[k],
                          preferred_element_type=jnp.float32)
    a2 = jnp.maximum(a2 + b2_ref[...], 0.0)
    act2[...] = a2

    # ---- maxpool(2): (512,32) -> (256,32) ---------------------------------
    _store_with_zero_border(pad2, jnp.maximum(
        act2[pl.ds(0, L // 4, stride=2), :],
        act2[pl.ds(1, L // 4, stride=2), :]))

    # ---- conv3: Conv1d(32, 64, k=5, pad=2) + ReLU -------------------------
    a3 = jnp.zeros((L // 4, 64), jnp.float32)
    for k in range(5):                                      # (256,32) @ (32,64)
        a3 = a3 + jnp.dot(pad2[pl.ds(k, L // 4), :], w3_ref[k],
                          preferred_element_type=jnp.float32)
    a3 = jnp.maximum(a3 + b3_ref[...], 0.0)
    act3[...] = a3

    # ---- maxpool(2): (256,64) -> (128,64), emit bf16 ----------------------
    out_ref[...] = jnp.maximum(
        act3[pl.ds(0, L // 8, stride=2), :],
        act3[pl.ds(1, L // 8, stride=2), :]).astype(out_ref.dtype)


def conv_features(x_ncl, kp):
    """x_ncl: (B, 1, L) f32 -> (B, 128, 64) bf16 features, layout (length, channels)."""
    B = x_ncl.shape[0]
    # NCL with C == 1: reshape to (B, L, 1) is layout-free (no transpose needed).
    x_lc = x_ncl.astype(jnp.float32).reshape(B, L, 1)

    return pl.pallas_call(
        _feature_kernel,
        out_shape=jax.ShapeDtypeStruct((B, L // 8, 64), jnp.bfloat16),
        grid_spec=pltpu.PrefetchScalarGridSpec(
            num_scalar_prefetch=0,
            grid=(B,),
            in_specs=[
                pl.BlockSpec((None, L, 1), lambda b: (b, 0, 0)),
                pl.BlockSpec((5, 1, 16), lambda b: (0, 0, 0)),
                pl.BlockSpec((1, 16), lambda b: (0, 0)),
                pl.BlockSpec((5, 16, 32), lambda b: (0, 0, 0)),
                pl.BlockSpec((1, 32), lambda b: (0, 0)),
                pl.BlockSpec((5, 32, 64), lambda b: (0, 0, 0)),
                pl.BlockSpec((1, 64), lambda b: (0, 0)),
            ],
            out_specs=pl.BlockSpec((None, L // 8, 64), lambda b: (b, 0, 0)),
            scratch_shapes=[
                pltpu.VMEM((L + 8, 1), jnp.float32),        # padded input
                pltpu.VMEM((L, 16), jnp.float32),           # conv1 activations
                pltpu.VMEM((L // 2 + 8, 16), jnp.float32),  # padded pooled1
                pltpu.VMEM((L // 2, 32), jnp.float32),      # conv2 activations
                pltpu.VMEM((L // 4 + 8, 32), jnp.float32),  # padded pooled2
                pltpu.VMEM((L // 4, 64), jnp.float32),      # conv3 activations
            ],
        ),
        compiler_params=pltpu.CompilerParams(
            dimension_semantics=("parallel",)),
    )(x_lc, kp["w1"], kp["b1"], kp["w2"], kp["b2"], kp["w3"], kp["b3"])


# --------------------------------------------------------------------------
# Kernel B: fc1 (8192 -> 2048, relu).  bf16 weight streaming, f32 accumulator,
# grid = (N tiles [parallel], K tiles [arbitrary]).
# --------------------------------------------------------------------------
def _fc1_kernel(f_ref, w_ref, b_ref, h_ref, acc_ref):
    k = pl.program_id(1)

    @pl.when(k == 0)
    def _():
        acc_ref[...] = jnp.zeros_like(acc_ref)

    acc_ref[...] += jnp.dot(f_ref[...], w_ref[...],
                            preferred_element_type=jnp.float32)

    @pl.when(k == pl.num_programs(1) - 1)
    def _():
        h_ref[...] = jnp.maximum(acc_ref[...] + b_ref[...], 0.0).astype(h_ref.dtype)


def fc1(feats, kp):
    """feats: (B, 8192) bf16 in l*64+c row order -> relu(fc1) as (B, 2048) bf16."""
    B, K = feats.shape
    N = kp["fc1_w"].shape[1]
    return pl.pallas_call(
        _fc1_kernel,
        out_shape=jax.ShapeDtypeStruct((B, N), jnp.bfloat16),
        grid_spec=pltpu.PrefetchScalarGridSpec(
            num_scalar_prefetch=0,
            grid=(N // FC1_TN, K // FC1_TK),
            in_specs=[
                pl.BlockSpec((B, FC1_TK), lambda n, k: (0, k)),
                pl.BlockSpec((FC1_TK, FC1_TN), lambda n, k: (k, n)),
                pl.BlockSpec((1, FC1_TN), lambda n, k: (0, n)),
            ],
            out_specs=pl.BlockSpec((B, FC1_TN), lambda n, k: (0, n)),
            scratch_shapes=[pltpu.VMEM((B, FC1_TN), jnp.float32)],
        ),
        compiler_params=pltpu.CompilerParams(
            dimension_semantics=("parallel", "arbitrary")),
    )(feats, kp["fc1_w"], kp["fc1_b"])


# --------------------------------------------------------------------------
# Kernel C: fc2 (2048 -> 1024).  Small; N-parallel, no K tiling needed.
# --------------------------------------------------------------------------
def _fc2_kernel(h_ref, w_ref, b_ref, o_ref):
    o_ref[...] = (jnp.dot(h_ref[...], w_ref[...],
                          preferred_element_type=jnp.float32) + b_ref[...])


def fc2(h, kp):
    B, K = h.shape
    N = kp["fc2_w"].shape[1]
    return pl.pallas_call(
        _fc2_kernel,
        out_shape=jax.ShapeDtypeStruct((B, N), jnp.float32),
        grid_spec=pltpu.PrefetchScalarGridSpec(
            num_scalar_prefetch=0,
            grid=(N // FC2_TN,),
            in_specs=[
                pl.BlockSpec((B, K), lambda n: (0, 0)),
                pl.BlockSpec((K, FC2_TN), lambda n: (0, n)),
                pl.BlockSpec((1, FC2_TN), lambda n: (0, n)),
            ],
            out_specs=pl.BlockSpec((B, FC2_TN), lambda n: (0, n)),
        ),
        compiler_params=pltpu.CompilerParams(
            dimension_semantics=("parallel",)),
    )(h, kp["fc2_w"], kp["fc2_b"])


# --------------------------------------------------------------------------
# One-time host-side weight preparation (kernel-ready layouts / dtypes).
# --------------------------------------------------------------------------
def prepare_params(params):
    # fc1 rows permuted from PyTorch's c*128 + l flatten order to the feature
    # kernel's l*64 + c order, so no runtime activation transpose is needed.
    w_fc1 = jnp.transpose(params["fc1_w"].reshape(2048, 64, L // 8), (2, 1, 0))
    w_fc1 = w_fc1.reshape(64 * (L // 8), 2048).astype(jnp.bfloat16)
    return {
        "w1": jnp.transpose(params["w1"], (2, 1, 0)),        # (5, 1, 16) f32
        "b1": params["b1"].reshape(1, 16),
        "w2": jnp.transpose(params["w2"], (2, 1, 0)),        # (5, 16, 32) f32
        "b2": params["b2"].reshape(1, 32),
        "w3": jnp.transpose(params["w3"], (2, 1, 0)),        # (5, 32, 64) f32
        "b3": params["b3"].reshape(1, 64),
        "fc1_w": w_fc1,                                      # (8192, 2048) bf16
        "fc1_b": params["fc1_b"].reshape(1, 2048),           # f32
        "fc2_w": params["fc2_w"].T.astype(jnp.bfloat16),     # (2048, 1024) bf16
        "fc2_b": params["fc2_b"].reshape(1, 1024),           # f32
    }


def peak_mag_cnn_forward(x, kparams):
    """x: (B, 1, L) float32 (NCL, like the PyTorch module). Returns (B, 1024) f32."""
    if x.ndim != 3 or x.shape[1] != 1 or x.shape[2] != L:
        raise ValueError(f"expected input of shape (B, 1, {L}), got {x.shape}")
    feats3d = conv_features(x, kparams)                  # (B, 128, 64) bf16, (l, c)
    feats = feats3d.reshape(x.shape[0], 64 * (L // 8))   # pure reshape (l*64 + c)
    h = fc1(feats, kparams)                              # (B, 2048) bf16
    return fc2(h, kparams)                               # (B, 1024) f32


# --------------------------------------------------------------------------
# Deterministic parameter init (PyTorch-shaped) + pure-JAX f32 reference.
# --------------------------------------------------------------------------
def init_params(key):
    ks = jax.random.split(key, 10)

    def u(k, shape, fan_in):
        bound = 1.0 / jnp.sqrt(jnp.float32(fan_in))
        return jax.random.uniform(k, shape, jnp.float32, -bound, bound)

    return {
        "w1": u(ks[0], (16, 1, 5), 1 * 5),
        "b1": u(ks[1], (16,), 1 * 5),
        "w2": u(ks[2], (32, 16, 5), 16 * 5),
        "b2": u(ks[3], (32,), 16 * 5),
        "w3": u(ks[4], (64, 32, 5), 32 * 5),
        "b3": u(ks[5], (64,), 32 * 5),
        "fc1_w": u(ks[6], (2048, 64 * 128), 64 * 128),
        "fc1_b": u(ks[7], (2048,), 64 * 128),
        "fc2_w": u(ks[8], (1024, 2048), 2048),
        "fc2_b": u(ks[9], (1024,), 2048),
    }


def reference_forward(x, params):
    def conv1d(h, w, b):
        y = jax.lax.conv_general_dilated(
            h, w, window_strides=(1,), padding=[(2, 2)],
            dimension_numbers=("NCH", "OIH", "NCH"))
        return y + b[None, :, None]

    def pool(h):
        B, C, Lx = h.shape
        return jnp.max(h.reshape(B, C, Lx // 2, 2), axis=-1)

    h = pool(jax.nn.relu(conv1d(x, params["w1"], params["b1"])))
    h = pool(jax.nn.relu(conv1d(h, params["w2"], params["b2"])))
    h = pool(jax.nn.relu(conv1d(h, params["w3"], params["b3"])))
    h = h.reshape(h.shape[0], -1)
    h = jax.nn.relu(h @ params["fc1_w"].T + params["fc1_b"])
    return h @ params["fc2_w"].T + params["fc2_b"]


if __name__ == "__main__":
    key = jax.random.PRNGKey(0)
    pkey, xkey = jax.random.split(key)
    params = init_params(pkey)
    kparams = prepare_params(params)      # one-time host-side weight prep

    B = 2
    x = jax.random.normal(xkey, (B, 1, L), jnp.float32)   # NCL, like nn.Conv1d input

    out = jax.block_until_ready(peak_mag_cnn_forward(x, kparams))
    assert out.shape == (B, 1024) and out.dtype == jnp.float32

    ref = jax.block_until_ready(reference_forward(x, params))
    # bf16-weight MXU path (f32 accumulation) vs pure-f32 reference.
    max_err = float(jnp.max(jnp.abs(out - ref)))
    assert jnp.allclose(out, ref, atol=2e-2, rtol=2e-2), max_err

    print("KERNEL_OK")
</pallas_src>

<mosaic_0001>
module attributes {stable_mosaic.version = 11 : i64} {
  func.func @_feature_kernel(%arg0: i32, %arg1: memref<1x1024x1xf32, #tpu.memory_space<vmem>>, %arg2: memref<5x1x16xf32, #tpu.memory_space<vmem>>, %arg3: memref<1x16xf32, #tpu.memory_space<vmem>>, %arg4: memref<5x16x32xf32, #tpu.memory_space<vmem>>, %arg5: memref<1x32xf32, #tpu.memory_space<vmem>>, %arg6: memref<5x32x64xf32, #tpu.memory_space<vmem>>, %arg7: memref<1x64xf32, #tpu.memory_space<vmem>>, %arg8: memref<1x128x64xbf16, #tpu.memory_space<vmem>>, %arg9: memref<1032x1xf32, #tpu.memory_space<vmem>>, %arg10: memref<1024x16xf32, #tpu.memory_space<vmem>>, %arg11: memref<520x16xf32, #tpu.memory_space<vmem>>, %arg12: memref<512x32xf32, #tpu.memory_space<vmem>>, %arg13: memref<264x32xf32, #tpu.memory_space<vmem>>, %arg14: memref<256x64xf32, #tpu.memory_space<vmem>>) attributes {dimension_semantics = [#tpu.dimension_semantics<parallel>], iteration_bounds = array<i64: 2>, scalar_prefetch = 0 : i64, scratch_operands = 6 : i64, tpu.core_type = #tpu.core_type<tc>, window_params = [{transform_indices = @transform_0, window_bounds = array<i64: 1, 1024, 1>}, {pipeline_mode = #tpu.pipeline_mode<synchronous>, transform_indices = @transform_1, window_bounds = array<i64: 5, 1, 16>}, {pipeline_mode = #tpu.pipeline_mode<synchronous>, transform_indices = @transform_2, window_bounds = array<i64: 1, 16>}, {pipeline_mode = #tpu.pipeline_mode<synchronous>, transform_indices = @transform_3, window_bounds = array<i64: 5, 16, 32>}, {pipeline_mode = #tpu.pipeline_mode<synchronous>, transform_indices = @transform_4, window_bounds = array<i64: 1, 32>}, {pipeline_mode = #tpu.pipeline_mode<synchronous>, transform_indices = @transform_5, window_bounds = array<i64: 5, 32, 64>}, {pipeline_mode = #tpu.pipeline_mode<synchronous>, transform_indices = @transform_6, window_bounds = array<i64: 1, 64>}, {transform_indices = @transform_7, window_bounds = array<i64: 1, 128, 64>}]} {
    %c0 = arith.constant 0 : index
    %c0_0 = arith.constant 0 : index
    %c0_1 = arith.constant 0 : index
    %0 = vector.load %arg1[%c0, %c0_0, %c0_1] : memref<1x1024x1xf32, #tpu.memory_space<vmem>>, vector<1x1024x1xf32>
    %1 = vector.shape_cast %0 : vector<1x1024x1xf32> to vector<1024x1xf32>
    %cst = arith.constant 0.000000e+00 : f32
    %2 = vector.broadcast %cst : f32 to vector<8x1xf32>
    %c0_2 = arith.constant 0 : index
    %c0_3 = arith.constant 0 : index
    %3 = vector.load %arg9[%c0_2, %c0_3] : memref<1032x1xf32, #tpu.memory_space<vmem>>, vector<8x1xf32>
    tpu.vector_store %arg9[%c0_2, %c0_3], %2 {strides = array<i32>} : memref<1032x1xf32, #tpu.memory_space<vmem>>, vector<8x1xf32>,
    %c1024 = arith.constant 1024 : index
    %c0_4 = arith.constant 0 : index
    %4 = vector.load %arg9[%c1024, %c0_4] : memref<1032x1xf32, #tpu.memory_space<vmem>>, vector<8x1xf32>
    tpu.vector_store %arg9[%c1024, %c0_4], %2 {strides = array<i32>} : memref<1032x1xf32, #tpu.memory_space<vmem>>, vector<8x1xf32>,
    %c2 = arith.constant 2 : index
    %c0_5 = arith.constant 0 : index
    %5 = vector.load %arg9[%c2, %c0_5] : memref<1032x1xf32, #tpu.memory_space<vmem>>, vector<1024x1xf32>
    tpu.vector_store %arg9[%c2, %c0_5], %1 {strides = array<i32>} : memref<1032x1xf32, #tpu.memory_space<vmem>>, vector<1024x1xf32>,
    %cst_6 = arith.constant 0.000000e+00 : f32
    %6 = vector.broadcast %cst_6 : f32 to vector<1024x16xf32>
    %c0_7 = arith.constant 0 : index
    %c0_8 = arith.constant 0 : index
    %7 = vector.load %arg9[%c0_7, %c0_8] : memref<1032x1xf32, #tpu.memory_space<vmem>>, vector<1024x1xf32>
    %c0_9 = arith.constant 0 : index
    %c0_10 = arith.constant 0 : index
    %c0_11 = arith.constant 0 : index
    %8 = vector.load %arg2[%c0_9, %c0_10, %c0_11] : memref<5x1x16xf32, #tpu.memory_space<vmem>>, vector<1x1x16xf32>
    %9 = vector.shape_cast %8 : vector<1x1x16xf32> to vector<1x16xf32>
    %10 = vector.broadcast %7 : vector<1024x1xf32> to vector<1024x16xf32>
    %11 = vector.broadcast %9 : vector<1x16xf32> to vector<1024x16xf32>
    %12 = arith.mulf %10, %11 : vector<1024x16xf32>
    %13 = arith.addf %6, %12 : vector<1024x16xf32>
    %c1 = arith.constant 1 : index
    %c0_12 = arith.constant 0 : index
    %14 = vector.load %arg9[%c1, %c0_12] : memref<1032x1xf32, #tpu.memory_space<vmem>>, vector<1024x1xf32>
    %c1_13 = arith.constant 1 : index
    %c0_14 = arith.constant 0 : index
    %c0_15 = arith.constant 0 : index
    %15 = vector.load %arg2[%c1_13, %c0_14, %c0_15] : memref<5x1x16xf32, #tpu.memory_space<vmem>>, vector<1x1x16xf32>
    %16 = vector.shape_cast %15 : vector<1x1x16xf32> to vector<1x16xf32>
    %17 = vector.broadcast %14 : vector<1024x1xf32> to vector<1024x16xf32>
    %18 = vector.broadcast %16 : vector<1x16xf32> to vector<1024x16xf32>
    %19 = arith.mulf %17, %18 : vector<1024x16xf32>
    %20 = arith.addf %13, %19 : vector<1024x16xf32>
    %c2_16 = arith.constant 2 : index
    %c0_17 = arith.constant 0 : index
    %21 = vector.load %arg9[%c2_16, %c0_17] : memref<1032x1xf32, #tpu.memory_space<vmem>>, vector<1024x1xf32>
    %c2_18 = arith.constant 2 : index
    %c0_19 = arith.constant 0 : index
    %c0_20 = arith.constant 0 : index
    %22 = vector.load %arg2[%c2_18, %c0_19, %c0_20] : memref<5x1x16xf32, #tpu.memory_space<vmem>>, vector<1x1x16xf32>
    %23 = vector.shape_cast %22 : vector<1x1x16xf32> to vector<1x16xf32>
    %24 = vector.broadcast %21 : vector<1024x1xf32> to vector<1024x16xf32>
    %25 = vector.broadcast %23 : vector<1x16xf32> to vector<1024x16xf32>
    %26 = arith.mulf %24, %25 : vector<1024x16xf32>
    %27 = arith.addf %20, %26 : vector<1024x16xf32>
    %c3 = arith.constant 3 : index
    %c0_21 = arith.constant 0 : index
    %28 = vector.load %arg9[%c3, %c0_21] : memref<1032x1xf32, #tpu.memory_space<vmem>>, vector<1024x1xf32>
    %c3_22 = arith.constant 3 : index
    %c0_23 = arith.constant 0 : index
    %c0_24 = arith.constant 0 : index
    %29 = vector.load %arg2[%c3_22, %c0_23, %c0_24] : memref<5x1x16xf32, #tpu.memory_space<vmem>>, vector<1x1x16xf32>
    %30 = vector.shape_cast %29 : vector<1x1x16xf32> to vector<1x16xf32>
    %31 = vector.broadcast %28 : vector<1024x1xf32> to vector<1024x16xf32>
    %32 = vector.broadcast %30 : vector<1x16xf32> to vector<1024x16xf32>
    %33 = arith.mulf %31, %32 : vector<1024x16xf32>
    %34 = arith.addf %27, %33 : vector<1024x16xf32>
    %c4 = arith.constant 4 : index
    %c0_25 = arith.constant 0 : index
    %35 = vector.load %arg9[%c4, %c0_25] : memref<1032x1xf32, #tpu.memory_space<vmem>>, vector<1024x1xf32>
    %c4_26 = arith.constant 4 : index
    %c0_27 = arith.constant 0 : index
    %c0_28 = arith.constant 0 : index
    %36 = vector.load %arg2[%c4_26, %c0_27, %c0_28] : memref<5x1x16xf32, #tpu.memory_space<vmem>>, vector<1x1x16xf32>
    %37 = vector.shape_cast %36 : vector<1x1x16xf32> to vector<1x16xf32>
    %38 = vector.broadcast %35 : vector<1024x1xf32> to vector<1024x16xf32>
    %39 = vector.broadcast %37 : vector<1x16xf32> to vector<1024x16xf32>
    %40 = arith.mulf %38, %39 : vector<1024x16xf32>
    %41 = arith.addf %34, %40 : vector<1024x16xf32>
    %c0_29 = arith.constant 0 : index
    %c0_30 = arith.constant 0 : index
    %42 = vector.load %arg3[%c0_29, %c0_30] : memref<1x16xf32, #tpu.memory_space<vmem>>, vector<1x16xf32>
    %43 = vector.broadcast %42 : vector<1x16xf32> to vector<1024x16xf32>
    %44 = arith.addf %41, %43 : vector<1024x16xf32>
    %cst_31 = arith.constant 0.000000e+00 : f32
    %45 = vector.broadcast %cst_31 : f32 to vector<1024x16xf32>
    %46 = arith.maximumf %44, %45 : vector<1024x16xf32>
    %c0_32 = arith.constant 0 : index
    %c0_33 = arith.constant 0 : index
    %47 = vector.load %arg10[%c0_32, %c0_33] : memref<1024x16xf32, #tpu.memory_space<vmem>>, vector<1024x16xf32>
    tpu.vector_store %arg10[%c0_32, %c0_33], %46 {strides = array<i32>} : memref<1024x16xf32, #tpu.memory_space<vmem>>, vector<1024x16xf32>,
    %c0_34 = arith.constant 0 : index
    %c0_35 = arith.constant 0 : index
    %48 = tpu.strided_load %arg10[%c0_34, %c0_35] {strides = array<i32: 2, 1>} : memref<1024x16xf32, #tpu.memory_space<vmem>>, vector<512x16xf32>
    %c1_36 = arith.constant 1 : index
    %c0_37 = arith.constant 0 : index
    %49 = tpu.strided_load %arg10[%c1_36, %c0_37] {strides = array<i32: 2, 1>} : memref<1024x16xf32, #tpu.memory_space<vmem>>, vector<512x16xf32>
    %50 = arith.maximumf %48, %49 : vector<512x16xf32>
    %cst_38 = arith.constant 0.000000e+00 : f32
    %51 = vector.broadcast %cst_38 : f32 to vector<8x16xf32>
    %c0_39 = arith.constant 0 : index
    %c0_40 = arith.constant 0 : index
    %52 = vector.load %arg11[%c0_39, %c0_40] : memref<520x16xf32, #tpu.memory_space<vmem>>, vector<8x16xf32>
    tpu.vector_store %arg11[%c0_39, %c0_40], %51 {strides = array<i32>} : memref<520x16xf32, #tpu.memory_space<vmem>>, vector<8x16xf32>,
    %c512 = arith.constant 512 : index
    %c0_41 = arith.constant 0 : index
    %53 = vector.load %arg11[%c512, %c0_41] : memref<520x16xf32, #tpu.memory_space<vmem>>, vector<8x16xf32>
    tpu.vector_store %arg11[%c512, %c0_41], %51 {strides = array<i32>} : memref<520x16xf32, #tpu.memory_space<vmem>>, vector<8x16xf32>,
    %c2_42 = arith.constant 2 : index
    %c0_43 = arith.constant 0 : index
    %54 = vector.load %arg11[%c2_42, %c0_43] : memref<520x16xf32, #tpu.memory_space<vmem>>, vector<512x16xf32>
    tpu.vector_store %arg11[%c2_42, %c0_43], %50 {strides = array<i32>} : memref<520x16xf32, #tpu.memory_space<vmem>>, vector<512x16xf32>,
    %cst_44 = arith.constant 0.000000e+00 : f32
    %55 = vector.broadcast %cst_44 : f32 to vector<512x32xf32>
    %c0_45 = arith.constant 0 : index
    %c0_46 = arith.constant 0 : index
    %56 = vector.load %arg11[%c0_45, %c0_46] : memref<520x16xf32, #tpu.memory_space<vmem>>, vector<512x16xf32>
    %c0_47 = arith.constant 0 : index
    %c0_48 = arith.constant 0 : index
    %c0_49 = arith.constant 0 : index
    %57 = vector.load %arg4[%c0_47, %c0_48, %c0_49] : memref<5x16x32xf32, #tpu.memory_space<vmem>>, vector<1x16x32xf32>
    %58 = vector.shape_cast %57 : vector<1x16x32xf32> to vector<16x32xf32>
    %cst_50 = arith.constant dense<0.000000e+00> : vector<512x32xf32>
    %59 = tpu.matmul %56, %58, %cst_50 {dimension_numbers = #tpu.dot_dimension_numbers<[1], [0], [0], [1], [0, 0, 1, 1], [], []>} : vector<512x16xf32>, vector<16x32xf32>, vector<512x32xf32> -> vector<512x32xf32>
    %60 = arith.addf %55, %59 : vector<512x32xf32>
    %c1_51 = arith.constant 1 : index
    %c0_52 = arith.constant 0 : index
    %61 = vector.load %arg11[%c1_51, %c0_52] : memref<520x16xf32, #tpu.memory_space<vmem>>, vector<512x16xf32>
    %c1_53 = arith.constant 1 : index
    %c0_54 = arith.constant 0 : index
    %c0_55 = arith.constant 0 : index
    %62 = vector.load %arg4[%c1_53, %c0_54, %c0_55] : memref<5x16x32xf32, #tpu.memory_space<vmem>>, vector<1x16x32xf32>
    %63 = vector.shape_cast %62 : vector<1x16x32xf32> to vector<16x32xf32>
    %cst_56 = arith.constant dense<0.000000e+00> : vector<512x32xf32>
    %64 = tpu.matmul %61, %63, %cst_56 {dimension_numbers = #tpu.dot_dimension_numbers<[1], [0], [0], [1], [0, 0, 1, 1], [], []>} : vector<512x16xf32>, vector<16x32xf32>, vector<512x32xf32> -> vector<512x32xf32>
    %65 = arith.addf %60, %64 : vector<512x32xf32>
    %c2_57 = arith.constant 2 : index
    %c0_58 = arith.constant 0 : index
    %66 = vector.load %arg11[%c2_57, %c0_58] : memref<520x16xf32, #tpu.memory_space<vmem>>, vector<512x16xf32>
    %c2_59 = arith.constant 2 : index
    %c0_60 = arith.constant 0 : index
    %c0_61 = arith.constant 0 : index
    %67 = vector.load %arg4[%c2_59, %c0_60, %c0_61] : memref<5x16x32xf32, #tpu.memory_space<vmem>>, vector<1x16x32xf32>
    %68 = vector.shape_cast %67 : vector<1x16x32xf32> to vector<16x32xf32>
    %cst_62 = arith.constant dense<0.000000e+00> : vector<512x32xf32>
    %69 = tpu.matmul %66, %68, %cst_62 {dimension_numbers = #tpu.dot_dimension_numbers<[1], [0], [0], [1], [0, 0, 1, 1], [], []>} : vector<512x16xf32>, vector<16x32xf32>, vector<512x32xf32> -> vector<512x32xf32>
    %70 = arith.addf %65, %69 : vector<512x32xf32>
    %c3_63 = arith.constant 3 : index
    %c0_64 = arith.constant 0 : index
    %71 = vector.load %arg11[%c3_63, %c0_64] : memref<520x16xf32, #tpu.memory_space<vmem>>, vector<512x16xf32>
    %c3_65 = arith.constant 3 : index
    %c0_66 = arith.constant 0 : index
    %c0_67 = arith.constant 0 : index
    %72 = vector.load %arg4[%c3_65, %c0_66, %c0_67] : memref<5x16x32xf32, #tpu.memory_space<vmem>>, vector<1x16x32xf32>
    %73 = vector.shape_cast %72 : vector<1x16x32xf32> to vector<16x32xf32>
    %cst_68 = arith.constant dense<0.000000e+00> : vector<512x32xf32>
    %74 = tpu.matmul %71, %73, %cst_68 {dimension_numbers = #tpu.dot_dimension_numbers<[1], [0], [0], [1], [0, 0, 1, 1], [], []>} : vector<512x16xf32>, vector<16x32xf32>, vector<512x32xf32> -> vector<512x32xf32>
    %75 = arith.addf %70, %74 : vector<512x32xf32>
    %c4_69 = arith.constant 4 : index
    %c0_70 = arith.constant 0 : index
    %76 = vector.load %arg11[%c4_69, %c0_70] : memref<520x16xf32, #tpu.memory_space<vmem>>, vector<512x16xf32>
    %c4_71 = arith.constant 4 : index
    %c0_72 = arith.constant 0 : index
    %c0_73 = arith.constant 0 : index
    %77 = vector.load %arg4[%c4_71, %c0_72, %c0_73] : memref<5x16x32xf32, #tpu.memory_space<vmem>>, vector<1x16x32xf32>
    %78 = vector.shape_cast %77 : vector<1x16x32xf32> to vector<16x32xf32>
    %cst_74 = arith.constant dense<0.000000e+00> : vector<512x32xf32>
    %79 = tpu.matmul %76, %78, %cst_74 {dimension_numbers = #tpu.dot_dimension_numbers<[1], [0], [0], [1], [0, 0, 1, 1], [], []>} : vector<512x16xf32>, vector<16x32xf32>, vector<512x32xf32> -> vector<512x32xf32>
    %80 = arith.addf %75, %79 : vector<512x32xf32>
    %c0_75 = arith.constant 0 : index
    %c0_76 = arith.constant 0 : index
    %81 = vector.load %arg5[%c0_75, %c0_76] : memref<1x32xf32, #tpu.memory_space<vmem>>, vector<1x32xf32>
    %82 = vector.broadcast %81 : vector<1x32xf32> to vector<512x32xf32>
    %83 = arith.addf %80, %82 : vector<512x32xf32>
    %cst_77 = arith.constant 0.000000e+00 : f32
    %84 = vector.broadcast %cst_77 : f32 to vector<512x32xf32>
    %85 = arith.maximumf %83, %84 : vector<512x32xf32>
    %c0_78 = arith.constant 0 : index
    %c0_79 = arith.constant 0 : index
    %86 = vector.load %arg12[%c0_78, %c0_79] : memref<512x32xf32, #tpu.memory_space<vmem>>, vector<512x32xf32>
    tpu.vector_store %arg12[%c0_78, %c0_79], %85 {strides = array<i32>} : memref<512x32xf32, #tpu.memory_space<vmem>>, vector<512x32xf32>,
    %c0_80 = arith.constant 0 : index
    %c0_81 = arith.constant 0 : index
    %87 = tpu.strided_load %arg12[%c0_80, %c0_81] {strides = array<i32: 2, 1>} : memref<512x32xf32, #tpu.memory_space<vmem>>, vector<256x32xf32>
    %c1_82 = arith.constant 1 : index
    %c0_83 = arith.constant 0 : index
    %88 = tpu.strided_load %arg12[%c1_82, %c0_83] {strides = array<i32: 2, 1>} : memref<512x32xf32, #tpu.memory_space<vmem>>, vector<256x32xf32>
    %89 = arith.maximumf %87, %88 : vector<256x32xf32>
    %cst_84 = arith.constant 0.000000e+00 : f32
    %90 = vector.broadcast %cst_84 : f32 to vector<8x32xf32>
    %c0_85 = arith.constant 0 : index
    %c0_86 = arith.constant 0 : index
    %91 = vector.load %arg13[%c0_85, %c0_86] : memref<264x32xf32, #tpu.memory_space<vmem>>, vector<8x32xf32>
    tpu.vector_store %arg13[%c0_85, %c0_86], %90 {strides = array<i32>} : memref<264x32xf32, #tpu.memory_space<vmem>>, vector<8x32xf32>,
    %c256 = arith.constant 256 : index
    %c0_87 = arith.constant 0 : index
    %92 = vector.load %arg13[%c256, %c0_87] : memref<264x32xf32, #tpu.memory_space<vmem>>, vector<8x32xf32>
    tpu.vector_store %arg13[%c256, %c0_87], %90 {strides = array<i32>} : memref<264x32xf32, #tpu.memory_space<vmem>>, vector<8x32xf32>,
    %c2_88 = arith.constant 2 : index
    %c0_89 = arith.constant 0 : index
    %93 = vector.load %arg13[%c2_88, %c0_89] : memref<264x32xf32, #tpu.memory_space<vmem>>, vector<256x32xf32>
    tpu.vector_store %arg13[%c2_88, %c0_89], %89 {strides = array<i32>} : memref<264x32xf32, #tpu.memory_space<vmem>>, vector<256x32xf32>,
    %cst_90 = arith.constant 0.000000e+00 : f32
    %94 = vector.broadcast %cst_90 : f32 to vector<256x64xf32>
    %c0_91 = arith.constant 0 : index
    %c0_92 = arith.constant 0 : index
    %95 = vector.load %arg13[%c0_91, %c0_92] : memref<264x32xf32, #tpu.memory_space<vmem>>, vector<256x32xf32>
    %c0_93 = arith.constant 0 : index
    %c0_94 = arith.constant 0 : index
    %c0_95 = arith.constant 0 : index
    %96 = vector.load %arg6[%c0_93, %c0_94, %c0_95] : memref<5x32x64xf32, #tpu.memory_space<vmem>>, vector<1x32x64xf32>
    %97 = vector.shape_cast %96 : vector<1x32x64xf32> to vector<32x64xf32>
    %cst_96 = arith.constant dense<0.000000e+00> : vector<256x64xf32>
    %98 = tpu.matmul %95, %97, %cst_96 {dimension_numbers = #tpu.dot_dimension_numbers<[1], [0], [0], [1], [0, 0, 1, 1], [], []>} : vector<256x32xf32>, vector<32x64xf32>, vector<256x64xf32> -> vector<256x64xf32>
    %99 = arith.addf %94, %98 : vector<256x64xf32>
    %c1_97 = arith.constant 1 : index
    %c0_98 = arith.constant 0 : index
    %100 = vector.load %arg13[%c1_97, %c0_98] : memref<264x32xf32, #tpu.memory_space<vmem>>, vector<256x32xf32>
    %c1_99 = arith.constant 1 : index
    %c0_100 = arith.constant 0 : index
    %c0_101 = arith.constant 0 : index
    %101 = vector.load %arg6[%c1_99, %c0_100, %c0_101] : memref<5x32x64xf32, #tpu.memory_space<vmem>>, vector<1x32x64xf32>
    %102 = vector.shape_cast %101 : vector<1x32x64xf32> to vector<32x64xf32>
    %cst_102 = arith.constant dense<0.000000e+00> : vector<256x64xf32>
    %103 = tpu.matmul %100, %102, %cst_102 {dimension_numbers = #tpu.dot_dimension_numbers<[1], [0], [0], [1], [0, 0, 1, 1], [], []>} : vector<256x32xf32>, vector<32x64xf32>, vector<256x64xf32> -> vector<256x64xf32>
    %104 = arith.addf %99, %103 : vector<256x64xf32>
    %c2_103 = arith.constant 2 : index
    %c0_104 = arith.constant 0 : index
    %105 = vector.load %arg13[%c2_103, %c0_104] : memref<264x32xf32, #tpu.memory_space<vmem>>, vector<256x32xf32>
    %c2_105 = arith.constant 2 : index
    %c0_106 = arith.constant 0 : index
    %c0_107 = arith.constant 0 : index
    %106 = vector.load %arg6[%c2_105, %c0_106, %c0_107] : memref<5x32x64xf32, #tpu.memory_space<vmem>>, vector<1x32x64xf32>
    %107 = vector.shape_cast %106 : vector<1x32x64xf32> to vector<32x64xf32>
    %cst_108 = arith.constant dense<0.000000e+00> : vector<256x64xf32>
    %108 = tpu.matmul %105, %107, %cst_108 {dimension_numbers = #tpu.dot_dimension_numbers<[1], [0], [0], [1], [0, 0, 1, 1], [], []>} : vector<256x32xf32>, vector<32x64xf32>, vector<256x64xf32> -> vector<256x64xf32>
    %109 = arith.addf %104, %108 : vector<256x64xf32>
    %c3_109 = arith.constant 3 : index
    %c0_110 = arith.constant 0 : index
    %110 = vector.load %arg13[%c3_109, %c0_110] : memref<264x32xf32, #tpu.memory_space<vmem>>, vector<256x32xf32>
    %c3_111 = arith.constant 3 : index
    %c0_112 = arith.constant 0 : index
    %c0_113 = arith.constant 0 : index
    %111 = vector.load %arg6[%c3_111, %c0_112, %c0_113] : memref<5x32x64xf32, #tpu.memory_space<vmem>>, vector<1x32x64xf32>
    %112 = vector.shape_cast %111 : vector<1x32x64xf32> to vector<32x64xf32>
    %cst_114 = arith.constant dense<0.000000e+00> : vector<256x64xf32>
    %113 = tpu.matmul %110, %112, %cst_114 {dimension_numbers = #tpu.dot_dimension_numbers<[1], [0], [0], [1], [0, 0, 1, 1], [], []>} : vector<256x32xf32>, vector<32x64xf32>, vector<256x64xf32> -> vector<256x64xf32>
    %114 = arith.addf %109, %113 : vector<256x64xf32>
    %c4_115 = arith.constant 4 : index
    %c0_116 = arith.constant 0 : index
    %115 = vector.load %arg13[%c4_115, %c0_116] : memref<264x32xf32, #tpu.memory_space<vmem>>, vector<256x32xf32>
    %c4_117 = arith.constant 4 : index
    %c0_118 = arith.constant 0 : index
    %c0_119 = arith.constant 0 : index
    %116 = vector.load %arg6[%c4_117, %c0_118, %c0_119] : memref<5x32x64xf32, #tpu.memory_space<vmem>>, vector<1x32x64xf32>
    %117 = vector.shape_cast %116 : vector<1x32x64xf32> to vector<32x64xf32>
    %cst_120 = arith.constant dense<0.000000e+00> : vector<256x64xf32>
    %118 = tpu.matmul %115, %117, %cst_120 {dimension_numbers = #tpu.dot_dimension_numbers<[1], [0], [0], [1], [0, 0, 1, 1], [], []>} : vector<256x32xf32>, vector<32x64xf32>, vector<256x64xf32> -> vector<256x64xf32>
    %119 = arith.addf %114, %118 : vector<256x64xf32>
    %c0_121 = arith.constant 0 : index
    %c0_122 = arith.constant 0 : index
    %120 = vector.load %arg7[%c0_121, %c0_122] : memref<1x64xf32, #tpu.memory_space<vmem>>, vector<1x64xf32>
    %121 = vector.broadcast %120 : vector<1x64xf32> to vector<256x64xf32>
    %122 = arith.addf %119, %121 : vector<256x64xf32>
    %cst_123 = arith.constant 0.000000e+00 : f32
    %123 = vector.broadcast %cst_123 : f32 to vector<256x64xf32>
    %124 = arith.maximumf %122, %123 : vector<256x64xf32>
    %c0_124 = arith.constant 0 : index
    %c0_125 = arith.constant 0 : index
    %125 = vector.load %arg14[%c0_124, %c0_125] : memref<256x64xf32, #tpu.memory_space<vmem>>, vector<256x64xf32>
    tpu.vector_store %arg14[%c0_124, %c0_125], %124 {strides = array<i32>} : memref<256x64xf32, #tpu.memory_space<vmem>>, vector<256x64xf32>,
    %c0_126 = arith.constant 0 : index
    %c0_127 = arith.constant 0 : index
    %126 = tpu.strided_load %arg14[%c0_126, %c0_127] {strides = array<i32: 2, 1>} : memref<256x64xf32, #tpu.memory_space<vmem>>, vector<128x64xf32>
    %c1_128 = arith.constant 1 : index
    %c0_129 = arith.constant 0 : index
    %127 = tpu.strided_load %arg14[%c1_128, %c0_129] {strides = array<i32: 2, 1>} : memref<256x64xf32, #tpu.memory_space<vmem>>, vector<128x64xf32>
    %128 = arith.maximumf %126, %127 : vector<128x64xf32>
    %129 = arith.truncf %128 : vector<128x64xf32> to vector<128x64xbf16>
    %c0_130 = arith.constant 0 : index
    %c0_131 = arith.constant 0 : index
    %c0_132 = arith.constant 0 : index
    %130 = vector.load %arg8[%c0_130, %c0_131, %c0_132] : memref<1x128x64xbf16, #tpu.memory_space<vmem>>, vector<1x128x64xbf16>
    %131 = vector.shape_cast %130 : vector<1x128x64xbf16> to vector<128x64xbf16>
    %132 = vector.shape_cast %129 : vector<128x64xbf16> to vector<1x128x64xbf16>
    tpu.vector_store %arg8[%c0_130, %c0_131, %c0_132], %132 {strides = array<i32>} : memref<1x128x64xbf16, #tpu.memory_space<vmem>>, vector<1x128x64xbf16>,
    return
  }
  func.func @transform_0(%arg0: i32) -> (i32, i32, i32) {
    %c0_i32 = arith.constant 0 : i32
    %c0_i32_0 = arith.constant 0 : i32
    %c0_i32_1 = arith.constant 0 : i32
    return %arg0, %c0_i32, %c0_i32_0 : i32, i32, i32
  }
  func.func @transform_1(%arg0: i32) -> (i32, i32, i32) {
    %c0_i32 = arith.constant 0 : i32
    %c0_i32_0 = arith.constant 0 : i32
    %c0_i32_1 = arith.constant 0 : i32
    %c0_i32_2 = arith.constant 0 : i32
    return %c0_i32, %c0_i32_0, %c0_i32_1 : i32, i32, i32
  }
  func.func @transform_2(%arg0: i32) -> (i32, i32) {
    %c0_i32 = arith.constant 0 : i32
    %c0_i32_0 = arith.constant 0 : i32
    %c0_i32_1 = arith.constant 0 : i32
    return %c0_i32, %c0_i32_0 : i32, i32
  }
  func.func @transform_3(%arg0: i32) -> (i32, i32, i32) {
    %c0_i32 = arith.constant 0 : i32
    %c0_i32_0 = arith.constant 0 : i32
    %c0_i32_1 = arith.constant 0 : i32
    %c0_i32_2 = arith.constant 0 : i32
    return %c0_i32, %c0_i32_0, %c0_i32_1 : i32, i32, i32
  }
  func.func @transform_4(%arg0: i32) -> (i32, i32) {
    %c0_i32 = arith.constant 0 : i32
    %c0_i32_0 = arith.constant 0 : i32
    %c0_i32_1 = arith.constant 0 : i32
    return %c0_i32, %c0_i32_0 : i32, i32
  }
  func.func @transform_5(%arg0: i32) -> (i32, i32, i32) {
    %c0_i32 = arith.constant 0 : i32
    %c0_i32_0 = arith.constant 0 : i32
    %c0_i32_1 = arith.constant 0 : i32
    %c0_i32_2 = arith.constant 0 : i32
    return %c0_i32, %c0_i32_0, %c0_i32_1 : i32, i32, i32
  }
  func.func @transform_6(%arg0: i32) -> (i32, i32) {
    %c0_i32 = arith.constant 0 : i32
    %c0_i32_0 = arith.constant 0 : i32
    %c0_i32_1 = arith.constant 0 : i32
    return %c0_i32, %c0_i32_0 : i32, i32
  }
  func.func @transform_7(%arg0: i32) -> (i32, i32, i32) {
    %c0_i32 = arith.constant 0 : i32
    %c0_i32_0 = arith.constant 0 : i32
    %c0_i32_1 = arith.constant 0 : i32
    return %arg0, %c0_i32, %c0_i32_0 : i32, i32, i32
  }
}

</mosaic_0001>

<llo_original>
// kernel: tpu_custom_call.1
$region0: #{tpu_custom_call.1}
  #allocation0 [shape = 'u32[]', space=smem, size = 0x4, offset = 0x4, fixed_abs, tag = 'smem constant byte address 0x4 - core index']
  #allocation1 [shape = 'u32[72,128]{1,0:T(1,128)}', space=vmem, size = 0x9000, scoped, tag = 'internal scratch']
  #allocation2 [shape = 'f32[1032,1]{1,0:T(8,128)}', space=vmem, size = 0x81000, scoped, tag = 'scratch operand']
  #allocation3 [shape = 'f32[1024,16]{1,0:T(8,128)}', space=vmem, size = 0x80000, scoped, tag = 'scratch operand']
  #allocation4 [shape = 'f32[520,16]{1,0:T(8,128)}', space=vmem, size = 0x41000, scoped, tag = 'scratch operand']
  #allocation5 [shape = 'f32[512,32]{1,0:T(8,128)}', space=vmem, size = 0x40000, scoped, tag = 'scratch operand']
  #allocation6 [shape = 'f32[264,32]{1,0:T(8,128)}', space=vmem, size = 0x21000, scoped, tag = 'scratch operand']
  #allocation7 [shape = 'f32[256,64]{1,0:T(8,128)}', space=vmem, size = 0x20000, scoped, tag = 'scratch operand']
  %s0 = inlined_call_operand.vmem [shape: f32[2,1024,1], index: 0, kind: input, shape index: {}]
  %s1 = inlined_call_operand.vmem [shape: f32[5,1,16], index: 1, kind: input, shape index: {}]
  %s2 = inlined_call_operand.vmem [shape: f32[1,16], index: 2, kind: input, shape index: {}]
  %s3 = inlined_call_operand.vmem [shape: f32[5,16,32], index: 3, kind: input, shape index: {}]
  %s4 = inlined_call_operand.vmem [shape: f32[1,32], index: 4, kind: input, shape index: {}]
  %s5 = inlined_call_operand.vmem [shape: f32[5,32,64], index: 5, kind: input, shape index: {}]
  %s6 = inlined_call_operand.vmem [shape: f32[1,64], index: 6, kind: input, shape index: {}]
  %s7 = inlined_call_operand.vmem [shape: bf16[2,128,64], index: 7, kind: output, shape index: {}]
  %s8 = sld [smem:[#allocation0]]
  $region61: #{tpu_custom_call.1} parent=0
    _
  %s10 = ssub.s32 1, %s8
  %s11 = scalar_select 0, %s10, %s8
  loop: start=0, step=1, limit=4
  $region2: #{tpu_custom_call.1} parent=0 // loop_pre_header
    _
  $region3: #{tpu_custom_call.1} parent=0 // loop_header
    %s13 = sphi 0, %s17
    %p14 = scmp.ge.s32.totalorder %s13, 4
    %s23 = sphi 0, %s25
    %s26 = sphi 0, %s23
    %s27 = sphi 0, %s26
    %s43 = sphi 0, %s27
    %s47 = sphi 0, %s47
    %s49 = sphi 0, %s47
    %s50 = sphi 0, %s49
    %s64 = sphi 0, %s50
    %s68 = sphi 0, %s68
    %s70 = sphi 0, %s68
    %s71 = sphi 0, %s70
    %s85 = sphi 0, %s71
    %s89 = sphi 0, %s89
    %s91 = sphi 0, %s89
    %s92 = sphi 0, %s91
    %s106 = sphi 0, %s92
    %s110 = sphi 0, %s110
    %s112 = sphi 0, %s110
    %s113 = sphi 0, %s112
    %s127 = sphi 0, %s113
    %s131 = sphi 0, %s131
    %s133 = sphi 0, %s131
    %s134 = sphi 0, %s133
    %s148 = sphi 0, %s134
    %s152 = sphi 0, %s152
    %s154 = sphi 0, %s152
    %s155 = sphi 0, %s154
    %s169 = sphi 0, %s155
    %s175 = sphi 0, %s177
    %s178 = sphi 0, %s175
    %s179 = sphi 0, %s178
    %s195 = sphi 0, %s179
  $region4: #{tpu_custom_call.1} parent=0 // loop_header_branch
    %16 = sbr.rel (%p14) target = $region8
  $region5: #{tpu_custom_call.1} parent=0 // loop_body
    %s18 = ssub.s32 %s13, 1
    %s19 = ssub.s32 %s13, 2
    %s20 = sadd.s32 %s13, 1
    %s21 = ssub.s32 %s13, %s20
    %p22 = scmp.eq.s32.totalorder %s21, 0
    %s24 = sadd.s32 %s23, 1
    %s25 = scalar_select %p22, %s23, %s24
    %p28 = pneg %p22
    %p29 = scmp.eq.s32.totalorder %s13, 1
    %p30 = por %p28, %p29
    %p31 = scmp.ne.s32.totalorder %s23, %s26
    %p32 = scmp.eq.s32.totalorder %s13, 0
    %p33 = por %p31, %p32
    %p34 = scmp.ne.s32.totalorder %s23, %s26
    %p35 = scmp.eq.s32.totalorder %s18, 1
    %p36 = por %p34, %p35
    %p37 = scmp.ne.s32.totalorder %s26, %s27
    %p38 = scmp.eq.s32.totalorder %s18, 0
    %p39 = por %p37, %p38
    %p40 = scmp.ne.s32.totalorder %s26, %s27
    %p41 = scmp.eq.s32.totalorder %s19, 1
    %p42 = por %p40, %p41
    %p44 = scmp.ne.s32.totalorder %s27, %s43
    %p45 = scmp.eq.s32.totalorder %s19, 0
    %p46 = por %p44, %p45
    %s48 = sadd.s32 %s47, 1
    %p51 = scmp.eq.s32.totalorder %s13, 1
    %p52 = scmp.ne.s32.totalorder %s47, %s49
    %p53 = scmp.eq.s32.totalorder %s13, 0
    %p54 = por %p52, %p53
    %p55 = scmp.ne.s32.totalorder %s47, %s49
    %p56 = scmp.eq.s32.totalorder %s18, 1
    %p57 = por %p55, %p56
    %p58 = scmp.ne.s32.totalorder %s49, %s50
    %p59 = scmp.eq.s32.totalorder %s18, 0
    %p60 = por %p58, %p59
    %p61 = scmp.ne.s32.totalorder %s49, %s50
    %p62 = scmp.eq.s32.totalorder %s19, 1
    %p63 = por %p61, %p62
    %p65 = scmp.ne.s32.totalorder %s50, %s64
    %p66 = scmp.eq.s32.totalorder %s19, 0
    %p67 = por %p65, %p66
    %s69 = sadd.s32 %s68, 1
    %p72 = scmp.eq.s32.totalorder %s13, 1
    %p73 = scmp.ne.s32.totalorder %s68, %s70
    %p74 = scmp.eq.s32.totalorder %s13, 0
    %p75 = por %p73, %p74
    %p76 = scmp.ne.s32.totalorder %s68, %s70
    %p77 = scmp.eq.s32.totalorder %s18, 1
    %p78 = por %p76, %p77
    %p79 = scmp.ne.s32.totalorder %s70, %s71
    %p80 = scmp.eq.s32.totalorder %s18, 0
    %p81 = por %p79, %p80
    %p82 = scmp.ne.s32.totalorder %s70, %s71
    %p83 = scmp.eq.s32.totalorder %s19, 1
    %p84 = por %p82, %p83
    %p86 = scmp.ne.s32.totalorder %s71, %s85
    %p87 = scmp.eq.s32.totalorder %s19, 0
    %p88 = por %p86, %p87
    %s90 = sadd.s32 %s89, 1
    %p93 = scmp.eq.s32.totalorder %s13, 1
    %p94 = scmp.ne.s32.totalorder %s89, %s91
    %p95 = scmp.eq.s32.totalorder %s13, 0
    %p96 = por %p94, %p95
    %p97 = scmp.ne.s32.totalorder %s89, %s91
    %p98 = scmp.eq.s32.totalorder %s18, 1
    %p99 = por %p97, %p98
    %p100 = scmp.ne.s32.totalorder %s91, %s92
    %p101 = scmp.eq.s32.totalorder %s18, 0
    %p102 = por %p100, %p101
    %p103 = scmp.ne.s32.totalorder %s91, %s92
    %p104 = scmp.eq.s32.totalorder %s19, 1
    %p105 = por %p103, %p104
    %p107 = scmp.ne.s32.totalorder %s92, %s106
    %p108 = scmp.eq.s32.totalorder %s19, 0
    %p109 = por %p107, %p108
    %s111 = sadd.s32 %s110, 1
    %p114 = scmp.eq.s32.totalorder %s13, 1
    %p115 = scmp.ne.s32.totalorder %s110, %s112
    %p116 = scmp.eq.s32.totalorder %s13, 0
    %p117 = por %p115, %p116
    %p118 = scmp.ne.s32.totalorder %s110, %s112
    %p119 = scmp.eq.s32.totalorder %s18, 1
    %p120 = por %p118, %p119
    %p121 = scmp.ne.s32.totalorder %s112, %s113
    %p122 = scmp.eq.s32.totalorder %s18, 0
    %p123 = por %p121, %p122
    %p124 = scmp.ne.s32.totalorder %s112, %s113
    %p125 = scmp.eq.s32.totalorder %s19, 1
    %p126 = por %p124, %p125
    %p128 = scmp.ne.s32.totalorder %s113, %s127
    %p129 = scmp.eq.s32.totalorder %s19, 0
    %p130 = por %p128, %p129
    %s132 = sadd.s32 %s131, 1
    %p135 = scmp.eq.s32.totalorder %s13, 1
    %p136 = scmp.ne.s32.totalorder %s131, %s133
    %p137 = scmp.eq.s32.totalorder %s13, 0
    %p138 = por %p136, %p137
    %p139 = scmp.ne.s32.totalorder %s131, %s133
    %p140 = scmp.eq.s32.totalorder %s18, 1
    %p141 = por %p139, %p140
    %p142 = scmp.ne.s32.totalorder %s133, %s134
    %p143 = scmp.eq.s32.totalorder %s18, 0
    %p144 = por %p142, %p143
    %p145 = scmp.ne.s32.totalorder %s133, %s134
    %p146 = scmp.eq.s32.totalorder %s19, 1
    %p147 = por %p145, %p146
    %p149 = scmp.ne.s32.totalorder %s134, %s148
    %p150 = scmp.eq.s32.totalorder %s19, 0
    %p151 = por %p149, %p150
    %s153 = sadd.s32 %s152, 1
    %p156 = scmp.eq.s32.totalorder %s13, 1
    %p157 = scmp.ne.s32.totalorder %s152, %s154
    %p158 = scmp.eq.s32.totalorder %s13, 0
    %p159 = por %p157, %p158
    %p160 = scmp.ne.s32.totalorder %s152, %s154
    %p161 = scmp.eq.s32.totalorder %s18, 1
    %p162 = por %p160, %p161
    %p163 = scmp.ne.s32.totalorder %s154, %s155
    %p164 = scmp.eq.s32.totalorder %s18, 0
    %p165 = por %p163, %p164
    %p166 = scmp.ne.s32.totalorder %s154, %s155
    %p167 = scmp.eq.s32.totalorder %s19, 1
    %p168 = por %p166, %p167
    %p170 = scmp.ne.s32.totalorder %s155, %s169
    %p171 = scmp.eq.s32.totalorder %s19, 0
    %p172 = por %p170, %p171
    %s173 = ssub.s32 %s13, %s20
    %p174 = scmp.eq.s32.totalorder %s173, 0
    %s176 = sadd.s32 %s175, 1
    %s177 = scalar_select %p174, %s175, %s176
    %p180 = pneg %p174
    %p181 = scmp.eq.s32.totalorder %s13, 1
    %p182 = por %p180, %p181
    %p183 = scmp.ne.s32.totalorder %s175, %s178
    %p184 = scmp.eq.s32.totalorder %s13, 0
    %p185 = por %p183, %p184
    %p186 = scmp.ne.s32.totalorder %s175, %s178
    %p187 = scmp.eq.s32.totalorder %s18, 1
    %p188 = por %p186, %p187
    %p189 = scmp.ne.s32.totalorder %s178, %s179
    %p190 = scmp.eq.s32.totalorder %s18, 0
    %p191 = por %p189, %p190
    %p192 = scmp.ne.s32.totalorder %s178, %s179
    %p193 = scmp.eq.s32.totalorder %s19, 1
    %p194 = por %p192, %p193
    %p196 = scmp.ne.s32.totalorder %s179, %s195
    %p197 = scmp.eq.s32.totalorder %s19, 0
    %p198 = por %p196, %p197
    %p199 = scmp.le.s32.totalorder 1, %s13
    %p200 = scmp.lt.s32.totalorder %s13, 3
    %p201 = pnand %p199, %p200
    %p202 = pneg %p201
    // Predicated region
    $region9: #{tpu_custom_call.1} parent=5 // pred_check
      _
    $region10: #{tpu_custom_call.1} parent=5 // pred_check_branch
      %204 = sbr.rel (%p201) target = $region12
    $region11: #{tpu_custom_call.1} parent=5 // pred_region
      %s205 = ssub.s32 %s13, 1
      // Predicated region
      $region13: #{tpu_custom_call.1} parent=11 // pred_check
        %p206 = pneg %p60
      $region14: #{tpu_custom_call.1} parent=11 // pred_check_branch
        %208 = sbr.rel (%p206) target = $region16
      $region15: #{tpu_custom_call.1} parent=11 // pred_region
        _
      $region16: #{tpu_custom_call.1} parent=11 // pred_fallthru
        _
      // Predicated region
      $region17: #{tpu_custom_call.1} parent=11 // pred_check
        %p209 = pneg %p81
      $region18: #{tpu_custom_call.1} parent=11 // pred_check_branch
        %211 = sbr.rel (%p209) target = $region20
      $region19: #{tpu_custom_call.1} parent=11 // pred_region
        _
      $region20: #{tpu_custom_call.1} parent=11 // pred_fallthru
        _
      // Predicated region
      $region21: #{tpu_custom_call.1} parent=11 // pred_check
        %p212 = pneg %p102
      $region22: #{tpu_custom_call.1} parent=11 // pred_check_branch
        %214 = sbr.rel (%p212) target = $region24
      $region23: #{tpu_custom_call.1} parent=11 // pred_region
        _
      $region24: #{tpu_custom_call.1} parent=11 // pred_fallthru
        _
      // Predicated region
      $region25: #{tpu_custom_call.1} parent=11 // pred_check
        %p215 = pneg %p123
      $region26: #{tpu_custom_call.1} parent=11 // pred_check_branch
        %217 = sbr.rel (%p215) target = $region28
      $region27: #{tpu_custom_call.1} parent=11 // pred_region
        _
      $region28: #{tpu_custom_call.1} parent=11 // pred_fallthru
        _
      // Predicated region
      $region29: #{tpu_custom_call.1} parent=11 // pred_check
        %p218 = pneg %p144
      $region30: #{tpu_custom_call.1} parent=11 // pred_check_branch
        %220 = sbr.rel (%p218) target = $region32
      $region31: #{tpu_custom_call.1} parent=11 // pred_region
        _
      $region32: #{tpu_custom_call.1} parent=11 // pred_fallthru
        _
      // Predicated region
      $region33: #{tpu_custom_call.1} parent=11 // pred_check
        %p221 = pneg %p165
      $region34: #{tpu_custom_call.1} parent=11 // pred_check_branch
        %223 = sbr.rel (%p221) target = $region36
      $region35: #{tpu_custom_call.1} parent=11 // pred_region
        _
      $region36: #{tpu_custom_call.1} parent=11 // pred_fallthru
        _
    $region12: #{tpu_custom_call.1} parent=5 // pred_fallthru
      _
    %p224 = scmp.lt.s32.totalorder %s13, 2
    // Predicated region
    $region37: #{tpu_custom_call.1} parent=5 // pred_check
      %p225 = pneg %p224
    $region38: #{tpu_custom_call.1} parent=5 // pred_check_branch
      %227 = sbr.rel (%p225) target = $region40
    $region39: #{tpu_custom_call.1} parent=5 // pred_region
      // Predicated region
      $region41: #{tpu_custom_call.1} parent=39 // pred_check
        %p228 = pneg %p33
      $region42: #{tpu_custom_call.1} parent=39 // pred_check_branch
        %230 = sbr.rel (%p228) target = $region44
      $region43: #{tpu_custom_call.1} parent=39 // pred_region
        %p231 = scmp.lt.s32.totalorder %s13, 1
        %s232 = scalar_select %p231, %s13, 1
        %s233 = smul.addr %s232, 128
        %s234 = smul.addr %s233, 8
        %s235 = scalar_lea.vmem %s0, %s234
      $region44: #{tpu_custom_call.1} parent=39 // pred_fallthru
        _
    $region40: #{tpu_custom_call.1} parent=5 // pred_fallthru
      _
    %p236 = scmp.le.s32.totalorder 1, %s13
    %p237 = scmp.lt.s32.totalorder %s13, 3
    %p238 = pnand %p236, %p237
    %p239 = pneg %p238
    // Predicated region
    $region45: #{tpu_custom_call.1} parent=5 // pred_check
      _
    $region46: #{tpu_custom_call.1} parent=5 // pred_check_branch
      %241 = sbr.rel (%p238) target = $region48
    $region47: #{tpu_custom_call.1} parent=5 // pred_region
      %s242 = ssub.s32 %s13, 1
      %p243 = scmp.lt.s32.totalorder %s18, 1
      %s244 = scalar_select %p243, %s18, 1
      %s245 = smul.addr %s244, 128
      %s246 = smul.addr %s245, 8
      %s247 = scalar_lea.vmem %s0, %s246
      %p248 = pneg %p39
      %p249 = pneg %p36
      %p250 = pneg %p60
      %p251 = pneg %p57
      %p252 = pneg %p81
      %p253 = pneg %p78
      %p254 = pneg %p102
      %p255 = pneg %p99
      %p256 = pneg %p123
      %p257 = pneg %p120
      %p258 = pneg %p144
      %p259 = pneg %p141
      %p260 = pneg %p165
      %p261 = pneg %p162
      %p262 = pneg %p191
      %p263 = pneg %p188
      %p264 = scmp.lt.s32.totalorder %s18, 1
      %s265 = scalar_select %p264, %s18, 1
      %s266 = smul.addr %s265, 16
      %s267 = smul.addr %s266, 4
      %s268 = scalar_lea.vmem %s7, %s267
      %p269 = scmp.lt.s32.totalorder %s18, 1
      %s270 = scalar_select %p269, %s18, 1
      %s271 = smul.addr %s270, 128
      %s272 = smul.addr %s271, 8
      %s273 = scalar_lea.vmem %s0, %s272
      %p274 = scmp.lt.s32.totalorder %s18, 1
      %s275 = scalar_select %p274, %s18, 1
      %s276 = smul.addr %s275, 16
      %s277 = smul.addr %s276, 4
      %s278 = scalar_lea.vmem %s7, %s277
      %v279 = vld [vmem:[%s273] sm:$0xff]
      %v280 = vld [vmem:[%s273 + $0x8] sm:$0xff]
      %v281 = vld [vmem:[%s273 + $0x10] sm:$0xff]
      %v282 = vld [vmem:[%s273 + $0x18] sm:$0xff]
      %v283 = vld [vmem:[%s273 + $0x20] sm:$0xff]
      %v284 = vld [vmem:[%s273 + $0x28] sm:$0xff]
      %v285 = vld [vmem:[%s273 + $0x30] sm:$0xff]
      %v286 = vld [vmem:[%s273 + $0x38] sm:$0xff]
      %v287 = vld [vmem:[%s273 + $0x40] sm:$0xff]
      %v288 = vld [vmem:[%s273 + $0x48] sm:$0xff]
      %v289 = vld [vmem:[%s273 + $0x50] sm:$0xff]
      %v290 = vld [vmem:[%s273 + $0x58] sm:$0xff]
      %v291 = vld [vmem:[%s273 + $0x60] sm:$0xff]
      %v292 = vld [vmem:[%s273 + $0x68] sm:$0xff]
      %v293 = vld [vmem:[%s273 + $0x70] sm:$0xff]
      %v294 = vld [vmem:[%s273 + $0x78] sm:$0xff]
      %v295 = vld [vmem:[%s273 + $0x80] sm:$0xff]
      %v296 = vld [vmem:[%s273 + $0x88] sm:$0xff]
      %v297 = vld [vmem:[%s273 + $0x90] sm:$0xff]
      %v298 = vld [vmem:[%s273 + $0x98] sm:$0xff]
      %v299 = vld [vmem:[%s273 + $0xa0] sm:$0xff]
      %v300 = vld [vmem:[%s273 + $0xa8] sm:$0xff]
      %v301 = vld [vmem:[%s273 + $0xb0] sm:$0xff]
      %v302 = vld [vmem:[%s273 + $0xb8] sm:$0xff]
      %v303 = vld [vmem:[%s273 + $0xc0] sm:$0xff]
      %v304 = vld [vmem:[%s273 + $0xc8] sm:$0xff]
      %v305 = vld [vmem:[%s273 + $0xd0] sm:$0xff]
      %v306 = vld [vmem:[%s273 + $0xd8] sm:$0xff]
      %v307 = vld [vmem:[%s273 + $0xe0] sm:$0xff]
      %v308 = vld [vmem:[%s273 + $0xe8] sm:$0xff]
      %v309 = vld [vmem:[%s273 + $0xf0] sm:$0xff]
      %v310 = vld [vmem:[%s273 + $0xf8] sm:$0xff]
      %v311 = vld [vmem:[%s273 + $0x100] sm:$0xff]
      %v312 = vld [vmem:[%s273 + $0x108] sm:$0xff]
      %v313 = vld [vmem:[%s273 + $0x110] sm:$0xff]
      %v314 = vld [vmem:[%s273 + $0x118] sm:$0xff]
      %v315 = vld [vmem:[%s273 + $0x120] sm:$0xff]
      %v316 = vld [vmem:[%s273 + $0x128] sm:$0xff]
      %v317 = vld [vmem:[%s273 + $0x130] sm:$0xff]
      %v318 = vld [vmem:[%s273 + $0x138] sm:$0xff]
      %v319 = vld [vmem:[%s273 + $0x140] sm:$0xff]
      %v320 = vld [vmem:[%s273 + $0x148] sm:$0xff]
      %v321 = vld [vmem:[%s273 + $0x150] sm:$0xff]
      %v322 = vld [vmem:[%s273 + $0x158] sm:$0xff]
      %v323 = vld [vmem:[%s273 + $0x160] sm:$0xff]
      %v324 = vld [vmem:[%s273 + $0x168] sm:$0xff]
      %v325 = vld [vmem:[%s273 + $0x170] sm:$0xff]
      %v326 = vld [vmem:[%s273 + $0x178] sm:$0xff]
      %v327 = vld [vmem:[%s273 + $0x180] sm:$0xff]
      %v328 = vld [vmem:[%s273 + $0x188] sm:$0xff]
      %v329 = vld [vmem:[%s273 + $0x190] sm:$0xff]
      %v330 = vld [vmem:[%s273 + $0x198] sm:$0xff]
      %v331 = vld [vmem:[%s273 + $0x1a0] sm:$0xff]
      %v332 = vld [vmem:[%s273 + $0x1a8] sm:$0xff]
      %v333 = vld [vmem:[%s273 + $0x1b0] sm:$0xff]
      %v334 = vld [vmem:[%s273 + $0x1b8] sm:$0xff]
      %v335 = vld [vmem:[%s273 + $0x1c0] sm:$0xff]
      %v336 = vld [vmem:[%s273 + $0x1c8] sm:$0xff]
      %v337 = vld [vmem:[%s273 + $0x1d0] sm:$0xff]
      %v338 = vld [vmem:[%s273 + $0x1d8] sm:$0xff]
      %v339 = vld [vmem:[%s273 + $0x1e0] sm:$0xff]
      %v340 = vld [vmem:[%s273 + $0x1e8] sm:$0xff]
      %v341 = vld [vmem:[%s273 + $0x1f0] sm:$0xff]
      %v342 = vld [vmem:[%s273 + $0x1f8] sm:$0xff]
      %v343 = vld [vmem:[%s273 + $0x200] sm:$0xff]
      %v344 = vld [vmem:[%s273 + $0x208] sm:$0xff]
      %v345 = vld [vmem:[%s273 + $0x210] sm:$0xff]
      %v346 = vld [vmem:[%s273 + $0x218] sm:$0xff]
      %v347 = vld [vmem:[%s273 + $0x220] sm:$0xff]
      %v348 = vld [vmem:[%s273 + $0x228] sm:$0xff]
      %v349 = vld [vmem:[%s273 + $0x230] sm:$0xff]
      %v350 = vld [vmem:[%s273 + $0x238] sm:$0xff]
      %v351 = vld [vmem:[%s273 + $0x240] sm:$0xff]
      %v352 = vld [vmem:[%s273 + $0x248] sm:$0xff]
      %v353 = vld [vmem:[%s273 + $0x250] sm:$0xff]
      %v354 = vld [vmem:[%s273 + $0x258] sm:$0xff]
      %v355 = vld [vmem:[%s273 + $0x260] sm:$0xff]
      %v356 = vld [vmem:[%s273 + $0x268] sm:$0xff]
      %v357 = vld [vmem:[%s273 + $0x270] sm:$0xff]
      %v358 = vld [vmem:[%s273 + $0x278] sm:$0xff]
      %v359 = vld [vmem:[%s273 + $0x280] sm:$0xff]
      %v360 = vld [vmem:[%s273 + $0x288] sm:$0xff]
      %v361 = vld [vmem:[%s273 + $0x290] sm:$0xff]
      %v362 = vld [vmem:[%s273 + $0x298] sm:$0xff]
      %v363 = vld [vmem:[%s273 + $0x2a0] sm:$0xff]
      %v364 = vld [vmem:[%s273 + $0x2a8] sm:$0xff]
      %v365 = vld [vmem:[%s273 + $0x2b0] sm:$0xff]
      %v366 = vld [vmem:[%s273 + $0x2b8] sm:$0xff]
      %v367 = vld [vmem:[%s273 + $0x2c0] sm:$0xff]
      %v368 = vld [vmem:[%s273 + $0x2c8] sm:$0xff]
      %v369 = vld [vmem:[%s273 + $0x2d0] sm:$0xff]
      %v370 = vld [vmem:[%s273 + $0x2d8] sm:$0xff]
      %v371 = vld [vmem:[%s273 + $0x2e0] sm:$0xff]
      %v372 = vld [vmem:[%s273 + $0x2e8] sm:$0xff]
      %v373 = vld [vmem:[%s273 + $0x2f0] sm:$0xff]
      %v374 = vld [vmem:[%s273 + $0x2f8] sm:$0xff]
      %v375 = vld [vmem:[%s273 + $0x300] sm:$0xff]
      %v376 = vld [vmem:[%s273 + $0x308] sm:$0xff]
      %v377 = vld [vmem:[%s273 + $0x310] sm:$0xff]
      %v378 = vld [vmem:[%s273 + $0x318] sm:$0xff]
      %v379 = vld [vmem:[%s273 + $0x320] sm:$0xff]
      %v380 = vld [vmem:[%s273 + $0x328] sm:$0xff]
      %v381 = vld [vmem:[%s273 + $0x330] sm:$0xff]
      %v382 = vld [vmem:[%s273 + $0x338] sm:$0xff]
      %v383 = vld [vmem:[%s273 + $0x340] sm:$0xff]
      %v384 = vld [vmem:[%s273 + $0x348] sm:$0xff]
      %v385 = vld [vmem:[%s273 + $0x350] sm:$0xff]
      %v386 = vld [vmem:[%s273 + $0x358] sm:$0xff]
      %v387 = vld [vmem:[%s273 + $0x360] sm:$0xff]
      %v388 = vld [vmem:[%s273 + $0x368] sm:$0xff]
      %v389 = vld [vmem:[%s273 + $0x370] sm:$0xff]
      %v390 = vld [vmem:[%s273 + $0x378] sm:$0xff]
      %v391 = vld [vmem:[%s273 + $0x380] sm:$0xff]
      %v392 = vld [vmem:[%s273 + $0x388] sm:$0xff]
      %v393 = vld [vmem:[%s273 + $0x390] sm:$0xff]
      %v394 = vld [vmem:[%s273 + $0x398] sm:$0xff]
      %v395 = vld [vmem:[%s273 + $0x3a0] sm:$0xff]
      %v396 = vld [vmem:[%s273 + $0x3a8] sm:$0xff]
      %v397 = vld [vmem:[%s273 + $0x3b0] sm:$0xff]
      %v398 = vld [vmem:[%s273 + $0x3b8] sm:$0xff]
      %v399 = vld [vmem:[%s273 + $0x3c0] sm:$0xff]
      %v400 = vld [vmem:[%s273 + $0x3c8] sm:$0xff]
      %v401 = vld [vmem:[%s273 + $0x3d0] sm:$0xff]
      %v402 = vld [vmem:[%s273 + $0x3d8] sm:$0xff]
      %v403 = vld [vmem:[%s273 + $0x3e0] sm:$0xff]
      %v404 = vld [vmem:[%s273 + $0x3e8] sm:$0xff]
      %v405 = vld [vmem:[%s273 + $0x3f0] sm:$0xff]
      %v406 = vld [vmem:[%s273 + $0x3f8] sm:$0xff]
      %vm407 = vcmask 7168
      %408 = vst.msk [vmem:[#allocation2] sm:$0xff] %vm407, 0.0
      %409 = vst.msk [vmem:[#allocation2 + $0x400] sm:$0xff] %vm407, 0.0
      %410 = vst.msk [vmem:[#allocation2 + $0x2] sm:$0xff] %vm407, %v279
      %411 = vst.msk [vmem:[#allocation2 + $0xa] sm:$0xff] %vm407, %v280
      %412 = vst.msk [vmem:[#allocation2 + $0x12] sm:$0xff] %vm407, %v281
      %413 = vst.msk [vmem:[#allocation2 + $0x1a] sm:$0xff] %vm407, %v282
      %414 = vst.msk [vmem:[#allocation2 + $0x22] sm:$0xff] %vm407, %v283
      %415 = vst.msk [vmem:[#allocation2 + $0x2a] sm:$0xff] %vm407, %v284
      %416 = vst.msk [vmem:[#allocation2 + $0x32] sm:$0xff] %vm407, %v285
      %417 = vst.msk [vmem:[#allocation2 + $0x3a] sm:$0xff] %vm407, %v286
      %418 = vst.msk [vmem:[#allocation2 + $0x42] sm:$0xff] %vm407, %v287
      %419 = vst.msk [vmem:[#allocation2 + $0x4a] sm:$0xff] %vm407, %v288
      %420 = vst.msk [vmem:[#allocation2 + $0x52] sm:$0xff] %vm407, %v289
      %421 = vst.msk [vmem:[#allocation2 + $0x5a] sm:$0xff] %vm407, %v290
      %422 = vst.msk [vmem:[#allocation2 + $0x62] sm:$0xff] %vm407, %v291
      %423 = vst.msk [vmem:[#allocation2 + $0x6a] sm:$0xff] %vm407, %v292
      %424 = vst.msk [vmem:[#allocation2 + $0x72] sm:$0xff] %vm407, %v293
      %425 = vst.msk [vmem:[#allocation2 + $0x7a] sm:$0xff] %vm407, %v294
      %426 = vst.msk [vmem:[#allocation2 + $0x82] sm:$0xff] %vm407, %v295
      %427 = vst.msk [vmem:[#allocation2 + $0x8a] sm:$0xff] %vm407, %v296
      %428 = vst.msk [vmem:[#allocation2 + $0x92] sm:$0xff] %vm407, %v297
      %429 = vst.msk [vmem:[#allocation2 + $0x9a] sm:$0xff] %vm407, %v298
      %430 = vst.msk [vmem:[#allocation2 + $0xa2] sm:$0xff] %vm407, %v299
      %431 = vst.msk [vmem:[#allocation2 + $0xaa] sm:$0xff] %vm407, %v300
      %432 = vst.msk [vmem:[#allocation2 + $0xb2] sm:$0xff] %vm407, %v301
      %433 = vst.msk [vmem:[#allocation2 + $0xba] sm:$0xff] %vm407, %v302
      %434 = vst.msk [vmem:[#allocation2 + $0xc2] sm:$0xff] %vm407, %v303
      %435 = vst.msk [vmem:[#allocation2 + $0xca] sm:$0xff] %vm407, %v304
      %436 = vst.msk [vmem:[#allocation2 + $0xd2] sm:$0xff] %vm407, %v305
      %437 = vst.msk [vmem:[#allocation2 + $0xda] sm:$0xff] %vm407, %v306
      %438 = vst.msk [vmem:[#allocation2 + $0xe2] sm:$0xff] %vm407, %v307
      %439 = vst.msk [vmem:[#allocation2 + $0xea] sm:$0xff] %vm407, %v308
      %440 = vst.msk [vmem:[#allocation2 + $0xf2] sm:$0xff] %vm407, %v309
      %441 = vst.msk [vmem:[#allocation2 + $0xfa] sm:$0xff] %vm407, %v310
      %442 = vst.msk [vmem:[#allocation2 + $0x102] sm:$0xff] %vm407, %v311
      %443 = vst.msk [vmem:[#allocation2 + $0x10a] sm:$0xff] %vm407, %v312
      %444 = vst.msk [vmem:[#allocation2 + $0x112] sm:$0xff] %vm407, %v313
      %445 = vst.msk [vmem:[#allocation2 + $0x11a] sm:$0xff] %vm407, %v314
      %446 = vst.msk [vmem:[#allocation2 + $0x122] sm:$0xff] %vm407, %v315
      %447 = vst.msk [vmem:[#allocation2 + $0x12a] sm:$0xff] %vm407, %v316
      %448 = vst.msk [vmem:[#allocation2 + $0x132] sm:$0xff] %vm407, %v317
      %449 = vst.msk [vmem:[#allocation2 + $0x13a] sm:$0xff] %vm407, %v318
      %450 = vst.msk [vmem:[#allocation2 + $0x142] sm:$0xff] %vm407, %v319
      %451 = vst.msk [vmem:[#allocation2 + $0x14a] sm:$0xff] %vm407, %v320
      %452 = vst.msk [vmem:[#allocation2 + $0x152] sm:$0xff] %vm407, %v321
      %453 = vst.msk [vmem:[#allocation2 + $0x15a] sm:$0xff] %vm407, %v322
      %454 = vst.msk [vmem:[#allocation2 + $0x162] sm:$0xff] %vm407, %v323
      %455 = vst.msk [vmem:[#allocation2 + $0x16a] sm:$0xff] %vm407, %v324
      %456 = vst.msk [vmem:[#allocation2 + $0x172] sm:$0xff] %vm407, %v325
      %457 = vst.msk [vmem:[#allocation2 + $0x17a] sm:$0xff] %vm407, %v326
      %458 = vst.msk [vmem:[#allocation2 + $0x182] sm:$0xff] %vm407, %v327
      %459 = vst.msk [vmem:[#allocation2 + $0x18a] sm:$0xff] %vm407, %v328
      %460 = vst.msk [vmem:[#allocation2 + $0x192] sm:$0xff] %vm407, %v329
      %461 = vst.msk [vmem:[#allocation2 + $0x19a] sm:$0xff] %vm407, %v330
      %462 = vst.msk [vmem:[#allocation2 + $0x1a2] sm:$0xff] %vm407, %v331
      %463 = vst.msk [vmem:[#allocation2 + $0x1aa] sm:$0xff] %vm407, %v332
      %464 = vst.msk [vmem:[#allocation2 + $0x1b2] sm:$0xff] %vm407, %v333
      %465 = vst.msk [vmem:[#allocation2 + $0x1ba] sm:$0xff] %vm407, %v334
      %466 = vst.msk [vmem:[#allocation2 + $0x1c2] sm:$0xff] %vm407, %v335
      %467 = vst.msk [vmem:[#allocation2 + $0x1ca] sm:$0xff] %vm407, %v336
      %468 = vst.msk [vmem:[#allocation2 + $0x1d2] sm:$0xff] %vm407, %v337
      %469 = vst.msk [vmem:[#allocation2 + $0x1da] sm:$0xff] %vm407, %v338
      %470 = vst.msk [vmem:[#allocation2 + $0x1e2] sm:$0xff] %vm407, %v339
      %471 = vst.msk [vmem:[#allocation2 + $0x1ea] sm:$0xff] %vm407, %v340
      %472 = vst.msk [vmem:[#allocation2 + $0x1f2] sm:$0xff] %vm407, %v341
      %473 = vst.msk [vmem:[#allocation2 + $0x1fa] sm:$0xff] %vm407, %v342
      %474 = vst.msk [vmem:[#allocation2 + $0x202] sm:$0xff] %vm407, %v343
      %475 = vst.msk [vmem:[#allocation2 + $0x20a] sm:$0xff] %vm407, %v344
      %476 = vst.msk [vmem:[#allocation2 + $0x212] sm:$0xff] %vm407, %v345
      %477 = vst.msk [vmem:[#allocation2 + $0x21a] sm:$0xff] %vm407, %v346
      %478 = vst.msk [vmem:[#allocation2 + $0x222] sm:$0xff] %vm407, %v347
      %479 = vst.msk [vmem:[#allocation2 + $0x22a] sm:$0xff] %vm407, %v348
      %480 = vst.msk [vmem:[#allocation2 + $0x232] sm:$0xff] %vm407, %v349
      %481 = vst.msk [vmem:[#allocation2 + $0x23a] sm:$0xff] %vm407, %v350
      %482 = vst.msk [vmem:[#allocation2 + $0x242] sm:$0xff] %vm407, %v351
      %483 = vst.msk [vmem:[#allocation2 + $0x24a] sm:$0xff] %vm407, %v352
      %484 = vst.msk [vmem:[#allocation2 + $0x252] sm:$0xff] %vm407, %v353
      %485 = vst.msk [vmem:[#allocation2 + $0x25a] sm:$0xff] %vm407, %v354
      %486 = vst.msk [vmem:[#allocation2 + $0x262] sm:$0xff] %vm407, %v355
      %487 = vst.msk [vmem:[#allocation2 + $0x26a] sm:$0xff] %vm407, %v356
      %488 = vst.msk [vmem:[#allocation2 + $0x272] sm:$0xff] %vm407, %v357
      %489 = vst.msk [vmem:[#allocation2 + $0x27a] sm:$0xff] %vm407, %v358
      %490 = vst.msk [vmem:[#allocation2 + $0x282] sm:$0xff] %vm407, %v359
      %491 = vst.msk [vmem:[#allocation2 + $0x28a] sm:$0xff] %vm407, %v360
      %492 = vst.msk [vmem:[#allocation2 + $0x292] sm:$0xff] %vm407, %v361
      %493 = vst.msk [vmem:[#allocation2 + $0x29a] sm:$0xff] %vm407, %v362
      %494 = vst.msk [vmem:[#allocation2 + $0x2a2] sm:$0xff] %vm407, %v363
      %495 = vst.msk [vmem:[#allocation2 + $0x2aa] sm:$0xff] %vm407, %v364
      %496 = vst.msk [vmem:[#allocation2 + $0x2b2] sm:$0xff] %vm407, %v365
      %497 = vst.msk [vmem:[#allocation2 + $0x2ba] sm:$0xff] %vm407, %v366
      %498 = vst.msk [vmem:[#allocation2 + $0x2c2] sm:$0xff] %vm407, %v367
      %499 = vst.msk [vmem:[#allocation2 + $0x2ca] sm:$0xff] %vm407, %v368
      %500 = vst.msk [vmem:[#allocation2 + $0x2d2] sm:$0xff] %vm407, %v369
      %501 = vst.msk [vmem:[#allocation2 + $0x2da] sm:$0xff] %vm407, %v370
      %502 = vst.msk [vmem:[#allocation2 + $0x2e2] sm:$0xff] %vm407, %v371
      %503 = vst.msk [vmem:[#allocation2 + $0x2ea] sm:$0xff] %vm407, %v372
      %504 = vst.msk [vmem:[#allocation2 + $0x2f2] sm:$0xff] %vm407, %v373
      %505 = vst.msk [vmem:[#allocation2 + $0x2fa] sm:$0xff] %vm407, %v374
      %506 = vst.msk [vmem:[#allocation2 + $0x302] sm:$0xff] %vm407, %v375
      %507 = vst.msk [vmem:[#allocation2 + $0x30a] sm:$0xff] %vm407, %v376
      %508 = vst.msk [vmem:[#allocation2 + $0x312] sm:$0xff] %vm407, %v377
      %509 = vst.msk [vmem:[#allocation2 + $0x31a] sm:$0xff] %vm407, %v378
      %510 = vst.msk [vmem:[#allocation2 + $0x322] sm:$0xff] %vm407, %v379
      %511 = vst.msk [vmem:[#allocation2 + $0x32a] sm:$0xff] %vm407, %v380
      %512 = vst.msk [vmem:[#allocation2 + $0x332] sm:$0xff] %vm407, %v381
      %513 = vst.msk [vmem:[#allocation2 + $0x33a] sm:$0xff] %vm407, %v382
      %514 = vst.msk [vmem:[#allocation2 + $0x342] sm:$0xff] %vm407, %v383
      %515 = vst.msk [vmem:[#allocation2 + $0x34a] sm:$0xff] %vm407, %v384
      %516 = vst.msk [vmem:[#allocation2 + $0x352] sm:$0xff] %vm407, %v385
      %517 = vst.msk [vmem:[#allocation2 + $0x35a] sm:$0xff] %vm407, %v386
      %518 = vst.msk [vmem:[#allocation2 + $0x362] sm:$0xff] %vm407, %v387
      %519 = vst.msk [vmem:[#allocation2 + $0x36a] sm:$0xff] %vm407, %v388
      %520 = vst.msk [vmem:[#allocation2 + $0x372] sm:$0xff] %vm407, %v389
      %521 = vst.msk [vmem:[#allocation2 + $0x37a] sm:$0xff] %vm407, %v390
      %522 = vst.msk [vmem:[#allocation2 + $0x382] sm:$0xff] %vm407, %v391
      %523 = vst.msk [vmem:[#allocation2 + $0x38a] sm:$0xff] %vm407, %v392
      %524 = vst.msk [vmem:[#allocation2 + $0x392] sm:$0xff] %vm407, %v393
      %525 = vst.msk [vmem:[#allocation2 + $0x39a] sm:$0xff] %vm407, %v394
      %526 = vst.msk [vmem:[#allocation2 + $0x3a2] sm:$0xff] %vm407, %v395
      %527 = vst.msk [vmem:[#allocation2 + $0x3aa] sm:$0xff] %vm407, %v396
      %528 = vst.msk [vmem:[#allocation2 + $0x3b2] sm:$0xff] %vm407, %v397
      %529 = vst.msk [vmem:[#allocation2 + $0x3ba] sm:$0xff] %vm407, %v398
      %530 = vst.msk [vmem:[#allocation2 + $0x3c2] sm:$0xff] %vm407, %v399
      %531 = vst.msk [vmem:[#allocation2 + $0x3ca] sm:$0xff] %vm407, %v400
      %532 = vst.msk [vmem:[#allocation2 + $0x3d2] sm:$0xff] %vm407, %v401
      %533 = vst.msk [vmem:[#allocation2 + $0x3da] sm:$0xff] %vm407, %v402
      %534 = vst.msk [vmem:[#allocation2 + $0x3e2] sm:$0xff] %vm407, %v403
      %535 = vst.msk [vmem:[#allocation2 + $0x3ea] sm:$0xff] %vm407, %v404
      %536 = vst.msk [vmem:[#allocation2 + $0x3f2] sm:$0xff] %vm407, %v405
      %537 = vst.msk [vmem:[#allocation2 + $0x3fa] sm:$0xff] %vm407, %v406
      %v538 = vld [vmem:[#allocation2] sm:$0xff]
      %v539 = vld [vmem:[#allocation2 + $0x8] sm:$0xff]
      %v540 = vld [vmem:[#allocation2 + $0x10] sm:$0xff]
      %v541 = vld [vmem:[#allocation2 + $0x18] sm:$0xff]
      %v542 = vld [vmem:[#allocation2 + $0x20] sm:$0xff]
      %v543 = vld [vmem:[#allocation2 + $0x28] sm:$0xff]
      %v544 = vld [vmem:[#allocation2 + $0x30] sm:$0xff]
      %v545 = vld [vmem:[#allocation2 + $0x38] sm:$0xff]
      %v546 = vld [vmem:[#allocation2 + $0x40] sm:$0xff]
      %v547 = vld [vmem:[#allocation2 + $0x48] sm:$0xff]
      %v548 = vld [vmem:[#allocation2 + $0x50] sm:$0xff]
      %v549 = vld [vmem:[#allocation2 + $0x58] sm:$0xff]
      %v550 = vld [vmem:[#allocation2 + $0x60] sm:$0xff]
      %v551 = vld [vmem:[#allocation2 + $0x68] sm:$0xff]
      %v552 = vld [vmem:[#allocation2 + $0x70] sm:$0xff]
      %v553 = vld [vmem:[#allocation2 + $0x78] sm:$0xff]
      %v554 = vld [vmem:[#allocation2 + $0x80] sm:$0xff]
      %v555 = vld [vmem:[#allocation2 + $0x88] sm:$0xff]
      %v556 = vld [vmem:[#allocation2 + $0x90] sm:$0xff]
      %v557 = vld [vmem:[#allocation2 + $0x98] sm:$0xff]
      %v558 = vld [vmem:[#allocation2 + $0xa0] sm:$0xff]
      %v559 = vld [vmem:[#allocation2 + $0xa8] sm:$0xff]
      %v560 = vld [vmem:[#allocation2 + $0xb0] sm:$0xff]
      %v561 = vld [vmem:[#allocation2 + $0xb8] sm:$0xff]
      %v562 = vld [vmem:[#allocation2 + $0xc0] sm:$0xff]
      %v563 = vld [vmem:[#allocation2 + $0xc8] sm:$0xff]
      %v564 = vld [vmem:[#allocation2 + $0xd0] sm:$0xff]
      %v565 = vld [vmem:[#allocation2 + $0xd8] sm:$0xff]
      %v566 = vld [vmem:[#allocation2 + $0xe0] sm:$0xff]
      %v567 = vld [vmem:[#allocation2 + $0xe8] sm:$0xff]
      %v568 = vld [vmem:[#allocation2 + $0xf0] sm:$0xff]
      %v569 = vld [vmem:[#allocation2 + $0xf8] sm:$0xff]
      %v570 = vld [vmem:[#allocation2 + $0x100] sm:$0xff]
      %v571 = vld [vmem:[#allocation2 + $0x108] sm:$0xff]
      %v572 = vld [vmem:[#allocation2 + $0x110] sm:$0xff]
      %v573 = vld [vmem:[#allocation2 + $0x118] sm:$0xff]
      %v574 = vld [vmem:[#allocation2 + $0x120] sm:$0xff]
      %v575 = vld [vmem:[#allocation2 + $0x128] sm:$0xff]
      %v576 = vld [vmem:[#allocation2 + $0x130] sm:$0xff]
      %v577 = vld [vmem:[#allocation2 + $0x138] sm:$0xff]
      %v578 = vld [vmem:[#allocation2 + $0x140] sm:$0xff]
      %v579 = vld [vmem:[#allocation2 + $0x148] sm:$0xff]
      %v580 = vld [vmem:[#allocation2 + $0x150] sm:$0xff]
      %v581 = vld [vmem:[#allocation2 + $0x158] sm:$0xff]
      %v582 = vld [vmem:[#allocation2 + $0x160] sm:$0xff]
      %v583 = vld [vmem:[#allocation2 + $0x168] sm:$0xff]
      %v584 = vld [vmem:[#allocation2 + $0x170] sm:$0xff]
      %v585 = vld [vmem:[#allocation2 + $0x178] sm:$0xff]
      %v586 = vld [vmem:[#allocation2 + $0x180] sm:$0xff]
      %v587 = vld [vmem:[#allocation2 + $0x188] sm:$0xff]
      %v588 = vld [vmem:[#allocation2 + $0x190] sm:$0xff]
      %v589 = vld [vmem:[#allocation2 + $0x198] sm:$0xff]
      %v590 = vld [vmem:[#allocation2 + $0x1a0] sm:$0xff]
      %v591 = vld [vmem:[#allocation2 + $0x1a8] sm:$0xff]
      %v592 = vld [vmem:[#allocation2 + $0x1b0] sm:$0xff]
      %v593 = vld [vmem:[#allocation2 + $0x1b8] sm:$0xff]
      %v594 = vld [vmem:[#allocation2 + $0x1c0] sm:$0xff]
      %v595 = vld [vmem:[#allocation2 + $0x1c8] sm:$0xff]
      %v596 = vld [vmem:[#allocation2 + $0x1d0] sm:$0xff]
      %v597 = vld [vmem:[#allocation2 + $0x1d8] sm:$0xff]
      %v598 = vld [vmem:[#allocation2 + $0x1e0] sm:$0xff]
      %v599 = vld [vmem:[#allocation2 + $0x1e8] sm:$0xff]
      %v600 = vld [vmem:[#allocation2 + $0x1f0] sm:$0xff]
      %v601 = vld [vmem:[#allocation2 + $0x1f8] sm:$0xff]
      %v602 = vld [vmem:[#allocation2 + $0x200] sm:$0xff]
      %v603 = vld [vmem:[#allocation2 + $0x208] sm:$0xff]
      %v604 = vld [vmem:[#allocation2 + $0x210] sm:$0xff]
      %v605 = vld [vmem:[#allocation2 + $0x218] sm:$0xff]
      %v606 = vld [vmem:[#allocation2 + $0x220] sm:$0xff]
      %v607 = vld [vmem:[#allocation2 + $0x228] sm:$0xff]
      %v608 = vld [vmem:[#allocation2 + $0x230] sm:$0xff]
      %v609 = vld [vmem:[#allocation2 + $0x238] sm:$0xff]
      %v610 = vld [vmem:[#allocation2 + $0x240] sm:$0xff]
      %v611 = vld [vmem:[#allocation2 + $0x248] sm:$0xff]
      %v612 = vld [vmem:[#allocation2 + $0x250] sm:$0xff]
      %v613 = vld [vmem:[#allocation2 + $0x258] sm:$0xff]
      %v614 = vld [vmem:[#allocation2 + $0x260] sm:$0xff]
      %v615 = vld [vmem:[#allocation2 + $0x268] sm:$0xff]
      %v616 = vld [vmem:[#allocation2 + $0x270] sm:$0xff]
      %v617 = vld [vmem:[#allocation2 + $0x278] sm:$0xff]
      %v618 = vld [vmem:[#allocation2 + $0x280] sm:$0xff]
      %v619 = vld [vmem:[#allocation2 + $0x288] sm:$0xff]
      %v620 = vld [vmem:[#allocation2 + $0x290] sm:$0xff]
      %v621 = vld [vmem:[#allocation2 + $0x298] sm:$0xff]
      %v622 = vld [vmem:[#allocation2 + $0x2a0] sm:$0xff]
      %v623 = vld [vmem:[#allocation2 + $0x2a8] sm:$0xff]
      %v624 = vld [vmem:[#allocation2 + $0x2b0] sm:$0xff]
      %v625 = vld [vmem:[#allocation2 + $0x2b8] sm:$0xff]
      %v626 = vld [vmem:[#allocation2 + $0x2c0] sm:$0xff]
      %v627 = vld [vmem:[#allocation2 + $0x2c8] sm:$0xff]
      %v628 = vld [vmem:[#allocation2 + $0x2d0] sm:$0xff]
      %v629 = vld [vmem:[#allocation2 + $0x2d8] sm:$0xff]
      %v630 = vld [vmem:[#allocation2 + $0x2e0] sm:$0xff]
      %v631 = vld [vmem:[#allocation2 + $0x2e8] sm:$0xff]
      %v632 = vld [vmem:[#allocation2 + $0x2f0] sm:$0xff]
      %v633 = vld [vmem:[#allocation2 + $0x2f8] sm:$0xff]
      %v634 = vld [vmem:[#allocation2 + $0x300] sm:$0xff]
      %v635 = vld [vmem:[#allocation2 + $0x308] sm:$0xff]
      %v636 = vld [vmem:[#allocation2 + $0x310] sm:$0xff]
      %v637 = vld [vmem:[#allocation2 + $0x318] sm:$0xff]
      %v638 = vld [vmem:[#allocation2 + $0x320] sm:$0xff]
      %v639 = vld [vmem:[#allocation2 + $0x328] sm:$0xff]
      %v640 = vld [vmem:[#allocation2 + $0x330] sm:$0xff]
      %v641 = vld [vmem:[#allocation2 + $0x338] sm:$0xff]
      %v642 = vld [vmem:[#allocation2 + $0x340] sm:$0xff]
      %v643 = vld [vmem:[#allocation2 + $0x348] sm:$0xff]
      %v644 = vld [vmem:[#allocation2 + $0x350] sm:$0xff]
      %v645 = vld [vmem:[#allocation2 + $0x358] sm:$0xff]
      %v646 = vld [vmem:[#allocation2 + $0x360] sm:$0xff]
      %v647 = vld [vmem:[#allocation2 + $0x368] sm:$0xff]
      %v648 = vld [vmem:[#allocation2 + $0x370] sm:$0xff]
      %v649 = vld [vmem:[#allocation2 + $0x378] sm:$0xff]
      %v650 = vld [vmem:[#allocation2 + $0x380] sm:$0xff]
      %v651 = vld [vmem:[#allocation2 + $0x388] sm:$0xff]
      %v652 = vld [vmem:[#allocation2 + $0x390] sm:$0xff]
      %v653 = vld [vmem:[#allocation2 + $0x398] sm:$0xff]
      %v654 = vld [vmem:[#allocation2 + $0x3a0] sm:$0xff]
      %v655 = vld [vmem:[#allocation2 + $0x3a8] sm:$0xff]
      %v656 = vld [vmem:[#allocation2 + $0x3b0] sm:$0xff]
      %v657 = vld [vmem:[#allocation2 + $0x3b8] sm:$0xff]
      %v658 = vld [vmem:[#allocation2 + $0x3c0] sm:$0xff]
      %v659 = vld [vmem:[#allocation2 + $0x3c8] sm:$0xff]
      %v660 = vld [vmem:[#allocation2 + $0x3d0] sm:$0xff]
      %v661 = vld [vmem:[#allocation2 + $0x3d8] sm:$0xff]
      %v662 = vld [vmem:[#allocation2 + $0x3e0] sm:$0xff]
      %v663 = vld [vmem:[#allocation2 + $0x3e8] sm:$0xff]
      %v664 = vld [vmem:[#allocation2 + $0x3f0] sm:$0xff]
      %v665 = vld [vmem:[#allocation2 + $0x3f8] sm:$0xff]
      %v666 = vld [vmem:[%s1] sm:$0x1]
      %668 = vset.pattern.permute.xlu0 0
      %669 = vperm.xlu0 %668, %v538
      %v670 = vpop.permute.xlu0 %669
      %673 = vset.pattern.permute.xlu0 0
      %674 = vperm.xlu0 %673, %v539
      %v675 = vpop.permute.xlu0 %674
      %678 = vset.pattern.permute.xlu0 0
      %679 = vperm.xlu0 %678, %v540
      %v680 = vpop.permute.xlu0 %679
      %683 = vset.pattern.permute.xlu0 0
      %684 = vperm.xlu0 %683, %v541
      %v685 = vpop.permute.xlu0 %684
      %688 = vset.pattern.permute.xlu0 0
      %689 = vperm.xlu0 %688, %v542
      %v690 = vpop.permute.xlu0 %689
      %693 = vset.pattern.permute.xlu0 0
      %694 = vperm.xlu0 %693, %v543
      %v695 = vpop.permute.xlu0 %694
      %698 = vset.pattern.permute.xlu0 0
      %699 = vperm.xlu0 %698, %v544
      %v700 = vpop.permute.xlu0 %699
      %703 = vset.pattern.permute.xlu0 0
      %704 = vperm.xlu0 %703, %v545
      %v705 = vpop.permute.xlu0 %704
      %708 = vset.pattern.permute.xlu0 0
      %709 = vperm.xlu0 %708, %v546
      %v710 = vpop.permute.xlu0 %709
      %713 = vset.pattern.permute.xlu0 0
      %714 = vperm.xlu0 %713, %v547
      %v715 = vpop.permute.xlu0 %714
      %718 = vset.pattern.permute.xlu0 0
      %719 = vperm.xlu0 %718, %v548
      %v720 = vpop.permute.xlu0 %719
      %723 = vset.pattern.permute.xlu0 0
      %724 = vperm.xlu0 %723, %v549
      %v725 = vpop.permute.xlu0 %724
      %728 = vset.pattern.permute.xlu0 0
      %729 = vperm.xlu0 %728, %v550
      %v730 = vpop.permute.xlu0 %729
      %733 = vset.pattern.permute.xlu0 0
      %734 = vperm.xlu0 %733, %v551
      %v735 = vpop.permute.xlu0 %734
      %738 = vset.pattern.permute.xlu0 0
      %739 = vperm.xlu0 %738, %v552
      %v740 = vpop.permute.xlu0 %739
      %743 = vset.pattern.permute.xlu0 0
      %744 = vperm.xlu0 %743, %v553
      %v745 = vpop.permute.xlu0 %744
      %748 = vset.pattern.permute.xlu0 0
      %749 = vperm.xlu0 %748, %v554
      %v750 = vpop.permute.xlu0 %749
      %753 = vset.pattern.permute.xlu0 0
      %754 = vperm.xlu0 %753, %v555
      %v755 = vpop.permute.xlu0 %754
      %758 = vset.pattern.permute.xlu0 0
      %759 = vperm.xlu0 %758, %v556
      %v760 = vpop.permute.xlu0 %759
      %763 = vset.pattern.permute.xlu0 0
      %764 = vperm.xlu0 %763, %v557
      %v765 = vpop.permute.xlu0 %764
      %768 = vset.pattern.permute.xlu0 0
      %769 = vperm.xlu0 %768, %v558
      %v770 = vpop.permute.xlu0 %769
      %773 = vset.pattern.permute.xlu0 0
      %774 = vperm.xlu0 %773, %v559
      %v775 = vpop.permute.xlu0 %774
      %778 = vset.pattern.permute.xlu0 0
      %779 = vperm.xlu0 %778, %v560
      %v780 = vpop.permute.xlu0 %779
      %783 = vset.pattern.permute.xlu0 0
      %784 = vperm.xlu0 %783, %v561
      %v785 = vpop.permute.xlu0 %784
      %788 = vset.pattern.permute.xlu0 0
      %789 = vperm.xlu0 %788, %v562
      %v790 = vpop.permute.xlu0 %789
      %793 = vset.pattern.permute.xlu0 0
      %794 = vperm.xlu0 %793, %v563
      %v795 = vpop.permute.xlu0 %794
      %798 = vset.pattern.permute.xlu0 0
      %799 = vperm.xlu0 %798, %v564
      %v800 = vpop.permute.xlu0 %799
      %803 = vset.pattern.permute.xlu0 0
      %804 = vperm.xlu0 %803, %v565
      %v805 = vpop.permute.xlu0 %804
      %808 = vset.pattern.permute.xlu0 0
      %809 = vperm.xlu0 %808, %v566
      %v810 = vpop.permute.xlu0 %809
      %813 = vset.pattern.permute.xlu0 0
      %814 = vperm.xlu0 %813, %v567
      %v815 = vpop.permute.xlu0 %814
      %818 = vset.pattern.permute.xlu0 0
      %819 = vperm.xlu0 %818, %v568
      %v820 = vpop.permute.xlu0 %819
      %823 = vset.pattern.permute.xlu0 0
      %824 = vperm.xlu0 %823, %v569
      %v825 = vpop.permute.xlu0 %824
      %828 = vset.pattern.permute.xlu0 0
      %829 = vperm.xlu0 %828, %v570
      %v830 = vpop.permute.xlu0 %829
      %833 = vset.pattern.permute.xlu0 0
      %834 = vperm.xlu0 %833, %v571
      %v835 = vpop.permute.xlu0 %834
      %838 = vset.pattern.permute.xlu0 0
      %839 = vperm.xlu0 %838, %v572
      %v840 = vpop.permute.xlu0 %839
      %843 = vset.pattern.permute.xlu0 0
      %844 = vperm.xlu0 %843, %v573
      %v845 = vpop.permute.xlu0 %844
      %848 = vset.pattern.permute.xlu0 0
      %849 = vperm.xlu0 %848, %v574
      %v850 = vpop.permute.xlu0 %849
      %853 = vset.pattern.permute.xlu0 0
      %854 = vperm.xlu0 %853, %v575
      %v855 = vpop.permute.xlu0 %854
      %858 = vset.pattern.permute.xlu0 0
      %859 = vperm.xlu0 %858, %v576
      %v860 = vpop.permute.xlu0 %859
      %863 = vset.pattern.permute.xlu0 0
      %864 = vperm.xlu0 %863, %v577
      %v865 = vpop.permute.xlu0 %864
      %868 = vset.pattern.permute.xlu0 0
      %869 = vperm.xlu0 %868, %v578
      %v870 = vpop.permute.xlu0 %869
      %873 = vset.pattern.permute.xlu0 0
      %874 = vperm.xlu0 %873, %v579
      %v875 = vpop.permute.xlu0 %874
      %878 = vset.pattern.permute.xlu0 0
      %879 = vperm.xlu0 %878, %v580
      %v880 = vpop.permute.xlu0 %879
      %883 = vset.pattern.permute.xlu0 0
      %884 = vperm.xlu0 %883, %v581
      %v885 = vpop.permute.xlu0 %884
      %888 = vset.pattern.permute.xlu0 0
      %889 = vperm.xlu0 %888, %v582
      %v890 = vpop.permute.xlu0 %889
      %893 = vset.pattern.permute.xlu0 0
      %894 = vperm.xlu0 %893, %v583
      %v895 = vpop.permute.xlu0 %894
      %898 = vset.pattern.permute.xlu0 0
      %899 = vperm.xlu0 %898, %v584
      %v900 = vpop.permute.xlu0 %899
      %903 = vset.pattern.permute.xlu0 0
      %904 = vperm.xlu0 %903, %v585
      %v905 = vpop.permute.xlu0 %904
      %908 = vset.pattern.permute.xlu0 0
      %909 = vperm.xlu0 %908, %v586
      %v910 = vpop.permute.xlu0 %909
      %913 = vset.pattern.permute.xlu0 0
      %914 = vperm.xlu0 %913, %v587
      %v915 = vpop.permute.xlu0 %914
      %918 = vset.pattern.permute.xlu0 0
      %919 = vperm.xlu0 %918, %v588
      %v920 = vpop.permute.xlu0 %919
      %923 = vset.pattern.permute.xlu0 0
      %924 = vperm.xlu0 %923, %v589
      %v925 = vpop.permute.xlu0 %924
      %928 = vset.pattern.permute.xlu0 0
      %929 = vperm.xlu0 %928, %v590
      %v930 = vpop.permute.xlu0 %929
      %933 = vset.pattern.permute.xlu0 0
      %934 = vperm.xlu0 %933, %v591
      %v935 = vpop.permute.xlu0 %934
      %938 = vset.pattern.permute.xlu0 0
      %939 = vperm.xlu0 %938, %v592
      %v940 = vpop.permute.xlu0 %939
      %943 = vset.pattern.permute.xlu0 0
      %944 = vperm.xlu0 %943, %v593
      %v945 = vpop.permute.xlu0 %944
      %948 = vset.pattern.permute.xlu0 0
      %949 = vperm.xlu0 %948, %v594
      %v950 = vpop.permute.xlu0 %949
      %953 = vset.pattern.permute.xlu0 0
      %954 = vperm.xlu0 %953, %v595
      %v955 = vpop.permute.xlu0 %954
      %958 = vset.pattern.permute.xlu0 0
      %959 = vperm.xlu0 %958, %v596
      %v960 = vpop.permute.xlu0 %959
      %963 = vset.pattern.permute.xlu0 0
      %964 = vperm.xlu0 %963, %v597
      %v965 = vpop.permute.xlu0 %964
      %968 = vset.pattern.permute.xlu0 0
      %969 = vperm.xlu0 %968, %v598
      %v970 = vpop.permute.xlu0 %969
      %973 = vset.pattern.permute.xlu0 0
      %974 = vperm.xlu0 %973, %v599
      %v975 = vpop.permute.xlu0 %974
      %978 = vset.pattern.permute.xlu0 0
      %979 = vperm.xlu0 %978, %v600
      %v980 = vpop.permute.xlu0 %979
      %983 = vset.pattern.permute.xlu0 0
      %984 = vperm.xlu0 %983, %v601
      %v985 = vpop.permute.xlu0 %984
      %988 = vset.pattern.permute.xlu0 0
      %989 = vperm.xlu0 %988, %v602
      %v990 = vpop.permute.xlu0 %989
      %993 = vset.pattern.permute.xlu0 0
      %994 = vperm.xlu0 %993, %v603
      %v995 = vpop.permute.xlu0 %994
      %998 = vset.pattern.permute.xlu0 0
      %999 = vperm.xlu0 %998, %v604
      %v1000 = vpop.permute.xlu0 %999
      %1003 = vset.pattern.permute.xlu0 0
      %1004 = vperm.xlu0 %1003, %v605
      %v1005 = vpop.permute.xlu0 %1004
      %1008 = vset.pattern.permute.xlu0 0
      %1009 = vperm.xlu0 %1008, %v606
      %v1010 = vpop.permute.xlu0 %1009
      %1013 = vset.pattern.permute.xlu0 0
      %1014 = vperm.xlu0 %1013, %v607
      %v1015 = vpop.permute.xlu0 %1014
      %1018 = vset.pattern.permute.xlu0 0
      %1019 = vperm.xlu0 %1018, %v608
      %v1020 = vpop.permute.xlu0 %1019
      %1023 = vset.pattern.permute.xlu0 0
      %1024 = vperm.xlu0 %1023, %v609
      %v1025 = vpop.permute.xlu0 %1024
      %1028 = vset.pattern.permute.xlu0 0
      %1029 = vperm.xlu0 %1028, %v610
      %v1030 = vpop.permute.xlu0 %1029
      %1033 = vset.pattern.permute.xlu0 0
      %1034 = vperm.xlu0 %1033, %v611
      %v1035 = vpop.permute.xlu0 %1034
      %1038 = vset.pattern.permute.xlu0 0
      %1039 = vperm.xlu0 %1038, %v612
      %v1040 = vpop.permute.xlu0 %1039
      %1043 = vset.pattern.permute.xlu0 0
      %1044 = vperm.xlu0 %1043, %v613
      %v1045 = vpop.permute.xlu0 %1044
      %1048 = vset.pattern.permute.xlu0 0
      %1049 = vperm.xlu0 %1048, %v614
      %v1050 = vpop.permute.xlu0 %1049
      %1053 = vset.pattern.permute.xlu0 0
      %1054 = vperm.xlu0 %1053, %v615
      %v1055 = vpop.permute.xlu0 %1054
      %1058 = vset.pattern.permute.xlu0 0
      %1059 = vperm.xlu0 %1058, %v616
      %v1060 = vpop.permute.xlu0 %1059
      %1063 = vset.pattern.permute.xlu0 0
      %1064 = vperm.xlu0 %1063, %v617
      %v1065 = vpop.permute.xlu0 %1064
      %1068 = vset.pattern.permute.xlu0 0
      %1069 = vperm.xlu0 %1068, %v618
      %v1070 = vpop.permute.xlu0 %1069
      %1073 = vset.pattern.permute.xlu0 0
      %1074 = vperm.xlu0 %1073, %v619
      %v1075 = vpop.permute.xlu0 %1074
      %1078 = vset.pattern.permute.xlu0 0
      %1079 = vperm.xlu0 %1078, %v620
      %v1080 = vpop.permute.xlu0 %1079
      %1083 = vset.pattern.permute.xlu0 0
      %1084 = vperm.xlu0 %1083, %v621
      %v1085 = vpop.permute.xlu0 %1084
      %1088 = vset.pattern.permute.xlu0 0
      %1089 = vperm.xlu0 %1088, %v622
      %v1090 = vpop.permute.xlu0 %1089
      %1093 = vset.pattern.permute.xlu0 0
      %1094 = vperm.xlu0 %1093, %v623
      %v1095 = vpop.permute.xlu0 %1094
      %1098 = vset.pattern.permute.xlu0 0
      %1099 = vperm.xlu0 %1098, %v624
      %v1100 = vpop.permute.xlu0 %1099
      %1103 = vset.pattern.permute.xlu0 0
      %1104 = vperm.xlu0 %1103, %v625
      %v1105 = vpop.permute.xlu0 %1104
      %1108 = vset.pattern.permute.xlu0 0
      %1109 = vperm.xlu0 %1108, %v626
      %v1110 = vpop.permute.xlu0 %1109
      %1113 = vset.pattern.permute.xlu0 0
      %1114 = vperm.xlu0 %1113, %v627
      %v1115 = vpop.permute.xlu0 %1114
      %1118 = vset.pattern.permute.xlu0 0
      %1119 = vperm.xlu0 %1118, %v628
      %v1120 = vpop.permute.xlu0 %1119
      %1123 = vset.pattern.permute.xlu0 0
      %1124 = vperm.xlu0 %1123, %v629
      %v1125 = vpop.permute.xlu0 %1124
      %1128 = vset.pattern.permute.xlu0 0
      %1129 = vperm.xlu0 %1128, %v630
      %v1130 = vpop.permute.xlu0 %1129
      %1133 = vset.pattern.permute.xlu0 0
      %1134 = vperm.xlu0 %1133, %v631
      %v1135 = vpop.permute.xlu0 %1134
      %1138 = vset.pattern.permute.xlu0 0
      %1139 = vperm.xlu0 %1138, %v632
      %v1140 = vpop.permute.xlu0 %1139
      %1143 = vset.pattern.permute.xlu0 0
      %1144 = vperm.xlu0 %1143, %v633
      %v1145 = vpop.permute.xlu0 %1144
      %1148 = vset.pattern.permute.xlu0 0
      %1149 = vperm.xlu0 %1148, %v634
      %v1150 = vpop.permute.xlu0 %1149
      %1153 = vset.pattern.permute.xlu0 0
      %1154 = vperm.xlu0 %1153, %v635
      %v1155 = vpop.permute.xlu0 %1154
      %1158 = vset.pattern.permute.xlu0 0
      %1159 = vperm.xlu0 %1158, %v636
      %v1160 = vpop.permute.xlu0 %1159
      %1163 = vset.pattern.permute.xlu0 0
      %1164 = vperm.xlu0 %1163, %v637
      %v1165 = vpop.permute.xlu0 %1164
      %1168 = vset.pattern.permute.xlu0 0
      %1169 = vperm.xlu0 %1168, %v638
      %v1170 = vpop.permute.xlu0 %1169
      %1173 = vset.pattern.permute.xlu0 0
      %1174 = vperm.xlu0 %1173, %v639
      %v1175 = vpop.permute.xlu0 %1174
      %1178 = vset.pattern.permute.xlu0 0
      %1179 = vperm.xlu0 %1178, %v640
      %v1180 = vpop.permute.xlu0 %1179
      %1183 = vset.pattern.permute.xlu0 0
      %1184 = vperm.xlu0 %1183, %v641
      %v1185 = vpop.permute.xlu0 %1184
      %1188 = vset.pattern.permute.xlu0 0
      %1189 = vperm.xlu0 %1188, %v642
      %v1190 = vpop.permute.xlu0 %1189
      %1193 = vset.pattern.permute.xlu0 0
      %1194 = vperm.xlu0 %1193, %v643
      %v1195 = vpop.permute.xlu0 %1194
      %1198 = vset.pattern.permute.xlu0 0
      %1199 = vperm.xlu0 %1198, %v644
      %v1200 = vpop.permute.xlu0 %1199
      %1203 = vset.pattern.permute.xlu0 0
      %1204 = vperm.xlu0 %1203, %v645
      %v1205 = vpop.permute.xlu0 %1204
      %1208 = vset.pattern.permute.xlu0 0
      %1209 = vperm.xlu0 %1208, %v646
      %v1210 = vpop.permute.xlu0 %1209
      %1213 = vset.pattern.permute.xlu0 0
      %1214 = vperm.xlu0 %1213, %v647
      %v1215 = vpop.permute.xlu0 %1214
      %1218 = vset.pattern.permute.xlu0 0
      %1219 = vperm.xlu0 %1218, %v648
      %v1220 = vpop.permute.xlu0 %1219
      %1223 = vset.pattern.permute.xlu0 0
      %1224 = vperm.xlu0 %1223, %v649
      %v1225 = vpop.permute.xlu0 %1224
      %1228 = vset.pattern.permute.xlu0 0
      %1229 = vperm.xlu0 %1228, %v650
      %v1230 = vpop.permute.xlu0 %1229
      %1233 = vset.pattern.permute.xlu0 0
      %1234 = vperm.xlu0 %1233, %v651
      %v1235 = vpop.permute.xlu0 %1234
      %1238 = vset.pattern.permute.xlu0 0
      %1239 = vperm.xlu0 %1238, %v652
      %v1240 = vpop.permute.xlu0 %1239
      %1243 = vset.pattern.permute.xlu0 0
      %1244 = vperm.xlu0 %1243, %v653
      %v1245 = vpop.permute.xlu0 %1244
      %1248 = vset.pattern.permute.xlu0 0
      %1249 = vperm.xlu0 %1248, %v654
      %v1250 = vpop.permute.xlu0 %1249
      %1253 = vset.pattern.permute.xlu0 0
      %1254 = vperm.xlu0 %1253, %v655
      %v1255 = vpop.permute.xlu0 %1254
      %1258 = vset.pattern.permute.xlu0 0
      %1259 = vperm.xlu0 %1258, %v656
      %v1260 = vpop.permute.xlu0 %1259
      %1263 = vset.pattern.permute.xlu0 0
      %1264 = vperm.xlu0 %1263, %v657
      %v1265 = vpop.permute.xlu0 %1264
      %1268 = vset.pattern.permute.xlu0 0
      %1269 = vperm.xlu0 %1268, %v658
      %v1270 = vpop.permute.xlu0 %1269
      %1273 = vset.pattern.permute.xlu0 0
      %1274 = vperm.xlu0 %1273, %v659
      %v1275 = vpop.permute.xlu0 %1274
      %1278 = vset.pattern.permute.xlu0 0
      %1279 = vperm.xlu0 %1278, %v660
      %v1280 = vpop.permute.xlu0 %1279
      %1283 = vset.pattern.permute.xlu0 0
      %1284 = vperm.xlu0 %1283, %v661
      %v1285 = vpop.permute.xlu0 %1284
      %1288 = vset.pattern.permute.xlu0 0
      %1289 = vperm.xlu0 %1288, %v662
      %v1290 = vpop.permute.xlu0 %1289
      %1293 = vset.pattern.permute.xlu0 0
      %1294 = vperm.xlu0 %1293, %v663
      %v1295 = vpop.permute.xlu0 %1294
      %1298 = vset.pattern.permute.xlu0 0
      %1299 = vperm.xlu0 %1298, %v664
      %v1300 = vpop.permute.xlu0 %1299
      %1303 = vset.pattern.permute.xlu0 0
      %1304 = vperm.xlu0 %1303, %v665
      %v1305 = vpop.permute.xlu0 %1304
      %v1308 = vperm.slane %v666, 0
      %v1310 = vmul.f32 %v670, %v1308
      %v1311 = vmul.f32 %v675, %v1308
      %v1312 = vmul.f32 %v680, %v1308
      %v1313 = vmul.f32 %v685, %v1308
      %v1314 = vmul.f32 %v690, %v1308
      %v1315 = vmul.f32 %v695, %v1308
      %v1316 = vmul.f32 %v700, %v1308
      %v1317 = vmul.f32 %v705, %v1308
      %v1318 = vmul.f32 %v710, %v1308
      %v1319 = vmul.f32 %v715, %v1308
      %v1320 = vmul.f32 %v720, %v1308
      %v1321 = vmul.f32 %v725, %v1308
      %v1322 = vmul.f32 %v730, %v1308
      %v1323 = vmul.f32 %v735, %v1308
      %v1324 = vmul.f32 %v740, %v1308
      %v1325 = vmul.f32 %v745, %v1308
      %v1326 = vmul.f32 %v750, %v1308
      %v1327 = vmul.f32 %v755, %v1308
      %v1328 = vmul.f32 %v760, %v1308
      %v1329 = vmul.f32 %v765, %v1308
      %v1330 = vmul.f32 %v770, %v1308
      %v1331 = vmul.f32 %v775, %v1308
      %v1332 = vmul.f32 %v780, %v1308
      %v1333 = vmul.f32 %v785, %v1308
      %v1334 = vmul.f32 %v790, %v1308
      %v1335 = vmul.f32 %v795, %v1308
      %v1336 = vmul.f32 %v800, %v1308
      %v1337 = vmul.f32 %v805, %v1308
      %v1338 = vmul.f32 %v810, %v1308
      %v1339 = vmul.f32 %v815, %v1308
      %v1340 = vmul.f32 %v820, %v1308
      %v1341 = vmul.f32 %v825, %v1308
      %v1342 = vmul.f32 %v830, %v1308
      %v1343 = vmul.f32 %v835, %v1308
      %v1344 = vmul.f32 %v840, %v1308
      %v1345 = vmul.f32 %v845, %v1308
      %v1346 = vmul.f32 %v850, %v1308
      %v1347 = vmul.f32 %v855, %v1308
      %v1348 = vmul.f32 %v860, %v1308
      %v1349 = vmul.f32 %v865, %v1308
      %v1350 = vmul.f32 %v870, %v1308
      %v1351 = vmul.f32 %v875, %v1308
      %v1352 = vmul.f32 %v880, %v1308
      %v1353 = vmul.f32 %v885, %v1308
      %v1354 = vmul.f32 %v890, %v1308
      %v1355 = vmul.f32 %v895, %v1308
      %v1356 = vmul.f32 %v900, %v1308
      %v1357 = vmul.f32 %v905, %v1308
      %v1358 = vmul.f32 %v910, %v1308
      %v1359 = vmul.f32 %v915, %v1308
      %v1360 = vmul.f32 %v920, %v1308
      %v1361 = vmul.f32 %v925, %v1308
      %v1362 = vmul.f32 %v930, %v1308
      %v1363 = vmul.f32 %v935, %v1308
      %v1364 = vmul.f32 %v940, %v1308
      %v1365 = vmul.f32 %v945, %v1308
      %v1366 = vmul.f32 %v950, %v1308
      %v1367 = vmul.f32 %v955, %v1308
      %v1368 = vmul.f32 %v960, %v1308
      %v1369 = vmul.f32 %v965, %v1308
      %v1370 = vmul.f32 %v970, %v1308
      %v1371 = vmul.f32 %v975, %v1308
      %v1372 = vmul.f32 %v980, %v1308
      %v1373 = vmul.f32 %v985, %v1308
      %v1374 = vmul.f32 %v990, %v1308
      %v1375 = vmul.f32 %v995, %v1308
      %v1376 = vmul.f32 %v1000, %v1308
      %v1377 = vmul.f32 %v1005, %v1308
      %v1378 = vmul.f32 %v1010, %v1308
      %v1379 = vmul.f32 %v1015, %v1308
      %v1380 = vmul.f32 %v1020, %v1308
      %v1381 = vmul.f32 %v1025, %v1308
      %v1382 = vmul.f32 %v1030, %v1308
      %v1383 = vmul.f32 %v1035, %v1308
      %v1384 = vmul.f32 %v1040, %v1308
      %v1385 = vmul.f32 %v1045, %v1308
      %v1386 = vmul.f32 %v1050, %v1308
      %v1387 = vmul.f32 %v1055, %v1308
      %v1388 = vmul.f32 %v1060, %v1308
      %v1389 = vmul.f32 %v1065, %v1308
      %v1390 = vmul.f32 %v1070, %v1308
      %v1391 = vmul.f32 %v1075, %v1308
      %v1392 = vmul.f32 %v1080, %v1308
      %v1393 = vmul.f32 %v1085, %v1308
      %v1394 = vmul.f32 %v1090, %v1308
      %v1395 = vmul.f32 %v1095, %v1308
      %v1396 = vmul.f32 %v1100, %v1308
      %v1397 = vmul.f32 %v1105, %v1308
      %v1398 = vmul.f32 %v1110, %v1308
      %v1399 = vmul.f32 %v1115, %v1308
      %v1400 = vmul.f32 %v1120, %v1308
      %v1401 = vmul.f32 %v1125, %v1308
      %v1402 = vmul.f32 %v1130, %v1308
      %v1403 = vmul.f32 %v1135, %v1308
      %v1404 = vmul.f32 %v1140, %v1308
      %v1405 = vmul.f32 %v1145, %v1308
      %v1406 = vmul.f32 %v1150, %v1308
      %v1407 = vmul.f32 %v1155, %v1308
      %v1408 = vmul.f32 %v1160, %v1308
      %v1409 = vmul.f32 %v1165, %v1308
      %v1410 = vmul.f32 %v1170, %v1308
      %v1411 = vmul.f32 %v1175, %v1308
      %v1412 = vmul.f32 %v1180, %v1308
      %v1413 = vmul.f32 %v1185, %v1308
      %v1414 = vmul.f32 %v1190, %v1308
      %v1415 = vmul.f32 %v1195, %v1308
      %v1416 = vmul.f32 %v1200, %v1308
      %v1417 = vmul.f32 %v1205, %v1308
      %v1418 = vmul.f32 %v1210, %v1308
      %v1419 = vmul.f32 %v1215, %v1308
      %v1420 = vmul.f32 %v1220, %v1308
      %v1421 = vmul.f32 %v1225, %v1308
      %v1422 = vmul.f32 %v1230, %v1308
      %v1423 = vmul.f32 %v1235, %v1308
      %v1424 = vmul.f32 %v1240, %v1308
      %v1425 = vmul.f32 %v1245, %v1308
      %v1426 = vmul.f32 %v1250, %v1308
      %v1427 = vmul.f32 %v1255, %v1308
      %v1428 = vmul.f32 %v1260, %v1308
      %v1429 = vmul.f32 %v1265, %v1308
      %v1430 = vmul.f32 %v1270, %v1308
      %v1431 = vmul.f32 %v1275, %v1308
      %v1432 = vmul.f32 %v1280, %v1308
      %v1433 = vmul.f32 %v1285, %v1308
      %v1434 = vmul.f32 %v1290, %v1308
      %v1435 = vmul.f32 %v1295, %v1308
      %v1436 = vmul.f32 %v1300, %v1308
      %v1437 = vmul.f32 %v1305, %v1308
      %v1438 = vadd.f32 %v1310, 0.0
      %v1439 = vadd.f32 %v1311, 0.0
      %v1440 = vadd.f32 %v1312, 0.0
      %v1441 = vadd.f32 %v1313, 0.0
      %v1442 = vadd.f32 %v1314, 0.0
      %v1443 = vadd.f32 %v1315, 0.0
      %v1444 = vadd.f32 %v1316, 0.0
      %v1445 = vadd.f32 %v1317, 0.0
      %v1446 = vadd.f32 %v1318, 0.0
      %v1447 = vadd.f32 %v1319, 0.0
      %v1448 = vadd.f32 %v1320, 0.0
      %v1449 = vadd.f32 %v1321, 0.0
      %v1450 = vadd.f32 %v1322, 0.0
      %v1451 = vadd.f32 %v1323, 0.0
      %v1452 = vadd.f32 %v1324, 0.0
      %v1453 = vadd.f32 %v1325, 0.0
      %v1454 = vadd.f32 %v1326, 0.0
      %v1455 = vadd.f32 %v1327, 0.0
      %v1456 = vadd.f32 %v1328, 0.0
      %v1457 = vadd.f32 %v1329, 0.0
      %v1458 = vadd.f32 %v1330, 0.0
      %v1459 = vadd.f32 %v1331, 0.0
      %v1460 = vadd.f32 %v1332, 0.0
      %v1461 = vadd.f32 %v1333, 0.0
      %v1462 = vadd.f32 %v1334, 0.0
      %v1463 = vadd.f32 %v1335, 0.0
      %v1464 = vadd.f32 %v1336, 0.0
      %v1465 = vadd.f32 %v1337, 0.0
      %v1466 = vadd.f32 %v1338, 0.0
      %v1467 = vadd.f32 %v1339, 0.0
      %v1468 = vadd.f32 %v1340, 0.0
      %v1469 = vadd.f32 %v1341, 0.0
      %v1470 = vadd.f32 %v1342, 0.0
      %v1471 = vadd.f32 %v1343, 0.0
      %v1472 = vadd.f32 %v1344, 0.0
      %v1473 = vadd.f32 %v1345, 0.0
      %v1474 = vadd.f32 %v1346, 0.0
      %v1475 = vadd.f32 %v1347, 0.0
      %v1476 = vadd.f32 %v1348, 0.0
      %v1477 = vadd.f32 %v1349, 0.0
      %v1478 = vadd.f32 %v1350, 0.0
      %v1479 = vadd.f32 %v1351, 0.0
      %v1480 = vadd.f32 %v1352, 0.0
      %v1481 = vadd.f32 %v1353, 0.0
      %v1482 = vadd.f32 %v1354, 0.0
      %v1483 = vadd.f32 %v1355, 0.0
      %v1484 = vadd.f32 %v1356, 0.0
      %v1485 = vadd.f32 %v1357, 0.0
      %v1486 = vadd.f32 %v1358, 0.0
      %v1487 = vadd.f32 %v1359, 0.0
      %v1488 = vadd.f32 %v1360, 0.0
      %v1489 = vadd.f32 %v1361, 0.0
      %v1490 = vadd.f32 %v1362, 0.0
      %v1491 = vadd.f32 %v1363, 0.0
      %v1492 = vadd.f32 %v1364, 0.0
      %v1493 = vadd.f32 %v1365, 0.0
      %v1494 = vadd.f32 %v1366, 0.0
      %v1495 = vadd.f32 %v1367, 0.0
      %v1496 = vadd.f32 %v1368, 0.0
      %v1497 = vadd.f32 %v1369, 0.0
      %v1498 = vadd.f32 %v1370, 0.0
      %v1499 = vadd.f32 %v1371, 0.0
      %v1500 = vadd.f32 %v1372, 0.0
      %v1501 = vadd.f32 %v1373, 0.0
      %v1502 = vadd.f32 %v1374, 0.0
      %v1503 = vadd.f32 %v1375, 0.0
      %v1504 = vadd.f32 %v1376, 0.0
      %v1505 = vadd.f32 %v1377, 0.0
      %v1506 = vadd.f32 %v1378, 0.0
      %v1507 = vadd.f32 %v1379, 0.0
      %v1508 = vadd.f32 %v1380, 0.0
      %v1509 = vadd.f32 %v1381, 0.0
      %v1510 = vadd.f32 %v1382, 0.0
      %v1511 = vadd.f32 %v1383, 0.0
      %v1512 = vadd.f32 %v1384, 0.0
      %v1513 = vadd.f32 %v1385, 0.0
      %v1514 = vadd.f32 %v1386, 0.0
      %v1515 = vadd.f32 %v1387, 0.0
      %v1516 = vadd.f32 %v1388, 0.0
      %v1517 = vadd.f32 %v1389, 0.0
      %v1518 = vadd.f32 %v1390, 0.0
      %v1519 = vadd.f32 %v1391, 0.0
      %v1520 = vadd.f32 %v1392, 0.0
      %v1521 = vadd.f32 %v1393, 0.0
      %v1522 = vadd.f32 %v1394, 0.0
      %v1523 = vadd.f32 %v1395, 0.0
      %v1524 = vadd.f32 %v1396, 0.0
      %v1525 = vadd.f32 %v1397, 0.0
      %v1526 = vadd.f32 %v1398, 0.0
      %v1527 = vadd.f32 %v1399, 0.0
      %v1528 = vadd.f32 %v1400, 0.0
      %v1529 = vadd.f32 %v1401, 0.0
      %v1530 = vadd.f32 %v1402, 0.0
      %v1531 = vadd.f32 %v1403, 0.0
      %v1532 = vadd.f32 %v1404, 0.0
      %v1533 = vadd.f32 %v1405, 0.0
      %v1534 = vadd.f32 %v1406, 0.0
      %v1535 = vadd.f32 %v1407, 0.0
      %v1536 = vadd.f32 %v1408, 0.0
      %v1537 = vadd.f32 %v1409, 0.0
      %v1538 = vadd.f32 %v1410, 0.0
      %v1539 = vadd.f32 %v1411, 0.0
      %v1540 = vadd.f32 %v1412, 0.0
      %v1541 = vadd.f32 %v1413, 0.0
      %v1542 = vadd.f32 %v1414, 0.0
      %v1543 = vadd.f32 %v1415, 0.0
      %v1544 = vadd.f32 %v1416, 0.0
      %v1545 = vadd.f32 %v1417, 0.0
      %v1546 = vadd.f32 %v1418, 0.0
      %v1547 = vadd.f32 %v1419, 0.0
      %v1548 = vadd.f32 %v1420, 0.0
      %v1549 = vadd.f32 %v1421, 0.0
      %v1550 = vadd.f32 %v1422, 0.0
      %v1551 = vadd.f32 %v1423, 0.0
      %v1552 = vadd.f32 %v1424, 0.0
      %v1553 = vadd.f32 %v1425, 0.0
      %v1554 = vadd.f32 %v1426, 0.0
      %v1555 = vadd.f32 %v1427, 0.0
      %v1556 = vadd.f32 %v1428, 0.0
      %v1557 = vadd.f32 %v1429, 0.0
      %v1558 = vadd.f32 %v1430, 0.0
      %v1559 = vadd.f32 %v1431, 0.0
      %v1560 = vadd.f32 %v1432, 0.0
      %v1561 = vadd.f32 %v1433, 0.0
      %v1562 = vadd.f32 %v1434, 0.0
      %v1563 = vadd.f32 %v1435, 0.0
      %v1564 = vadd.f32 %v1436, 0.0
      %v1565 = vadd.f32 %v1437, 0.0
      %v1566 = vld [vmem:[#allocation2 + $0x1] sm:$0xff]
      %v1567 = vld [vmem:[#allocation2 + $0x9] sm:$0xff]
      %v1568 = vld [vmem:[#allocation2 + $0x11] sm:$0xff]
      %v1569 = vld [vmem:[#allocation2 + $0x19] sm:$0xff]
      %v1570 = vld [vmem:[#allocation2 + $0x21] sm:$0xff]
      %v1571 = vld [vmem:[#allocation2 + $0x29] sm:$0xff]
      %v1572 = vld [vmem:[#allocation2 + $0x31] sm:$0xff]
      %v1573 = vld [vmem:[#allocation2 + $0x39] sm:$0xff]
      %v1574 = vld [vmem:[#allocation2 + $0x41] sm:$0xff]
      %v1575 = vld [vmem:[#allocation2 + $0x49] sm:$0xff]
      %v1576 = vld [vmem:[#allocation2 + $0x51] sm:$0xff]
      %v1577 = vld [vmem:[#allocation2 + $0x59] sm:$0xff]
      %v1578 = vld [vmem:[#allocation2 + $0x61] sm:$0xff]
      %v1579 = vld [vmem:[#allocation2 + $0x69] sm:$0xff]
      %v1580 = vld [vmem:[#allocation2 + $0x71] sm:$0xff]
      %v1581 = vld [vmem:[#allocation2 + $0x79] sm:$0xff]
      %v1582 = vld [vmem:[#allocation2 + $0x81] sm:$0xff]
      %v1583 = vld [vmem:[#allocation2 + $0x89] sm:$0xff]
      %v1584 = vld [vmem:[#allocation2 + $0x91] sm:$0xff]
      %v1585 = vld [vmem:[#allocation2 + $0x99] sm:$0xff]
      %v1586 = vld [vmem:[#allocation2 + $0xa1] sm:$0xff]
      %v1587 = vld [vmem:[#allocation2 + $0xa9] sm:$0xff]
      %v1588 = vld [vmem:[#allocation2 + $0xb1] sm:$0xff]
      %v1589 = vld [vmem:[#allocation2 + $0xb9] sm:$0xff]
      %v1590 = vld [vmem:[#allocation2 + $0xc1] sm:$0xff]
      %v1591 = vld [vmem:[#allocation2 + $0xc9] sm:$0xff]
      %v1592 = vld [vmem:[#allocation2 + $0xd1] sm:$0xff]
      %v1593 = vld [vmem:[#allocation2 + $0xd9] sm:$0xff]
      %v1594 = vld [vmem:[#allocation2 + $0xe1] sm:$0xff]
      %v1595 = vld [vmem:[#allocation2 + $0xe9] sm:$0xff]
      %v1596 = vld [vmem:[#allocation2 + $0xf1] sm:$0xff]
      %v1597 = vld [vmem:[#allocation2 + $0xf9] sm:$0xff]
      %v1598 = vld [vmem:[#allocation2 + $0x101] sm:$0xff]
      %v1599 = vld [vmem:[#allocation2 + $0x109] sm:$0xff]
      %v1600 = vld [vmem:[#allocation2 + $0x111] sm:$0xff]
      %v1601 = vld [vmem:[#allocation2 + $0x119] sm:$0xff]
      %v1602 = vld [vmem:[#allocation2 + $0x121] sm:$0xff]
      %v1603 = vld [vmem:[#allocation2 + $0x129] sm:$0xff]
      %v1604 = vld [vmem:[#allocation2 + $0x131] sm:$0xff]
      %v1605 = vld [vmem:[#allocation2 + $0x139] sm:$0xff]
      %v1606 = vld [vmem:[#allocation2 + $0x141] sm:$0xff]
      %v1607 = vld [vmem:[#allocation2 + $0x149] sm:$0xff]
      %v1608 = vld [vmem:[#allocation2 + $0x151] sm:$0xff]
      %v1609 = vld [vmem:[#allocation2 + $0x159] sm:$0xff]
      %v1610 = vld [vmem:[#allocation2 + $0x161] sm:$0xff]
      %v1611 = vld [vmem:[#allocation2 + $0x169] sm:$0xff]
      %v1612 = vld [vmem:[#allocation2 + $0x171] sm:$0xff]
      %v1613 = vld [vmem:[#allocation2 + $0x179] sm:$0xff]
      %v1614 = vld [vmem:[#allocation2 + $0x181] sm:$0xff]
      %v1615 = vld [vmem:[#allocation2 + $0x189] sm:$0xff]
      %v1616 = vld [vmem:[#allocation2 + $0x191] sm:$0xff]
      %v1617 = vld [vmem:[#allocation2 + $0x199] sm:$0xff]
      %v1618 = vld [vmem:[#allocation2 + $0x1a1] sm:$0xff]
      %v1619 = vld [vmem:[#allocation2 + $0x1a9] sm:$0xff]
      %v1620 = vld [vmem:[#allocation2 + $0x1b1] sm:$0xff]
      %v1621 = vld [vmem:[#allocation2 + $0x1b9] sm:$0xff]
      %v1622 = vld [vmem:[#allocation2 + $0x1c1] sm:$0xff]
      %v1623 = vld [vmem:[#allocation2 + $0x1c9] sm:$0xff]
      %v1624 = vld [vmem:[#allocation2 + $0x1d1] sm:$0xff]
      %v1625 = vld [vmem:[#allocation2 + $0x1d9] sm:$0xff]
      %v1626 = vld [vmem:[#allocation2 + $0x1e1] sm:$0xff]
      %v1627 = vld [vmem:[#allocation2 + $0x1e9] sm:$0xff]
      %v1628 = vld [vmem:[#allocation2 + $0x1f1] sm:$0xff]
      %v1629 = vld [vmem:[#allocation2 + $0x1f9] sm:$0xff]
      %v1630 = vld [vmem:[#allocation2 + $0x201] sm:$0xff]
      %v1631 = vld [vmem:[#allocation2 + $0x209] sm:$0xff]
      %v1632 = vld [vmem:[#allocation2 + $0x211] sm:$0xff]
      %v1633 = vld [vmem:[#allocation2 + $0x219] sm:$0xff]
      %v1634 = vld [vmem:[#allocation2 + $0x221] sm:$0xff]
      %v1635 = vld [vmem:[#allocation2 + $0x229] sm:$0xff]
      %v1636 = vld [vmem:[#allocation2 + $0x231] sm:$0xff]
      %v1637 = vld [vmem:[#allocation2 + $0x239] sm:$0xff]
      %v1638 = vld [vmem:[#allocation2 + $0x241] sm:$0xff]
      %v1639 = vld [vmem:[#allocation2 + $0x249] sm:$0xff]
      %v1640 = vld [vmem:[#allocation2 + $0x251] sm:$0xff]
      %v1641 = vld [vmem:[#allocation2 + $0x259] sm:$0xff]
      %v1642 = vld [vmem:[#allocation2 + $0x261] sm:$0xff]
      %v1643 = vld [vmem:[#allocation2 + $0x269] sm:$0xff]
      %v1644 = vld [vmem:[#allocation2 + $0x271] sm:$0xff]
      %v1645 = vld [vmem:[#allocation2 + $0x279] sm:$0xff]
      %v1646 = vld [vmem:[#allocation2 + $0x281] sm:$0xff]
      %v1647 = vld [vmem:[#allocation2 + $0x289] sm:$0xff]
      %v1648 = vld [vmem:[#allocation2 + $0x291] sm:$0xff]
      %v1649 = vld [vmem:[#allocation2 + $0x299] sm:$0xff]
      %v1650 = vld [vmem:[#allocation2 + $0x2a1] sm:$0xff]
      %v1651 = vld [vmem:[#allocation2 + $0x2a9] sm:$0xff]
      %v1652 = vld [vmem:[#allocation2 + $0x2b1] sm:$0xff]
      %v1653 = vld [vmem:[#allocation2 + $0x2b9] sm:$0xff]
      %v1654 = vld [vmem:[#allocation2 + $0x2c1] sm:$0xff]
      %v1655 = vld [vmem:[#allocation2 + $0x2c9] sm:$0xff]
      %v1656 = vld [vmem:[#allocation2 + $0x2d1] sm:$0xff]
      %v1657 = vld [vmem:[#allocation2 + $0x2d9] sm:$0xff]
      %v1658 = vld [vmem:[#allocation2 + $0x2e1] sm:$0xff]
      %v1659 = vld [vmem:[#allocation2 + $0x2e9] sm:$0xff]
      %v1660 = vld [vmem:[#allocation2 + $0x2f1] sm:$0xff]
      %v1661 = vld [vmem:[#allocation2 + $0x2f9] sm:$0xff]
      %v1662 = vld [vmem:[#allocation2 + $0x301] sm:$0xff]
      %v1663 = vld [vmem:[#allocation2 + $0x309] sm:$0xff]
      %v1664 = vld [vmem:[#allocation2 + $0x311] sm:$0xff]
      %v1665 = vld [vmem:[#allocation2 + $0x319] sm:$0xff]
      %v1666 = vld [vmem:[#allocation2 + $0x321] sm:$0xff]
      %v1667 = vld [vmem:[#allocation2 + $0x329] sm:$0xff]
      %v1668 = vld [vmem:[#allocation2 + $0x331] sm:$0xff]
      %v1669 = vld [vmem:[#allocation2 + $0x339] sm:$0xff]
      %v1670 = vld [vmem:[#allocation2 + $0x341] sm:$0xff]
      %v1671 = vld [vmem:[#allocation2 + $0x349] sm:$0xff]
      %v1672 = vld [vmem:[#allocation2 + $0x351] sm:$0xff]
      %v1673 = vld [vmem:[#allocation2 + $0x359] sm:$0xff]
      %v1674 = vld [vmem:[#allocation2 + $0x361] sm:$0xff]
      %v1675 = vld [vmem:[#allocation2 + $0x369] sm:$0xff]
      %v1676 = vld [vmem:[#allocation2 + $0x371] sm:$0xff]
      %v1677 = vld [vmem:[#allocation2 + $0x379] sm:$0xff]
      %v1678 = vld [vmem:[#allocation2 + $0x381] sm:$0xff]
      %v1679 = vld [vmem:[#allocation2 + $0x389] sm:$0xff]
      %v1680 = vld [vmem:[#allocation2 + $0x391] sm:$0xff]
      %v1681 = vld [vmem:[#allocation2 + $0x399] sm:$0xff]
      %v1682 = vld [vmem:[#allocation2 + $0x3a1] sm:$0xff]
      %v1683 = vld [vmem:[#allocation2 + $0x3a9] sm:$0xff]
      %v1684 = vld [vmem:[#allocation2 + $0x3b1] sm:$0xff]
      %v1685 = vld [vmem:[#allocation2 + $0x3b9] sm:$0xff]
      %v1686 = vld [vmem:[#allocation2 + $0x3c1] sm:$0xff]
      %v1687 = vld [vmem:[#allocation2 + $0x3c9] sm:$0xff]
      %v1688 = vld [vmem:[#allocation2 + $0x3d1] sm:$0xff]
      %v1689 = vld [vmem:[#allocation2 + $0x3d9] sm:$0xff]
      %v1690 = vld [vmem:[#allocation2 + $0x3e1] sm:$0xff]
      %v1691 = vld [vmem:[#allocation2 + $0x3e9] sm:$0xff]
      %v1692 = vld [vmem:[#allocation2 + $0x3f1] sm:$0xff]
      %v1693 = vld [vmem:[#allocation2 + $0x3f9] sm:$0xff]
      %s1694 = scalar_lea.vmem %s1, 1
      %v1695 = vld [vmem:[%s1694] sm:$0x1]
      %1697 = vset.pattern.permute.xlu0 0
      %1698 = vperm.xlu0 %1697, %v1566
      %v1699 = vpop.permute.xlu0 %1698
      %1702 = vset.pattern.permute.xlu0 0
      %1703 = vperm.xlu0 %1702, %v1567
      %v1704 = vpop.permute.xlu0 %1703
      %1707 = vset.pattern.permute.xlu0 0
      %1708 = vperm.xlu0 %1707, %v1568
      %v1709 = vpop.permute.xlu0 %1708
      %1712 = vset.pattern.permute.xlu0 0
      %1713 = vperm.xlu0 %1712, %v1569
      %v1714 = vpop.permute.xlu0 %1713
      %1717 = vset.pattern.permute.xlu0 0
      %1718 = vperm.xlu0 %1717, %v1570
      %v1719 = vpop.permute.xlu0 %1718
      %1722 = vset.pattern.permute.xlu0 0
      %1723 = vperm.xlu0 %1722, %v1571
      %v1724 = vpop.permute.xlu0 %1723
      %1727 = vset.pattern.permute.xlu0 0
      %1728 = vperm.xlu0 %1727, %v1572
      %v1729 = vpop.permute.xlu0 %1728
      %1732 = vset.pattern.permute.xlu0 0
      %1733 = vperm.xlu0 %1732, %v1573
      %v1734 = vpop.permute.xlu0 %1733
      %1737 = vset.pattern.permute.xlu0 0
      %1738 = vperm.xlu0 %1737, %v1574
      %v1739 = vpop.permute.xlu0 %1738
      %1742 = vset.pattern.permute.xlu0 0
      %1743 = vperm.xlu0 %1742, %v1575
      %v1744 = vpop.permute.xlu0 %1743
      %1747 = vset.pattern.permute.xlu0 0
      %1748 = vperm.xlu0 %1747, %v1576
      %v1749 = vpop.permute.xlu0 %1748
      %1752 = vset.pattern.permute.xlu0 0
      %1753 = vperm.xlu0 %1752, %v1577
      %v1754 = vpop.permute.xlu0 %1753
      %1757 = vset.pattern.permute.xlu0 0
      %1758 = vperm.xlu0 %1757, %v1578
      %v1759 = vpop.permute.xlu0 %1758
      %1762 = vset.pattern.permute.xlu0 0
      %1763 = vperm.xlu0 %1762, %v1579
      %v1764 = vpop.permute.xlu0 %1763
      %1767 = vset.pattern.permute.xlu0 0
      %1768 = vperm.xlu0 %1767, %v1580
      %v1769 = vpop.permute.xlu0 %1768
      %1772 = vset.pattern.permute.xlu0 0
      %1773 = vperm.xlu0 %1772, %v1581
      %v1774 = vpop.permute.xlu0 %1773
      %1777 = vset.pattern.permute.xlu0 0
      %1778 = vperm.xlu0 %1777, %v1582
      %v1779 = vpop.permute.xlu0 %1778
      %1782 = vset.pattern.permute.xlu0 0
      %1783 = vperm.xlu0 %1782, %v1583
      %v1784 = vpop.permute.xlu0 %1783
      %1787 = vset.pattern.permute.xlu0 0
      %1788 = vperm.xlu0 %1787, %v1584
      %v1789 = vpop.permute.xlu0 %1788
      %1792 = vset.pattern.permute.xlu0 0
      %1793 = vperm.xlu0 %1792, %v1585
      %v1794 = vpop.permute.xlu0 %1793
      %1797 = vset.pattern.permute.xlu0 0
      %1798 = vperm.xlu0 %1797, %v1586
      %v1799 = vpop.permute.xlu0 %1798
      %1802 = vset.pattern.permute.xlu0 0
      %1803 = vperm.xlu0 %1802, %v1587
      %v1804 = vpop.permute.xlu0 %1803
      %1807 = vset.pattern.permute.xlu0 0
      %1808 = vperm.xlu0 %1807, %v1588
      %v1809 = vpop.permute.xlu0 %1808
      %1812 = vset.pattern.permute.xlu0 0
      %1813 = vperm.xlu0 %1812, %v1589
      %v1814 = vpop.permute.xlu0 %1813
      %1817 = vset.pattern.permute.xlu0 0
      %1818 = vperm.xlu0 %1817, %v1590
      %v1819 = vpop.permute.xlu0 %1818
      %1822 = vset.pattern.permute.xlu0 0
      %1823 = vperm.xlu0 %1822, %v1591
      %v1824 = vpop.permute.xlu0 %1823
      %1827 = vset.pattern.permute.xlu0 0
      %1828 = vperm.xlu0 %1827, %v1592
      %v1829 = vpop.permute.xlu0 %1828
      %1832 = vset.pattern.permute.xlu0 0
      %1833 = vperm.xlu0 %1832, %v1593
      %v1834 = vpop.permute.xlu0 %1833
      %1837 = vset.pattern.permute.xlu0 0
      %1838 = vperm.xlu0 %1837, %v1594
      %v1839 = vpop.permute.xlu0 %1838
      %1842 = vset.pattern.permute.xlu0 0
      %1843 = vperm.xlu0 %1842, %v1595
      %v1844 = vpop.permute.xlu0 %1843
      %1847 = vset.pattern.permute.xlu0 0
      %1848 = vperm.xlu0 %1847, %v1596
      %v1849 = vpop.permute.xlu0 %1848
      %1852 = vset.pattern.permute.xlu0 0
      %1853 = vperm.xlu0 %1852, %v1597
      %v1854 = vpop.permute.xlu0 %1853
      %1857 = vset.pattern.permute.xlu0 0
      %1858 = vperm.xlu0 %1857, %v1598
      %v1859 = vpop.permute.xlu0 %1858
      %1862 = vset.pattern.permute.xlu0 0
      %1863 = vperm.xlu0 %1862, %v1599
      %v1864 = vpop.permute.xlu0 %1863
      %1867 = vset.pattern.permute.xlu0 0
      %1868 = vperm.xlu0 %1867, %v1600
      %v1869 = vpop.permute.xlu0 %1868
      %1872 = vset.pattern.permute.xlu0 0
      %1873 = vperm.xlu0 %1872, %v1601
      %v1874 = vpop.permute.xlu0 %1873
      %1877 = vset.pattern.permute.xlu0 0
      %1878 = vperm.xlu0 %1877, %v1602
      %v1879 = vpop.permute.xlu0 %1878
      %1882 = vset.pattern.permute.xlu0 0
      %1883 = vperm.xlu0 %1882, %v1603
      %v1884 = vpop.permute.xlu0 %1883
      %1887 = vset.pattern.permute.xlu0 0
      %1888 = vperm.xlu0 %1887, %v1604
      %v1889 = vpop.permute.xlu0 %1888
      %1892 = vset.pattern.permute.xlu0 0
      %1893 = vperm.xlu0 %1892, %v1605
      %v1894 = vpop.permute.xlu0 %1893
      %1897 = vset.pattern.permute.xlu0 0
      %1898 = vperm.xlu0 %1897, %v1606
      %v1899 = vpop.permute.xlu0 %1898
      %1902 = vset.pattern.permute.xlu0 0
      %1903 = vperm.xlu0 %1902, %v1607
      %v1904 = vpop.permute.xlu0 %1903
      %1907 = vset.pattern.permute.xlu0 0
      %1908 = vperm.xlu0 %1907, %v1608
      %v1909 = vpop.permute.xlu0 %1908
      %1912 = vset.pattern.permute.xlu0 0
      %1913 = vperm.xlu0 %1912, %v1609
      %v1914 = vpop.permute.xlu0 %1913
      %1917 = vset.pattern.permute.xlu0 0
      %1918 = vperm.xlu0 %1917, %v1610
      %v1919 = vpop.permute.xlu0 %1918
      %1922 = vset.pattern.permute.xlu0 0
      %1923 = vperm.xlu0 %1922, %v1611
      %v1924 = vpop.permute.xlu0 %1923
      %1927 = vset.pattern.permute.xlu0 0
      %1928 = vperm.xlu0 %1927, %v1612
      %v1929 = vpop.permute.xlu0 %1928
      %1932 = vset.pattern.permute.xlu0 0
      %1933 = vperm.xlu0 %1932, %v1613
      %v1934 = vpop.permute.xlu0 %1933
      %1937 = vset.pattern.permute.xlu0 0
      %1938 = vperm.xlu0 %1937, %v1614
      %v1939 = vpop.permute.xlu0 %1938
      %1942 = vset.pattern.permute.xlu0 0
      %1943 = vperm.xlu0 %1942, %v1615
      %v1944 = vpop.permute.xlu0 %1943
      %1947 = vset.pattern.permute.xlu0 0
      %1948 = vperm.xlu0 %1947, %v1616
      %v1949 = vpop.permute.xlu0 %1948
      %1952 = vset.pattern.permute.xlu0 0
      %1953 = vperm.xlu0 %1952, %v1617
      %v1954 = vpop.permute.xlu0 %1953
      %1957 = vset.pattern.permute.xlu0 0
      %1958 = vperm.xlu0 %1957, %v1618
      %v1959 = vpop.permute.xlu0 %1958
      %1962 = vset.pattern.permute.xlu0 0
      %1963 = vperm.xlu0 %1962, %v1619
      %v1964 = vpop.permute.xlu0 %1963
      %1967 = vset.pattern.permute.xlu0 0
      %1968 = vperm.xlu0 %1967, %v1620
      %v1969 = vpop.permute.xlu0 %1968
      %1972 = vset.pattern.permute.xlu0 0
      %1973 = vperm.xlu0 %1972, %v1621
      %v1974 = vpop.permute.xlu0 %1973
      %1977 = vset.pattern.permute.xlu0 0
      %1978 = vperm.xlu0 %1977, %v1622
      %v1979 = vpop.permute.xlu0 %1978
      %1982 = vset.pattern.permute.xlu0 0
      %1983 = vperm.xlu0 %1982, %v1623
      %v1984 = vpop.permute.xlu0 %1983
      %1987 = vset.pattern.permute.xlu0 0
      %1988 = vperm.xlu0 %1987, %v1624
      %v1989 = vpop.permute.xlu0 %1988
      %1992 = vset.pattern.permute.xlu0 0
      %1993 = vperm.xlu0 %1992, %v1625
      %v1994 = vpop.permute.xlu0 %1993
      %1997 = vset.pattern.permute.xlu0 0
      %1998 = vperm.xlu0 %1997, %v1626
      %v1999 = vpop.permute.xlu0 %1998
      %2002 = vset.pattern.permute.xlu0 0
      %2003 = vperm.xlu0 %2002, %v1627
      %v2004 = vpop.permute.xlu0 %2003
      %2007 = vset.pattern.permute.xlu0 0
      %2008 = vperm.xlu0 %2007, %v1628
      %v2009 = vpop.permute.xlu0 %2008
      %2012 = vset.pattern.permute.xlu0 0
      %2013 = vperm.xlu0 %2012, %v1629
      %v2014 = vpop.permute.xlu0 %2013
      %2017 = vset.pattern.permute.xlu0 0
      %2018 = vperm.xlu0 %2017, %v1630
      %v2019 = vpop.permute.xlu0 %2018
      %2022 = vset.pattern.permute.xlu0 0
      %2023 = vperm.xlu0 %2022, %v1631
      %v2024 = vpop.permute.xlu0 %2023
      %2027 = vset.pattern.permute.xlu0 0
      %2028 = vperm.xlu0 %2027, %v1632
      %v2029 = vpop.permute.xlu0 %2028
      %2032 = vset.pattern.permute.xlu0 0
      %2033 = vperm.xlu0 %2032, %v1633
      %v2034 = vpop.permute.xlu0 %2033
      %2037 = vset.pattern.permute.xlu0 0
      %2038 = vperm.xlu0 %2037, %v1634
      %v2039 = vpop.permute.xlu0 %2038
      %2042 = vset.pattern.permute.xlu0 0
      %2043 = vperm.xlu0 %2042, %v1635
      %v2044 = vpop.permute.xlu0 %2043
      %2047 = vset.pattern.permute.xlu0 0
      %2048 = vperm.xlu0 %2047, %v1636
      %v2049 = vpop.permute.xlu0 %2048
      %2052 = vset.pattern.permute.xlu0 0
      %2053 = vperm.xlu0 %2052, %v1637
      %v2054 = vpop.permute.xlu0 %2053
      %2057 = vset.pattern.permute.xlu0 0
      %2058 = vperm.xlu0 %2057, %v1638
      %v2059 = vpop.permute.xlu0 %2058
      %2062 = vset.pattern.permute.xlu0 0
      %2063 = vperm.xlu0 %2062, %v1639
      %v2064 = vpop.permute.xlu0 %2063
      %2067 = vset.pattern.permute.xlu0 0
      %2068 = vperm.xlu0 %2067, %v1640
      %v2069 = vpop.permute.xlu0 %2068
      %2072 = vset.pattern.permute.xlu0 0
      %2073 = vperm.xlu0 %2072, %v1641
      %v2074 = vpop.permute.xlu0 %2073
      %2077 = vset.pattern.permute.xlu0 0
      %2078 = vperm.xlu0 %2077, %v1642
      %v2079 = vpop.permute.xlu0 %2078
      %2082 = vset.pattern.permute.xlu0 0
      %2083 = vperm.xlu0 %2082, %v1643
      %v2084 = vpop.permute.xlu0 %2083
      %2087 = vset.pattern.permute.xlu0 0
      %2088 = vperm.xlu0 %2087, %v1644
      %v2089 = vpop.permute.xlu0 %2088
      %2092 = vset.pattern.permute.xlu0 0
      %2093 = vperm.xlu0 %2092, %v1645
      %v2094 = vpop.permute.xlu0 %2093
      %2097 = vset.pattern.permute.xlu0 0
      %2098 = vperm.xlu0 %2097, %v1646
      %v2099 = vpop.permute.xlu0 %2098
      %2102 = vset.pattern.permute.xlu0 0
      %2103 = vperm.xlu0 %2102, %v1647
      %v2104 = vpop.permute.xlu0 %2103
      %2107 = vset.pattern.permute.xlu0 0
      %2108 = vperm.xlu0 %2107, %v1648
      %v2109 = vpop.permute.xlu0 %2108
      %2112 = vset.pattern.permute.xlu0 0
      %2113 = vperm.xlu0 %2112, %v1649
      %v2114 = vpop.permute.xlu0 %2113
      %2117 = vset.pattern.permute.xlu0 0
      %2118 = vperm.xlu0 %2117, %v1650
      %v2119 = vpop.permute.xlu0 %2118
      %2122 = vset.pattern.permute.xlu0 0
      %2123 = vperm.xlu0 %2122, %v1651
      %v2124 = vpop.permute.xlu0 %2123
      %2127 = vset.pattern.permute.xlu0 0
      %2128 = vperm.xlu0 %2127, %v1652
      %v2129 = vpop.permute.xlu0 %2128
      %2132 = vset.pattern.permute.xlu0 0
      %2133 = vperm.xlu0 %2132, %v1653
      %v2134 = vpop.permute.xlu0 %2133
      %2137 = vset.pattern.permute.xlu0 0
      %2138 = vperm.xlu0 %2137, %v1654
      %v2139 = vpop.permute.xlu0 %2138
      %2142 = vset.pattern.permute.xlu0 0
      %2143 = vperm.xlu0 %2142, %v1655
      %v2144 = vpop.permute.xlu0 %2143
      %2147 = vset.pattern.permute.xlu0 0
      %2148 = vperm.xlu0 %2147, %v1656
      %v2149 = vpop.permute.xlu0 %2148
      %2152 = vset.pattern.permute.xlu0 0
      %2153 = vperm.xlu0 %2152, %v1657
      %v2154 = vpop.permute.xlu0 %2153
      %2157 = vset.pattern.permute.xlu0 0
      %2158 = vperm.xlu0 %2157, %v1658
      %v2159 = vpop.permute.xlu0 %2158
      %2162 = vset.pattern.permute.xlu0 0
      %2163 = vperm.xlu0 %2162, %v1659
      %v2164 = vpop.permute.xlu0 %2163
      %2167 = vset.pattern.permute.xlu0 0
      %2168 = vperm.xlu0 %2167, %v1660
      %v2169 = vpop.permute.xlu0 %2168
      %2172 = vset.pattern.permute.xlu0 0
      %2173 = vperm.xlu0 %2172, %v1661
      %v2174 = vpop.permute.xlu0 %2173
      %2177 = vset.pattern.permute.xlu0 0
      %2178 = vperm.xlu0 %2177, %v1662
      %v2179 = vpop.permute.xlu0 %2178
      %2182 = vset.pattern.permute.xlu0 0
      %2183 = vperm.xlu0 %2182, %v1663
      %v2184 = vpop.permute.xlu0 %2183
      %2187 = vset.pattern.permute.xlu0 0
      %2188 = vperm.xlu0 %2187, %v1664
      %v2189 = vpop.permute.xlu0 %2188
      %2192 = vset.pattern.permute.xlu0 0
      %2193 = vperm.xlu0 %2192, %v1665
      %v2194 = vpop.permute.xlu0 %2193
      %2197 = vset.pattern.permute.xlu0 0
      %2198 = vperm.xlu0 %2197, %v1666
      %v2199 = vpop.permute.xlu0 %2198
      %2202 = vset.pattern.permute.xlu0 0
      %2203 = vperm.xlu0 %2202, %v1667
      %v2204 = vpop.permute.xlu0 %2203
      %2207 = vset.pattern.permute.xlu0 0
      %2208 = vperm.xlu0 %2207, %v1668
      %v2209 = vpop.permute.xlu0 %2208
      %2212 = vset.pattern.permute.xlu0 0
      %2213 = vperm.xlu0 %2212, %v1669
      %v2214 = vpop.permute.xlu0 %2213
      %2217 = vset.pattern.permute.xlu0 0
      %2218 = vperm.xlu0 %2217, %v1670
      %v2219 = vpop.permute.xlu0 %2218
      %2222 = vset.pattern.permute.xlu0 0
      %2223 = vperm.xlu0 %2222, %v1671
      %v2224 = vpop.permute.xlu0 %2223
      %2227 = vset.pattern.permute.xlu0 0
      %2228 = vperm.xlu0 %2227, %v1672
      %v2229 = vpop.permute.xlu0 %2228
      %2232 = vset.pattern.permute.xlu0 0
      %2233 = vperm.xlu0 %2232, %v1673
      %v2234 = vpop.permute.xlu0 %2233
      %2237 = vset.pattern.permute.xlu0 0
      %2238 = vperm.xlu0 %2237, %v1674
      %v2239 = vpop.permute.xlu0 %2238
      %2242 = vset.pattern.permute.xlu0 0
      %2243 = vperm.xlu0 %2242, %v1675
      %v2244 = vpop.permute.xlu0 %2243
      %2247 = vset.pattern.permute.xlu0 0
      %2248 = vperm.xlu0 %2247, %v1676
      %v2249 = vpop.permute.xlu0 %2248
      %2252 = vset.pattern.permute.xlu0 0
      %2253 = vperm.xlu0 %2252, %v1677
      %v2254 = vpop.permute.xlu0 %2253
      %2257 = vset.pattern.permute.xlu0 0
      %2258 = vperm.xlu0 %2257, %v1678
      %v2259 = vpop.permute.xlu0 %2258
      %2262 = vset.pattern.permute.xlu0 0
      %2263 = vperm.xlu0 %2262, %v1679
      %v2264 = vpop.permute.xlu0 %2263
      %2267 = vset.pattern.permute.xlu0 0
      %2268 = vperm.xlu0 %2267, %v1680
      %v2269 = vpop.permute.xlu0 %2268
      %2272 = vset.pattern.permute.xlu0 0
      %2273 = vperm.xlu0 %2272, %v1681
      %v2274 = vpop.permute.xlu0 %2273
      %2277 = vset.pattern.permute.xlu0 0
      %2278 = vperm.xlu0 %2277, %v1682
      %v2279 = vpop.permute.xlu0 %2278
      %2282 = vset.pattern.permute.xlu0 0
      %2283 = vperm.xlu0 %2282, %v1683
      %v2284 = vpop.permute.xlu0 %2283
      %2287 = vset.pattern.permute.xlu0 0
      %2288 = vperm.xlu0 %2287, %v1684
      %v2289 = vpop.permute.xlu0 %2288
      %2292 = vset.pattern.permute.xlu0 0
      %2293 = vperm.xlu0 %2292, %v1685
      %v2294 = vpop.permute.xlu0 %2293
      %2297 = vset.pattern.permute.xlu0 0
      %2298 = vperm.xlu0 %2297, %v1686
      %v2299 = vpop.permute.xlu0 %2298
      %2302 = vset.pattern.permute.xlu0 0
      %2303 = vperm.xlu0 %2302, %v1687
      %v2304 = vpop.permute.xlu0 %2303
      %2307 = vset.pattern.permute.xlu0 0
      %2308 = vperm.xlu0 %2307, %v1688
      %v2309 = vpop.permute.xlu0 %2308
      %2312 = vset.pattern.permute.xlu0 0
      %2313 = vperm.xlu0 %2312, %v1689
      %v2314 = vpop.permute.xlu0 %2313
      %2317 = vset.pattern.permute.xlu0 0
      %2318 = vperm.xlu0 %2317, %v1690
      %v2319 = vpop.permute.xlu0 %2318
      %2322 = vset.pattern.permute.xlu0 0
      %2323 = vperm.xlu0 %2322, %v1691
      %v2324 = vpop.permute.xlu0 %2323
      %2327 = vset.pattern.permute.xlu0 0
      %2328 = vperm.xlu0 %2327, %v1692
      %v2329 = vpop.permute.xlu0 %2328
      %2332 = vset.pattern.permute.xlu0 0
      %2333 = vperm.xlu0 %2332, %v1693
      %v2334 = vpop.permute.xlu0 %2333
      %v2337 = vperm.slane %v1695, 0
      %v2339 = vmul.f32 %v1699, %v2337
      %v2340 = vmul.f32 %v1704, %v2337
      %v2341 = vmul.f32 %v1709, %v2337
      %v2342 = vmul.f32 %v1714, %v2337
      %v2343 = vmul.f32 %v1719, %v2337
      %v2344 = vmul.f32 %v1724, %v2337
      %v2345 = vmul.f32 %v1729, %v2337
      %v2346 = vmul.f32 %v1734, %v2337
      %v2347 = vmul.f32 %v1739, %v2337
      %v2348 = vmul.f32 %v1744, %v2337
      %v2349 = vmul.f32 %v1749, %v2337
      %v2350 = vmul.f32 %v1754, %v2337
      %v2351 = vmul.f32 %v1759, %v2337
      %v2352 = vmul.f32 %v1764, %v2337
      %v2353 = vmul.f32 %v1769, %v2337
      %v2354 = vmul.f32 %v1774, %v2337
      %v2355 = vmul.f32 %v1779, %v2337
      %v2356 = vmul.f32 %v1784, %v2337
      %v2357 = vmul.f32 %v1789, %v2337
      %v2358 = vmul.f32 %v1794, %v2337
      %v2359 = vmul.f32 %v1799, %v2337
      %v2360 = vmul.f32 %v1804, %v2337
      %v2361 = vmul.f32 %v1809, %v2337
      %v2362 = vmul.f32 %v1814, %v2337
      %v2363 = vmul.f32 %v1819, %v2337
      %v2364 = vmul.f32 %v1824, %v2337
      %v2365 = vmul.f32 %v1829, %v2337
      %v2366 = vmul.f32 %v1834, %v2337
      %v2367 = vmul.f32 %v1839, %v2337
      %v2368 = vmul.f32 %v1844, %v2337
      %v2369 = vmul.f32 %v1849, %v2337
      %v2370 = vmul.f32 %v1854, %v2337
      %v2371 = vmul.f32 %v1859, %v2337
      %v2372 = vmul.f32 %v1864, %v2337
      %v2373 = vmul.f32 %v1869, %v2337
      %v2374 = vmul.f32 %v1874, %v2337
      %v2375 = vmul.f32 %v1879, %v2337
      %v2376 = vmul.f32 %v1884, %v2337
      %v2377 = vmul.f32 %v1889, %v2337
      %v2378 = vmul.f32 %v1894, %v2337
      %v2379 = vmul.f32 %v1899, %v2337
      %v2380 = vmul.f32 %v1904, %v2337
      %v2381 = vmul.f32 %v1909, %v2337
      %v2382 = vmul.f32 %v1914, %v2337
      %v2383 = vmul.f32 %v1919, %v2337
      %v2384 = vmul.f32 %v1924, %v2337
      %v2385 = vmul.f32 %v1929, %v2337
      %v2386 = vmul.f32 %v1934, %v2337
      %v2387 = vmul.f32 %v1939, %v2337
      %v2388 = vmul.f32 %v1944, %v2337
      %v2389 = vmul.f32 %v1949, %v2337
      %v2390 = vmul.f32 %v1954, %v2337
      %v2391 = vmul.f32 %v1959, %v2337
      %v2392 = vmul.f32 %v1964, %v2337
      %v2393 = vmul.f32 %v1969, %v2337
      %v2394 = vmul.f32 %v1974, %v2337
      %v2395 = vmul.f32 %v1979, %v2337
      %v2396 = vmul.f32 %v1984, %v2337
      %v2397 = vmul.f32 %v1989, %v2337
      %v2398 = vmul.f32 %v1994, %v2337
      %v2399 = vmul.f32 %v1999, %v2337
      %v2400 = vmul.f32 %v2004, %v2337
      %v2401 = vmul.f32 %v2009, %v2337
      %v2402 = vmul.f32 %v2014, %v2337
      %v2403 = vmul.f32 %v2019, %v2337
      %v2404 = vmul.f32 %v2024, %v2337
      %v2405 = vmul.f32 %v2029, %v2337
      %v2406 = vmul.f32 %v2034, %v2337
      %v2407 = vmul.f32 %v2039, %v2337
      %v2408 = vmul.f32 %v2044, %v2337
      %v2409 = vmul.f32 %v2049, %v2337
      %v2410 = vmul.f32 %v2054, %v2337
      %v2411 = vmul.f32 %v2059, %v2337
      %v2412 = vmul.f32 %v2064, %v2337
      %v2413 = vmul.f32 %v2069, %v2337
      %v2414 = vmul.f32 %v2074, %v2337
      %v2415 = vmul.f32 %v2079, %v2337
      %v2416 = vmul.f32 %v2084, %v2337
      %v2417 = vmul.f32 %v2089, %v2337
      %v2418 = vmul.f32 %v2094, %v2337
      %v2419 = vmul.f32 %v2099, %v2337
      %v2420 = vmul.f32 %v2104, %v2337
      %v2421 = vmul.f32 %v2109, %v2337
      %v2422 = vmul.f32 %v2114, %v2337
      %v2423 = vmul.f32 %v2119, %v2337
      %v2424 = vmul.f32 %v2124, %v2337
      %v2425 = vmul.f32 %v2129, %v2337
      %v2426 = vmul.f32 %v2134, %v2337
      %v2427 = vmul.f32 %v2139, %v2337
      %v2428 = vmul.f32 %v2144, %v2337
      %v2429 = vmul.f32 %v2149, %v2337
      %v2430 = vmul.f32 %v2154, %v2337
      %v2431 = vmul.f32 %v2159, %v2337
      %v2432 = vmul.f32 %v2164, %v2337
      %v2433 = vmul.f32 %v2169, %v2337
      %v2434 = vmul.f32 %v2174, %v2337
      %v2435 = vmul.f32 %v2179, %v2337
      %v2436 = vmul.f32 %v2184, %v2337
      %v2437 = vmul.f32 %v2189, %v2337
      %v2438 = vmul.f32 %v2194, %v2337
      %v2439 = vmul.f32 %v2199, %v2337
      %v2440 = vmul.f32 %v2204, %v2337
      %v2441 = vmul.f32 %v2209, %v2337
      %v2442 = vmul.f32 %v2214, %v2337
      %v2443 = vmul.f32 %v2219, %v2337
      %v2444 = vmul.f32 %v2224, %v2337
      %v2445 = vmul.f32 %v2229, %v2337
      %v2446 = vmul.f32 %v2234, %v2337
      %v2447 = vmul.f32 %v2239, %v2337
      %v2448 = vmul.f32 %v2244, %v2337
      %v2449 = vmul.f32 %v2249, %v2337
      %v2450 = vmul.f32 %v2254, %v2337
      %v2451 = vmul.f32 %v2259, %v2337
      %v2452 = vmul.f32 %v2264, %v2337
      %v2453 = vmul.f32 %v2269, %v2337
      %v2454 = vmul.f32 %v2274, %v2337
      %v2455 = vmul.f32 %v2279, %v2337
      %v2456 = vmul.f32 %v2284, %v2337
      %v2457 = vmul.f32 %v2289, %v2337
      %v2458 = vmul.f32 %v2294, %v2337
      %v2459 = vmul.f32 %v2299, %v2337
      %v2460 = vmul.f32 %v2304, %v2337
      %v2461 = vmul.f32 %v2309, %v2337
      %v2462 = vmul.f32 %v2314, %v2337
      %v2463 = vmul.f32 %v2319, %v2337
      %v2464 = vmul.f32 %v2324, %v2337
      %v2465 = vmul.f32 %v2329, %v2337
      %v2466 = vmul.f32 %v2334, %v2337
      %v2467 = vadd.f32 %v1438, %v2339
      %v2468 = vadd.f32 %v1439, %v2340
      %v2469 = vadd.f32 %v1440, %v2341
      %v2470 = vadd.f32 %v1441, %v2342
      %v2471 = vadd.f32 %v1442, %v2343
      %v2472 = vadd.f32 %v1443, %v2344
      %v2473 = vadd.f32 %v1444, %v2345
      %v2474 = vadd.f32 %v1445, %v2346
      %v2475 = vadd.f32 %v1446, %v2347
      %v2476 = vadd.f32 %v1447, %v2348
      %v2477 = vadd.f32 %v1448, %v2349
      %v2478 = vadd.f32 %v1449, %v2350
      %v2479 = vadd.f32 %v1450, %v2351
      %v2480 = vadd.f32 %v1451, %v2352
      %v2481 = vadd.f32 %v1452, %v2353
      %v2482 = vadd.f32 %v1453, %v2354
      %v2483 = vadd.f32 %v1454, %v2355
      %v2484 = vadd.f32 %v1455, %v2356
      %v2485 = vadd.f32 %v1456, %v2357
      %v2486 = vadd.f32 %v1457, %v2358
      %v2487 = vadd.f32 %v1458, %v2359
      %v2488 = vadd.f32 %v1459, %v2360
      %v2489 = vadd.f32 %v1460, %v2361
      %v2490 = vadd.f32 %v1461, %v2362
      %v2491 = vadd.f32 %v1462, %v2363
      %v2492 = vadd.f32 %v1463, %v2364
      %v2493 = vadd.f32 %v1464, %v2365
      %v2494 = vadd.f32 %v1465, %v2366
      %v2495 = vadd.f32 %v1466, %v2367
      %v2496 = vadd.f32 %v1467, %v2368
      %v2497 = vadd.f32 %v1468, %v2369
      %v2498 = vadd.f32 %v1469, %v2370
      %v2499 = vadd.f32 %v1470, %v2371
      %v2500 = vadd.f32 %v1471, %v2372
      %v2501 = vadd.f32 %v1472, %v2373
      %v2502 = vadd.f32 %v1473, %v2374
      %v2503 = vadd.f32 %v1474, %v2375
      %v2504 = vadd.f32 %v1475, %v2376
      %v2505 = vadd.f32 %v1476, %v2377
      %v2506 = vadd.f32 %v1477, %v2378
      %v2507 = vadd.f32 %v1478, %v2379
      %v2508 = vadd.f32 %v1479, %v2380
      %v2509 = vadd.f32 %v1480, %v2381
      %v2510 = vadd.f32 %v1481, %v2382
      %v2511 = vadd.f32 %v1482, %v2383
      %v2512 = vadd.f32 %v1483, %v2384
      %v2513 = vadd.f32 %v1484, %v2385
      %v2514 = vadd.f32 %v1485, %v2386
      %v2515 = vadd.f32 %v1486, %v2387
      %v2516 = vadd.f32 %v1487, %v2388
      %v2517 = vadd.f32 %v1488, %v2389
      %v2518 = vadd.f32 %v1489, %v2390
      %v2519 = vadd.f32 %v1490, %v2391
      %v2520 = vadd.f32 %v1491, %v2392
      %v2521 = vadd.f32 %v1492, %v2393
      %v2522 = vadd.f32 %v1493, %v2394
      %v2523 = vadd.f32 %v1494, %v2395
      %v2524 = vadd.f32 %v1495, %v2396
      %v2525 = vadd.f32 %v1496, %v2397
      %v2526 = vadd.f32 %v1497, %v2398
      %v2527 = vadd.f32 %v1498, %v2399
      %v2528 = vadd.f32 %v1499, %v2400
      %v2529 = vadd.f32 %v1500, %v2401
      %v2530 = vadd.f32 %v1501, %v2402
      %v2531 = vadd.f32 %v1502, %v2403
      %v2532 = vadd.f32 %v1503, %v2404
      %v2533 = vadd.f32 %v1504, %v2405
      %v2534 = vadd.f32 %v1505, %v2406
      %v2535 = vadd.f32 %v1506, %v2407
      %v2536 = vadd.f32 %v1507, %v2408
      %v2537 = vadd.f32 %v1508, %v2409
      %v2538 = vadd.f32 %v1509, %v2410
      %v2539 = vadd.f32 %v1510, %v2411
      %v2540 = vadd.f32 %v1511, %v2412
      %v2541 = vadd.f32 %v1512, %v2413
      %v2542 = vadd.f32 %v1513, %v2414
      %v2543 = vadd.f32 %v1514, %v2415
      %v2544 = vadd.f32 %v1515, %v2416
      %v2545 = vadd.f32 %v1516, %v2417
      %v2546 = vadd.f32 %v1517, %v2418
      %v2547 = vadd.f32 %v1518, %v2419
      %v2548 = vadd.f32 %v1519, %v2420
      %v2549 = vadd.f32 %v1520, %v2421
      %v2550 = vadd.f32 %v1521, %v2422
      %v2551 = vadd.f32 %v1522, %v2423
      %v2552 = vadd.f32 %v1523, %v2424
      %v2553 = vadd.f32 %v1524, %v2425
      %v2554 = vadd.f32 %v1525, %v2426
      %v2555 = vadd.f32 %v1526, %v2427
      %v2556 = vadd.f32 %v1527, %v2428
      %v2557 = vadd.f32 %v1528, %v2429
      %v2558 = vadd.f32 %v1529, %v2430
      %v2559 = vadd.f32 %v1530, %v2431
      %v2560 = vadd.f32 %v1531, %v2432
      %v2561 = vadd.f32 %v1532, %v2433
      %v2562 = vadd.f32 %v1533, %v2434
      %v2563 = vadd.f32 %v1534, %v2435
      %v2564 = vadd.f32 %v1535, %v2436
      %v2565 = vadd.f32 %v1536, %v2437
      %v2566 = vadd.f32 %v1537, %v2438
      %v2567 = vadd.f32 %v1538, %v2439
      %v2568 = vadd.f32 %v1539, %v2440
      %v2569 = vadd.f32 %v1540, %v2441
      %v2570 = vadd.f32 %v1541, %v2442
      %v2571 = vadd.f32 %v1542, %v2443
      %v2572 = vadd.f32 %v1543, %v2444
      %v2573 = vadd.f32 %v1544, %v2445
      %v2574 = vadd.f32 %v1545, %v2446
      %v2575 = vadd.f32 %v1546, %v2447
      %v2576 = vadd.f32 %v1547, %v2448
      %v2577 = vadd.f32 %v1548, %v2449
      %v2578 = vadd.f32 %v1549, %v2450
      %v2579 = vadd.f32 %v1550, %v2451
      %v2580 = vadd.f32 %v1551, %v2452
      %v2581 = vadd.f32 %v1552, %v2453
      %v2582 = vadd.f32 %v1553, %v2454
      %v2583 = vadd.f32 %v1554, %v2455
      %v2584 = vadd.f32 %v1555, %v2456
      %v2585 = vadd.f32 %v1556, %v2457
      %v2586 = vadd.f32 %v1557, %v2458
      %v2587 = vadd.f32 %v1558, %v2459
      %v2588 = vadd.f32 %v1559, %v2460
      %v2589 = vadd.f32 %v1560, %v2461
      %v2590 = vadd.f32 %v1561, %v2462
      %v2591 = vadd.f32 %v1562, %v2463
      %v2592 = vadd.f32 %v1563, %v2464
      %v2593 = vadd.f32 %v1564, %v2465
      %v2594 = vadd.f32 %v1565, %v2466
      %v2595 = vld [vmem:[#allocation2 + $0x2] sm:$0xff]
      %v2596 = vld [vmem:[#allocation2 + $0xa] sm:$0xff]
      %v2597 = vld [vmem:[#allocation2 + $0x12] sm:$0xff]
      %v2598 = vld [vmem:[#allocation2 + $0x1a] sm:$0xff]
      %v2599 = vld [vmem:[#allocation2 + $0x22] sm:$0xff]
      %v2600 = vld [vmem:[#allocation2 + $0x2a] sm:$0xff]
      %v2601 = vld [vmem:[#allocation2 + $0x32] sm:$0xff]
      %v2602 = vld [vmem:[#allocation2 + $0x3a] sm:$0xff]
      %v2603 = vld [vmem:[#allocation2 + $0x42] sm:$0xff]
      %v2604 = vld [vmem:[#allocation2 + $0x4a] sm:$0xff]
      %v2605 = vld [vmem:[#allocation2 + $0x52] sm:$0xff]
      %v2606 = vld [vmem:[#allocation2 + $0x5a] sm:$0xff]
      %v2607 = vld [vmem:[#allocation2 + $0x62] sm:$0xff]
      %v2608 = vld [vmem:[#allocation2 + $0x6a] sm:$0xff]
      %v2609 = vld [vmem:[#allocation2 + $0x72] sm:$0xff]
      %v2610 = vld [vmem:[#allocation2 + $0x7a] sm:$0xff]
      %v2611 = vld [vmem:[#allocation2 + $0x82] sm:$0xff]
      %v2612 = vld [vmem:[#allocation2 + $0x8a] sm:$0xff]
      %v2613 = vld [vmem:[#allocation2 + $0x92] sm:$0xff]
      %v2614 = vld [vmem:[#allocation2 + $0x9a] sm:$0xff]
      %v2615 = vld [vmem:[#allocation2 + $0xa2] sm:$0xff]
      %v2616 = vld [vmem:[#allocation2 + $0xaa] sm:$0xff]
      %v2617 = vld [vmem:[#allocation2 + $0xb2] sm:$0xff]
      %v2618 = vld [vmem:[#allocation2 + $0xba] sm:$0xff]
      %v2619 = vld [vmem:[#allocation2 + $0xc2] sm:$0xff]
      %v2620 = vld [vmem:[#allocation2 + $0xca] sm:$0xff]
      %v2621 = vld [vmem:[#allocation2 + $0xd2] sm:$0xff]
      %v2622 = vld [vmem:[#allocation2 + $0xda] sm:$0xff]
      %v2623 = vld [vmem:[#allocation2 + $0xe2] sm:$0xff]
      %v2624 = vld [vmem:[#allocation2 + $0xea] sm:$0xff]
      %v2625 = vld [vmem:[#allocation2 + $0xf2] sm:$0xff]
      %v2626 = vld [vmem:[#allocation2 + $0xfa] sm:$0xff]
      %v2627 = vld [vmem:[#allocation2 + $0x102] sm:$0xff]
      %v2628 = vld [vmem:[#allocation2 + $0x10a] sm:$0xff]
      %v2629 = vld [vmem:[#allocation2 + $0x112] sm:$0xff]
      %v2630 = vld [vmem:[#allocation2 + $0x11a] sm:$0xff]
      %v2631 = vld [vmem:[#allocation2 + $0x122] sm:$0xff]
      %v2632 = vld [vmem:[#allocation2 + $0x12a] sm:$0xff]
      %v2633 = vld [vmem:[#allocation2 + $0x132] sm:$0xff]
      %v2634 = vld [vmem:[#allocation2 + $0x13a] sm:$0xff]
      %v2635 = vld [vmem:[#allocation2 + $0x142] sm:$0xff]
      %v2636 = vld [vmem:[#allocation2 + $0x14a] sm:$0xff]
      %v2637 = vld [vmem:[#allocation2 + $0x152] sm:$0xff]
      %v2638 = vld [vmem:[#allocation2 + $0x15a] sm:$0xff]
      %v2639 = vld [vmem:[#allocation2 + $0x162] sm:$0xff]
      %v2640 = vld [vmem:[#allocation2 + $0x16a] sm:$0xff]
      %v2641 = vld [vmem:[#allocation2 + $0x172] sm:$0xff]
      %v2642 = vld [vmem:[#allocation2 + $0x17a] sm:$0xff]
      %v2643 = vld [vmem:[#allocation2 + $0x182] sm:$0xff]
      %v2644 = vld [vmem:[#allocation2 + $0x18a] sm:$0xff]
      %v2645 = vld [vmem:[#allocation2 + $0x192] sm:$0xff]
      %v2646 = vld [vmem:[#allocation2 + $0x19a] sm:$0xff]
      %v2647 = vld [vmem:[#allocation2 + $0x1a2] sm:$0xff]
      %v2648 = vld [vmem:[#allocation2 + $0x1aa] sm:$0xff]
      %v2649 = vld [vmem:[#allocation2 + $0x1b2] sm:$0xff]
      %v2650 = vld [vmem:[#allocation2 + $0x1ba] sm:$0xff]
      %v2651 = vld [vmem:[#allocation2 + $0x1c2] sm:$0xff]
      %v2652 = vld [vmem:[#allocation2 + $0x1ca] sm:$0xff]
      %v2653 = vld [vmem:[#allocation2 + $0x1d2] sm:$0xff]
      %v2654 = vld [vmem:[#allocation2 + $0x1da] sm:$0xff]
      %v2655 = vld [vmem:[#allocation2 + $0x1e2] sm:$0xff]
      %v2656 = vld [vmem:[#allocation2 + $0x1ea] sm:$0xff]
      %v2657 = vld [vmem:[#allocation2 + $0x1f2] sm:$0xff]
      %v2658 = vld [vmem:[#allocation2 + $0x1fa] sm:$0xff]
      %v2659 = vld [vmem:[#allocation2 + $0x202] sm:$0xff]
      %v2660 = vld [vmem:[#allocation2 + $0x20a] sm:$0xff]
      %v2661 = vld [vmem:[#allocation2 + $0x212] sm:$0xff]
      %v2662 = vld [vmem:[#allocation2 + $0x21a] sm:$0xff]
      %v2663 = vld [vmem:[#allocation2 + $0x222] sm:$0xff]
      %v2664 = vld [vmem:[#allocation2 + $0x22a] sm:$0xff]
      %v2665 = vld [vmem:[#allocation2 + $0x232] sm:$0xff]
      %v2666 = vld [vmem:[#allocation2 + $0x23a] sm:$0xff]
      %v2667 = vld [vmem:[#allocation2 + $0x242] sm:$0xff]
      %v2668 = vld [vmem:[#allocation2 + $0x24a] sm:$0xff]
      %v2669 = vld [vmem:[#allocation2 + $0x252] sm:$0xff]
      %v2670 = vld [vmem:[#allocation2 + $0x25a] sm:$0xff]
      %v2671 = vld [vmem:[#allocation2 + $0x262] sm:$0xff]
      %v2672 = vld [vmem:[#allocation2 + $0x26a] sm:$0xff]
      %v2673 = vld [vmem:[#allocation2 + $0x272] sm:$0xff]
      %v2674 = vld [vmem:[#allocation2 + $0x27a] sm:$0xff]
      %v2675 = vld [vmem:[#allocation2 + $0x282] sm:$0xff]
      %v2676 = vld [vmem:[#allocation2 + $0x28a] sm:$0xff]
      %v2677 = vld [vmem:[#allocation2 + $0x292] sm:$0xff]
      %v2678 = vld [vmem:[#allocation2 + $0x29a] sm:$0xff]
      %v2679 = vld [vmem:[#allocation2 + $0x2a2] sm:$0xff]
      %v2680 = vld [vmem:[#allocation2 + $0x2aa] sm:$0xff]
      %v2681 = vld [vmem:[#allocation2 + $0x2b2] sm:$0xff]
      %v2682 = vld [vmem:[#allocation2 + $0x2ba] sm:$0xff]
      %v2683 = vld [vmem:[#allocation2 + $0x2c2] sm:$0xff]
      %v2684 = vld [vmem:[#allocation2 + $0x2ca] sm:$0xff]
      %v2685 = vld [vmem:[#allocation2 + $0x2d2] sm:$0xff]
      %v2686 = vld [vmem:[#allocation2 + $0x2da] sm:$0xff]
      %v2687 = vld [vmem:[#allocation2 + $0x2e2] sm:$0xff]
      %v2688 = vld [vmem:[#allocation2 + $0x2ea] sm:$0xff]
      %v2689 = vld [vmem:[#allocation2 + $0x2f2] sm:$0xff]
      %v2690 = vld [vmem:[#allocation2 + $0x2fa] sm:$0xff]
      %v2691 = vld [vmem:[#allocation2 + $0x302] sm:$0xff]
      %v2692 = vld [vmem:[#allocation2 + $0x30a] sm:$0xff]
      %v2693 = vld [vmem:[#allocation2 + $0x312] sm:$0xff]
      %v2694 = vld [vmem:[#allocation2 + $0x31a] sm:$0xff]
      %v2695 = vld [vmem:[#allocation2 + $0x322] sm:$0xff]
      %v2696 = vld [vmem:[#allocation2 + $0x32a] sm:$0xff]
      %v2697 = vld [vmem:[#allocation2 + $0x332] sm:$0xff]
      %v2698 = vld [vmem:[#allocation2 + $0x33a] sm:$0xff]
      %v2699 = vld [vmem:[#allocation2 + $0x342] sm:$0xff]
      %v2700 = vld [vmem:[#allocation2 + $0x34a] sm:$0xff]
      %v2701 = vld [vmem:[#allocation2 + $0x352] sm:$0xff]
      %v2702 = vld [vmem:[#allocation2 + $0x35a] sm:$0xff]
      %v2703 = vld [vmem:[#allocation2 + $0x362] sm:$0xff]
      %v2704 = vld [vmem:[#allocation2 + $0x36a] sm:$0xff]
      %v2705 = vld [vmem:[#allocation2 + $0x372] sm:$0xff]
      %v2706 = vld [vmem:[#allocation2 + $0x37a] sm:$0xff]
      %v2707 = vld [vmem:[#allocation2 + $0x382] sm:$0xff]
      %v2708 = vld [vmem:[#allocation2 + $0x38a] sm:$0xff]
      %v2709 = vld [vmem:[#allocation2 + $0x392] sm:$0xff]
      %v2710 = vld [vmem:[#allocation2 + $0x39a] sm:$0xff]
      %v2711 = vld [vmem:[#allocation2 + $0x3a2] sm:$0xff]
      %v2712 = vld [vmem:[#allocation2 + $0x3aa] sm:$0xff]
      %v2713 = vld [vmem:[#allocation2 + $0x3b2] sm:$0xff]
      %v2714 = vld [vmem:[#allocation2 + $0x3ba] sm:$0xff]
      %v2715 = vld [vmem:[#allocation2 + $0x3c2] sm:$0xff]
      %v2716 = vld [vmem:[#allocation2 + $0x3ca] sm:$0xff]
      %v2717 = vld [vmem:[#allocation2 + $0x3d2] sm:$0xff]
      %v2718 = vld [vmem:[#allocation2 + $0x3da] sm:$0xff]
      %v2719 = vld [vmem:[#allocation2 + $0x3e2] sm:$0xff]
      %v2720 = vld [vmem:[#allocation2 + $0x3ea] sm:$0xff]
      %v2721 = vld [vmem:[#allocation2 + $0x3f2] sm:$0xff]
      %v2722 = vld [vmem:[#allocation2 + $0x3fa] sm:$0xff]
      %s2723 = scalar_lea.vmem %s1, 2
      %v2724 = vld [vmem:[%s2723] sm:$0x1]
      %2726 = vset.pattern.permute.xlu0 0
      %2727 = vperm.xlu0 %2726, %v2595
      %v2728 = vpop.permute.xlu0 %2727
      %2731 = vset.pattern.permute.xlu0 0
      %2732 = vperm.xlu0 %2731, %v2596
      %v2733 = vpop.permute.xlu0 %2732
      %2736 = vset.pattern.permute.xlu0 0
      %2737 = vperm.xlu0 %2736, %v2597
      %v2738 = vpop.permute.xlu0 %2737
      %2741 = vset.pattern.permute.xlu0 0
      %2742 = vperm.xlu0 %2741, %v2598
      %v2743 = vpop.permute.xlu0 %2742
      %2746 = vset.pattern.permute.xlu0 0
      %2747 = vperm.xlu0 %2746, %v2599
      %v2748 = vpop.permute.xlu0 %2747
      %2751 = vset.pattern.permute.xlu0 0
      %2752 = vperm.xlu0 %2751, %v2600
      %v2753 = vpop.permute.xlu0 %2752
      %2756 = vset.pattern.permute.xlu0 0
      %2757 = vperm.xlu0 %2756, %v2601
      %v2758 = vpop.permute.xlu0 %2757
      %2761 = vset.pattern.permute.xlu0 0
      %2762 = vperm.xlu0 %2761, %v2602
      %v2763 = vpop.permute.xlu0 %2762
      %2766 = vset.pattern.permute.xlu0 0
      %2767 = vperm.xlu0 %2766, %v2603
      %v2768 = vpop.permute.xlu0 %2767
      %2771 = vset.pattern.permute.xlu0 0
      %2772 = vperm.xlu0 %2771, %v2604
      %v2773 = vpop.permute.xlu0 %2772
      %2776 = vset.pattern.permute.xlu0 0
      %2777 = vperm.xlu0 %2776, %v2605
      %v2778 = vpop.permute.xlu0 %2777
      %2781 = vset.pattern.permute.xlu0 0
      %2782 = vperm.xlu0 %2781, %v2606
      %v2783 = vpop.permute.xlu0 %2782
      %2786 = vset.pattern.permute.xlu0 0
      %2787 = vperm.xlu0 %2786, %v2607
      %v2788 = vpop.permute.xlu0 %2787
      %2791 = vset.pattern.permute.xlu0 0
      %2792 = vperm.xlu0 %2791, %v2608
      %v2793 = vpop.permute.xlu0 %2792
      %2796 = vset.pattern.permute.xlu0 0
      %2797 = vperm.xlu0 %2796, %v2609
      %v2798 = vpop.permute.xlu0 %2797
      %2801 = vset.pattern.permute.xlu0 0
      %2802 = vperm.xlu0 %2801, %v2610
      %v2803 = vpop.permute.xlu0 %2802
      %2806 = vset.pattern.permute.xlu0 0
      %2807 = vperm.xlu0 %2806, %v2611
      %v2808 = vpop.permute.xlu0 %2807
      %2811 = vset.pattern.permute.xlu0 0
      %2812 = vperm.xlu0 %2811, %v2612
      %v2813 = vpop.permute.xlu0 %2812
      %2816 = vset.pattern.permute.xlu0 0
      %2817 = vperm.xlu0 %2816, %v2613
      %v2818 = vpop.permute.xlu0 %2817
      %2821 = vset.pattern.permute.xlu0 0
      %2822 = vperm.xlu0 %2821, %v2614
      %v2823 = vpop.permute.xlu0 %2822
      %2826 = vset.pattern.permute.xlu0 0
      %2827 = vperm.xlu0 %2826, %v2615
      %v2828 = vpop.permute.xlu0 %2827
      %2831 = vset.pattern.permute.xlu0 0
      %2832 = vperm.xlu0 %2831, %v2616
      %v2833 = vpop.permute.xlu0 %2832
      %2836 = vset.pattern.permute.xlu0 0
      %2837 = vperm.xlu0 %2836, %v2617
      %v2838 = vpop.permute.xlu0 %2837
      %2841 = vset.pattern.permute.xlu0 0
      %2842 = vperm.xlu0 %2841, %v2618
      %v2843 = vpop.permute.xlu0 %2842
      %2846 = vset.pattern.permute.xlu0 0
      %2847 = vperm.xlu0 %2846, %v2619
      %v2848 = vpop.permute.xlu0 %2847
      %2851 = vset.pattern.permute.xlu0 0
      %2852 = vperm.xlu0 %2851, %v2620
      %v2853 = vpop.permute.xlu0 %2852
      %2856 = vset.pattern.permute.xlu0 0
      %2857 = vperm.xlu0 %2856, %v2621
      %v2858 = vpop.permute.xlu0 %2857
      %2861 = vset.pattern.permute.xlu0 0
      %2862 = vperm.xlu0 %2861, %v2622
      %v2863 = vpop.permute.xlu0 %2862
      %2866 = vset.pattern.permute.xlu0 0
      %2867 = vperm.xlu0 %2866, %v2623
      %v2868 = vpop.permute.xlu0 %2867
      %2871 = vset.pattern.permute.xlu0 0
      %2872 = vperm.xlu0 %2871, %v2624
      %v2873 = vpop.permute.xlu0 %2872
      %2876 = vset.pattern.permute.xlu0 0
      %2877 = vperm.xlu0 %2876, %v2625
      %v2878 = vpop.permute.xlu0 %2877
      %2881 = vset.pattern.permute.xlu0 0
      %2882 = vperm.xlu0 %2881, %v2626
      %v2883 = vpop.permute.xlu0 %2882
      %2886 = vset.pattern.permute.xlu0 0
      %2887 = vperm.xlu0 %2886, %v2627
      %v2888 = vpop.permute.xlu0 %2887
      %2891 = vset.pattern.permute.xlu0 0
      %2892 = vperm.xlu0 %2891, %v2628
      %v2893 = vpop.permute.xlu0 %2892
      %2896 = vset.pattern.permute.xlu0 0
      %2897 = vperm.xlu0 %2896, %v2629
      %v2898 = vpop.permute.xlu0 %2897
      %2901 = vset.pattern.permute.xlu0 0
      %2902 = vperm.xlu0 %2901, %v2630
      %v2903 = vpop.permute.xlu0 %2902
      %2906 = vset.pattern.permute.xlu0 0
      %2907 = vperm.xlu0 %2906, %v2631
      %v2908 = vpop.permute.xlu0 %2907
      %2911 = vset.pattern.permute.xlu0 0
      %2912 = vperm.xlu0 %2911, %v2632
      %v2913 = vpop.permute.xlu0 %2912
      %2916 = vset.pattern.permute.xlu0 0
      %2917 = vperm.xlu0 %2916, %v2633
      %v2918 = vpop.permute.xlu0 %2917
      %2921 = vset.pattern.permute.xlu0 0
      %2922 = vperm.xlu0 %2921, %v2634
      %v2923 = vpop.permute.xlu0 %2922
      %2926 = vset.pattern.permute.xlu0 0
      %2927 = vperm.xlu0 %2926, %v2635
      %v2928 = vpop.permute.xlu0 %2927
      %2931 = vset.pattern.permute.xlu0 0
      %2932 = vperm.xlu0 %2931, %v2636
      %v2933 = vpop.permute.xlu0 %2932
      %2936 = vset.pattern.permute.xlu0 0
      %2937 = vperm.xlu0 %2936, %v2637
      %v2938 = vpop.permute.xlu0 %2937
      %2941 = vset.pattern.permute.xlu0 0
      %2942 = vperm.xlu0 %2941, %v2638
      %v2943 = vpop.permute.xlu0 %2942
      %2946 = vset.pattern.permute.xlu0 0
      %2947 = vperm.xlu0 %2946, %v2639
      %v2948 = vpop.permute.xlu0 %2947
      %2951 = vset.pattern.permute.xlu0 0
      %2952 = vperm.xlu0 %2951, %v2640
      %v2953 = vpop.permute.xlu0 %2952
      %2956 = vset.pattern.permute.xlu0 0
      %2957 = vperm.xlu0 %2956, %v2641
      %v2958 = vpop.permute.xlu0 %2957
      %2961 = vset.pattern.permute.xlu0 0
      %2962 = vperm.xlu0 %2961, %v2642
      %v2963 = vpop.permute.xlu0 %2962
      %2966 = vset.pattern.permute.xlu0 0
      %2967 = vperm.xlu0 %2966, %v2643
      %v2968 = vpop.permute.xlu0 %2967
      %2971 = vset.pattern.permute.xlu0 0
      %2972 = vperm.xlu0 %2971, %v2644
      %v2973 = vpop.permute.xlu0 %2972
      %2976 = vset.pattern.permute.xlu0 0
      %2977 = vperm.xlu0 %2976, %v2645
      %v2978 = vpop.permute.xlu0 %2977
      %2981 = vset.pattern.permute.xlu0 0
      %2982 = vperm.xlu0 %2981, %v2646
      %v2983 = vpop.permute.xlu0 %2982
      %2986 = vset.pattern.permute.xlu0 0
      %2987 = vperm.xlu0 %2986, %v2647
      %v2988 = vpop.permute.xlu0 %2987
      %2991 = vset.pattern.permute.xlu0 0
      %2992 = vperm.xlu0 %2991, %v2648
      %v2993 = vpop.permute.xlu0 %2992
      %2996 = vset.pattern.permute.xlu0 0
      %2997 = vperm.xlu0 %2996, %v2649
      %v2998 = vpop.permute.xlu0 %2997
      %3001 = vset.pattern.permute.xlu0 0
      %3002 = vperm.xlu0 %3001, %v2650
      %v3003 = vpop.permute.xlu0 %3002
      %3006 = vset.pattern.permute.xlu0 0
      %3007 = vperm.xlu0 %3006, %v2651
      %v3008 = vpop.permute.xlu0 %3007
      %3011 = vset.pattern.permute.xlu0 0
      %3012 = vperm.xlu0 %3011, %v2652
      %v3013 = vpop.permute.xlu0 %3012
      %3016 = vset.pattern.permute.xlu0 0
      %3017 = vperm.xlu0 %3016, %v2653
      %v3018 = vpop.permute.xlu0 %3017
      %3021 = vset.pattern.permute.xlu0 0
      %3022 = vperm.xlu0 %3021, %v2654
      %v3023 = vpop.permute.xlu0 %3022
      %3026 = vset.pattern.permute.xlu0 0
      %3027 = vperm.xlu0 %3026, %v2655
      %v3028 = vpop.permute.xlu0 %3027
      %3031 = vset.pattern.permute.xlu0 0
      %3032 = vperm.xlu0 %3031, %v2656
      %v3033 = vpop.permute.xlu0 %3032
      %3036 = vset.pattern.permute.xlu0 0
      %3037 = vperm.xlu0 %3036, %v2657
      %v3038 = vpop.permute.xlu0 %3037
      %3041 = vset.pattern.permute.xlu0 0
      %3042 = vperm.xlu0 %3041, %v2658
      %v3043 = vpop.permute.xlu0 %3042
      %3046 = vset.pattern.permute.xlu0 0
      %3047 = vperm.xlu0 %3046, %v2659
      %v3048 = vpop.permute.xlu0 %3047
      %3051 = vset.pattern.permute.xlu0 0
      %3052 = vperm.xlu0 %3051, %v2660
      %v3053 = vpop.permute.xlu0 %3052
      %3056 = vset.pattern.permute.xlu0 0
      %3057 = vperm.xlu0 %3056, %v2661
      %v3058 = vpop.permute.xlu0 %3057
      %3061 = vset.pattern.permute.xlu0 0
      %3062 = vperm.xlu0 %3061, %v2662
      %v3063 = vpop.permute.xlu0 %3062
      %3066 = vset.pattern.permute.xlu0 0
      %3067 = vperm.xlu0 %3066, %v2663
      %v3068 = vpop.permute.xlu0 %3067
      %3071 = vset.pattern.permute.xlu0 0
      %3072 = vperm.xlu0 %3071, %v2664
      %v3073 = vpop.permute.xlu0 %3072
      %3076 = vset.pattern.permute.xlu0 0
      %3077 = vperm.xlu0 %3076, %v2665
      %v3078 = vpop.permute.xlu0 %3077
      %3081 = vset.pattern.permute.xlu0 0
      %3082 = vperm.xlu0 %3081, %v2666
      %v3083 = vpop.permute.xlu0 %3082
      %3086 = vset.pattern.permute.xlu0 0
      %3087 = vperm.xlu0 %3086, %v2667
      %v3088 = vpop.permute.xlu0 %3087
      %3091 = vset.pattern.permute.xlu0 0
      %3092 = vperm.xlu0 %3091, %v2668
      %v3093 = vpop.permute.xlu0 %3092
      %3096 = vset.pattern.permute.xlu0 0
      %3097 = vperm.xlu0 %3096, %v2669
      %v3098 = vpop.permute.xlu0 %3097
      %3101 = vset.pattern.permute.xlu0 0
      %3102 = vperm.xlu0 %3101, %v2670
      %v3103 = vpop.permute.xlu0 %3102
      %3106 = vset.pattern.permute.xlu0 0
      %3107 = vperm.xlu0 %3106, %v2671
      %v3108 = vpop.permute.xlu0 %3107
      %3111 = vset.pattern.permute.xlu0 0
      %3112 = vperm.xlu0 %3111, %v2672
      %v3113 = vpop.permute.xlu0 %3112
      %3116 = vset.pattern.permute.xlu0 0
      %3117 = vperm.xlu0 %3116, %v2673
      %v3118 = vpop.permute.xlu0 %3117
      %3121 = vset.pattern.permute.xlu0 0
      %3122 = vperm.xlu0 %3121, %v2674
      %v3123 = vpop.permute.xlu0 %3122
      %3126 = vset.pattern.permute.xlu0 0
      %3127 = vperm.xlu0 %3126, %v2675
      %v3128 = vpop.permute.xlu0 %3127
      %3131 = vset.pattern.permute.xlu0 0
      %3132 = vperm.xlu0 %3131, %v2676
      %v3133 = vpop.permute.xlu0 %3132
      %3136 = vset.pattern.permute.xlu0 0
      %3137 = vperm.xlu0 %3136, %v2677
      %v3138 = vpop.permute.xlu0 %3137
      %3141 = vset.pattern.permute.xlu0 0
      %3142 = vperm.xlu0 %3141, %v2678
      %v3143 = vpop.permute.xlu0 %3142
      %3146 = vset.pattern.permute.xlu0 0
      %3147 = vperm.xlu0 %3146, %v2679
      %v3148 = vpop.permute.xlu0 %3147
      %3151 = vset.pattern.permute.xlu0 0
      %3152 = vperm.xlu0 %3151, %v2680
      %v3153 = vpop.permute.xlu0 %3152
      %3156 = vset.pattern.permute.xlu0 0
      %3157 = vperm.xlu0 %3156, %v2681
      %v3158 = vpop.permute.xlu0 %3157
      %3161 = vset.pattern.permute.xlu0 0
      %3162 = vperm.xlu0 %3161, %v2682
      %v3163 = vpop.permute.xlu0 %3162
      %3166 = vset.pattern.permute.xlu0 0
      %3167 = vperm.xlu0 %3166, %v2683
      %v3168 = vpop.permute.xlu0 %3167
      %3171 = vset.pattern.permute.xlu0 0
      %3172 = vperm.xlu0 %3171, %v2684
      %v3173 = vpop.permute.xlu0 %3172
      %3176 = vset.pattern.permute.xlu0 0
      %3177 = vperm.xlu0 %3176, %v2685
      %v3178 = vpop.permute.xlu0 %3177
      %3181 = vset.pattern.permute.xlu0 0
      %3182 = vperm.xlu0 %3181, %v2686
      %v3183 = vpop.permute.xlu0 %3182
      %3186 = vset.pattern.permute.xlu0 0
      %3187 = vperm.xlu0 %3186, %v2687
      %v3188 = vpop.permute.xlu0 %3187
      %3191 = vset.pattern.permute.xlu0 0
      %3192 = vperm.xlu0 %3191, %v2688
      %v3193 = vpop.permute.xlu0 %3192
      %3196 = vset.pattern.permute.xlu0 0
      %3197 = vperm.xlu0 %3196, %v2689
      %v3198 = vpop.permute.xlu0 %3197
      %3201 = vset.pattern.permute.xlu0 0
      %3202 = vperm.xlu0 %3201, %v2690
      %v3203 = vpop.permute.xlu0 %3202
      %3206 = vset.pattern.permute.xlu0 0
      %3207 = vperm.xlu0 %3206, %v2691
      %v3208 = vpop.permute.xlu0 %3207
      %3211 = vset.pattern.permute.xlu0 0
      %3212 = vperm.xlu0 %3211, %v2692
      %v3213 = vpop.permute.xlu0 %3212
      %3216 = vset.pattern.permute.xlu0 0
      %3217 = vperm.xlu0 %3216, %v2693
      %v3218 = vpop.permute.xlu0 %3217
      %3221 = vset.pattern.permute.xlu0 0
      %3222 = vperm.xlu0 %3221, %v2694
      %v3223 = vpop.permute.xlu0 %3222
      %3226 = vset.pattern.permute.xlu0 0
      %3227 = vperm.xlu0 %3226, %v2695
      %v3228 = vpop.permute.xlu0 %3227
      %3231 = vset.pattern.permute.xlu0 0
      %3232 = vperm.xlu0 %3231, %v2696
      %v3233 = vpop.permute.xlu0 %3232
      %3236 = vset.pattern.permute.xlu0 0
      %3237 = vperm.xlu0 %3236, %v2697
      %v3238 = vpop.permute.xlu0 %3237
      %3241 = vset.pattern.permute.xlu0 0
      %3242 = vperm.xlu0 %3241, %v2698
      %v3243 = vpop.permute.xlu0 %3242
      %3246 = vset.pattern.permute.xlu0 0
      %3247 = vperm.xlu0 %3246, %v2699
      %v3248 = vpop.permute.xlu0 %3247
      %3251 = vset.pattern.permute.xlu0 0
      %3252 = vperm.xlu0 %3251, %v2700
      %v3253 = vpop.permute.xlu0 %3252
      %3256 = vset.pattern.permute.xlu0 0
      %3257 = vperm.xlu0 %3256, %v2701
      %v3258 = vpop.permute.xlu0 %3257
      %3261 = vset.pattern.permute.xlu0 0
      %3262 = vperm.xlu0 %3261, %v2702
      %v3263 = vpop.permute.xlu0 %3262
      %3266 = vset.pattern.permute.xlu0 0
      %3267 = vperm.xlu0 %3266, %v2703
      %v3268 = vpop.permute.xlu0 %3267
      %3271 = vset.pattern.permute.xlu0 0
      %3272 = vperm.xlu0 %3271, %v2704
      %v3273 = vpop.permute.xlu0 %3272
      %3276 = vset.pattern.permute.xlu0 0
      %3277 = vperm.xlu0 %3276, %v2705
      %v3278 = vpop.permute.xlu0 %3277
      %3281 = vset.pattern.permute.xlu0 0
      %3282 = vperm.xlu0 %3281, %v2706
      %v3283 = vpop.permute.xlu0 %3282
      %3286 = vset.pattern.permute.xlu0 0
      %3287 = vperm.xlu0 %3286, %v2707
      %v3288 = vpop.permute.xlu0 %3287
      %3291 = vset.pattern.permute.xlu0 0
      %3292 = vperm.xlu0 %3291, %v2708
      %v3293 = vpop.permute.xlu0 %3292
      %3296 = vset.pattern.permute.xlu0 0
      %3297 = vperm.xlu0 %3296, %v2709
      %v3298 = vpop.permute.xlu0 %3297
      %3301 = vset.pattern.permute.xlu0 0
      %3302 = vperm.xlu0 %3301, %v2710
      %v3303 = vpop.permute.xlu0 %3302
      %3306 = vset.pattern.permute.xlu0 0
      %3307 = vperm.xlu0 %3306, %v2711
      %v3308 = vpop.permute.xlu0 %3307
      %3311 = vset.pattern.permute.xlu0 0
      %3312 = vperm.xlu0 %3311, %v2712
      %v3313 = vpop.permute.xlu0 %3312
      %3316 = vset.pattern.permute.xlu0 0
      %3317 = vperm.xlu0 %3316, %v2713
      %v3318 = vpop.permute.xlu0 %3317
      %3321 = vset.pattern.permute.xlu0 0
      %3322 = vperm.xlu0 %3321, %v2714
      %v3323 = vpop.permute.xlu0 %3322
      %3326 = vset.pattern.permute.xlu0 0
      %3327 = vperm.xlu0 %3326, %v2715
      %v3328 = vpop.permute.xlu0 %3327
      %3331 = vset.pattern.permute.xlu0 0
      %3332 = vperm.xlu0 %3331, %v2716
      %v3333 = vpop.permute.xlu0 %3332
      %3336 = vset.pattern.permute.xlu0 0
      %3337 = vperm.xlu0 %3336, %v2717
      %v3338 = vpop.permute.xlu0 %3337
      %3341 = vset.pattern.permute.xlu0 0
      %3342 = vperm.xlu0 %3341, %v2718
      %v3343 = vpop.permute.xlu0 %3342
      %3346 = vset.pattern.permute.xlu0 0
      %3347 = vperm.xlu0 %3346, %v2719
      %v3348 = vpop.permute.xlu0 %3347
      %3351 = vset.pattern.permute.xlu0 0
      %3352 = vperm.xlu0 %3351, %v2720
      %v3353 = vpop.permute.xlu0 %3352
      %3356 = vset.pattern.permute.xlu0 0
      %3357 = vperm.xlu0 %3356, %v2721
      %v3358 = vpop.permute.xlu0 %3357
      %3361 = vset.pattern.permute.xlu0 0
      %3362 = vperm.xlu0 %3361, %v2722
      %v3363 = vpop.permute.xlu0 %3362
      %v3366 = vperm.slane %v2724, 0
      %v3368 = vmul.f32 %v2728, %v3366
      %v3369 = vmul.f32 %v2733, %v3366
      %v3370 = vmul.f32 %v2738, %v3366
      %v3371 = vmul.f32 %v2743, %v3366
      %v3372 = vmul.f32 %v2748, %v3366
      %v3373 = vmul.f32 %v2753, %v3366
      %v3374 = vmul.f32 %v2758, %v3366
      %v3375 = vmul.f32 %v2763, %v3366
      %v3376 = vmul.f32 %v2768, %v3366
      %v3377 = vmul.f32 %v2773, %v3366
      %v3378 = vmul.f32 %v2778, %v3366
      %v3379 = vmul.f32 %v2783, %v3366
      %v3380 = vmul.f32 %v2788, %v3366
      %v3381 = vmul.f32 %v2793, %v3366
      %v3382 = vmul.f32 %v2798, %v3366
      %v3383 = vmul.f32 %v2803, %v3366
      %v3384 = vmul.f32 %v2808, %v3366
      %v3385 = vmul.f32 %v2813, %v3366
      %v3386 = vmul.f32 %v2818, %v3366
      %v3387 = vmul.f32 %v2823, %v3366
      %v3388 = vmul.f32 %v2828, %v3366
      %v3389 = vmul.f32 %v2833, %v3366
      %v3390 = vmul.f32 %v2838, %v3366
      %v3391 = vmul.f32 %v2843, %v3366
      %v3392 = vmul.f32 %v2848, %v3366
      %v3393 = vmul.f32 %v2853, %v3366
      %v3394 = vmul.f32 %v2858, %v3366
      %v3395 = vmul.f32 %v2863, %v3366
      %v3396 = vmul.f32 %v2868, %v3366
      %v3397 = vmul.f32 %v2873, %v3366
      %v3398 = vmul.f32 %v2878, %v3366
      %v3399 = vmul.f32 %v2883, %v3366
      %v3400 = vmul.f32 %v2888, %v3366
      %v3401 = vmul.f32 %v2893, %v3366
      %v3402 = vmul.f32 %v2898, %v3366
      %v3403 = vmul.f32 %v2903, %v3366
      %v3404 = vmul.f32 %v2908, %v3366
      %v3405 = vmul.f32 %v2913, %v3366
      %v3406 = vmul.f32 %v2918, %v3366
      %v3407 = vmul.f32 %v2923, %v3366
      %v3408 = vmul.f32 %v2928, %v3366
      %v3409 = vmul.f32 %v2933, %v3366
      %v3410 = vmul.f32 %v2938, %v3366
      %v3411 = vmul.f32 %v2943, %v3366
      %v3412 = vmul.f32 %v2948, %v3366
      %v3413 = vmul.f32 %v2953, %v3366
      %v3414 = vmul.f32 %v2958, %v3366
      %v3415 = vmul.f32 %v2963, %v3366
      %v3416 = vmul.f32 %v2968, %v3366
      %v3417 = vmul.f32 %v2973, %v3366
      %v3418 = vmul.f32 %v2978, %v3366
      %v3419 = vmul.f32 %v2983, %v3366
      %v3420 = vmul.f32 %v2988, %v3366
      %v3421 = vmul.f32 %v2993, %v3366
      %v3422 = vmul.f32 %v2998, %v3366
      %v3423 = vmul.f32 %v3003, %v3366
      %v3424 = vmul.f32 %v3008, %v3366
      %v3425 = vmul.f32 %v3013, %v3366
      %v3426 = vmul.f32 %v3018, %v3366
      %v3427 = vmul.f32 %v3023, %v3366
      %v3428 = vmul.f32 %v3028, %v3366
      %v3429 = vmul.f32 %v3033, %v3366
      %v3430 = vmul.f32 %v3038, %v3366
      %v3431 = vmul.f32 %v3043, %v3366
      %v3432 = vmul.f32 %v3048, %v3366
      %v3433 = vmul.f32 %v3053, %v3366
      %v3434 = vmul.f32 %v3058, %v3366
      %v3435 = vmul.f32 %v3063, %v3366
      %v3436 = vmul.f32 %v3068, %v3366
      %v3437 = vmul.f32 %v3073, %v3366
      %v3438 = vmul.f32 %v3078, %v3366
      %v3439 = vmul.f32 %v3083, %v3366
      %v3440 = vmul.f32 %v3088, %v3366
      %v3441 = vmul.f32 %v3093, %v3366
      %v3442 = vmul.f32 %v3098, %v3366
      %v3443 = vmul.f32 %v3103, %v3366
      %v3444 = vmul.f32 %v3108, %v3366
      %v3445 = vmul.f32 %v3113, %v3366
      %v3446 = vmul.f32 %v3118, %v3366
      %v3447 = vmul.f32 %v3123, %v3366
      %v3448 = vmul.f32 %v3128, %v3366
      %v3449 = vmul.f32 %v3133, %v3366
      %v3450 = vmul.f32 %v3138, %v3366
      %v3451 = vmul.f32 %v3143, %v3366
      %v3452 = vmul.f32 %v3148, %v3366
      %v3453 = vmul.f32 %v3153, %v3366
      %v3454 = vmul.f32 %v3158, %v3366
      %v3455 = vmul.f32 %v3163, %v3366
      %v3456 = vmul.f32 %v3168, %v3366
      %v3457 = vmul.f32 %v3173, %v3366
      %v3458 = vmul.f32 %v3178, %v3366
      %v3459 = vmul.f32 %v3183, %v3366
      %v3460 = vmul.f32 %v3188, %v3366
      %v3461 = vmul.f32 %v3193, %v3366
      %v3462 = vmul.f32 %v3198, %v3366
      %v3463 = vmul.f32 %v3203, %v3366
      %v3464 = vmul.f32 %v3208, %v3366
      %v3465 = vmul.f32 %v3213, %v3366
      %v3466 = vmul.f32 %v3218, %v3366
      %v3467 = vmul.f32 %v3223, %v3366
      %v3468 = vmul.f32 %v3228, %v3366
      %v3469 = vmul.f32 %v3233, %v3366
      %v3470 = vmul.f32 %v3238, %v3366
      %v3471 = vmul.f32 %v3243, %v3366
      %v3472 = vmul.f32 %v3248, %v3366
      %v3473 = vmul.f32 %v3253, %v3366
      %v3474 = vmul.f32 %v3258, %v3366
      %v3475 = vmul.f32 %v3263, %v3366
      %v3476 = vmul.f32 %v3268, %v3366
      %v3477 = vmul.f32 %v3273, %v3366
      %v3478 = vmul.f32 %v3278, %v3366
      %v3479 = vmul.f32 %v3283, %v3366
      %v3480 = vmul.f32 %v3288, %v3366
      %v3481 = vmul.f32 %v3293, %v3366
      %v3482 = vmul.f32 %v3298, %v3366
      %v3483 = vmul.f32 %v3303, %v3366
      %v3484 = vmul.f32 %v3308, %v3366
      %v3485 = vmul.f32 %v3313, %v3366
      %v3486 = vmul.f32 %v3318, %v3366
      %v3487 = vmul.f32 %v3323, %v3366
      %v3488 = vmul.f32 %v3328, %v3366
      %v3489 = vmul.f32 %v3333, %v3366
      %v3490 = vmul.f32 %v3338, %v3366
      %v3491 = vmul.f32 %v3343, %v3366
      %v3492 = vmul.f32 %v3348, %v3366
      %v3493 = vmul.f32 %v3353, %v3366
      %v3494 = vmul.f32 %v3358, %v3366
      %v3495 = vmul.f32 %v3363, %v3366
      %v3496 = vadd.f32 %v2467, %v3368
      %v3497 = vadd.f32 %v2468, %v3369
      %v3498 = vadd.f32 %v2469, %v3370
      %v3499 = vadd.f32 %v2470, %v3371
      %v3500 = vadd.f32 %v2471, %v3372
      %v3501 = vadd.f32 %v2472, %v3373
      %v3502 = vadd.f32 %v2473, %v3374
      %v3503 = vadd.f32 %v2474, %v3375
      %v3504 = vadd.f32 %v2475, %v3376
      %v3505 = vadd.f32 %v2476, %v3377
      %v3506 = vadd.f32 %v2477, %v3378
      %v3507 = vadd.f32 %v2478, %v3379
      %v3508 = vadd.f32 %v2479, %v3380
      %v3509 = vadd.f32 %v2480, %v3381
      %v3510 = vadd.f32 %v2481, %v3382
      %v3511 = vadd.f32 %v2482, %v3383
      %v3512 = vadd.f32 %v2483, %v3384
      %v3513 = vadd.f32 %v2484, %v3385
      %v3514 = vadd.f32 %v2485, %v3386
      %v3515 = vadd.f32 %v2486, %v3387
      %v3516 = vadd.f32 %v2487, %v3388
      %v3517 = vadd.f32 %v2488, %v3389
      %v3518 = vadd.f32 %v2489, %v3390
      %v3519 = vadd.f32 %v2490, %v3391
      %v3520 = vadd.f32 %v2491, %v3392
      %v3521 = vadd.f32 %v2492, %v3393
      %v3522 = vadd.f32 %v2493, %v3394
      %v3523 = vadd.f32 %v2494, %v3395
      %v3524 = vadd.f32 %v2495, %v3396
      %v3525 = vadd.f32 %v2496, %v3397
      %v3526 = vadd.f32 %v2497, %v3398
      %v3527 = vadd.f32 %v2498, %v3399
      %v3528 = vadd.f32 %v2499, %v3400
      %v3529 = vadd.f32 %v2500, %v3401
      %v3530 = vadd.f32 %v2501, %v3402
      %v3531 = vadd.f32 %v2502, %v3403
      %v3532 = vadd.f32 %v2503, %v3404
      %v3533 = vadd.f32 %v2504, %v3405
      %v3534 = vadd.f32 %v2505, %v3406
      %v3535 = vadd.f32 %v2506, %v3407
      %v3536 = vadd.f32 %v2507, %v3408
      %v3537 = vadd.f32 %v2508, %v3409
      %v3538 = vadd.f32 %v2509, %v3410
      %v3539 = vadd.f32 %v2510, %v3411
      %v3540 = vadd.f32 %v2511, %v3412
      %v3541 = vadd.f32 %v2512, %v3413
      %v3542 = vadd.f32 %v2513, %v3414
      %v3543 = vadd.f32 %v2514, %v3415
      %v3544 = vadd.f32 %v2515, %v3416
      %v3545 = vadd.f32 %v2516, %v3417
      %v3546 = vadd.f32 %v2517, %v3418
      %v3547 = vadd.f32 %v2518, %v3419
      %v3548 = vadd.f32 %v2519, %v3420
      %v3549 = vadd.f32 %v2520, %v3421
      %v3550 = vadd.f32 %v2521, %v3422
      %v3551 = vadd.f32 %v2522, %v3423
      %v3552 = vadd.f32 %v2523, %v3424
      %v3553 = vadd.f32 %v2524, %v3425
      %v3554 = vadd.f32 %v2525, %v3426
      %v3555 = vadd.f32 %v2526, %v3427
      %v3556 = vadd.f32 %v2527, %v3428
      %v3557 = vadd.f32 %v2528, %v3429
      %v3558 = vadd.f32 %v2529, %v3430
      %v3559 = vadd.f32 %v2530, %v3431
      %v3560 = vadd.f32 %v2531, %v3432
      %v3561 = vadd.f32 %v2532, %v3433
      %v3562 = vadd.f32 %v2533, %v3434
      %v3563 = vadd.f32 %v2534, %v3435
      %v3564 = vadd.f32 %v2535, %v3436
      %v3565 = vadd.f32 %v2536, %v3437
      %v3566 = vadd.f32 %v2537, %v3438
      %v3567 = vadd.f32 %v2538, %v3439
      %v3568 = vadd.f32 %v2539, %v3440
      %v3569 = vadd.f32 %v2540, %v3441
      %v3570 = vadd.f32 %v2541, %v3442
      %v3571 = vadd.f32 %v2542, %v3443
      %v3572 = vadd.f32 %v2543, %v3444
      %v3573 = vadd.f32 %v2544, %v3445
      %v3574 = vadd.f32 %v2545, %v3446
      %v3575 = vadd.f32 %v2546, %v3447
      %v3576 = vadd.f32 %v2547, %v3448
      %v3577 = vadd.f32 %v2548, %v3449
      %v3578 = vadd.f32 %v2549, %v3450
      %v3579 = vadd.f32 %v2550, %v3451
      %v3580 = vadd.f32 %v2551, %v3452
      %v3581 = vadd.f32 %v2552, %v3453
      %v3582 = vadd.f32 %v2553, %v3454
      %v3583 = vadd.f32 %v2554, %v3455
      %v3584 = vadd.f32 %v2555, %v3456
      %v3585 = vadd.f32 %v2556, %v3457
      %v3586 = vadd.f32 %v2557, %v3458
      %v3587 = vadd.f32 %v2558, %v3459
      %v3588 = vadd.f32 %v2559, %v3460
      %v3589 = vadd.f32 %v2560, %v3461
      %v3590 = vadd.f32 %v2561, %v3462
      %v3591 = vadd.f32 %v2562, %v3463
      %v3592 = vadd.f32 %v2563, %v3464
      %v3593 = vadd.f32 %v2564, %v3465
      %v3594 = vadd.f32 %v2565, %v3466
      %v3595 = vadd.f32 %v2566, %v3467
      %v3596 = vadd.f32 %v2567, %v3468
      %v3597 = vadd.f32 %v2568, %v3469
      %v3598 = vadd.f32 %v2569, %v3470
      %v3599 = vadd.f32 %v2570, %v3471
      %v3600 = vadd.f32 %v2571, %v3472
      %v3601 = vadd.f32 %v2572, %v3473
      %v3602 = vadd.f32 %v2573, %v3474
      %v3603 = vadd.f32 %v2574, %v3475
      %v3604 = vadd.f32 %v2575, %v3476
      %v3605 = vadd.f32 %v2576, %v3477
      %v3606 = vadd.f32 %v2577, %v3478
      %v3607 = vadd.f32 %v2578, %v3479
      %v3608 = vadd.f32 %v2579, %v3480
      %v3609 = vadd.f32 %v2580, %v3481
      %v3610 = vadd.f32 %v2581, %v3482
      %v3611 = vadd.f32 %v2582, %v3483
      %v3612 = vadd.f32 %v2583, %v3484
      %v3613 = vadd.f32 %v2584, %v3485
      %v3614 = vadd.f32 %v2585, %v3486
      %v3615 = vadd.f32 %v2586, %v3487
      %v3616 = vadd.f32 %v2587, %v3488
      %v3617 = vadd.f32 %v2588, %v3489
      %v3618 = vadd.f32 %v2589, %v3490
      %v3619 = vadd.f32 %v2590, %v3491
      %v3620 = vadd.f32 %v2591, %v3492
      %v3621 = vadd.f32 %v2592, %v3493
      %v3622 = vadd.f32 %v2593, %v3494
      %v3623 = vadd.f32 %v2594, %v3495
      %v3624 = vld [vmem:[#allocation2 + $0x3] sm:$0xff]
      %v3625 = vld [vmem:[#allocation2 + $0xb] sm:$0xff]
      %v3626 = vld [vmem:[#allocation2 + $0x13] sm:$0xff]
      %v3627 = vld [vmem:[#allocation2 + $0x1b] sm:$0xff]
      %v3628 = vld [vmem:[#allocation2 + $0x23] sm:$0xff]
      %v3629 = vld [vmem:[#allocation2 + $0x2b] sm:$0xff]
      %v3630 = vld [vmem:[#allocation2 + $0x33] sm:$0xff]
      %v3631 = vld [vmem:[#allocation2 + $0x3b] sm:$0xff]
      %v3632 = vld [vmem:[#allocation2 + $0x43] sm:$0xff]
      %v3633 = vld [vmem:[#allocation2 + $0x4b] sm:$0xff]
      %v3634 = vld [vmem:[#allocation2 + $0x53] sm:$0xff]
      %v3635 = vld [vmem:[#allocation2 + $0x5b] sm:$0xff]
      %v3636 = vld [vmem:[#allocation2 + $0x63] sm:$0xff]
      %v3637 = vld [vmem:[#allocation2 + $0x6b] sm:$0xff]
      %v3638 = vld [vmem:[#allocation2 + $0x73] sm:$0xff]
      %v3639 = vld [vmem:[#allocation2 + $0x7b] sm:$0xff]
      %v3640 = vld [vmem:[#allocation2 + $0x83] sm:$0xff]
      %v3641 = vld [vmem:[#allocation2 + $0x8b] sm:$0xff]
      %v3642 = vld [vmem:[#allocation2 + $0x93] sm:$0xff]
      %v3643 = vld [vmem:[#allocation2 + $0x9b] sm:$0xff]
      %v3644 = vld [vmem:[#allocation2 + $0xa3] sm:$0xff]
      %v3645 = vld [vmem:[#allocation2 + $0xab] sm:$0xff]
      %v3646 = vld [vmem:[#allocation2 + $0xb3] sm:$0xff]
      %v3647 = vld [vmem:[#allocation2 + $0xbb] sm:$0xff]
      %v3648 = vld [vmem:[#allocation2 + $0xc3] sm:$0xff]
      %v3649 = vld [vmem:[#allocation2 + $0xcb] sm:$0xff]
      %v3650 = vld [vmem:[#allocation2 + $0xd3] sm:$0xff]
      %v3651 = vld [vmem:[#allocation2 + $0xdb] sm:$0xff]
      %v3652 = vld [vmem:[#allocation2 + $0xe3] sm:$0xff]
      %v3653 = vld [vmem:[#allocation2 + $0xeb] sm:$0xff]
      %v3654 = vld [vmem:[#allocation2 + $0xf3] sm:$0xff]
      %v3655 = vld [vmem:[#allocation2 + $0xfb] sm:$0xff]
      %v3656 = vld [vmem:[#allocation2 + $0x103] sm:$0xff]
      %v3657 = vld [vmem:[#allocation2 + $0x10b] sm:$0xff]
      %v3658 = vld [vmem:[#allocation2 + $0x113] sm:$0xff]
      %v3659 = vld [vmem:[#allocation2 + $0x11b] sm:$0xff]
      %v3660 = vld [vmem:[#allocation2 + $0x123] sm:$0xff]
      %v3661 = vld [vmem:[#allocation2 + $0x12b] sm:$0xff]
      %v3662 = vld [vmem:[#allocation2 + $0x133] sm:$0xff]
      %v3663 = vld [vmem:[#allocation2 + $0x13b] sm:$0xff]
      %v3664 = vld [vmem:[#allocation2 + $0x143] sm:$0xff]
      %v3665 = vld [vmem:[#allocation2 + $0x14b] sm:$0xff]
      %v3666 = vld [vmem:[#allocation2 + $0x153] sm:$0xff]
      %v3667 = vld [vmem:[#allocation2 + $0x15b] sm:$0xff]
      %v3668 = vld [vmem:[#allocation2 + $0x163] sm:$0xff]
      %v3669 = vld [vmem:[#allocation2 + $0x16b] sm:$0xff]
      %v3670 = vld [vmem:[#allocation2 + $0x173] sm:$0xff]
      %v3671 = vld [vmem:[#allocation2 + $0x17b] sm:$0xff]
      %v3672 = vld [vmem:[#allocation2 + $0x183] sm:$0xff]
      %v3673 = vld [vmem:[#allocation2 + $0x18b] sm:$0xff]
      %v3674 = vld [vmem:[#allocation2 + $0x193] sm:$0xff]
      %v3675 = vld [vmem:[#allocation2 + $0x19b] sm:$0xff]
      %v3676 = vld [vmem:[#allocation2 + $0x1a3] sm:$0xff]
      %v3677 = vld [vmem:[#allocation2 + $0x1ab] sm:$0xff]
      %v3678 = vld [vmem:[#allocation2 + $0x1b3] sm:$0xff]
      %v3679 = vld [vmem:[#allocation2 + $0x1bb] sm:$0xff]
      %v3680 = vld [vmem:[#allocation2 + $0x1c3] sm:$0xff]
      %v3681 = vld [vmem:[#allocation2 + $0x1cb] sm:$0xff]
      %v3682 = vld [vmem:[#allocation2 + $0x1d3] sm:$0xff]
      %v3683 = vld [vmem:[#allocation2 + $0x1db] sm:$0xff]
      %v3684 = vld [vmem:[#allocation2 + $0x1e3] sm:$0xff]
      %v3685 = vld [vmem:[#allocation2 + $0x1eb] sm:$0xff]
      %v3686 = vld [vmem:[#allocation2 + $0x1f3] sm:$0xff]
      %v3687 = vld [vmem:[#allocation2 + $0x1fb] sm:$0xff]
      %v3688 = vld [vmem:[#allocation2 + $0x203] sm:$0xff]
      %v3689 = vld [vmem:[#allocation2 + $0x20b] sm:$0xff]
      %v3690 = vld [vmem:[#allocation2 + $0x213] sm:$0xff]
      %v3691 = vld [vmem:[#allocation2 + $0x21b] sm:$0xff]
      %v3692 = vld [vmem:[#allocation2 + $0x223] sm:$0xff]
      %v3693 = vld [vmem:[#allocation2 + $0x22b] sm:$0xff]
      %v3694 = vld [vmem:[#allocation2 + $0x233] sm:$0xff]
      %v3695 = vld [vmem:[#allocation2 + $0x23b] sm:$0xff]
      %v3696 = vld [vmem:[#allocation2 + $0x243] sm:$0xff]
      %v3697 = vld [vmem:[#allocation2 + $0x24b] sm:$0xff]
      %v3698 = vld [vmem:[#allocation2 + $0x253] sm:$0xff]
      %v3699 = vld [vmem:[#allocation2 + $0x25b] sm:$0xff]
      %v3700 = vld [vmem:[#allocation2 + $0x263] sm:$0xff]
      %v3701 = vld [vmem:[#allocation2 + $0x26b] sm:$0xff]
      %v3702 = vld [vmem:[#allocation2 + $0x273] sm:$0xff]
      %v3703 = vld [vmem:[#allocation2 + $0x27b] sm:$0xff]
      %v3704 = vld [vmem:[#allocation2 + $0x283] sm:$0xff]
      %v3705 = vld [vmem:[#allocation2 + $0x28b] sm:$0xff]
      %v3706 = vld [vmem:[#allocation2 + $0x293] sm:$0xff]
      %v3707 = vld [vmem:[#allocation2 + $0x29b] sm:$0xff]
      %v3708 = vld [vmem:[#allocation2 + $0x2a3] sm:$0xff]
      %v3709 = vld [vmem:[#allocation2 + $0x2ab] sm:$0xff]
      %v3710 = vld [vmem:[#allocation2 + $0x2b3] sm:$0xff]
      %v3711 = vld [vmem:[#allocation2 + $0x2bb] sm:$0xff]
      %v3712 = vld [vmem:[#allocation2 + $0x2c3] sm:$0xff]
      %v3713 = vld [vmem:[#allocation2 + $0x2cb] sm:$0xff]
      %v3714 = vld [vmem:[#allocation2 + $0x2d3] sm:$0xff]
      %v3715 = vld [vmem:[#allocation2 + $0x2db] sm:$0xff]
      %v3716 = vld [vmem:[#allocation2 + $0x2e3] sm:$0xff]
      %v3717 = vld [vmem:[#allocation2 + $0x2eb] sm:$0xff]
      %v3718 = vld [vmem:[#allocation2 + $0x2f3] sm:$0xff]
      %v3719 = vld [vmem:[#allocation2 + $0x2fb] sm:$0xff]
      %v3720 = vld [vmem:[#allocation2 + $0x303] sm:$0xff]
      %v3721 = vld [vmem:[#allocation2 + $0x30b] sm:$0xff]
      %v3722 = vld [vmem:[#allocation2 + $0x313] sm:$0xff]
      %v3723 = vld [vmem:[#allocation2 + $0x31b] sm:$0xff]
      %v3724 = vld [vmem:[#allocation2 + $0x323] sm:$0xff]
      %v3725 = vld [vmem:[#allocation2 + $0x32b] sm:$0xff]
      %v3726 = vld [vmem:[#allocation2 + $0x333] sm:$0xff]
      %v3727 = vld [vmem:[#allocation2 + $0x33b] sm:$0xff]
      %v3728 = vld [vmem:[#allocation2 + $0x343] sm:$0xff]
      %v3729 = vld [vmem:[#allocation2 + $0x34b] sm:$0xff]
      %v3730 = vld [vmem:[#allocation2 + $0x353] sm:$0xff]
      %v3731 = vld [vmem:[#allocation2 + $0x35b] sm:$0xff]
      %v3732 = vld [vmem:[#allocation2 + $0x363] sm:$0xff]
      %v3733 = vld [vmem:[#allocation2 + $0x36b] sm:$0xff]
      %v3734 = vld [vmem:[#allocation2 + $0x373] sm:$0xff]
      %v3735 = vld [vmem:[#allocation2 + $0x37b] sm:$0xff]
      %v3736 = vld [vmem:[#allocation2 + $0x383] sm:$0xff]
      %v3737 = vld [vmem:[#allocation2 + $0x38b] sm:$0xff]
      %v3738 = vld [vmem:[#allocation2 + $0x393] sm:$0xff]
      %v3739 = vld [vmem:[#allocation2 + $0x39b] sm:$0xff]
      %v3740 = vld [vmem:[#allocation2 + $0x3a3] sm:$0xff]
      %v3741 = vld [vmem:[#allocation2 + $0x3ab] sm:$0xff]
      %v3742 = vld [vmem:[#allocation2 + $0x3b3] sm:$0xff]
      %v3743 = vld [vmem:[#allocation2 + $0x3bb] sm:$0xff]
      %v3744 = vld [vmem:[#allocation2 + $0x3c3] sm:$0xff]
      %v3745 = vld [vmem:[#allocation2 + $0x3cb] sm:$0xff]
      %v3746 = vld [vmem:[#allocation2 + $0x3d3] sm:$0xff]
      %v3747 = vld [vmem:[#allocation2 + $0x3db] sm:$0xff]
      %v3748 = vld [vmem:[#allocation2 + $0x3e3] sm:$0xff]
      %v3749 = vld [vmem:[#allocation2 + $0x3eb] sm:$0xff]
      %v3750 = vld [vmem:[#allocation2 + $0x3f3] sm:$0xff]
      %v3751 = vld [vmem:[#allocation2 + $0x3fb] sm:$0xff]
      %s3752 = scalar_lea.vmem %s1, 3
      %v3753 = vld [vmem:[%s3752] sm:$0x1]
      %3755 = vset.pattern.permute.xlu0 0
      %3756 = vperm.xlu0 %3755, %v3624
      %v3757 = vpop.permute.xlu0 %3756
      %3760 = vset.pattern.permute.xlu0 0
      %3761 = vperm.xlu0 %3760, %v3625
      %v3762 = vpop.permute.xlu0 %3761
      %3765 = vset.pattern.permute.xlu0 0
      %3766 = vperm.xlu0 %3765, %v3626
      %v3767 = vpop.permute.xlu0 %3766
      %3770 = vset.pattern.permute.xlu0 0
      %3771 = vperm.xlu0 %3770, %v3627
      %v3772 = vpop.permute.xlu0 %3771
      %3775 = vset.pattern.permute.xlu0 0
      %3776 = vperm.xlu0 %3775, %v3628
      %v3777 = vpop.permute.xlu0 %3776
      %3780 = vset.pattern.permute.xlu0 0
      %3781 = vperm.xlu0 %3780, %v3629
      %v3782 = vpop.permute.xlu0 %3781
      %3785 = vset.pattern.permute.xlu0 0
      %3786 = vperm.xlu0 %3785, %v3630
      %v3787 = vpop.permute.xlu0 %3786
      %3790 = vset.pattern.permute.xlu0 0
      %3791 = vperm.xlu0 %3790, %v3631
      %v3792 = vpop.permute.xlu0 %3791
      %3795 = vset.pattern.permute.xlu0 0
      %3796 = vperm.xlu0 %3795, %v3632
      %v3797 = vpop.permute.xlu0 %3796
      %3800 = vset.pattern.permute.xlu0 0
      %3801 = vperm.xlu0 %3800, %v3633
      %v3802 = vpop.permute.xlu0 %3801
      %3805 = vset.pattern.permute.xlu0 0
      %3806 = vperm.xlu0 %3805, %v3634
      %v3807 = vpop.permute.xlu0 %3806
      %3810 = vset.pattern.permute.xlu0 0
      %3811 = vperm.xlu0 %3810, %v3635
      %v3812 = vpop.permute.xlu0 %3811
      %3815 = vset.pattern.permute.xlu0 0
      %3816 = vperm.xlu0 %3815, %v3636
      %v3817 = vpop.permute.xlu0 %3816
      %3820 = vset.pattern.permute.xlu0 0
      %3821 = vperm.xlu0 %3820, %v3637
      %v3822 = vpop.permute.xlu0 %3821
      %3825 = vset.pattern.permute.xlu0 0
      %3826 = vperm.xlu0 %3825, %v3638
      %v3827 = vpop.permute.xlu0 %3826
      %3830 = vset.pattern.permute.xlu0 0
      %3831 = vperm.xlu0 %3830, %v3639
      %v3832 = vpop.permute.xlu0 %3831
      %3835 = vset.pattern.permute.xlu0 0
      %3836 = vperm.xlu0 %3835, %v3640
      %v3837 = vpop.permute.xlu0 %3836
      %3840 = vset.pattern.permute.xlu0 0
      %3841 = vperm.xlu0 %3840, %v3641
      %v3842 = vpop.permute.xlu0 %3841
      %3845 = vset.pattern.permute.xlu0 0
      %3846 = vperm.xlu0 %3845, %v3642
      %v3847 = vpop.permute.xlu0 %3846
      %3850 = vset.pattern.permute.xlu0 0
      %3851 = vperm.xlu0 %3850, %v3643
      %v3852 = vpop.permute.xlu0 %3851
      %3855 = vset.pattern.permute.xlu0 0
      %3856 = vperm.xlu0 %3855, %v3644
      %v3857 = vpop.permute.xlu0 %3856
      %3860 = vset.pattern.permute.xlu0 0
      %3861 = vperm.xlu0 %3860, %v3645
      %v3862 = vpop.permute.xlu0 %3861
      %3865 = vset.pattern.permute.xlu0 0
      %3866 = vperm.xlu0 %3865, %v3646
      %v3867 = vpop.permute.xlu0 %3866
      %3870 = vset.pattern.permute.xlu0 0
      %3871 = vperm.xlu0 %3870, %v3647
      %v3872 = vpop.permute.xlu0 %3871
      %3875 = vset.pattern.permute.xlu0 0
      %3876 = vperm.xlu0 %3875, %v3648
      %v3877 = vpop.permute.xlu0 %3876
      %3880 = vset.pattern.permute.xlu0 0
      %3881 = vperm.xlu0 %3880, %v3649
      %v3882 = vpop.permute.xlu0 %3881
      %3885 = vset.pattern.permute.xlu0 0
      %3886 = vperm.xlu0 %3885, %v3650
      %v3887 = vpop.permute.xlu0 %3886
      %3890 = vset.pattern.permute.xlu0 0
      %3891 = vperm.xlu0 %3890, %v3651
      %v3892 = vpop.permute.xlu0 %3891
      %3895 = vset.pattern.permute.xlu0 0
      %3896 = vperm.xlu0 %3895, %v3652
      %v3897 = vpop.permute.xlu0 %3896
      %3900 = vset.pattern.permute.xlu0 0
      %3901 = vperm.xlu0 %3900, %v3653
      %v3902 = vpop.permute.xlu0 %3901
      %3905 = vset.pattern.permute.xlu0 0
      %3906 = vperm.xlu0 %3905, %v3654
      %v3907 = vpop.permute.xlu0 %3906
      %3910 = vset.pattern.permute.xlu0 0
      %3911 = vperm.xlu0 %3910, %v3655
      %v3912 = vpop.permute.xlu0 %3911
      %3915 = vset.pattern.permute.xlu0 0
      %3916 = vperm.xlu0 %3915, %v3656
      %v3917 = vpop.permute.xlu0 %3916
      %3920 = vset.pattern.permute.xlu0 0
      %3921 = vperm.xlu0 %3920, %v3657
      %v3922 = vpop.permute.xlu0 %3921
      %3925 = vset.pattern.permute.xlu0 0
      %3926 = vperm.xlu0 %3925, %v3658
      %v3927 = vpop.permute.xlu0 %3926
      %3930 = vset.pattern.permute.xlu0 0
      %3931 = vperm.xlu0 %3930, %v3659
      %v3932 = vpop.permute.xlu0 %3931
      %3935 = vset.pattern.permute.xlu0 0
      %3936 = vperm.xlu0 %3935, %v3660
      %v3937 = vpop.permute.xlu0 %3936
      %3940 = vset.pattern.permute.xlu0 0
      %3941 = vperm.xlu0 %3940, %v3661
      %v3942 = vpop.permute.xlu0 %3941
      %3945 = vset.pattern.permute.xlu0 0
      %3946 = vperm.xlu0 %3945, %v3662
      %v3947 = vpop.permute.xlu0 %3946
      %3950 = vset.pattern.permute.xlu0 0
      %3951 = vperm.xlu0 %3950, %v3663
      %v3952 = vpop.permute.xlu0 %3951
      %3955 = vset.pattern.permute.xlu0 0
      %3956 = vperm.xlu0 %3955, %v3664
      %v3957 = vpop.permute.xlu0 %3956
      %3960 = vset.pattern.permute.xlu0 0
      %3961 = vperm.xlu0 %3960, %v3665
      %v3962 = vpop.permute.xlu0 %3961
      %3965 = vset.pattern.permute.xlu0 0
      %3966 = vperm.xlu0 %3965, %v3666
      %v3967 = vpop.permute.xlu0 %3966
      %3970 = vset.pattern.permute.xlu0 0
      %3971 = vperm.xlu0 %3970, %v3667
      %v3972 = vpop.permute.xlu0 %3971
      %3975 = vset.pattern.permute.xlu0 0
      %3976 = vperm.xlu0 %3975, %v3668
      %v3977 = vpop.permute.xlu0 %3976
      %3980 = vset.pattern.permute.xlu0 0
      %3981 = vperm.xlu0 %3980, %v3669
      %v3982 = vpop.permute.xlu0 %3981
      %3985 = vset.pattern.permute.xlu0 0
      %3986 = vperm.xlu0 %3985, %v3670
      %v3987 = vpop.permute.xlu0 %3986
      %3990 = vset.pattern.permute.xlu0 0
      %3991 = vperm.xlu0 %3990, %v3671
      %v3992 = vpop.permute.xlu0 %3991
      %3995 = vset.pattern.permute.xlu0 0
      %3996 = vperm.xlu0 %3995, %v3672
      %v3997 = vpop.permute.xlu0 %3996
      %4000 = vset.pattern.permute.xlu0 0
      %4001 = vperm.xlu0 %4000, %v3673
      %v4002 = vpop.permute.xlu0 %4001
      %4005 = vset.pattern.permute.xlu0 0
      %4006 = vperm.xlu0 %4005, %v3674
      %v4007 = vpop.permute.xlu0 %4006
      %4010 = vset.pattern.permute.xlu0 0
      %4011 = vperm.xlu0 %4010, %v3675
      %v4012 = vpop.permute.xlu0 %4011
      %4015 = vset.pattern.permute.xlu0 0
      %4016 = vperm.xlu0 %4015, %v3676
      %v4017 = vpop.permute.xlu0 %4016
      %4020 = vset.pattern.permute.xlu0 0
      %4021 = vperm.xlu0 %4020, %v3677
      %v4022 = vpop.permute.xlu0 %4021
      %4025 = vset.pattern.permute.xlu0 0
      %4026 = vperm.xlu0 %4025, %v3678
      %v4027 = vpop.permute.xlu0 %4026
      %4030 = vset.pattern.permute.xlu0 0
      %4031 = vperm.xlu0 %4030, %v3679
      %v4032 = vpop.permute.xlu0 %4031
      %4035 = vset.pattern.permute.xlu0 0
      %4036 = vperm.xlu0 %4035, %v3680
      %v4037 = vpop.permute.xlu0 %4036
      %4040 = vset.pattern.permute.xlu0 0
      %4041 = vperm.xlu0 %4040, %v3681
      %v4042 = vpop.permute.xlu0 %4041
      %4045 = vset.pattern.permute.xlu0 0
      %4046 = vperm.xlu0 %4045, %v3682
      %v4047 = vpop.permute.xlu0 %4046
      %4050 = vset.pattern.permute.xlu0 0
      %4051 = vperm.xlu0 %4050, %v3683
      %v4052 = vpop.permute.xlu0 %4051
      %4055 = vset.pattern.permute.xlu0 0
      %4056 = vperm.xlu0 %4055, %v3684
      %v4057 = vpop.permute.xlu0 %4056
      %4060 = vset.pattern.permute.xlu0 0
      %4061 = vperm.xlu0 %4060, %v3685
      %v4062 = vpop.permute.xlu0 %4061
      %4065 = vset.pattern.permute.xlu0 0
      %4066 = vperm.xlu0 %4065, %v3686
      %v4067 = vpop.permute.xlu0 %4066
      %4070 = vset.pattern.permute.xlu0 0
      %4071 = vperm.xlu0 %4070, %v3687
      %v4072 = vpop.permute.xlu0 %4071
      %4075 = vset.pattern.permute.xlu0 0
      %4076 = vperm.xlu0 %4075, %v3688
      %v4077 = vpop.permute.xlu0 %4076
      %4080 = vset.pattern.permute.xlu0 0
      %4081 = vperm.xlu0 %4080, %v3689
      %v4082 = vpop.permute.xlu0 %4081
      %4085 = vset.pattern.permute.xlu0 0
      %4086 = vperm.xlu0 %4085, %v3690
      %v4087 = vpop.permute.xlu0 %4086
      %4090 = vset.pattern.permute.xlu0 0
      %4091 = vperm.xlu0 %4090, %v3691
      %v4092 = vpop.permute.xlu0 %4091
      %4095 = vset.pattern.permute.xlu0 0
      %4096 = vperm.xlu0 %4095, %v3692
      %v4097 = vpop.permute.xlu0 %4096
      %4100 = vset.pattern.permute.xlu0 0
      %4101 = vperm.xlu0 %4100, %v3693
      %v4102 = vpop.permute.xlu0 %4101
      %4105 = vset.pattern.permute.xlu0 0
      %4106 = vperm.xlu0 %4105, %v3694
      %v4107 = vpop.permute.xlu0 %4106
      %4110 = vset.pattern.permute.xlu0 0
      %4111 = vperm.xlu0 %4110, %v3695
      %v4112 = vpop.permute.xlu0 %4111
      %4115 = vset.pattern.permute.xlu0 0
      %4116 = vperm.xlu0 %4115, %v3696
      %v4117 = vpop.permute.xlu0 %4116
      %4120 = vset.pattern.permute.xlu0 0
      %4121 = vperm.xlu0 %4120, %v3697
      %v4122 = vpop.permute.xlu0 %4121
      %4125 = vset.pattern.permute.xlu0 0
      %4126 = vperm.xlu0 %4125, %v3698
      %v4127 = vpop.permute.xlu0 %4126
      %4130 = vset.pattern.permute.xlu0 0
      %4131 = vperm.xlu0 %4130, %v3699
      %v4132 = vpop.permute.xlu0 %4131
      %4135 = vset.pattern.permute.xlu0 0
      %4136 = vperm.xlu0 %4135, %v3700
      %v4137 = vpop.permute.xlu0 %4136
      %4140 = vset.pattern.permute.xlu0 0
      %4141 = vperm.xlu0 %4140, %v3701
      %v4142 = vpop.permute.xlu0 %4141
      %4145 = vset.pattern.permute.xlu0 0
      %4146 = vperm.xlu0 %4145, %v3702
      %v4147 = vpop.permute.xlu0 %4146
      %4150 = vset.pattern.permute.xlu0 0
      %4151 = vperm.xlu0 %4150, %v3703
      %v4152 = vpop.permute.xlu0 %4151
      %4155 = vset.pattern.permute.xlu0 0
      %4156 = vperm.xlu0 %4155, %v3704
      %v4157 = vpop.permute.xlu0 %4156
      %4160 = vset.pattern.permute.xlu0 0
      %4161 = vperm.xlu0 %4160, %v3705
      %v4162 = vpop.permute.xlu0 %4161
      %4165 = vset.pattern.permute.xlu0 0
      %4166 = vperm.xlu0 %4165, %v3706
      %v4167 = vpop.permute.xlu0 %4166
      %4170 = vset.pattern.permute.xlu0 0
      %4171 = vperm.xlu0 %4170, %v3707
      %v4172 = vpop.permute.xlu0 %4171
      %4175 = vset.pattern.permute.xlu0 0
      %4176 = vperm.xlu0 %4175, %v3708
      %v4177 = vpop.permute.xlu0 %4176
      %4180 = vset.pattern.permute.xlu0 0
      %4181 = vperm.xlu0 %4180, %v3709
      %v4182 = vpop.permute.xlu0 %4181
      %4185 = vset.pattern.permute.xlu0 0
      %4186 = vperm.xlu0 %4185, %v3710
      %v4187 = vpop.permute.xlu0 %4186
      %4190 = vset.pattern.permute.xlu0 0
      %4191 = vperm.xlu0 %4190, %v3711
      %v4192 = vpop.permute.xlu0 %4191
      %4195 = vset.pattern.permute.xlu0 0
      %4196 = vperm.xlu0 %4195, %v3712
      %v4197 = vpop.permute.xlu0 %4196
      %4200 = vset.pattern.permute.xlu0 0
      %4201 = vperm.xlu0 %4200, %v3713
      %v4202 = vpop.permute.xlu0 %4201
      %4205 = vset.pattern.permute.xlu0 0
      %4206 = vperm.xlu0 %4205, %v3714
      %v4207 = vpop.permute.xlu0 %4206
      %4210 = vset.pattern.permute.xlu0 0
      %4211 = vperm.xlu0 %4210, %v3715
      %v4212 = vpop.permute.xlu0 %4211
      %4215 = vset.pattern.permute.xlu0 0
      %4216 = vperm.xlu0 %4215, %v3716
      %v4217 = vpop.permute.xlu0 %4216
      %4220 = vset.pattern.permute.xlu0 0
      %4221 = vperm.xlu0 %4220, %v3717
      %v4222 = vpop.permute.xlu0 %4221
      %4225 = vset.pattern.permute.xlu0 0
      %4226 = vperm.xlu0 %4225, %v3718
      %v4227 = vpop.permute.xlu0 %4226
      %4230 = vset.pattern.permute.xlu0 0
      %4231 = vperm.xlu0 %4230, %v3719
      %v4232 = vpop.permute.xlu0 %4231
      %4235 = vset.pattern.permute.xlu0 0
      %4236 = vperm.xlu0 %4235, %v3720
      %v4237 = vpop.permute.xlu0 %4236
      %4240 = vset.pattern.permute.xlu0 0
      %4241 = vperm.xlu0 %4240, %v3721
      %v4242 = vpop.permute.xlu0 %4241
      %4245 = vset.pattern.permute.xlu0 0
      %4246 = vperm.xlu0 %4245, %v3722
      %v4247 = vpop.permute.xlu0 %4246
      %4250 = vset.pattern.permute.xlu0 0
      %4251 = vperm.xlu0 %4250, %v3723
      %v4252 = vpop.permute.xlu0 %4251
      %4255 = vset.pattern.permute.xlu0 0
      %4256 = vperm.xlu0 %4255, %v3724
      %v4257 = vpop.permute.xlu0 %4256
      %4260 = vset.pattern.permute.xlu0 0
      %4261 = vperm.xlu0 %4260, %v3725
      %v4262 = vpop.permute.xlu0 %4261
      %4265 = vset.pattern.permute.xlu0 0
      %4266 = vperm.xlu0 %4265, %v3726
      %v4267 = vpop.permute.xlu0 %4266
      %4270 = vset.pattern.permute.xlu0 0
      %4271 = vperm.xlu0 %4270, %v3727
      %v4272 = vpop.permute.xlu0 %4271
      %4275 = vset.pattern.permute.xlu0 0
      %4276 = vperm.xlu0 %4275, %v3728
      %v4277 = vpop.permute.xlu0 %4276
      %4280 = vset.pattern.permute.xlu0 0
      %4281 = vperm.xlu0 %4280, %v3729
      %v4282 = vpop.permute.xlu0 %4281
      %4285 = vset.pattern.permute.xlu0 0
      %4286 = vperm.xlu0 %4285, %v3730
      %v4287 = vpop.permute.xlu0 %4286
      %4290 = vset.pattern.permute.xlu0 0
      %4291 = vperm.xlu0 %4290, %v3731
      %v4292 = vpop.permute.xlu0 %4291
      %4295 = vset.pattern.permute.xlu0 0
      %4296 = vperm.xlu0 %4295, %v3732
      %v4297 = vpop.permute.xlu0 %4296
      %4300 = vset.pattern.permute.xlu0 0
      %4301 = vperm.xlu0 %4300, %v3733
      %v4302 = vpop.permute.xlu0 %4301
      %4305 = vset.pattern.permute.xlu0 0
      %4306 = vperm.xlu0 %4305, %v3734
      %v4307 = vpop.permute.xlu0 %4306
      %4310 = vset.pattern.permute.xlu0 0
      %4311 = vperm.xlu0 %4310, %v3735
      %v4312 = vpop.permute.xlu0 %4311
      %4315 = vset.pattern.permute.xlu0 0
      %4316 = vperm.xlu0 %4315, %v3736
      %v4317 = vpop.permute.xlu0 %4316
      %4320 = vset.pattern.permute.xlu0 0
      %4321 = vperm.xlu0 %4320, %v3737
      %v4322 = vpop.permute.xlu0 %4321
      %4325 = vset.pattern.permute.xlu0 0
      %4326 = vperm.xlu0 %4325, %v3738
      %v4327 = vpop.permute.xlu0 %4326
      %4330 = vset.pattern.permute.xlu0 0
      %4331 = vperm.xlu0 %4330, %v3739
      %v4332 = vpop.permute.xlu0 %4331
      %4335 = vset.pattern.permute.xlu0 0
      %4336 = vperm.xlu0 %4335, %v3740
      %v4337 = vpop.permute.xlu0 %4336
      %4340 = vset.pattern.permute.xlu0 0
      %4341 = vperm.xlu0 %4340, %v3741
      %v4342 = vpop.permute.xlu0 %4341
      %4345 = vset.pattern.permute.xlu0 0
      %4346 = vperm.xlu0 %4345, %v3742
      %v4347 = vpop.permute.xlu0 %4346
      %4350 = vset.pattern.permute.xlu0 0
      %4351 = vperm.xlu0 %4350, %v3743
      %v4352 = vpop.permute.xlu0 %4351
      %4355 = vset.pattern.permute.xlu0 0
      %4356 = vperm.xlu0 %4355, %v3744
      %v4357 = vpop.permute.xlu0 %4356
      %4360 = vset.pattern.permute.xlu0 0
      %4361 = vperm.xlu0 %4360, %v3745
      %v4362 = vpop.permute.xlu0 %4361
      %4365 = vset.pattern.permute.xlu0 0
      %4366 = vperm.xlu0 %4365, %v3746
      %v4367 = vpop.permute.xlu0 %4366
      %4370 = vset.pattern.permute.xlu0 0
      %4371 = vperm.xlu0 %4370, %v3747
      %v4372 = vpop.permute.xlu0 %4371
      %4375 = vset.pattern.permute.xlu0 0
      %4376 = vperm.xlu0 %4375, %v3748
      %v4377 = vpop.permute.xlu0 %4376
      %4380 = vset.pattern.permute.xlu0 0
      %4381 = vperm.xlu0 %4380, %v3749
      %v4382 = vpop.permute.xlu0 %4381
      %4385 = vset.pattern.permute.xlu0 0
      %4386 = vperm.xlu0 %4385, %v3750
      %v4387 = vpop.permute.xlu0 %4386
      %4390 = vset.pattern.permute.xlu0 0
      %4391 = vperm.xlu0 %4390, %v3751
      %v4392 = vpop.permute.xlu0 %4391
      %v4395 = vperm.slane %v3753, 0
      %v4397 = vmul.f32 %v3757, %v4395
      %v4398 = vmul.f32 %v3762, %v4395
      %v4399 = vmul.f32 %v3767, %v4395
      %v4400 = vmul.f32 %v3772, %v4395
      %v4401 = vmul.f32 %v3777, %v4395
      %v4402 = vmul.f32 %v3782, %v4395
      %v4403 = vmul.f32 %v3787, %v4395
      %v4404 = vmul.f32 %v3792, %v4395
      %v4405 = vmul.f32 %v3797, %v4395
      %v4406 = vmul.f32 %v3802, %v4395
      %v4407 = vmul.f32 %v3807, %v4395
      %v4408 = vmul.f32 %v3812, %v4395
      %v4409 = vmul.f32 %v3817, %v4395
      %v4410 = vmul.f32 %v3822, %v4395
      %v4411 = vmul.f32 %v3827, %v4395
      %v4412 = vmul.f32 %v3832, %v4395
      %v4413 = vmul.f32 %v3837, %v4395
      %v4414 = vmul.f32 %v3842, %v4395
      %v4415 = vmul.f32 %v3847, %v4395
      %v4416 = vmul.f32 %v3852, %v4395
      %v4417 = vmul.f32 %v3857, %v4395
      %v4418 = vmul.f32 %v3862, %v4395
      %v4419 = vmul.f32 %v3867, %v4395
      %v4420 = vmul.f32 %v3872, %v4395
      %v4421 = vmul.f32 %v3877, %v4395
      %v4422 = vmul.f32 %v3882, %v4395
      %v4423 = vmul.f32 %v3887, %v4395
      %v4424 = vmul.f32 %v3892, %v4395
      %v4425 = vmul.f32 %v3897, %v4395
      %v4426 = vmul.f32 %v3902, %v4395
      %v4427 = vmul.f32 %v3907, %v4395
      %v4428 = vmul.f32 %v3912, %v4395
      %v4429 = vmul.f32 %v3917, %v4395
      %v4430 = vmul.f32 %v3922, %v4395
      %v4431 = vmul.f32 %v3927, %v4395
      %v4432 = vmul.f32 %v3932, %v4395
      %v4433 = vmul.f32 %v3937, %v4395
      %v4434 = vmul.f32 %v3942, %v4395
      %v4435 = vmul.f32 %v3947, %v4395
      %v4436 = vmul.f32 %v3952, %v4395
      %v4437 = vmul.f32 %v3957, %v4395
      %v4438 = vmul.f32 %v3962, %v4395
      %v4439 = vmul.f32 %v3967, %v4395
      %v4440 = vmul.f32 %v3972, %v4395
      %v4441 = vmul.f32 %v3977, %v4395
      %v4442 = vmul.f32 %v3982, %v4395
      %v4443 = vmul.f32 %v3987, %v4395
      %v4444 = vmul.f32 %v3992, %v4395
      %v4445 = vmul.f32 %v3997, %v4395
      %v4446 = vmul.f32 %v4002, %v4395
      %v4447 = vmul.f32 %v4007, %v4395
      %v4448 = vmul.f32 %v4012, %v4395
      %v4449 = vmul.f32 %v4017, %v4395
      %v4450 = vmul.f32 %v4022, %v4395
      %v4451 = vmul.f32 %v4027, %v4395
      %v4452 = vmul.f32 %v4032, %v4395
      %v4453 = vmul.f32 %v4037, %v4395
      %v4454 = vmul.f32 %v4042, %v4395
      %v4455 = vmul.f32 %v4047, %v4395
      %v4456 = vmul.f32 %v4052, %v4395
      %v4457 = vmul.f32 %v4057, %v4395
      %v4458 = vmul.f32 %v4062, %v4395
      %v4459 = vmul.f32 %v4067, %v4395
      %v4460 = vmul.f32 %v4072, %v4395
      %v4461 = vmul.f32 %v4077, %v4395
      %v4462 = vmul.f32 %v4082, %v4395
      %v4463 = vmul.f32 %v4087, %v4395
      %v4464 = vmul.f32 %v4092, %v4395
      %v4465 = vmul.f32 %v4097, %v4395
      %v4466 = vmul.f32 %v4102, %v4395
      %v4467 = vmul.f32 %v4107, %v4395
      %v4468 = vmul.f32 %v4112, %v4395
      %v4469 = vmul.f32 %v4117, %v4395
      %v4470 = vmul.f32 %v4122, %v4395
      %v4471 = vmul.f32 %v4127, %v4395
      %v4472 = vmul.f32 %v4132, %v4395
      %v4473 = vmul.f32 %v4137, %v4395
      %v4474 = vmul.f32 %v4142, %v4395
      %v4475 = vmul.f32 %v4147, %v4395
      %v4476 = vmul.f32 %v4152, %v4395
      %v4477 = vmul.f32 %v4157, %v4395
      %v4478 = vmul.f32 %v4162, %v4395
      %v4479 = vmul.f32 %v4167, %v4395
      %v4480 = vmul.f32 %v4172, %v4395
      %v4481 = vmul.f32 %v4177, %v4395
      %v4482 = vmul.f32 %v4182, %v4395
      %v4483 = vmul.f32 %v4187, %v4395
      %v4484 = vmul.f32 %v4192, %v4395
      %v4485 = vmul.f32 %v4197, %v4395
      %v4486 = vmul.f32 %v4202, %v4395
      %v4487 = vmul.f32 %v4207, %v4395
      %v4488 = vmul.f32 %v4212, %v4395
      %v4489 = vmul.f32 %v4217, %v4395
      %v4490 = vmul.f32 %v4222, %v4395
      %v4491 = vmul.f32 %v4227, %v4395
      %v4492 = vmul.f32 %v4232, %v4395
      %v4493 = vmul.f32 %v4237, %v4395
      %v4494 = vmul.f32 %v4242, %v4395
      %v4495 = vmul.f32 %v4247, %v4395
      %v4496 = vmul.f32 %v4252, %v4395
      %v4497 = vmul.f32 %v4257, %v4395
      %v4498 = vmul.f32 %v4262, %v4395
      %v4499 = vmul.f32 %v4267, %v4395
      %v4500 = vmul.f32 %v4272, %v4395
      %v4501 = vmul.f32 %v4277, %v4395
      %v4502 = vmul.f32 %v4282, %v4395
      %v4503 = vmul.f32 %v4287, %v4395
      %v4504 = vmul.f32 %v4292, %v4395
      %v4505 = vmul.f32 %v4297, %v4395
      %v4506 = vmul.f32 %v4302, %v4395
      %v4507 = vmul.f32 %v4307, %v4395
      %v4508 = vmul.f32 %v4312, %v4395
      %v4509 = vmul.f32 %v4317, %v4395
      %v4510 = vmul.f32 %v4322, %v4395
      %v4511 = vmul.f32 %v4327, %v4395
      %v4512 = vmul.f32 %v4332, %v4395
      %v4513 = vmul.f32 %v4337, %v4395
      %v4514 = vmul.f32 %v4342, %v4395
      %v4515 = vmul.f32 %v4347, %v4395
      %v4516 = vmul.f32 %v4352, %v4395
      %v4517 = vmul.f32 %v4357, %v4395
      %v4518 = vmul.f32 %v4362, %v4395
      %v4519 = vmul.f32 %v4367, %v4395
      %v4520 = vmul.f32 %v4372, %v4395
      %v4521 = vmul.f32 %v4377, %v4395
      %v4522 = vmul.f32 %v4382, %v4395
      %v4523 = vmul.f32 %v4387, %v4395
      %v4524 = vmul.f32 %v4392, %v4395
      %v4525 = vadd.f32 %v3496, %v4397
      %v4526 = vadd.f32 %v3497, %v4398
      %v4527 = vadd.f32 %v3498, %v4399
      %v4528 = vadd.f32 %v3499, %v4400
      %v4529 = vadd.f32 %v3500, %v4401
      %v4530 = vadd.f32 %v3501, %v4402
      %v4531 = vadd.f32 %v3502, %v4403
      %v4532 = vadd.f32 %v3503, %v4404
      %v4533 = vadd.f32 %v3504, %v4405
      %v4534 = vadd.f32 %v3505, %v4406
      %v4535 = vadd.f32 %v3506, %v4407
      %v4536 = vadd.f32 %v3507, %v4408
      %v4537 = vadd.f32 %v3508, %v4409
      %v4538 = vadd.f32 %v3509, %v4410
      %v4539 = vadd.f32 %v3510, %v4411
      %v4540 = vadd.f32 %v3511, %v4412
      %v4541 = vadd.f32 %v3512, %v4413
      %v4542 = vadd.f32 %v3513, %v4414
      %v4543 = vadd.f32 %v3514, %v4415
      %v4544 = vadd.f32 %v3515, %v4416
      %v4545 = vadd.f32 %v3516, %v4417
      %v4546 = vadd.f32 %v3517, %v4418
      %v4547 = vadd.f32 %v3518, %v4419
      %v4548 = vadd.f32 %v3519, %v4420
      %v4549 = vadd.f32 %v3520, %v4421
      %v4550 = vadd.f32 %v3521, %v4422
      %v4551 = vadd.f32 %v3522, %v4423
      %v4552 = vadd.f32 %v3523, %v4424
      %v4553 = vadd.f32 %v3524, %v4425
      %v4554 = vadd.f32 %v3525, %v4426
      %v4555 = vadd.f32 %v3526, %v4427
      %v4556 = vadd.f32 %v3527, %v4428
      %v4557 = vadd.f32 %v3528, %v4429
      %v4558 = vadd.f32 %v3529, %v4430
      %v4559 = vadd.f32 %v3530, %v4431
      %v4560 = vadd.f32 %v3531, %v4432
      %v4561 = vadd.f32 %v3532, %v4433
      %v4562 = vadd.f32 %v3533, %v4434
      %v4563 = vadd.f32 %v3534, %v4435
      %v4564 = vadd.f32 %v3535, %v4436
      %v4565 = vadd.f32 %v3536, %v4437
      %v4566 = vadd.f32 %v3537, %v4438
      %v4567 = vadd.f32 %v3538, %v4439
      %v4568 = vadd.f32 %v3539, %v4440
      %v4569 = vadd.f32 %v3540, %v4441
      %v4570 = vadd.f32 %v3541, %v4442
      %v4571 = vadd.f32 %v3542, %v4443
      %v4572 = vadd.f32 %v3543, %v4444
      %v4573 = vadd.f32 %v3544, %v4445
      %v4574 = vadd.f32 %v3545, %v4446
      %v4575 = vadd.f32 %v3546, %v4447
      %v4576 = vadd.f32 %v3547, %v4448
      %v4577 = vadd.f32 %v3548, %v4449
      %v4578 = vadd.f32 %v3549, %v4450
      %v4579 = vadd.f32 %v3550, %v4451
      %v4580 = vadd.f32 %v3551, %v4452
      %v4581 = vadd.f32 %v3552, %v4453
      %v4582 = vadd.f32 %v3553, %v4454
      %v4583 = vadd.f32 %v3554, %v4455
      %v4584 = vadd.f32 %v3555, %v4456
      %v4585 = vadd.f32 %v3556, %v4457
      %v4586 = vadd.f32 %v3557, %v4458
      %v4587 = vadd.f32 %v3558, %v4459
      %v4588 = vadd.f32 %v3559, %v4460
      %v4589 = vadd.f32 %v3560, %v4461
      %v4590 = vadd.f32 %v3561, %v4462
      %v4591 = vadd.f32 %v3562, %v4463
      %v4592 = vadd.f32 %v3563, %v4464
      %v4593 = vadd.f32 %v3564, %v4465
      %v4594 = vadd.f32 %v3565, %v4466
      %v4595 = vadd.f32 %v3566, %v4467
      %v4596 = vadd.f32 %v3567, %v4468
      %v4597 = vadd.f32 %v3568, %v4469
      %v4598 = vadd.f32 %v3569, %v4470
      %v4599 = vadd.f32 %v3570, %v4471
      %v4600 = vadd.f32 %v3571, %v4472
      %v4601 = vadd.f32 %v3572, %v4473
      %v4602 = vadd.f32 %v3573, %v4474
      %v4603 = vadd.f32 %v3574, %v4475
      %v4604 = vadd.f32 %v3575, %v4476
      %v4605 = vadd.f32 %v3576, %v4477
      %v4606 = vadd.f32 %v3577, %v4478
      %v4607 = vadd.f32 %v3578, %v4479
      %v4608 = vadd.f32 %v3579, %v4480
      %v4609 = vadd.f32 %v3580, %v4481
      %v4610 = vadd.f32 %v3581, %v4482
      %v4611 = vadd.f32 %v3582, %v4483
      %v4612 = vadd.f32 %v3583, %v4484
      %v4613 = vadd.f32 %v3584, %v4485
      %v4614 = vadd.f32 %v3585, %v4486
      %v4615 = vadd.f32 %v3586, %v4487
      %v4616 = vadd.f32 %v3587, %v4488
      %v4617 = vadd.f32 %v3588, %v4489
      %v4618 = vadd.f32 %v3589, %v4490
      %v4619 = vadd.f32 %v3590, %v4491
      %v4620 = vadd.f32 %v3591, %v4492
      %v4621 = vadd.f32 %v3592, %v4493
      %v4622 = vadd.f32 %v3593, %v4494
      %v4623 = vadd.f32 %v3594, %v4495
      %v4624 = vadd.f32 %v3595, %v4496
      %v4625 = vadd.f32 %v3596, %v4497
      %v4626 = vadd.f32 %v3597, %v4498
      %v4627 = vadd.f32 %v3598, %v4499
      %v4628 = vadd.f32 %v3599, %v4500
      %v4629 = vadd.f32 %v3600, %v4501
      %v4630 = vadd.f32 %v3601, %v4502
      %v4631 = vadd.f32 %v3602, %v4503
      %v4632 = vadd.f32 %v3603, %v4504
      %v4633 = vadd.f32 %v3604, %v4505
      %v4634 = vadd.f32 %v3605, %v4506
      %v4635 = vadd.f32 %v3606, %v4507
      %v4636 = vadd.f32 %v3607, %v4508
      %v4637 = vadd.f32 %v3608, %v4509
      %v4638 = vadd.f32 %v3609, %v4510
      %v4639 = vadd.f32 %v3610, %v4511
      %v4640 = vadd.f32 %v3611, %v4512
      %v4641 = vadd.f32 %v3612, %v4513
      %v4642 = vadd.f32 %v3613, %v4514
      %v4643 = vadd.f32 %v3614, %v4515
      %v4644 = vadd.f32 %v3615, %v4516
      %v4645 = vadd.f32 %v3616, %v4517
      %v4646 = vadd.f32 %v3617, %v4518
      %v4647 = vadd.f32 %v3618, %v4519
      %v4648 = vadd.f32 %v3619, %v4520
      %v4649 = vadd.f32 %v3620, %v4521
      %v4650 = vadd.f32 %v3621, %v4522
      %v4651 = vadd.f32 %v3622, %v4523
      %v4652 = vadd.f32 %v3623, %v4524
      %v4653 = vld [vmem:[#allocation2 + $0x4] sm:$0xff]
      %v4654 = vld [vmem:[#allocation2 + $0xc] sm:$0xff]
      %v4655 = vld [vmem:[#allocation2 + $0x14] sm:$0xff]
      %v4656 = vld [vmem:[#allocation2 + $0x1c] sm:$0xff]
      %v4657 = vld [vmem:[#allocation2 + $0x24] sm:$0xff]
      %v4658 = vld [vmem:[#allocation2 + $0x2c] sm:$0xff]
      %v4659 = vld [vmem:[#allocation2 + $0x34] sm:$0xff]
      %v4660 = vld [vmem:[#allocation2 + $0x3c] sm:$0xff]
      %v4661 = vld [vmem:[#allocation2 + $0x44] sm:$0xff]
      %v4662 = vld [vmem:[#allocation2 + $0x4c] sm:$0xff]
      %v4663 = vld [vmem:[#allocation2 + $0x54] sm:$0xff]
      %v4664 = vld [vmem:[#allocation2 + $0x5c] sm:$0xff]
      %v4665 = vld [vmem:[#allocation2 + $0x64] sm:$0xff]
      %v4666 = vld [vmem:[#allocation2 + $0x6c] sm:$0xff]
      %v4667 = vld [vmem:[#allocation2 + $0x74] sm:$0xff]
      %v4668 = vld [vmem:[#allocation2 + $0x7c] sm:$0xff]
      %v4669 = vld [vmem:[#allocation2 + $0x84] sm:$0xff]
      %v4670 = vld [vmem:[#allocation2 + $0x8c] sm:$0xff]
      %v4671 = vld [vmem:[#allocation2 + $0x94] sm:$0xff]
      %v4672 = vld [vmem:[#allocation2 + $0x9c] sm:$0xff]
      %v4673 = vld [vmem:[#allocation2 + $0xa4] sm:$0xff]
      %v4674 = vld [vmem:[#allocation2 + $0xac] sm:$0xff]
      %v4675 = vld [vmem:[#allocation2 + $0xb4] sm:$0xff]
      %v4676 = vld [vmem:[#allocation2 + $0xbc] sm:$0xff]
      %v4677 = vld [vmem:[#allocation2 + $0xc4] sm:$0xff]
      %v4678 = vld [vmem:[#allocation2 + $0xcc] sm:$0xff]
      %v4679 = vld [vmem:[#allocation2 + $0xd4] sm:$0xff]
      %v4680 = vld [vmem:[#allocation2 + $0xdc] sm:$0xff]
      %v4681 = vld [vmem:[#allocation2 + $0xe4] sm:$0xff]
      %v4682 = vld [vmem:[#allocation2 + $0xec] sm:$0xff]
      %v4683 = vld [vmem:[#allocation2 + $0xf4] sm:$0xff]
      %v4684 = vld [vmem:[#allocation2 + $0xfc] sm:$0xff]
      %v4685 = vld [vmem:[#allocation2 + $0x104] sm:$0xff]
      %v4686 = vld [vmem:[#allocation2 + $0x10c] sm:$0xff]
      %v4687 = vld [vmem:[#allocation2 + $0x114] sm:$0xff]
      %v4688 = vld [vmem:[#allocation2 + $0x11c] sm:$0xff]
      %v4689 = vld [vmem:[#allocation2 + $0x124] sm:$0xff]
      %v4690 = vld [vmem:[#allocation2 + $0x12c] sm:$0xff]
      %v4691 = vld [vmem:[#allocation2 + $0x134] sm:$0xff]
      %v4692 = vld [vmem:[#allocation2 + $0x13c] sm:$0xff]
      %v4693 = vld [vmem:[#allocation2 + $0x144] sm:$0xff]
      %v4694 = vld [vmem:[#allocation2 + $0x14c] sm:$0xff]
      %v4695 = vld [vmem:[#allocation2 + $0x154] sm:$0xff]
      %v4696 = vld [vmem:[#allocation2 + $0x15c] sm:$0xff]
      %v4697 = vld [vmem:[#allocation2 + $0x164] sm:$0xff]
      %v4698 = vld [vmem:[#allocation2 + $0x16c] sm:$0xff]
      %v4699 = vld [vmem:[#allocation2 + $0x174] sm:$0xff]
      %v4700 = vld [vmem:[#allocation2 + $0x17c] sm:$0xff]
      %v4701 = vld [vmem:[#allocation2 + $0x184] sm:$0xff]
      %v4702 = vld [vmem:[#allocation2 + $0x18c] sm:$0xff]
      %v4703 = vld [vmem:[#allocation2 + $0x194] sm:$0xff]
      %v4704 = vld [vmem:[#allocation2 + $0x19c] sm:$0xff]
      %v4705 = vld [vmem:[#allocation2 + $0x1a4] sm:$0xff]
      %v4706 = vld [vmem:[#allocation2 + $0x1ac] sm:$0xff]
      %v4707 = vld [vmem:[#allocation2 + $0x1b4] sm:$0xff]
      %v4708 = vld [vmem:[#allocation2 + $0x1bc] sm:$0xff]
      %v4709 = vld [vmem:[#allocation2 + $0x1c4] sm:$0xff]
      %v4710 = vld [vmem:[#allocation2 + $0x1cc] sm:$0xff]
      %v4711 = vld [vmem:[#allocation2 + $0x1d4] sm:$0xff]
      %v4712 = vld [vmem:[#allocation2 + $0x1dc] sm:$0xff]
      %v4713 = vld [vmem:[#allocation2 + $0x1e4] sm:$0xff]
      %v4714 = vld [vmem:[#allocation2 + $0x1ec] sm:$0xff]
      %v4715 = vld [vmem:[#allocation2 + $0x1f4] sm:$0xff]
      %v4716 = vld [vmem:[#allocation2 + $0x1fc] sm:$0xff]
      %v4717 = vld [vmem:[#allocation2 + $0x204] sm:$0xff]
      %v4718 = vld [vmem:[#allocation2 + $0x20c] sm:$0xff]
      %v4719 = vld [vmem:[#allocation2 + $0x214] sm:$0xff]
      %v4720 = vld [vmem:[#allocation2 + $0x21c] sm:$0xff]
      %v4721 = vld [vmem:[#allocation2 + $0x224] sm:$0xff]
      %v4722 = vld [vmem:[#allocation2 + $0x22c] sm:$0xff]
      %v4723 = vld [vmem:[#allocation2 + $0x234] sm:$0xff]
      %v4724 = vld [vmem:[#allocation2 + $0x23c] sm:$0xff]
      %v4725 = vld [vmem:[#allocation2 + $0x244] sm:$0xff]
      %v4726 = vld [vmem:[#allocation2 + $0x24c] sm:$0xff]
      %v4727 = vld [vmem:[#allocation2 + $0x254] sm:$0xff]
      %v4728 = vld [vmem:[#allocation2 + $0x25c] sm:$0xff]
      %v4729 = vld [vmem:[#allocation2 + $0x264] sm:$0xff]
      %v4730 = vld [vmem:[#allocation2 + $0x26c] sm:$0xff]
      %v4731 = vld [vmem:[#allocation2 + $0x274] sm:$0xff]
      %v4732 = vld [vmem:[#allocation2 + $0x27c] sm:$0xff]
      %v4733 = vld [vmem:[#allocation2 + $0x284] sm:$0xff]
      %v4734 = vld [vmem:[#allocation2 + $0x28c] sm:$0xff]
      %v4735 = vld [vmem:[#allocation2 + $0x294] sm:$0xff]
      %v4736 = vld [vmem:[#allocation2 + $0x29c] sm:$0xff]
      %v4737 = vld [vmem:[#allocation2 + $0x2a4] sm:$0xff]
      %v4738 = vld [vmem:[#allocation2 + $0x2ac] sm:$0xff]
      %v4739 = vld [vmem:[#allocation2 + $0x2b4] sm:$0xff]
      %v4740 = vld [vmem:[#allocation2 + $0x2bc] sm:$0xff]
      %v4741 = vld [vmem:[#allocation2 + $0x2c4] sm:$0xff]
      %v4742 = vld [vmem:[#allocation2 + $0x2cc] sm:$0xff]
      %v4743 = vld [vmem:[#allocation2 + $0x2d4] sm:$0xff]
      %v4744 = vld [vmem:[#allocation2 + $0x2dc] sm:$0xff]
      %v4745 = vld [vmem:[#allocation2 + $0x2e4] sm:$0xff]
      %v4746 = vld [vmem:[#allocation2 + $0x2ec] sm:$0xff]
      %v4747 = vld [vmem:[#allocation2 + $0x2f4] sm:$0xff]
      %v4748 = vld [vmem:[#allocation2 + $0x2fc] sm:$0xff]
      %v4749 = vld [vmem:[#allocation2 + $0x304] sm:$0xff]
      %v4750 = vld [vmem:[#allocation2 + $0x30c] sm:$0xff]
      %v4751 = vld [vmem:[#allocation2 + $0x314] sm:$0xff]
      %v4752 = vld [vmem:[#allocation2 + $0x31c] sm:$0xff]
      %v4753 = vld [vmem:[#allocation2 + $0x324] sm:$0xff]
      %v4754 = vld [vmem:[#allocation2 + $0x32c] sm:$0xff]
      %v4755 = vld [vmem:[#allocation2 + $0x334] sm:$0xff]
      %v4756 = vld [vmem:[#allocation2 + $0x33c] sm:$0xff]
      %v4757 = vld [vmem:[#allocation2 + $0x344] sm:$0xff]
      %v4758 = vld [vmem:[#allocation2 + $0x34c] sm:$0xff]
      %v4759 = vld [vmem:[#allocation2 + $0x354] sm:$0xff]
      %v4760 = vld [vmem:[#allocation2 + $0x35c] sm:$0xff]
      %v4761 = vld [vmem:[#allocation2 + $0x364] sm:$0xff]
      %v4762 = vld [vmem:[#allocation2 + $0x36c] sm:$0xff]
      %v4763 = vld [vmem:[#allocation2 + $0x374] sm:$0xff]
      %v4764 = vld [vmem:[#allocation2 + $0x37c] sm:$0xff]
      %v4765 = vld [vmem:[#allocation2 + $0x384] sm:$0xff]
      %v4766 = vld [vmem:[#allocation2 + $0x38c] sm:$0xff]
      %v4767 = vld [vmem:[#allocation2 + $0x394] sm:$0xff]
      %v4768 = vld [vmem:[#allocation2 + $0x39c] sm:$0xff]
      %v4769 = vld [vmem:[#allocation2 + $0x3a4] sm:$0xff]
      %v4770 = vld [vmem:[#allocation2 + $0x3ac] sm:$0xff]
      %v4771 = vld [vmem:[#allocation2 + $0x3b4] sm:$0xff]
      %v4772 = vld [vmem:[#allocation2 + $0x3bc] sm:$0xff]
      %v4773 = vld [vmem:[#allocation2 + $0x3c4] sm:$0xff]
      %v4774 = vld [vmem:[#allocation2 + $0x3cc] sm:$0xff]
      %v4775 = vld [vmem:[#allocation2 + $0x3d4] sm:$0xff]
      %v4776 = vld [vmem:[#allocation2 + $0x3dc] sm:$0xff]
      %v4777 = vld [vmem:[#allocation2 + $0x3e4] sm:$0xff]
      %v4778 = vld [vmem:[#allocation2 + $0x3ec] sm:$0xff]
      %v4779 = vld [vmem:[#allocation2 + $0x3f4] sm:$0xff]
      %v4780 = vld [vmem:[#allocation2 + $0x3fc] sm:$0xff]
      %s4781 = scalar_lea.vmem %s1, 4
      %v4782 = vld [vmem:[%s4781] sm:$0x1]
      %4784 = vset.pattern.permute.xlu0 0
      %4785 = vperm.xlu0 %4784, %v4653
      %v4786 = vpop.permute.xlu0 %4785
      %4789 = vset.pattern.permute.xlu0 0
      %4790 = vperm.xlu0 %4789, %v4654
      %v4791 = vpop.permute.xlu0 %4790
      %4794 = vset.pattern.permute.xlu0 0
      %4795 = vperm.xlu0 %4794, %v4655
      %v4796 = vpop.permute.xlu0 %4795
      %4799 = vset.pattern.permute.xlu0 0
      %4800 = vperm.xlu0 %4799, %v4656
      %v4801 = vpop.permute.xlu0 %4800
      %4804 = vset.pattern.permute.xlu0 0
      %4805 = vperm.xlu0 %4804, %v4657
      %v4806 = vpop.permute.xlu0 %4805
      %4809 = vset.pattern.permute.xlu0 0
      %4810 = vperm.xlu0 %4809, %v4658
      %v4811 = vpop.permute.xlu0 %4810
      %4814 = vset.pattern.permute.xlu0 0
      %4815 = vperm.xlu0 %4814, %v4659
      %v4816 = vpop.permute.xlu0 %4815
      %4819 = vset.pattern.permute.xlu0 0
      %4820 = vperm.xlu0 %4819, %v4660
      %v4821 = vpop.permute.xlu0 %4820
      %4824 = vset.pattern.permute.xlu0 0
      %4825 = vperm.xlu0 %4824, %v4661
      %v4826 = vpop.permute.xlu0 %4825
      %4829 = vset.pattern.permute.xlu0 0
      %4830 = vperm.xlu0 %4829, %v4662
      %v4831 = vpop.permute.xlu0 %4830
      %4834 = vset.pattern.permute.xlu0 0
      %4835 = vperm.xlu0 %4834, %v4663
      %v4836 = vpop.permute.xlu0 %4835
      %4839 = vset.pattern.permute.xlu0 0
      %4840 = vperm.xlu0 %4839, %v4664
      %v4841 = vpop.permute.xlu0 %4840
      %4844 = vset.pattern.permute.xlu0 0
      %4845 = vperm.xlu0 %4844, %v4665
      %v4846 = vpop.permute.xlu0 %4845
      %4849 = vset.pattern.permute.xlu0 0
      %4850 = vperm.xlu0 %4849, %v4666
      %v4851 = vpop.permute.xlu0 %4850
      %4854 = vset.pattern.permute.xlu0 0
      %4855 = vperm.xlu0 %4854, %v4667
      %v4856 = vpop.permute.xlu0 %4855
      %4859 = vset.pattern.permute.xlu0 0
      %4860 = vperm.xlu0 %4859, %v4668
      %v4861 = vpop.permute.xlu0 %4860
      %4864 = vset.pattern.permute.xlu0 0
      %4865 = vperm.xlu0 %4864, %v4669
      %v4866 = vpop.permute.xlu0 %4865
      %4869 = vset.pattern.permute.xlu0 0
      %4870 = vperm.xlu0 %4869, %v4670
      %v4871 = vpop.permute.xlu0 %4870
      %4874 = vset.pattern.permute.xlu0 0
      %4875 = vperm.xlu0 %4874, %v4671
      %v4876 = vpop.permute.xlu0 %4875
      %4879 = vset.pattern.permute.xlu0 0
      %4880 = vperm.xlu0 %4879, %v4672
      %v4881 = vpop.permute.xlu0 %4880
      %4884 = vset.pattern.permute.xlu0 0
      %4885 = vperm.xlu0 %4884, %v4673
      %v4886 = vpop.permute.xlu0 %4885
      %4889 = vset.pattern.permute.xlu0 0
      %4890 = vperm.xlu0 %4889, %v4674
      %v4891 = vpop.permute.xlu0 %4890
      %4894 = vset.pattern.permute.xlu0 0
      %4895 = vperm.xlu0 %4894, %v4675
      %v4896 = vpop.permute.xlu0 %4895
      %4899 = vset.pattern.permute.xlu0 0
      %4900 = vperm.xlu0 %4899, %v4676
      %v4901 = vpop.permute.xlu0 %4900
      %4904 = vset.pattern.permute.xlu0 0
      %4905 = vperm.xlu0 %4904, %v4677
      %v4906 = vpop.permute.xlu0 %4905
      %4909 = vset.pattern.permute.xlu0 0
      %4910 = vperm.xlu0 %4909, %v4678
      %v4911 = vpop.permute.xlu0 %4910
      %4914 = vset.pattern.permute.xlu0 0
      %4915 = vperm.xlu0 %4914, %v4679
      %v4916 = vpop.permute.xlu0 %4915
      %4919 = vset.pattern.permute.xlu0 0
      %4920 = vperm.xlu0 %4919, %v4680
      %v4921 = vpop.permute.xlu0 %4920
      %4924 = vset.pattern.permute.xlu0 0
      %4925 = vperm.xlu0 %4924, %v4681
      %v4926 = vpop.permute.xlu0 %4925
      %4929 = vset.pattern.permute.xlu0 0
      %4930 = vperm.xlu0 %4929, %v4682
      %v4931 = vpop.permute.xlu0 %4930
      %4934 = vset.pattern.permute.xlu0 0
      %4935 = vperm.xlu0 %4934, %v4683
      %v4936 = vpop.permute.xlu0 %4935
      %4939 = vset.pattern.permute.xlu0 0
      %4940 = vperm.xlu0 %4939, %v4684
      %v4941 = vpop.permute.xlu0 %4940
      %4944 = vset.pattern.permute.xlu0 0
      %4945 = vperm.xlu0 %4944, %v4685
      %v4946 = vpop.permute.xlu0 %4945
      %4949 = vset.pattern.permute.xlu0 0
      %4950 = vperm.xlu0 %4949, %v4686
      %v4951 = vpop.permute.xlu0 %4950
      %4954 = vset.pattern.permute.xlu0 0
      %4955 = vperm.xlu0 %4954, %v4687
      %v4956 = vpop.permute.xlu0 %4955
      %4959 = vset.pattern.permute.xlu0 0
      %4960 = vperm.xlu0 %4959, %v4688
      %v4961 = vpop.permute.xlu0 %4960
      %4964 = vset.pattern.permute.xlu0 0
      %4965 = vperm.xlu0 %4964, %v4689
      %v4966 = vpop.permute.xlu0 %4965
      %4969 = vset.pattern.permute.xlu0 0
      %4970 = vperm.xlu0 %4969, %v4690
      %v4971 = vpop.permute.xlu0 %4970
      %4974 = vset.pattern.permute.xlu0 0
      %4975 = vperm.xlu0 %4974, %v4691
      %v4976 = vpop.permute.xlu0 %4975
      %4979 = vset.pattern.permute.xlu0 0
      %4980 = vperm.xlu0 %4979, %v4692
      %v4981 = vpop.permute.xlu0 %4980
      %4984 = vset.pattern.permute.xlu0 0
      %4985 = vperm.xlu0 %4984, %v4693
      %v4986 = vpop.permute.xlu0 %4985
      %4989 = vset.pattern.permute.xlu0 0
      %4990 = vperm.xlu0 %4989, %v4694
      %v4991 = vpop.permute.xlu0 %4990
      %4994 = vset.pattern.permute.xlu0 0
      %4995 = vperm.xlu0 %4994, %v4695
      %v4996 = vpop.permute.xlu0 %4995
      %4999 = vset.pattern.permute.xlu0 0
      %5000 = vperm.xlu0 %4999, %v4696
      %v5001 = vpop.permute.xlu0 %5000
      %5004 = vset.pattern.permute.xlu0 0
      %5005 = vperm.xlu0 %5004, %v4697
      %v5006 = vpop.permute.xlu0 %5005
      %5009 = vset.pattern.permute.xlu0 0
      %5010 = vperm.xlu0 %5009, %v4698
      %v5011 = vpop.permute.xlu0 %5010
      %5014 = vset.pattern.permute.xlu0 0
      %5015 = vperm.xlu0 %5014, %v4699
      %v5016 = vpop.permute.xlu0 %5015
      %5019 = vset.pattern.permute.xlu0 0
      %5020 = vperm.xlu0 %5019, %v4700
      %v5021 = vpop.permute.xlu0 %5020
      %5024 = vset.pattern.permute.xlu0 0
      %5025 = vperm.xlu0 %5024, %v4701
      %v5026 = vpop.permute.xlu0 %5025
      %5029 = vset.pattern.permute.xlu0 0
      %5030 = vperm.xlu0 %5029, %v4702
      %v5031 = vpop.permute.xlu0 %5030
      %5034 = vset.pattern.permute.xlu0 0
      %5035 = vperm.xlu0 %5034, %v4703
      %v5036 = vpop.permute.xlu0 %5035
      %5039 = vset.pattern.permute.xlu0 0
      %5040 = vperm.xlu0 %5039, %v4704
      %v5041 = vpop.permute.xlu0 %5040
      %5044 = vset.pattern.permute.xlu0 0
      %5045 = vperm.xlu0 %5044, %v4705
      %v5046 = vpop.permute.xlu0 %5045
      %5049 = vset.pattern.permute.xlu0 0
      %5050 = vperm.xlu0 %5049, %v4706
      %v5051 = vpop.permute.xlu0 %5050
      %5054 = vset.pattern.permute.xlu0 0
      %5055 = vperm.xlu0 %5054, %v4707
      %v5056 = vpop.permute.xlu0 %5055
      %5059 = vset.pattern.permute.xlu0 0
      %5060 = vperm.xlu0 %5059, %v4708
      %v5061 = vpop.permute.xlu0 %5060
      %5064 = vset.pattern.permute.xlu0 0
      %5065 = vperm.xlu0 %5064, %v4709
      %v5066 = vpop.permute.xlu0 %5065
      %5069 = vset.pattern.permute.xlu0 0
      %5070 = vperm.xlu0 %5069, %v4710
      %v5071 = vpop.permute.xlu0 %5070
      %5074 = vset.pattern.permute.xlu0 0
      %5075 = vperm.xlu0 %5074, %v4711
      %v5076 = vpop.permute.xlu0 %5075
      %5079 = vset.pattern.permute.xlu0 0
      %5080 = vperm.xlu0 %5079, %v4712
      %v5081 = vpop.permute.xlu0 %5080
      %5084 = vset.pattern.permute.xlu0 0
      %5085 = vperm.xlu0 %5084, %v4713
      %v5086 = vpop.permute.xlu0 %5085
      %5089 = vset.pattern.permute.xlu0 0
      %5090 = vperm.xlu0 %5089, %v4714
      %v5091 = vpop.permute.xlu0 %5090
      %5094 = vset.pattern.permute.xlu0 0
      %5095 = vperm.xlu0 %5094, %v4715
      %v5096 = vpop.permute.xlu0 %5095
      %5099 = vset.pattern.permute.xlu0 0
      %5100 = vperm.xlu0 %5099, %v4716
      %v5101 = vpop.permute.xlu0 %5100
      %5104 = vset.pattern.permute.xlu0 0
      %5105 = vperm.xlu0 %5104, %v4717
      %v5106 = vpop.permute.xlu0 %5105
      %5109 = vset.pattern.permute.xlu0 0
      %5110 = vperm.xlu0 %5109, %v4718
      %v5111 = vpop.permute.xlu0 %5110
      %5114 = vset.pattern.permute.xlu0 0
      %5115 = vperm.xlu0 %5114, %v4719
      %v5116 = vpop.permute.xlu0 %5115
      %5119 = vset.pattern.permute.xlu0 0
      %5120 = vperm.xlu0 %5119, %v4720
      %v5121 = vpop.permute.xlu0 %5120
      %5124 = vset.pattern.permute.xlu0 0
      %5125 = vperm.xlu0 %5124, %v4721
      %v5126 = vpop.permute.xlu0 %5125
      %5129 = vset.pattern.permute.xlu0 0
      %5130 = vperm.xlu0 %5129, %v4722
      %v5131 = vpop.permute.xlu0 %5130
      %5134 = vset.pattern.permute.xlu0 0
      %5135 = vperm.xlu0 %5134, %v4723
      %v5136 = vpop.permute.xlu0 %5135
      %5139 = vset.pattern.permute.xlu0 0
      %5140 = vperm.xlu0 %5139, %v4724
      %v5141 = vpop.permute.xlu0 %5140
      %5144 = vset.pattern.permute.xlu0 0
      %5145 = vperm.xlu0 %5144, %v4725
      %v5146 = vpop.permute.xlu0 %5145
      %5149 = vset.pattern.permute.xlu0 0
      %5150 = vperm.xlu0 %5149, %v4726
      %v5151 = vpop.permute.xlu0 %5150
      %5154 = vset.pattern.permute.xlu0 0
      %5155 = vperm.xlu0 %5154, %v4727
      %v5156 = vpop.permute.xlu0 %5155
      %5159 = vset.pattern.permute.xlu0 0
      %5160 = vperm.xlu0 %5159, %v4728
      %v5161 = vpop.permute.xlu0 %5160
      %5164 = vset.pattern.permute.xlu0 0
      %5165 = vperm.xlu0 %5164, %v4729
      %v5166 = vpop.permute.xlu0 %5165
      %5169 = vset.pattern.permute.xlu0 0
      %5170 = vperm.xlu0 %5169, %v4730
      %v5171 = vpop.permute.xlu0 %5170
      %5174 = vset.pattern.permute.xlu0 0
      %5175 = vperm.xlu0 %5174, %v4731
      %v5176 = vpop.permute.xlu0 %5175
      %5179 = vset.pattern.permute.xlu0 0
      %5180 = vperm.xlu0 %5179, %v4732
      %v5181 = vpop.permute.xlu0 %5180
      %5184 = vset.pattern.permute.xlu0 0
      %5185 = vperm.xlu0 %5184, %v4733
      %v5186 = vpop.permute.xlu0 %5185
      %5189 = vset.pattern.permute.xlu0 0
      %5190 = vperm.xlu0 %5189, %v4734
      %v5191 = vpop.permute.xlu0 %5190
      %5194 = vset.pattern.permute.xlu0 0
      %5195 = vperm.xlu0 %5194, %v4735
      %v5196 = vpop.permute.xlu0 %5195
      %5199 = vset.pattern.permute.xlu0 0
      %5200 = vperm.xlu0 %5199, %v4736
      %v5201 = vpop.permute.xlu0 %5200
      %5204 = vset.pattern.permute.xlu0 0
      %5205 = vperm.xlu0 %5204, %v4737
      %v5206 = vpop.permute.xlu0 %5205
      %5209 = vset.pattern.permute.xlu0 0
      %5210 = vperm.xlu0 %5209, %v4738
      %v5211 = vpop.permute.xlu0 %5210
      %5214 = vset.pattern.permute.xlu0 0
      %5215 = vperm.xlu0 %5214, %v4739
      %v5216 = vpop.permute.xlu0 %5215
      %5219 = vset.pattern.permute.xlu0 0
      %5220 = vperm.xlu0 %5219, %v4740
      %v5221 = vpop.permute.xlu0 %5220
      %5224 = vset.pattern.permute.xlu0 0
      %5225 = vperm.xlu0 %5224, %v4741
      %v5226 = vpop.permute.xlu0 %5225
      %5229 = vset.pattern.permute.xlu0 0
      %5230 = vperm.xlu0 %5229, %v4742
      %v5231 = vpop.permute.xlu0 %5230
      %5234 = vset.pattern.permute.xlu0 0
      %5235 = vperm.xlu0 %5234, %v4743
      %v5236 = vpop.permute.xlu0 %5235
      %5239 = vset.pattern.permute.xlu0 0
      %5240 = vperm.xlu0 %5239, %v4744
      %v5241 = vpop.permute.xlu0 %5240
      %5244 = vset.pattern.permute.xlu0 0
      %5245 = vperm.xlu0 %5244, %v4745
      %v5246 = vpop.permute.xlu0 %5245
      %5249 = vset.pattern.permute.xlu0 0
      %5250 = vperm.xlu0 %5249, %v4746
      %v5251 = vpop.permute.xlu0 %5250
      %5254 = vset.pattern.permute.xlu0 0
      %5255 = vperm.xlu0 %5254, %v4747
      %v5256 = vpop.permute.xlu0 %5255
      %5259 = vset.pattern.permute.xlu0 0
      %5260 = vperm.xlu0 %5259, %v4748
      %v5261 = vpop.permute.xlu0 %5260
      %5264 = vset.pattern.permute.xlu0 0
      %5265 = vperm.xlu0 %5264, %v4749
      %v5266 = vpop.permute.xlu0 %5265
      %5269 = vset.pattern.permute.xlu0 0
      %5270 = vperm.xlu0 %5269, %v4750
      %v5271 = vpop.permute.xlu0 %5270
      %5274 = vset.pattern.permute.xlu0 0
      %5275 = vperm.xlu0 %5274, %v4751
      %v5276 = vpop.permute.xlu0 %5275
      %5279 = vset.pattern.permute.xlu0 0
      %5280 = vperm.xlu0 %5279, %v4752
      %v5281 = vpop.permute.xlu0 %5280
      %5284 = vset.pattern.permute.xlu0 0
      %5285 = vperm.xlu0 %5284, %v4753
      %v5286 = vpop.permute.xlu0 %5285
      %5289 = vset.pattern.permute.xlu0 0
      %5290 = vperm.xlu0 %5289, %v4754
      %v5291 = vpop.permute.xlu0 %5290
      %5294 = vset.pattern.permute.xlu0 0
      %5295 = vperm.xlu0 %5294, %v4755
      %v5296 = vpop.permute.xlu0 %5295
      %5299 = vset.pattern.permute.xlu0 0
      %5300 = vperm.xlu0 %5299, %v4756
      %v5301 = vpop.permute.xlu0 %5300
      %5304 = vset.pattern.permute.xlu0 0
      %5305 = vperm.xlu0 %5304, %v4757
      %v5306 = vpop.permute.xlu0 %5305
      %5309 = vset.pattern.permute.xlu0 0
      %5310 = vperm.xlu0 %5309, %v4758
      %v5311 = vpop.permute.xlu0 %5310
      %5314 = vset.pattern.permute.xlu0 0
      %5315 = vperm.xlu0 %5314, %v4759
      %v5316 = vpop.permute.xlu0 %5315
      %5319 = vset.pattern.permute.xlu0 0
      %5320 = vperm.xlu0 %5319, %v4760
      %v5321 = vpop.permute.xlu0 %5320
      %5324 = vset.pattern.permute.xlu0 0
      %5325 = vperm.xlu0 %5324, %v4761
      %v5326 = vpop.permute.xlu0 %5325
      %5329 = vset.pattern.permute.xlu0 0
      %5330 = vperm.xlu0 %5329, %v4762
      %v5331 = vpop.permute.xlu0 %5330
      %5334 = vset.pattern.permute.xlu0 0
      %5335 = vperm.xlu0 %5334, %v4763
      %v5336 = vpop.permute.xlu0 %5335
      %5339 = vset.pattern.permute.xlu0 0
      %5340 = vperm.xlu0 %5339, %v4764
      %v5341 = vpop.permute.xlu0 %5340
      %5344 = vset.pattern.permute.xlu0 0
      %5345 = vperm.xlu0 %5344, %v4765
      %v5346 = vpop.permute.xlu0 %5345
      %5349 = vset.pattern.permute.xlu0 0
      %5350 = vperm.xlu0 %5349, %v4766
      %v5351 = vpop.permute.xlu0 %5350
      %5354 = vset.pattern.permute.xlu0 0
      %5355 = vperm.xlu0 %5354, %v4767
      %v5356 = vpop.permute.xlu0 %5355
      %5359 = vset.pattern.permute.xlu0 0
      %5360 = vperm.xlu0 %5359, %v4768
      %v5361 = vpop.permute.xlu0 %5360
      %5364 = vset.pattern.permute.xlu0 0
      %5365 = vperm.xlu0 %5364, %v4769
      %v5366 = vpop.permute.xlu0 %5365
      %5369 = vset.pattern.permute.xlu0 0
      %5370 = vperm.xlu0 %5369, %v4770
      %v5371 = vpop.permute.xlu0 %5370
      %5374 = vset.pattern.permute.xlu0 0
      %5375 = vperm.xlu0 %5374, %v4771
      %v5376 = vpop.permute.xlu0 %5375
      %5379 = vset.pattern.permute.xlu0 0
      %5380 = vperm.xlu0 %5379, %v4772
      %v5381 = vpop.permute.xlu0 %5380
      %5384 = vset.pattern.permute.xlu0 0
      %5385 = vperm.xlu0 %5384, %v4773
      %v5386 = vpop.permute.xlu0 %5385
      %5389 = vset.pattern.permute.xlu0 0
      %5390 = vperm.xlu0 %5389, %v4774
      %v5391 = vpop.permute.xlu0 %5390
      %5394 = vset.pattern.permute.xlu0 0
      %5395 = vperm.xlu0 %5394, %v4775
      %v5396 = vpop.permute.xlu0 %5395
      %5399 = vset.pattern.permute.xlu0 0
      %5400 = vperm.xlu0 %5399, %v4776
      %v5401 = vpop.permute.xlu0 %5400
      %5404 = vset.pattern.permute.xlu0 0
      %5405 = vperm.xlu0 %5404, %v4777
      %v5406 = vpop.permute.xlu0 %5405
      %5409 = vset.pattern.permute.xlu0 0
      %5410 = vperm.xlu0 %5409, %v4778
      %v5411 = vpop.permute.xlu0 %5410
      %5414 = vset.pattern.permute.xlu0 0
      %5415 = vperm.xlu0 %5414, %v4779
      %v5416 = vpop.permute.xlu0 %5415
      %5419 = vset.pattern.permute.xlu0 0
      %5420 = vperm.xlu0 %5419, %v4780
      %v5421 = vpop.permute.xlu0 %5420
      %v5424 = vperm.slane %v4782, 0
      %v5426 = vmul.f32 %v4786, %v5424
      %v5427 = vmul.f32 %v4791, %v5424
      %v5428 = vmul.f32 %v4796, %v5424
      %v5429 = vmul.f32 %v4801, %v5424
      %v5430 = vmul.f32 %v4806, %v5424
      %v5431 = vmul.f32 %v4811, %v5424
      %v5432 = vmul.f32 %v4816, %v5424
      %v5433 = vmul.f32 %v4821, %v5424
      %v5434 = vmul.f32 %v4826, %v5424
      %v5435 = vmul.f32 %v4831, %v5424
      %v5436 = vmul.f32 %v4836, %v5424
      %v5437 = vmul.f32 %v4841, %v5424
      %v5438 = vmul.f32 %v4846, %v5424
      %v5439 = vmul.f32 %v4851, %v5424
      %v5440 = vmul.f32 %v4856, %v5424
      %v5441 = vmul.f32 %v4861, %v5424
      %v5442 = vmul.f32 %v4866, %v5424
      %v5443 = vmul.f32 %v4871, %v5424
      %v5444 = vmul.f32 %v4876, %v5424
      %v5445 = vmul.f32 %v4881, %v5424
      %v5446 = vmul.f32 %v4886, %v5424
      %v5447 = vmul.f32 %v4891, %v5424
      %v5448 = vmul.f32 %v4896, %v5424
      %v5449 = vmul.f32 %v4901, %v5424
      %v5450 = vmul.f32 %v4906, %v5424
      %v5451 = vmul.f32 %v4911, %v5424
      %v5452 = vmul.f32 %v4916, %v5424
      %v5453 = vmul.f32 %v4921, %v5424
      %v5454 = vmul.f32 %v4926, %v5424
      %v5455 = vmul.f32 %v4931, %v5424
      %v5456 = vmul.f32 %v4936, %v5424
      %v5457 = vmul.f32 %v4941, %v5424
      %v5458 = vmul.f32 %v4946, %v5424
      %v5459 = vmul.f32 %v4951, %v5424
      %v5460 = vmul.f32 %v4956, %v5424
      %v5461 = vmul.f32 %v4961, %v5424
      %v5462 = vmul.f32 %v4966, %v5424
      %v5463 = vmul.f32 %v4971, %v5424
      %v5464 = vmul.f32 %v4976, %v5424
      %v5465 = vmul.f32 %v4981, %v5424
      %v5466 = vmul.f32 %v4986, %v5424
      %v5467 = vmul.f32 %v4991, %v5424
      %v5468 = vmul.f32 %v4996, %v5424
      %v5469 = vmul.f32 %v5001, %v5424
      %v5470 = vmul.f32 %v5006, %v5424
      %v5471 = vmul.f32 %v5011, %v5424
      %v5472 = vmul.f32 %v5016, %v5424
      %v5473 = vmul.f32 %v5021, %v5424
      %v5474 = vmul.f32 %v5026, %v5424
      %v5475 = vmul.f32 %v5031, %v5424
      %v5476 = vmul.f32 %v5036, %v5424
      %v5477 = vmul.f32 %v5041, %v5424
      %v5478 = vmul.f32 %v5046, %v5424
      %v5479 = vmul.f32 %v5051, %v5424
      %v5480 = vmul.f32 %v5056, %v5424
      %v5481 = vmul.f32 %v5061, %v5424
      %v5482 = vmul.f32 %v5066, %v5424
      %v5483 = vmul.f32 %v5071, %v5424
      %v5484 = vmul.f32 %v5076, %v5424
      %v5485 = vmul.f32 %v5081, %v5424
      %v5486 = vmul.f32 %v5086, %v5424
      %v5487 = vmul.f32 %v5091, %v5424
      %v5488 = vmul.f32 %v5096, %v5424
      %v5489 = vmul.f32 %v5101, %v5424
      %v5490 = vmul.f32 %v5106, %v5424
      %v5491 = vmul.f32 %v5111, %v5424
      %v5492 = vmul.f32 %v5116, %v5424
      %v5493 = vmul.f32 %v5121, %v5424
      %v5494 = vmul.f32 %v5126, %v5424
      %v5495 = vmul.f32 %v5131, %v5424
      %v5496 = vmul.f32 %v5136, %v5424
      %v5497 = vmul.f32 %v5141, %v5424
      %v5498 = vmul.f32 %v5146, %v5424
      %v5499 = vmul.f32 %v5151, %v5424
      %v5500 = vmul.f32 %v5156, %v5424
      %v5501 = vmul.f32 %v5161, %v5424
      %v5502 = vmul.f32 %v5166, %v5424
      %v5503 = vmul.f32 %v5171, %v5424
      %v5504 = vmul.f32 %v5176, %v5424
      %v5505 = vmul.f32 %v5181, %v5424
      %v5506 = vmul.f32 %v5186, %v5424
      %v5507 = vmul.f32 %v5191, %v5424
      %v5508 = vmul.f32 %v5196, %v5424
      %v5509 = vmul.f32 %v5201, %v5424
      %v5510 = vmul.f32 %v5206, %v5424
      %v5511 = vmul.f32 %v5211, %v5424
      %v5512 = vmul.f32 %v5216, %v5424
      %v5513 = vmul.f32 %v5221, %v5424
      %v5514 = vmul.f32 %v5226, %v5424
      %v5515 = vmul.f32 %v5231, %v5424
      %v5516 = vmul.f32 %v5236, %v5424
      %v5517 = vmul.f32 %v5241, %v5424
      %v5518 = vmul.f32 %v5246, %v5424
      %v5519 = vmul.f32 %v5251, %v5424
      %v5520 = vmul.f32 %v5256, %v5424
      %v5521 = vmul.f32 %v5261, %v5424
      %v5522 = vmul.f32 %v5266, %v5424
      %v5523 = vmul.f32 %v5271, %v5424
      %v5524 = vmul.f32 %v5276, %v5424
      %v5525 = vmul.f32 %v5281, %v5424
      %v5526 = vmul.f32 %v5286, %v5424
      %v5527 = vmul.f32 %v5291, %v5424
      %v5528 = vmul.f32 %v5296, %v5424
      %v5529 = vmul.f32 %v5301, %v5424
      %v5530 = vmul.f32 %v5306, %v5424
      %v5531 = vmul.f32 %v5311, %v5424
      %v5532 = vmul.f32 %v5316, %v5424
      %v5533 = vmul.f32 %v5321, %v5424
      %v5534 = vmul.f32 %v5326, %v5424
      %v5535 = vmul.f32 %v5331, %v5424
      %v5536 = vmul.f32 %v5336, %v5424
      %v5537 = vmul.f32 %v5341, %v5424
      %v5538 = vmul.f32 %v5346, %v5424
      %v5539 = vmul.f32 %v5351, %v5424
      %v5540 = vmul.f32 %v5356, %v5424
      %v5541 = vmul.f32 %v5361, %v5424
      %v5542 = vmul.f32 %v5366, %v5424
      %v5543 = vmul.f32 %v5371, %v5424
      %v5544 = vmul.f32 %v5376, %v5424
      %v5545 = vmul.f32 %v5381, %v5424
      %v5546 = vmul.f32 %v5386, %v5424
      %v5547 = vmul.f32 %v5391, %v5424
      %v5548 = vmul.f32 %v5396, %v5424
      %v5549 = vmul.f32 %v5401, %v5424
      %v5550 = vmul.f32 %v5406, %v5424
      %v5551 = vmul.f32 %v5411, %v5424
      %v5552 = vmul.f32 %v5416, %v5424
      %v5553 = vmul.f32 %v5421, %v5424
      %v5554 = vadd.f32 %v4525, %v5426
      %v5555 = vadd.f32 %v4526, %v5427
      %v5556 = vadd.f32 %v4527, %v5428
      %v5557 = vadd.f32 %v4528, %v5429
      %v5558 = vadd.f32 %v4529, %v5430
      %v5559 = vadd.f32 %v4530, %v5431
      %v5560 = vadd.f32 %v4531, %v5432
      %v5561 = vadd.f32 %v4532, %v5433
      %v5562 = vadd.f32 %v4533, %v5434
      %v5563 = vadd.f32 %v4534, %v5435
      %v5564 = vadd.f32 %v4535, %v5436
      %v5565 = vadd.f32 %v4536, %v5437
      %v5566 = vadd.f32 %v4537, %v5438
      %v5567 = vadd.f32 %v4538, %v5439
      %v5568 = vadd.f32 %v4539, %v5440
      %v5569 = vadd.f32 %v4540, %v5441
      %v5570 = vadd.f32 %v4541, %v5442
      %v5571 = vadd.f32 %v4542, %v5443
      %v5572 = vadd.f32 %v4543, %v5444
      %v5573 = vadd.f32 %v4544, %v5445
      %v5574 = vadd.f32 %v4545, %v5446
      %v5575 = vadd.f32 %v4546, %v5447
      %v5576 = vadd.f32 %v4547, %v5448
      %v5577 = vadd.f32 %v4548, %v5449
      %v5578 = vadd.f32 %v4549, %v5450
      %v5579 = vadd.f32 %v4550, %v5451
      %v5580 = vadd.f32 %v4551, %v5452
      %v5581 = vadd.f32 %v4552, %v5453
      %v5582 = vadd.f32 %v4553, %v5454
      %v5583 = vadd.f32 %v4554, %v5455
      %v5584 = vadd.f32 %v4555, %v5456
      %v5585 = vadd.f32 %v4556, %v5457
      %v5586 = vadd.f32 %v4557, %v5458
      %v5587 = vadd.f32 %v4558, %v5459
      %v5588 = vadd.f32 %v4559, %v5460
      %v5589 = vadd.f32 %v4560, %v5461
      %v5590 = vadd.f32 %v4561, %v5462
      %v5591 = vadd.f32 %v4562, %v5463
      %v5592 = vadd.f32 %v4563, %v5464
      %v5593 = vadd.f32 %v4564, %v5465
      %v5594 = vadd.f32 %v4565, %v5466
      %v5595 = vadd.f32 %v4566, %v5467
      %v5596 = vadd.f32 %v4567, %v5468
      %v5597 = vadd.f32 %v4568, %v5469
      %v5598 = vadd.f32 %v4569, %v5470
      %v5599 = vadd.f32 %v4570, %v5471
      %v5600 = vadd.f32 %v4571, %v5472
      %v5601 = vadd.f32 %v4572, %v5473
      %v5602 = vadd.f32 %v4573, %v5474
      %v5603 = vadd.f32 %v4574, %v5475
      %v5604 = vadd.f32 %v4575, %v5476
      %v5605 = vadd.f32 %v4576, %v5477
      %v5606 = vadd.f32 %v4577, %v5478
      %v5607 = vadd.f32 %v4578, %v5479
      %v5608 = vadd.f32 %v4579, %v5480
      %v5609 = vadd.f32 %v4580, %v5481
      %v5610 = vadd.f32 %v4581, %v5482
      %v5611 = vadd.f32 %v4582, %v5483
      %v5612 = vadd.f32 %v4583, %v5484
      %v5613 = vadd.f32 %v4584, %v5485
      %v5614 = vadd.f32 %v4585, %v5486
      %v5615 = vadd.f32 %v4586, %v5487
      %v5616 = vadd.f32 %v4587, %v5488
      %v5617 = vadd.f32 %v4588, %v5489
      %v5618 = vadd.f32 %v4589, %v5490
      %v5619 = vadd.f32 %v4590, %v5491
      %v5620 = vadd.f32 %v4591, %v5492
      %v5621 = vadd.f32 %v4592, %v5493
      %v5622 = vadd.f32 %v4593, %v5494
      %v5623 = vadd.f32 %v4594, %v5495
      %v5624 = vadd.f32 %v4595, %v5496
      %v5625 = vadd.f32 %v4596, %v5497
      %v5626 = vadd.f32 %v4597, %v5498
      %v5627 = vadd.f32 %v4598, %v5499
      %v5628 = vadd.f32 %v4599, %v5500
      %v5629 = vadd.f32 %v4600, %v5501
      %v5630 = vadd.f32 %v4601, %v5502
      %v5631 = vadd.f32 %v4602, %v5503
      %v5632 = vadd.f32 %v4603, %v5504
      %v5633 = vadd.f32 %v4604, %v5505
      %v5634 = vadd.f32 %v4605, %v5506
      %v5635 = vadd.f32 %v4606, %v5507
      %v5636 = vadd.f32 %v4607, %v5508
      %v5637 = vadd.f32 %v4608, %v5509
      %v5638 = vadd.f32 %v4609, %v5510
      %v5639 = vadd.f32 %v4610, %v5511
      %v5640 = vadd.f32 %v4611, %v5512
      %v5641 = vadd.f32 %v4612, %v5513
      %v5642 = vadd.f32 %v4613, %v5514
      %v5643 = vadd.f32 %v4614, %v5515
      %v5644 = vadd.f32 %v4615, %v5516
      %v5645 = vadd.f32 %v4616, %v5517
      %v5646 = vadd.f32 %v4617, %v5518
      %v5647 = vadd.f32 %v4618, %v5519
      %v5648 = vadd.f32 %v4619, %v5520
      %v5649 = vadd.f32 %v4620, %v5521
      %v5650 = vadd.f32 %v4621, %v5522
      %v5651 = vadd.f32 %v4622, %v5523
      %v5652 = vadd.f32 %v4623, %v5524
      %v5653 = vadd.f32 %v4624, %v5525
      %v5654 = vadd.f32 %v4625, %v5526
      %v5655 = vadd.f32 %v4626, %v5527
      %v5656 = vadd.f32 %v4627, %v5528
      %v5657 = vadd.f32 %v4628, %v5529
      %v5658 = vadd.f32 %v4629, %v5530
      %v5659 = vadd.f32 %v4630, %v5531
      %v5660 = vadd.f32 %v4631, %v5532
      %v5661 = vadd.f32 %v4632, %v5533
      %v5662 = vadd.f32 %v4633, %v5534
      %v5663 = vadd.f32 %v4634, %v5535
      %v5664 = vadd.f32 %v4635, %v5536
      %v5665 = vadd.f32 %v4636, %v5537
      %v5666 = vadd.f32 %v4637, %v5538
      %v5667 = vadd.f32 %v4638, %v5539
      %v5668 = vadd.f32 %v4639, %v5540
      %v5669 = vadd.f32 %v4640, %v5541
      %v5670 = vadd.f32 %v4641, %v5542
      %v5671 = vadd.f32 %v4642, %v5543
      %v5672 = vadd.f32 %v4643, %v5544
      %v5673 = vadd.f32 %v4644, %v5545
      %v5674 = vadd.f32 %v4645, %v5546
      %v5675 = vadd.f32 %v4646, %v5547
      %v5676 = vadd.f32 %v4647, %v5548
      %v5677 = vadd.f32 %v4648, %v5549
      %v5678 = vadd.f32 %v4649, %v5550
      %v5679 = vadd.f32 %v4650, %v5551
      %v5680 = vadd.f32 %v4651, %v5552
      %v5681 = vadd.f32 %v4652, %v5553
      %v5682 = vld [vmem:[%s2] sm:$0x1]
      %v5684 = vperm.slane %v5682, 0
      %v5686 = vadd.f32 %v5554, %v5684
      %v5687 = vadd.f32 %v5555, %v5684
      %v5688 = vadd.f32 %v5556, %v5684
      %v5689 = vadd.f32 %v5557, %v5684
      %v5690 = vadd.f32 %v5558, %v5684
      %v5691 = vadd.f32 %v5559, %v5684
      %v5692 = vadd.f32 %v5560, %v5684
      %v5693 = vadd.f32 %v5561, %v5684
      %v5694 = vadd.f32 %v5562, %v5684
      %v5695 = vadd.f32 %v5563, %v5684
      %v5696 = vadd.f32 %v5564, %v5684
      %v5697 = vadd.f32 %v5565, %v5684
      %v5698 = vadd.f32 %v5566, %v5684
      %v5699 = vadd.f32 %v5567, %v5684
      %v5700 = vadd.f32 %v5568, %v5684
      %v5701 = vadd.f32 %v5569, %v5684
      %v5702 = vadd.f32 %v5570, %v5684
      %v5703 = vadd.f32 %v5571, %v5684
      %v5704 = vadd.f32 %v5572, %v5684
      %v5705 = vadd.f32 %v5573, %v5684
      %v5706 = vadd.f32 %v5574, %v5684
      %v5707 = vadd.f32 %v5575, %v5684
      %v5708 = vadd.f32 %v5576, %v5684
      %v5709 = vadd.f32 %v5577, %v5684
      %v5710 = vadd.f32 %v5578, %v5684
      %v5711 = vadd.f32 %v5579, %v5684
      %v5712 = vadd.f32 %v5580, %v5684
      %v5713 = vadd.f32 %v5581, %v5684
      %v5714 = vadd.f32 %v5582, %v5684
      %v5715 = vadd.f32 %v5583, %v5684
      %v5716 = vadd.f32 %v5584, %v5684
      %v5717 = vadd.f32 %v5585, %v5684
      %v5718 = vadd.f32 %v5586, %v5684
      %v5719 = vadd.f32 %v5587, %v5684
      %v5720 = vadd.f32 %v5588, %v5684
      %v5721 = vadd.f32 %v5589, %v5684
      %v5722 = vadd.f32 %v5590, %v5684
      %v5723 = vadd.f32 %v5591, %v5684
      %v5724 = vadd.f32 %v5592, %v5684
      %v5725 = vadd.f32 %v5593, %v5684
      %v5726 = vadd.f32 %v5594, %v5684
      %v5727 = vadd.f32 %v5595, %v5684
      %v5728 = vadd.f32 %v5596, %v5684
      %v5729 = vadd.f32 %v5597, %v5684
      %v5730 = vadd.f32 %v5598, %v5684
      %v5731 = vadd.f32 %v5599, %v5684
      %v5732 = vadd.f32 %v5600, %v5684
      %v5733 = vadd.f32 %v5601, %v5684
      %v5734 = vadd.f32 %v5602, %v5684
      %v5735 = vadd.f32 %v5603, %v5684
      %v5736 = vadd.f32 %v5604, %v5684
      %v5737 = vadd.f32 %v5605, %v5684
      %v5738 = vadd.f32 %v5606, %v5684
      %v5739 = vadd.f32 %v5607, %v5684
      %v5740 = vadd.f32 %v5608, %v5684
      %v5741 = vadd.f32 %v5609, %v5684
      %v5742 = vadd.f32 %v5610, %v5684
      %v5743 = vadd.f32 %v5611, %v5684
      %v5744 = vadd.f32 %v5612, %v5684
      %v5745 = vadd.f32 %v5613, %v5684
      %v5746 = vadd.f32 %v5614, %v5684
      %v5747 = vadd.f32 %v5615, %v5684
      %v5748 = vadd.f32 %v5616, %v5684
      %v5749 = vadd.f32 %v5617, %v5684
      %v5750 = vadd.f32 %v5618, %v5684
      %v5751 = vadd.f32 %v5619, %v5684
      %v5752 = vadd.f32 %v5620, %v5684
      %v5753 = vadd.f32 %v5621, %v5684
      %v5754 = vadd.f32 %v5622, %v5684
      %v5755 = vadd.f32 %v5623, %v5684
      %v5756 = vadd.f32 %v5624, %v5684
      %v5757 = vadd.f32 %v5625, %v5684
      %v5758 = vadd.f32 %v5626, %v5684
      %v5759 = vadd.f32 %v5627, %v5684
      %v5760 = vadd.f32 %v5628, %v5684
      %v5761 = vadd.f32 %v5629, %v5684
      %v5762 = vadd.f32 %v5630, %v5684
      %v5763 = vadd.f32 %v5631, %v5684
      %v5764 = vadd.f32 %v5632, %v5684
      %v5765 = vadd.f32 %v5633, %v5684
      %v5766 = vadd.f32 %v5634, %v5684
      %v5767 = vadd.f32 %v5635, %v5684
      %v5768 = vadd.f32 %v5636, %v5684
      %v5769 = vadd.f32 %v5637, %v5684
      %v5770 = vadd.f32 %v5638, %v5684
      %v5771 = vadd.f32 %v5639, %v5684
      %v5772 = vadd.f32 %v5640, %v5684
      %v5773 = vadd.f32 %v5641, %v5684
      %v5774 = vadd.f32 %v5642, %v5684
      %v5775 = vadd.f32 %v5643, %v5684
      %v5776 = vadd.f32 %v5644, %v5684
      %v5777 = vadd.f32 %v5645, %v5684
      %v5778 = vadd.f32 %v5646, %v5684
      %v5779 = vadd.f32 %v5647, %v5684
      %v5780 = vadd.f32 %v5648, %v5684
      %v5781 = vadd.f32 %v5649, %v5684
      %v5782 = vadd.f32 %v5650, %v5684
      %v5783 = vadd.f32 %v5651, %v5684
      %v5784 = vadd.f32 %v5652, %v5684
      %v5785 = vadd.f32 %v5653, %v5684
      %v5786 = vadd.f32 %v5654, %v5684
      %v5787 = vadd.f32 %v5655, %v5684
      %v5788 = vadd.f32 %v5656, %v5684
      %v5789 = vadd.f32 %v5657, %v5684
      %v5790 = vadd.f32 %v5658, %v5684
      %v5791 = vadd.f32 %v5659, %v5684
      %v5792 = vadd.f32 %v5660, %v5684
      %v5793 = vadd.f32 %v5661, %v5684
      %v5794 = vadd.f32 %v5662, %v5684
      %v5795 = vadd.f32 %v5663, %v5684
      %v5796 = vadd.f32 %v5664, %v5684
      %v5797 = vadd.f32 %v5665, %v5684
      %v5798 = vadd.f32 %v5666, %v5684
      %v5799 = vadd.f32 %v5667, %v5684
      %v5800 = vadd.f32 %v5668, %v5684
      %v5801 = vadd.f32 %v5669, %v5684
      %v5802 = vadd.f32 %v5670, %v5684
      %v5803 = vadd.f32 %v5671, %v5684
      %v5804 = vadd.f32 %v5672, %v5684
      %v5805 = vadd.f32 %v5673, %v5684
      %v5806 = vadd.f32 %v5674, %v5684
      %v5807 = vadd.f32 %v5675, %v5684
      %v5808 = vadd.f32 %v5676, %v5684
      %v5809 = vadd.f32 %v5677, %v5684
      %v5810 = vadd.f32 %v5678, %v5684
      %v5811 = vadd.f32 %v5679, %v5684
      %v5812 = vadd.f32 %v5680, %v5684
      %v5813 = vadd.f32 %v5681, %v5684
      %v5814 = vmax.f32 %v5686, 0.0
      %v5815 = vmax.f32 %v5687, 0.0
      %v5816 = vmax.f32 %v5688, 0.0
      %v5817 = vmax.f32 %v5689, 0.0
      %v5818 = vmax.f32 %v5690, 0.0
      %v5819 = vmax.f32 %v5691, 0.0
      %v5820 = vmax.f32 %v5692, 0.0
      %v5821 = vmax.f32 %v5693, 0.0
      %v5822 = vmax.f32 %v5694, 0.0
      %v5823 = vmax.f32 %v5695, 0.0
      %v5824 = vmax.f32 %v5696, 0.0
      %v5825 = vmax.f32 %v5697, 0.0
      %v5826 = vmax.f32 %v5698, 0.0
      %v5827 = vmax.f32 %v5699, 0.0
      %v5828 = vmax.f32 %v5700, 0.0
      %v5829 = vmax.f32 %v5701, 0.0
      %v5830 = vmax.f32 %v5702, 0.0
      %v5831 = vmax.f32 %v5703, 0.0
      %v5832 = vmax.f32 %v5704, 0.0
      %v5833 = vmax.f32 %v5705, 0.0
      %v5834 = vmax.f32 %v5706, 0.0
      %v5835 = vmax.f32 %v5707, 0.0
      %v5836 = vmax.f32 %v5708, 0.0
      %v5837 = vmax.f32 %v5709, 0.0
      %v5838 = vmax.f32 %v5710, 0.0
      %v5839 = vmax.f32 %v5711, 0.0
      %v5840 = vmax.f32 %v5712, 0.0
      %v5841 = vmax.f32 %v5713, 0.0
      %v5842 = vmax.f32 %v5714, 0.0
      %v5843 = vmax.f32 %v5715, 0.0
      %v5844 = vmax.f32 %v5716, 0.0
      %v5845 = vmax.f32 %v5717, 0.0
      %v5846 = vmax.f32 %v5718, 0.0
      %v5847 = vmax.f32 %v5719, 0.0
      %v5848 = vmax.f32 %v5720, 0.0
      %v5849 = vmax.f32 %v5721, 0.0
      %v5850 = vmax.f32 %v5722, 0.0
      %v5851 = vmax.f32 %v5723, 0.0
      %v5852 = vmax.f32 %v5724, 0.0
      %v5853 = vmax.f32 %v5725, 0.0
      %v5854 = vmax.f32 %v5726, 0.0
      %v5855 = vmax.f32 %v5727, 0.0
      %v5856 = vmax.f32 %v5728, 0.0
      %v5857 = vmax.f32 %v5729, 0.0
      %v5858 = vmax.f32 %v5730, 0.0
      %v5859 = vmax.f32 %v5731, 0.0
      %v5860 = vmax.f32 %v5732, 0.0
      %v5861 = vmax.f32 %v5733, 0.0
      %v5862 = vmax.f32 %v5734, 0.0
      %v5863 = vmax.f32 %v5735, 0.0
      %v5864 = vmax.f32 %v5736, 0.0
      %v5865 = vmax.f32 %v5737, 0.0
      %v5866 = vmax.f32 %v5738, 0.0
      %v5867 = vmax.f32 %v5739, 0.0
      %v5868 = vmax.f32 %v5740, 0.0
      %v5869 = vmax.f32 %v5741, 0.0
      %v5870 = vmax.f32 %v5742, 0.0
      %v5871 = vmax.f32 %v5743, 0.0
      %v5872 = vmax.f32 %v5744, 0.0
      %v5873 = vmax.f32 %v5745, 0.0
      %v5874 = vmax.f32 %v5746, 0.0
      %v5875 = vmax.f32 %v5747, 0.0
      %v5876 = vmax.f32 %v5748, 0.0
      %v5877 = vmax.f32 %v5749, 0.0
      %v5878 = vmax.f32 %v5750, 0.0
      %v5879 = vmax.f32 %v5751, 0.0
      %v5880 = vmax.f32 %v5752, 0.0
      %v5881 = vmax.f32 %v5753, 0.0
      %v5882 = vmax.f32 %v5754, 0.0
      %v5883 = vmax.f32 %v5755, 0.0
      %v5884 = vmax.f32 %v5756, 0.0
      %v5885 = vmax.f32 %v5757, 0.0
      %v5886 = vmax.f32 %v5758, 0.0
      %v5887 = vmax.f32 %v5759, 0.0
      %v5888 = vmax.f32 %v5760, 0.0
      %v5889 = vmax.f32 %v5761, 0.0
      %v5890 = vmax.f32 %v5762, 0.0
      %v5891 = vmax.f32 %v5763, 0.0
      %v5892 = vmax.f32 %v5764, 0.0
      %v5893 = vmax.f32 %v5765, 0.0
      %v5894 = vmax.f32 %v5766, 0.0
      %v5895 = vmax.f32 %v5767, 0.0
      %v5896 = vmax.f32 %v5768, 0.0
      %v5897 = vmax.f32 %v5769, 0.0
      %v5898 = vmax.f32 %v5770, 0.0
      %v5899 = vmax.f32 %v5771, 0.0
      %v5900 = vmax.f32 %v5772, 0.0
      %v5901 = vmax.f32 %v5773, 0.0
      %v5902 = vmax.f32 %v5774, 0.0
      %v5903 = vmax.f32 %v5775, 0.0
      %v5904 = vmax.f32 %v5776, 0.0
      %v5905 = vmax.f32 %v5777, 0.0
      %v5906 = vmax.f32 %v5778, 0.0
      %v5907 = vmax.f32 %v5779, 0.0
      %v5908 = vmax.f32 %v5780, 0.0
      %v5909 = vmax.f32 %v5781, 0.0
      %v5910 = vmax.f32 %v5782, 0.0
      %v5911 = vmax.f32 %v5783, 0.0
      %v5912 = vmax.f32 %v5784, 0.0
      %v5913 = vmax.f32 %v5785, 0.0
      %v5914 = vmax.f32 %v5786, 0.0
      %v5915 = vmax.f32 %v5787, 0.0
      %v5916 = vmax.f32 %v5788, 0.0
      %v5917 = vmax.f32 %v5789, 0.0
      %v5918 = vmax.f32 %v5790, 0.0
      %v5919 = vmax.f32 %v5791, 0.0
      %v5920 = vmax.f32 %v5792, 0.0
      %v5921 = vmax.f32 %v5793, 0.0
      %v5922 = vmax.f32 %v5794, 0.0
      %v5923 = vmax.f32 %v5795, 0.0
      %v5924 = vmax.f32 %v5796, 0.0
      %v5925 = vmax.f32 %v5797, 0.0
      %v5926 = vmax.f32 %v5798, 0.0
      %v5927 = vmax.f32 %v5799, 0.0
      %v5928 = vmax.f32 %v5800, 0.0
      %v5929 = vmax.f32 %v5801, 0.0
      %v5930 = vmax.f32 %v5802, 0.0
      %v5931 = vmax.f32 %v5803, 0.0
      %v5932 = vmax.f32 %v5804, 0.0
      %v5933 = vmax.f32 %v5805, 0.0
      %v5934 = vmax.f32 %v5806, 0.0
      %v5935 = vmax.f32 %v5807, 0.0
      %v5936 = vmax.f32 %v5808, 0.0
      %v5937 = vmax.f32 %v5809, 0.0
      %v5938 = vmax.f32 %v5810, 0.0
      %v5939 = vmax.f32 %v5811, 0.0
      %v5940 = vmax.f32 %v5812, 0.0
      %v5941 = vmax.f32 %v5813, 0.0
      %vm5942 = vcmask 130048
      %5943 = vst.msk [vmem:[#allocation3] sm:$0xff] %vm5942, %v5814
      %5944 = vst.msk [vmem:[#allocation3 + $0x8] sm:$0xff] %vm5942, %v5815
      %5945 = vst.msk [vmem:[#allocation3 + $0x10] sm:$0xff] %vm5942, %v5816
      %5946 = vst.msk [vmem:[#allocation3 + $0x18] sm:$0xff] %vm5942, %v5817
      %5947 = vst.msk [vmem:[#allocation3 + $0x20] sm:$0xff] %vm5942, %v5818
      %5948 = vst.msk [vmem:[#allocation3 + $0x28] sm:$0xff] %vm5942, %v5819
      %5949 = vst.msk [vmem:[#allocation3 + $0x30] sm:$0xff] %vm5942, %v5820
      %5950 = vst.msk [vmem:[#allocation3 + $0x38] sm:$0xff] %vm5942, %v5821
      %5951 = vst.msk [vmem:[#allocation3 + $0x40] sm:$0xff] %vm5942, %v5822
      %5952 = vst.msk [vmem:[#allocation3 + $0x48] sm:$0xff] %vm5942, %v5823
      %5953 = vst.msk [vmem:[#allocation3 + $0x50] sm:$0xff] %vm5942, %v5824
      %5954 = vst.msk [vmem:[#allocation3 + $0x58] sm:$0xff] %vm5942, %v5825
      %5955 = vst.msk [vmem:[#allocation3 + $0x60] sm:$0xff] %vm5942, %v5826
      %5956 = vst.msk [vmem:[#allocation3 + $0x68] sm:$0xff] %vm5942, %v5827
      %5957 = vst.msk [vmem:[#allocation3 + $0x70] sm:$0xff] %vm5942, %v5828
      %5958 = vst.msk [vmem:[#allocation3 + $0x78] sm:$0xff] %vm5942, %v5829
      %5959 = vst.msk [vmem:[#allocation3 + $0x80] sm:$0xff] %vm5942, %v5830
      %5960 = vst.msk [vmem:[#allocation3 + $0x88] sm:$0xff] %vm5942, %v5831
      %5961 = vst.msk [vmem:[#allocation3 + $0x90] sm:$0xff] %vm5942, %v5832
      %5962 = vst.msk [vmem:[#allocation3 + $0x98] sm:$0xff] %vm5942, %v5833
      %5963 = vst.msk [vmem:[#allocation3 + $0xa0] sm:$0xff] %vm5942, %v5834
      %5964 = vst.msk [vmem:[#allocation3 + $0xa8] sm:$0xff] %vm5942, %v5835
      %5965 = vst.msk [vmem:[#allocation3 + $0xb0] sm:$0xff] %vm5942, %v5836
      %5966 = vst.msk [vmem:[#allocation3 + $0xb8] sm:$0xff] %vm5942, %v5837
      %5967 = vst.msk [vmem:[#allocation3 + $0xc0] sm:$0xff] %vm5942, %v5838
      %5968 = vst.msk [vmem:[#allocation3 + $0xc8] sm:$0xff] %vm5942, %v5839
      %5969 = vst.msk [vmem:[#allocation3 + $0xd0] sm:$0xff] %vm5942, %v5840
      %5970 = vst.msk [vmem:[#allocation3 + $0xd8] sm:$0xff] %vm5942, %v5841
      %5971 = vst.msk [vmem:[#allocation3 + $0xe0] sm:$0xff] %vm5942, %v5842
      %5972 = vst.msk [vmem:[#allocation3 + $0xe8] sm:$0xff] %vm5942, %v5843
      %5973 = vst.msk [vmem:[#allocation3 + $0xf0] sm:$0xff] %vm5942, %v5844
      %5974 = vst.msk [vmem:[#allocation3 + $0xf8] sm:$0xff] %vm5942, %v5845
      %5975 = vst.msk [vmem:[#allocation3 + $0x100] sm:$0xff] %vm5942, %v5846
      %5976 = vst.msk [vmem:[#allocation3 + $0x108] sm:$0xff] %vm5942, %v5847
      %5977 = vst.msk [vmem:[#allocation3 + $0x110] sm:$0xff] %vm5942, %v5848
      %5978 = vst.msk [vmem:[#allocation3 + $0x118] sm:$0xff] %vm5942, %v5849
      %5979 = vst.msk [vmem:[#allocation3 + $0x120] sm:$0xff] %vm5942, %v5850
      %5980 = vst.msk [vmem:[#allocation3 + $0x128] sm:$0xff] %vm5942, %v5851
      %5981 = vst.msk [vmem:[#allocation3 + $0x130] sm:$0xff] %vm5942, %v5852
      %5982 = vst.msk [vmem:[#allocation3 + $0x138] sm:$0xff] %vm5942, %v5853
      %5983 = vst.msk [vmem:[#allocation3 + $0x140] sm:$0xff] %vm5942, %v5854
      %5984 = vst.msk [vmem:[#allocation3 + $0x148] sm:$0xff] %vm5942, %v5855
      %5985 = vst.msk [vmem:[#allocation3 + $0x150] sm:$0xff] %vm5942, %v5856
      %5986 = vst.msk [vmem:[#allocation3 + $0x158] sm:$0xff] %vm5942, %v5857
      %5987 = vst.msk [vmem:[#allocation3 + $0x160] sm:$0xff] %vm5942, %v5858
      %5988 = vst.msk [vmem:[#allocation3 + $0x168] sm:$0xff] %vm5942, %v5859
      %5989 = vst.msk [vmem:[#allocation3 + $0x170] sm:$0xff] %vm5942, %v5860
      %5990 = vst.msk [vmem:[#allocation3 + $0x178] sm:$0xff] %vm5942, %v5861
      %5991 = vst.msk [vmem:[#allocation3 + $0x180] sm:$0xff] %vm5942, %v5862
      %5992 = vst.msk [vmem:[#allocation3 + $0x188] sm:$0xff] %vm5942, %v5863
      %5993 = vst.msk [vmem:[#allocation3 + $0x190] sm:$0xff] %vm5942, %v5864
      %5994 = vst.msk [vmem:[#allocation3 + $0x198] sm:$0xff] %vm5942, %v5865
      %5995 = vst.msk [vmem:[#allocation3 + $0x1a0] sm:$0xff] %vm5942, %v5866
      %5996 = vst.msk [vmem:[#allocation3 + $0x1a8] sm:$0xff] %vm5942, %v5867
      %5997 = vst.msk [vmem:[#allocation3 + $0x1b0] sm:$0xff] %vm5942, %v5868
      %5998 = vst.msk [vmem:[#allocation3 + $0x1b8] sm:$0xff] %vm5942, %v5869
      %5999 = vst.msk [vmem:[#allocation3 + $0x1c0] sm:$0xff] %vm5942, %v5870
      %6000 = vst.msk [vmem:[#allocation3 + $0x1c8] sm:$0xff] %vm5942, %v5871
      %6001 = vst.msk [vmem:[#allocation3 + $0x1d0] sm:$0xff] %vm5942, %v5872
      %6002 = vst.msk [vmem:[#allocation3 + $0x1d8] sm:$0xff] %vm5942, %v5873
      %6003 = vst.msk [vmem:[#allocation3 + $0x1e0] sm:$0xff] %vm5942, %v5874
      %6004 = vst.msk [vmem:[#allocation3 + $0x1e8] sm:$0xff] %vm5942, %v5875
      %6005 = vst.msk [vmem:[#allocation3 + $0x1f0] sm:$0xff] %vm5942, %v5876
      %6006 = vst.msk [vmem:[#allocation3 + $0x1f8] sm:$0xff] %vm5942, %v5877
      %6007 = vst.msk [vmem:[#allocation3 + $0x200] sm:$0xff] %vm5942, %v5878
      %6008 = vst.msk [vmem:[#allocation3 + $0x208] sm:$0xff] %vm5942, %v5879
      %6009 = vst.msk [vmem:[#allocation3 + $0x210] sm:$0xff] %vm5942, %v5880
      %6010 = vst.msk [vmem:[#allocation3 + $0x218] sm:$0xff] %vm5942, %v5881
      %6011 = vst.msk [vmem:[#allocation3 + $0x220] sm:$0xff] %vm5942, %v5882
      %6012 = vst.msk [vmem:[#allocation3 + $0x228] sm:$0xff] %vm5942, %v5883
      %6013 = vst.msk [vmem:[#allocation3 + $0x230] sm:$0xff] %vm5942, %v5884
      %6014 = vst.msk [vmem:[#allocation3 + $0x238] sm:$0xff] %vm5942, %v5885
      %6015 = vst.msk [vmem:[#allocation3 + $0x240] sm:$0xff] %vm5942, %v5886
      %6016 = vst.msk [vmem:[#allocation3 + $0x248] sm:$0xff] %vm5942, %v5887
      %6017 = vst.msk [vmem:[#allocation3 + $0x250] sm:$0xff] %vm5942, %v5888
      %6018 = vst.msk [vmem:[#allocation3 + $0x258] sm:$0xff] %vm5942, %v5889
      %6019 = vst.msk [vmem:[#allocation3 + $0x260] sm:$0xff] %vm5942, %v5890
      %6020 = vst.msk [vmem:[#allocation3 + $0x268] sm:$0xff] %vm5942, %v5891
      %6021 = vst.msk [vmem:[#allocation3 + $0x270] sm:$0xff] %vm5942, %v5892
      %6022 = vst.msk [vmem:[#allocation3 + $0x278] sm:$0xff] %vm5942, %v5893
      %6023 = vst.msk [vmem:[#allocation3 + $0x280] sm:$0xff] %vm5942, %v5894
      %6024 = vst.msk [vmem:[#allocation3 + $0x288] sm:$0xff] %vm5942, %v5895
      %6025 = vst.msk [vmem:[#allocation3 + $0x290] sm:$0xff] %vm5942, %v5896
      %6026 = vst.msk [vmem:[#allocation3 + $0x298] sm:$0xff] %vm5942, %v5897
      %6027 = vst.msk [vmem:[#allocation3 + $0x2a0] sm:$0xff] %vm5942, %v5898
      %6028 = vst.msk [vmem:[#allocation3 + $0x2a8] sm:$0xff] %vm5942, %v5899
      %6029 = vst.msk [vmem:[#allocation3 + $0x2b0] sm:$0xff] %vm5942, %v5900
      %6030 = vst.msk [vmem:[#allocation3 + $0x2b8] sm:$0xff] %vm5942, %v5901
      %6031 = vst.msk [vmem:[#allocation3 + $0x2c0] sm:$0xff] %vm5942, %v5902
      %6032 = vst.msk [vmem:[#allocation3 + $0x2c8] sm:$0xff] %vm5942, %v5903
      %6033 = vst.msk [vmem:[#allocation3 + $0x2d0] sm:$0xff] %vm5942, %v5904
      %6034 = vst.msk [vmem:[#allocation3 + $0x2d8] sm:$0xff] %vm5942, %v5905
      %6035 = vst.msk [vmem:[#allocation3 + $0x2e0] sm:$0xff] %vm5942, %v5906
      %6036 = vst.msk [vmem:[#allocation3 + $0x2e8] sm:$0xff] %vm5942, %v5907
      %6037 = vst.msk [vmem:[#allocation3 + $0x2f0] sm:$0xff] %vm5942, %v5908
      %6038 = vst.msk [vmem:[#allocation3 + $0x2f8] sm:$0xff] %vm5942, %v5909
      %6039 = vst.msk [vmem:[#allocation3 + $0x300] sm:$0xff] %vm5942, %v5910
      %6040 = vst.msk [vmem:[#allocation3 + $0x308] sm:$0xff] %vm5942, %v5911
      %6041 = vst.msk [vmem:[#allocation3 + $0x310] sm:$0xff] %vm5942, %v5912
      %6042 = vst.msk [vmem:[#allocation3 + $0x318] sm:$0xff] %vm5942, %v5913
      %6043 = vst.msk [vmem:[#allocation3 + $0x320] sm:$0xff] %vm5942, %v5914
      %6044 = vst.msk [vmem:[#allocation3 + $0x328] sm:$0xff] %vm5942, %v5915
      %6045 = vst.msk [vmem:[#allocation3 + $0x330] sm:$0xff] %vm5942, %v5916
      %6046 = vst.msk [vmem:[#allocation3 + $0x338] sm:$0xff] %vm5942, %v5917
      %6047 = vst.msk [vmem:[#allocation3 + $0x340] sm:$0xff] %vm5942, %v5918
      %6048 = vst.msk [vmem:[#allocation3 + $0x348] sm:$0xff] %vm5942, %v5919
      %6049 = vst.msk [vmem:[#allocation3 + $0x350] sm:$0xff] %vm5942, %v5920
      %6050 = vst.msk [vmem:[#allocation3 + $0x358] sm:$0xff] %vm5942, %v5921
      %6051 = vst.msk [vmem:[#allocation3 + $0x360] sm:$0xff] %vm5942, %v5922
      %6052 = vst.msk [vmem:[#allocation3 + $0x368] sm:$0xff] %vm5942, %v5923
      %6053 = vst.msk [vmem:[#allocation3 + $0x370] sm:$0xff] %vm5942, %v5924
      %6054 = vst.msk [vmem:[#allocation3 + $0x378] sm:$0xff] %vm5942, %v5925
      %6055 = vst.msk [vmem:[#allocation3 + $0x380] sm:$0xff] %vm5942, %v5926
      %6056 = vst.msk [vmem:[#allocation3 + $0x388] sm:$0xff] %vm5942, %v5927
      %6057 = vst.msk [vmem:[#allocation3 + $0x390] sm:$0xff] %vm5942, %v5928
      %6058 = vst.msk [vmem:[#allocation3 + $0x398] sm:$0xff] %vm5942, %v5929
      %6059 = vst.msk [vmem:[#allocation3 + $0x3a0] sm:$0xff] %vm5942, %v5930
      %6060 = vst.msk [vmem:[#allocation3 + $0x3a8] sm:$0xff] %vm5942, %v5931
      %6061 = vst.msk [vmem:[#allocation3 + $0x3b0] sm:$0xff] %vm5942, %v5932
      %6062 = vst.msk [vmem:[#allocation3 + $0x3b8] sm:$0xff] %vm5942, %v5933
      %6063 = vst.msk [vmem:[#allocation3 + $0x3c0] sm:$0xff] %vm5942, %v5934
      %6064 = vst.msk [vmem:[#allocation3 + $0x3c8] sm:$0xff] %vm5942, %v5935
      %6065 = vst.msk [vmem:[#allocation3 + $0x3d0] sm:$0xff] %vm5942, %v5936
      %6066 = vst.msk [vmem:[#allocation3 + $0x3d8] sm:$0xff] %vm5942, %v5937
      %6067 = vst.msk [vmem:[#allocation3 + $0x3e0] sm:$0xff] %vm5942, %v5938
      %6068 = vst.msk [vmem:[#allocation3 + $0x3e8] sm:$0xff] %vm5942, %v5939
      %6069 = vst.msk [vmem:[#allocation3 + $0x3f0] sm:$0xff] %vm5942, %v5940
      %6070 = vst.msk [vmem:[#allocation3 + $0x3f8] sm:$0xff] %vm5942, %v5941
      %v6071 = vld [vmem:[#allocation3] ss:$2 sm:$0xff]
      %s6072 = scalar_lea.vmem [#allocation3], 16
      %v6073 = vld [vmem:[%s6072] ss:$2 sm:$0xff]
      %s6074 = scalar_lea.vmem [#allocation3], 32
      %v6075 = vld [vmem:[%s6074] ss:$2 sm:$0xff]
      %s6076 = scalar_lea.vmem [#allocation3], 48
      %v6077 = vld [vmem:[%s6076] ss:$2 sm:$0xff]
      %s6078 = scalar_lea.vmem [#allocation3], 64
      %v6079 = vld [vmem:[%s6078] ss:$2 sm:$0xff]
      %s6080 = scalar_lea.vmem [#allocation3], 80
      %v6081 = vld [vmem:[%s6080] ss:$2 sm:$0xff]
      %s6082 = scalar_lea.vmem [#allocation3], 96
      %v6083 = vld [vmem:[%s6082] ss:$2 sm:$0xff]
      %s6084 = scalar_lea.vmem [#allocation3], 112
      %v6085 = vld [vmem:[%s6084] ss:$2 sm:$0xff]
      %s6086 = scalar_lea.vmem [#allocation3], 128
      %v6087 = vld [vmem:[%s6086] ss:$2 sm:$0xff]
      %s6088 = scalar_lea.vmem [#allocation3], 144
      %v6089 = vld [vmem:[%s6088] ss:$2 sm:$0xff]
      %s6090 = scalar_lea.vmem [#allocation3], 160
      %v6091 = vld [vmem:[%s6090] ss:$2 sm:$0xff]
      %s6092 = scalar_lea.vmem [#allocation3], 176
      %v6093 = vld [vmem:[%s6092] ss:$2 sm:$0xff]
      %s6094 = scalar_lea.vmem [#allocation3], 192
      %v6095 = vld [vmem:[%s6094] ss:$2 sm:$0xff]
      %s6096 = scalar_lea.vmem [#allocation3], 208
      %v6097 = vld [vmem:[%s6096] ss:$2 sm:$0xff]
      %s6098 = scalar_lea.vmem [#allocation3], 224
      %v6099 = vld [vmem:[%s6098] ss:$2 sm:$0xff]
      %s6100 = scalar_lea.vmem [#allocation3], 240
      %v6101 = vld [vmem:[%s6100] ss:$2 sm:$0xff]
      %s6102 = scalar_lea.vmem [#allocation3], 256
      %v6103 = vld [vmem:[%s6102] ss:$2 sm:$0xff]
      %s6104 = scalar_lea.vmem [#allocation3], 272
      %v6105 = vld [vmem:[%s6104] ss:$2 sm:$0xff]
      %s6106 = scalar_lea.vmem [#allocation3], 288
      %v6107 = vld [vmem:[%s6106] ss:$2 sm:$0xff]
      %s6108 = scalar_lea.vmem [#allocation3], 304
      %v6109 = vld [vmem:[%s6108] ss:$2 sm:$0xff]
      %s6110 = scalar_lea.vmem [#allocation3], 320
      %v6111 = vld [vmem:[%s6110] ss:$2 sm:$0xff]
      %s6112 = scalar_lea.vmem [#allocation3], 336
      %v6113 = vld [vmem:[%s6112] ss:$2 sm:$0xff]
      %s6114 = scalar_lea.vmem [#allocation3], 352
      %v6115 = vld [vmem:[%s6114] ss:$2 sm:$0xff]
      %s6116 = scalar_lea.vmem [#allocation3], 368
      %v6117 = vld [vmem:[%s6116] ss:$2 sm:$0xff]
      %s6118 = scalar_lea.vmem [#allocation3], 384
      %v6119 = vld [vmem:[%s6118] ss:$2 sm:$0xff]
      %s6120 = scalar_lea.vmem [#allocation3], 400
      %v6121 = vld [vmem:[%s6120] ss:$2 sm:$0xff]
      %s6122 = scalar_lea.vmem [#allocation3], 416
      %v6123 = vld [vmem:[%s6122] ss:$2 sm:$0xff]
      %s6124 = scalar_lea.vmem [#allocation3], 432
      %v6125 = vld [vmem:[%s6124] ss:$2 sm:$0xff]
      %s6126 = scalar_lea.vmem [#allocation3], 448
      %v6127 = vld [vmem:[%s6126] ss:$2 sm:$0xff]
      %s6128 = scalar_lea.vmem [#allocation3], 464
      %v6129 = vld [vmem:[%s6128] ss:$2 sm:$0xff]
      %s6130 = scalar_lea.vmem [#allocation3], 480
      %v6131 = vld [vmem:[%s6130] ss:$2 sm:$0xff]
      %s6132 = scalar_lea.vmem [#allocation3], 496
      %v6133 = vld [vmem:[%s6132] ss:$2 sm:$0xff]
      %s6134 = scalar_lea.vmem [#allocation3], 512
      %v6135 = vld [vmem:[%s6134] ss:$2 sm:$0xff]
      %s6136 = scalar_lea.vmem [#allocation3], 528
      %v6137 = vld [vmem:[%s6136] ss:$2 sm:$0xff]
      %s6138 = scalar_lea.vmem [#allocation3], 544
      %v6139 = vld [vmem:[%s6138] ss:$2 sm:$0xff]
      %s6140 = scalar_lea.vmem [#allocation3], 560
      %v6141 = vld [vmem:[%s6140] ss:$2 sm:$0xff]
      %s6142 = scalar_lea.vmem [#allocation3], 576
      %v6143 = vld [vmem:[%s6142] ss:$2 sm:$0xff]
      %s6144 = scalar_lea.vmem [#allocation3], 592
      %v6145 = vld [vmem:[%s6144] ss:$2 sm:$0xff]
      %s6146 = scalar_lea.vmem [#allocation3], 608
      %v6147 = vld [vmem:[%s6146] ss:$2 sm:$0xff]
      %s6148 = scalar_lea.vmem [#allocation3], 624
      %v6149 = vld [vmem:[%s6148] ss:$2 sm:$0xff]
      %s6150 = scalar_lea.vmem [#allocation3], 640
      %v6151 = vld [vmem:[%s6150] ss:$2 sm:$0xff]
      %s6152 = scalar_lea.vmem [#allocation3], 656
      %v6153 = vld [vmem:[%s6152] ss:$2 sm:$0xff]
      %s6154 = scalar_lea.vmem [#allocation3], 672
      %v6155 = vld [vmem:[%s6154] ss:$2 sm:$0xff]
      %s6156 = scalar_lea.vmem [#allocation3], 688
      %v6157 = vld [vmem:[%s6156] ss:$2 sm:$0xff]
      %s6158 = scalar_lea.vmem [#allocation3], 704
      %v6159 = vld [vmem:[%s6158] ss:$2 sm:$0xff]
      %s6160 = scalar_lea.vmem [#allocation3], 720
      %v6161 = vld [vmem:[%s6160] ss:$2 sm:$0xff]
      %s6162 = scalar_lea.vmem [#allocation3], 736
      %v6163 = vld [vmem:[%s6162] ss:$2 sm:$0xff]
      %s6164 = scalar_lea.vmem [#allocation3], 752
      %v6165 = vld [vmem:[%s6164] ss:$2 sm:$0xff]
      %s6166 = scalar_lea.vmem [#allocation3], 768
      %v6167 = vld [vmem:[%s6166] ss:$2 sm:$0xff]
      %s6168 = scalar_lea.vmem [#allocation3], 784
      %v6169 = vld [vmem:[%s6168] ss:$2 sm:$0xff]
      %s6170 = scalar_lea.vmem [#allocation3], 800
      %v6171 = vld [vmem:[%s6170] ss:$2 sm:$0xff]
      %s6172 = scalar_lea.vmem [#allocation3], 816
      %v6173 = vld [vmem:[%s6172] ss:$2 sm:$0xff]
      %s6174 = scalar_lea.vmem [#allocation3], 832
      %v6175 = vld [vmem:[%s6174] ss:$2 sm:$0xff]
      %s6176 = scalar_lea.vmem [#allocation3], 848
      %v6177 = vld [vmem:[%s6176] ss:$2 sm:$0xff]
      %s6178 = scalar_lea.vmem [#allocation3], 864
      %v6179 = vld [vmem:[%s6178] ss:$2 sm:$0xff]
      %s6180 = scalar_lea.vmem [#allocation3], 880
      %v6181 = vld [vmem:[%s6180] ss:$2 sm:$0xff]
      %s6182 = scalar_lea.vmem [#allocation3], 896
      %v6183 = vld [vmem:[%s6182] ss:$2 sm:$0xff]
      %s6184 = scalar_lea.vmem [#allocation3], 912
      %v6185 = vld [vmem:[%s6184] ss:$2 sm:$0xff]
      %s6186 = scalar_lea.vmem [#allocation3], 928
      %v6187 = vld [vmem:[%s6186] ss:$2 sm:$0xff]
      %s6188 = scalar_lea.vmem [#allocation3], 944
      %v6189 = vld [vmem:[%s6188] ss:$2 sm:$0xff]
      %s6190 = scalar_lea.vmem [#allocation3], 960
      %v6191 = vld [vmem:[%s6190] ss:$2 sm:$0xff]
      %s6192 = scalar_lea.vmem [#allocation3], 976
      %v6193 = vld [vmem:[%s6192] ss:$2 sm:$0xff]
      %s6194 = scalar_lea.vmem [#allocation3], 992
      %v6195 = vld [vmem:[%s6194] ss:$2 sm:$0xff]
      %s6196 = scalar_lea.vmem [#allocation3], 1008
      %v6197 = vld [vmem:[%s6196] ss:$2 sm:$0xff]
      %s6198 = scalar_lea.vmem [#allocation3], 1
      %v6199 = vld [vmem:[%s6198] ss:$2 sm:$0xff]
      %s6200 = scalar_lea.vmem [#allocation3], 17
      %v6201 = vld [vmem:[%s6200] ss:$2 sm:$0xff]
      %s6202 = scalar_lea.vmem [#allocation3], 33
      %v6203 = vld [vmem:[%s6202] ss:$2 sm:$0xff]
      %s6204 = scalar_lea.vmem [#allocation3], 49
      %v6205 = vld [vmem:[%s6204] ss:$2 sm:$0xff]
      %s6206 = scalar_lea.vmem [#allocation3], 65
      %v6207 = vld [vmem:[%s6206] ss:$2 sm:$0xff]
      %s6208 = scalar_lea.vmem [#allocation3], 81
      %v6209 = vld [vmem:[%s6208] ss:$2 sm:$0xff]
      %s6210 = scalar_lea.vmem [#allocation3], 97
      %v6211 = vld [vmem:[%s6210] ss:$2 sm:$0xff]
      %s6212 = scalar_lea.vmem [#allocation3], 113
      %v6213 = vld [vmem:[%s6212] ss:$2 sm:$0xff]
      %s6214 = scalar_lea.vmem [#allocation3], 129
      %v6215 = vld [vmem:[%s6214] ss:$2 sm:$0xff]
      %s6216 = scalar_lea.vmem [#allocation3], 145
      %v6217 = vld [vmem:[%s6216] ss:$2 sm:$0xff]
      %s6218 = scalar_lea.vmem [#allocation3], 161
      %v6219 = vld [vmem:[%s6218] ss:$2 sm:$0xff]
      %s6220 = scalar_lea.vmem [#allocation3], 177
      %v6221 = vld [vmem:[%s6220] ss:$2 sm:$0xff]
      %s6222 = scalar_lea.vmem [#allocation3], 193
      %v6223 = vld [vmem:[%s6222] ss:$2 sm:$0xff]
      %s6224 = scalar_lea.vmem [#allocation3], 209
      %v6225 = vld [vmem:[%s6224] ss:$2 sm:$0xff]
      %s6226 = scalar_lea.vmem [#allocation3], 225
      %v6227 = vld [vmem:[%s6226] ss:$2 sm:$0xff]
      %s6228 = scalar_lea.vmem [#allocation3], 241
      %v6229 = vld [vmem:[%s6228] ss:$2 sm:$0xff]
      %s6230 = scalar_lea.vmem [#allocation3], 257
      %v6231 = vld [vmem:[%s6230] ss:$2 sm:$0xff]
      %s6232 = scalar_lea.vmem [#allocation3], 273
      %v6233 = vld [vmem:[%s6232] ss:$2 sm:$0xff]
      %s6234 = scalar_lea.vmem [#allocation3], 289
      %v6235 = vld [vmem:[%s6234] ss:$2 sm:$0xff]
      %s6236 = scalar_lea.vmem [#allocation3], 305
      %v6237 = vld [vmem:[%s6236] ss:$2 sm:$0xff]
      %s6238 = scalar_lea.vmem [#allocation3], 321
      %v6239 = vld [vmem:[%s6238] ss:$2 sm:$0xff]
      %s6240 = scalar_lea.vmem [#allocation3], 337
      %v6241 = vld [vmem:[%s6240] ss:$2 sm:$0xff]
      %s6242 = scalar_lea.vmem [#allocation3], 353
      %v6243 = vld [vmem:[%s6242] ss:$2 sm:$0xff]
      %s6244 = scalar_lea.vmem [#allocation3], 369
      %v6245 = vld [vmem:[%s6244] ss:$2 sm:$0xff]
      %s6246 = scalar_lea.vmem [#allocation3], 385
      %v6247 = vld [vmem:[%s6246] ss:$2 sm:$0xff]
      %s6248 = scalar_lea.vmem [#allocation3], 401
      %v6249 = vld [vmem:[%s6248] ss:$2 sm:$0xff]
      %s6250 = scalar_lea.vmem [#allocation3], 417
      %v6251 = vld [vmem:[%s6250] ss:$2 sm:$0xff]
      %s6252 = scalar_lea.vmem [#allocation3], 433
      %v6253 = vld [vmem:[%s6252] ss:$2 sm:$0xff]
      %s6254 = scalar_lea.vmem [#allocation3], 449
      %v6255 = vld [vmem:[%s6254] ss:$2 sm:$0xff]
      %s6256 = scalar_lea.vmem [#allocation3], 465
      %v6257 = vld [vmem:[%s6256] ss:$2 sm:$0xff]
      %s6258 = scalar_lea.vmem [#allocation3], 481
      %v6259 = vld [vmem:[%s6258] ss:$2 sm:$0xff]
      %s6260 = scalar_lea.vmem [#allocation3], 497
      %v6261 = vld [vmem:[%s6260] ss:$2 sm:$0xff]
      %s6262 = scalar_lea.vmem [#allocation3], 513
      %v6263 = vld [vmem:[%s6262] ss:$2 sm:$0xff]
      %s6264 = scalar_lea.vmem [#allocation3], 529
      %v6265 = vld [vmem:[%s6264] ss:$2 sm:$0xff]
      %s6266 = scalar_lea.vmem [#allocation3], 545
      %v6267 = vld [vmem:[%s6266] ss:$2 sm:$0xff]
      %s6268 = scalar_lea.vmem [#allocation3], 561
      %v6269 = vld [vmem:[%s6268] ss:$2 sm:$0xff]
      %s6270 = scalar_lea.vmem [#allocation3], 577
      %v6271 = vld [vmem:[%s6270] ss:$2 sm:$0xff]
      %s6272 = scalar_lea.vmem [#allocation3], 593
      %v6273 = vld [vmem:[%s6272] ss:$2 sm:$0xff]
      %s6274 = scalar_lea.vmem [#allocation3], 609
      %v6275 = vld [vmem:[%s6274] ss:$2 sm:$0xff]
      %s6276 = scalar_lea.vmem [#allocation3], 625
      %v6277 = vld [vmem:[%s6276] ss:$2 sm:$0xff]
      %s6278 = scalar_lea.vmem [#allocation3], 641
      %v6279 = vld [vmem:[%s6278] ss:$2 sm:$0xff]
      %s6280 = scalar_lea.vmem [#allocation3], 657
      %v6281 = vld [vmem:[%s6280] ss:$2 sm:$0xff]
      %s6282 = scalar_lea.vmem [#allocation3], 673
      %v6283 = vld [vmem:[%s6282] ss:$2 sm:$0xff]
      %s6284 = scalar_lea.vmem [#allocation3], 689
      %v6285 = vld [vmem:[%s6284] ss:$2 sm:$0xff]
      %s6286 = scalar_lea.vmem [#allocation3], 705
      %v6287 = vld [vmem:[%s6286] ss:$2 sm:$0xff]
      %s6288 = scalar_lea.vmem [#allocation3], 721
      %v6289 = vld [vmem:[%s6288] ss:$2 sm:$0xff]
      %s6290 = scalar_lea.vmem [#allocation3], 737
      %v6291 = vld [vmem:[%s6290] ss:$2 sm:$0xff]
      %s6292 = scalar_lea.vmem [#allocation3], 753
      %v6293 = vld [vmem:[%s6292] ss:$2 sm:$0xff]
      %s6294 = scalar_lea.vmem [#allocation3], 769
      %v6295 = vld [vmem:[%s6294] ss:$2 sm:$0xff]
      %s6296 = scalar_lea.vmem [#allocation3], 785
      %v6297 = vld [vmem:[%s6296] ss:$2 sm:$0xff]
      %s6298 = scalar_lea.vmem [#allocation3], 801
      %v6299 = vld [vmem:[%s6298] ss:$2 sm:$0xff]
      %s6300 = scalar_lea.vmem [#allocation3], 817
      %v6301 = vld [vmem:[%s6300] ss:$2 sm:$0xff]
      %s6302 = scalar_lea.vmem [#allocation3], 833
      %v6303 = vld [vmem:[%s6302] ss:$2 sm:$0xff]
      %s6304 = scalar_lea.vmem [#allocation3], 849
      %v6305 = vld [vmem:[%s6304] ss:$2 sm:$0xff]
      %s6306 = scalar_lea.vmem [#allocation3], 865
      %v6307 = vld [vmem:[%s6306] ss:$2 sm:$0xff]
      %s6308 = scalar_lea.vmem [#allocation3], 881
      %v6309 = vld [vmem:[%s6308] ss:$2 sm:$0xff]
      %s6310 = scalar_lea.vmem [#allocation3], 897
      %v6311 = vld [vmem:[%s6310] ss:$2 sm:$0xff]
      %s6312 = scalar_lea.vmem [#allocation3], 913
      %v6313 = vld [vmem:[%s6312] ss:$2 sm:$0xff]
      %s6314 = scalar_lea.vmem [#allocation3], 929
      %v6315 = vld [vmem:[%s6314] ss:$2 sm:$0xff]
      %s6316 = scalar_lea.vmem [#allocation3], 945
      %v6317 = vld [vmem:[%s6316] ss:$2 sm:$0xff]
      %s6318 = scalar_lea.vmem [#allocation3], 961
      %v6319 = vld [vmem:[%s6318] ss:$2 sm:$0xff]
      %s6320 = scalar_lea.vmem [#allocation3], 977
      %v6321 = vld [vmem:[%s6320] ss:$2 sm:$0xff]
      %s6322 = scalar_lea.vmem [#allocation3], 993
      %v6323 = vld [vmem:[%s6322] ss:$2 sm:$0xff]
      %s6324 = scalar_lea.vmem [#allocation3], 1009
      %v6325 = vld [vmem:[%s6324] ss:$2 sm:$0xff]
      %v6326 = vmax.f32 %v6071, %v6199
      %v6327 = vmax.f32 %v6073, %v6201
      %v6328 = vmax.f32 %v6075, %v6203
      %v6329 = vmax.f32 %v6077, %v6205
      %v6330 = vmax.f32 %v6079, %v6207
      %v6331 = vmax.f32 %v6081, %v6209
      %v6332 = vmax.f32 %v6083, %v6211
      %v6333 = vmax.f32 %v6085, %v6213
      %v6334 = vmax.f32 %v6087, %v6215
      %v6335 = vmax.f32 %v6089, %v6217
      %v6336 = vmax.f32 %v6091, %v6219
      %v6337 = vmax.f32 %v6093, %v6221
      %v6338 = vmax.f32 %v6095, %v6223
      %v6339 = vmax.f32 %v6097, %v6225
      %v6340 = vmax.f32 %v6099, %v6227
      %v6341 = vmax.f32 %v6101, %v6229
      %v6342 = vmax.f32 %v6103, %v6231
      %v6343 = vmax.f32 %v6105, %v6233
      %v6344 = vmax.f32 %v6107, %v6235
      %v6345 = vmax.f32 %v6109, %v6237
      %v6346 = vmax.f32 %v6111, %v6239
      %v6347 = vmax.f32 %v6113, %v6241
      %v6348 = vmax.f32 %v6115, %v6243
      %v6349 = vmax.f32 %v6117, %v6245
      %v6350 = vmax.f32 %v6119, %v6247
      %v6351 = vmax.f32 %v6121, %v6249
      %v6352 = vmax.f32 %v6123, %v6251
      %v6353 = vmax.f32 %v6125, %v6253
      %v6354 = vmax.f32 %v6127, %v6255
      %v6355 = vmax.f32 %v6129, %v6257
      %v6356 = vmax.f32 %v6131, %v6259
      %v6357 = vmax.f32 %v6133, %v6261
      %v6358 = vmax.f32 %v6135, %v6263
      %v6359 = vmax.f32 %v6137, %v6265
      %v6360 = vmax.f32 %v6139, %v6267
      %v6361 = vmax.f32 %v6141, %v6269
      %v6362 = vmax.f32 %v6143, %v6271
      %v6363 = vmax.f32 %v6145, %v6273
      %v6364 = vmax.f32 %v6147, %v6275
      %v6365 = vmax.f32 %v6149, %v6277
      %v6366 = vmax.f32 %v6151, %v6279
      %v6367 = vmax.f32 %v6153, %v6281
      %v6368 = vmax.f32 %v6155, %v6283
      %v6369 = vmax.f32 %v6157, %v6285
      %v6370 = vmax.f32 %v6159, %v6287
      %v6371 = vmax.f32 %v6161, %v6289
      %v6372 = vmax.f32 %v6163, %v6291
      %v6373 = vmax.f32 %v6165, %v6293
      %v6374 = vmax.f32 %v6167, %v6295
      %v6375 = vmax.f32 %v6169, %v6297
      %v6376 = vmax.f32 %v6171, %v6299
      %v6377 = vmax.f32 %v6173, %v6301
      %v6378 = vmax.f32 %v6175, %v6303
      %v6379 = vmax.f32 %v6177, %v6305
      %v6380 = vmax.f32 %v6179, %v6307
      %v6381 = vmax.f32 %v6181, %v6309
      %v6382 = vmax.f32 %v6183, %v6311
      %v6383 = vmax.f32 %v6185, %v6313
      %v6384 = vmax.f32 %v6187, %v6315
      %v6385 = vmax.f32 %v6189, %v6317
      %v6386 = vmax.f32 %v6191, %v6319
      %v6387 = vmax.f32 %v6193, %v6321
      %v6388 = vmax.f32 %v6195, %v6323
      %v6389 = vmax.f32 %v6197, %v6325
      %6390 = vst.msk [vmem:[#allocation4] sm:$0xff] %vm5942, 0.0
      %6391 = vst.msk [vmem:[#allocation4 + $0x200] sm:$0xff] %vm5942, 0.0
      %6392 = vst.msk [vmem:[#allocation4 + $0x2] sm:$0xff] %vm5942, %v6326
      %6393 = vst.msk [vmem:[#allocation4 + $0xa] sm:$0xff] %vm5942, %v6327
      %6394 = vst.msk [vmem:[#allocation4 + $0x12] sm:$0xff] %vm5942, %v6328
      %6395 = vst.msk [vmem:[#allocation4 + $0x1a] sm:$0xff] %vm5942, %v6329
      %6396 = vst.msk [vmem:[#allocation4 + $0x22] sm:$0xff] %vm5942, %v6330
      %6397 = vst.msk [vmem:[#allocation4 + $0x2a] sm:$0xff] %vm5942, %v6331
      %6398 = vst.msk [vmem:[#allocation4 + $0x32] sm:$0xff] %vm5942, %v6332
      %6399 = vst.msk [vmem:[#allocation4 + $0x3a] sm:$0xff] %vm5942, %v6333
      %6400 = vst.msk [vmem:[#allocation4 + $0x42] sm:$0xff] %vm5942, %v6334
      %6401 = vst.msk [vmem:[#allocation4 + $0x4a] sm:$0xff] %vm5942, %v6335
      %6402 = vst.msk [vmem:[#allocation4 + $0x52] sm:$0xff] %vm5942, %v6336
      %6403 = vst.msk [vmem:[#allocation4 + $0x5a] sm:$0xff] %vm5942, %v6337
      %6404 = vst.msk [vmem:[#allocation4 + $0x62] sm:$0xff] %vm5942, %v6338
      %6405 = vst.msk [vmem:[#allocation4 + $0x6a] sm:$0xff] %vm5942, %v6339
      %6406 = vst.msk [vmem:[#allocation4 + $0x72] sm:$0xff] %vm5942, %v6340
      %6407 = vst.msk [vmem:[#allocation4 + $0x7a] sm:$0xff] %vm5942, %v6341
      %6408 = vst.msk [vmem:[#allocation4 + $0x82] sm:$0xff] %vm5942, %v6342
      %6409 = vst.msk [vmem:[#allocation4 + $0x8a] sm:$0xff] %vm5942, %v6343
      %6410 = vst.msk [vmem:[#allocation4 + $0x92] sm:$0xff] %vm5942, %v6344
      %6411 = vst.msk [vmem:[#allocation4 + $0x9a] sm:$0xff] %vm5942, %v6345
      %6412 = vst.msk [vmem:[#allocation4 + $0xa2] sm:$0xff] %vm5942, %v6346
      %6413 = vst.msk [vmem:[#allocation4 + $0xaa] sm:$0xff] %vm5942, %v6347
      %6414 = vst.msk [vmem:[#allocation4 + $0xb2] sm:$0xff] %vm5942, %v6348
      %6415 = vst.msk [vmem:[#allocation4 + $0xba] sm:$0xff] %vm5942, %v6349
      %6416 = vst.msk [vmem:[#allocation4 + $0xc2] sm:$0xff] %vm5942, %v6350
      %6417 = vst.msk [vmem:[#allocation4 + $0xca] sm:$0xff] %vm5942, %v6351
      %6418 = vst.msk [vmem:[#allocation4 + $0xd2] sm:$0xff] %vm5942, %v6352
      %6419 = vst.msk [vmem:[#allocation4 + $0xda] sm:$0xff] %vm5942, %v6353
      %6420 = vst.msk [vmem:[#allocation4 + $0xe2] sm:$0xff] %vm5942, %v6354
      %6421 = vst.msk [vmem:[#allocation4 + $0xea] sm:$0xff] %vm5942, %v6355
      %6422 = vst.msk [vmem:[#allocation4 + $0xf2] sm:$0xff] %vm5942, %v6356
      %6423 = vst.msk [vmem:[#allocation4 + $0xfa] sm:$0xff] %vm5942, %v6357
      %6424 = vst.msk [vmem:[#allocation4 + $0x102] sm:$0xff] %vm5942, %v6358
      %6425 = vst.msk [vmem:[#allocation4 + $0x10a] sm:$0xff] %vm5942, %v6359
      %6426 = vst.msk [vmem:[#allocation4 + $0x112] sm:$0xff] %vm5942, %v6360
      %6427 = vst.msk [vmem:[#allocation4 + $0x11a] sm:$0xff] %vm5942, %v6361
      %6428 = vst.msk [vmem:[#allocation4 + $0x122] sm:$0xff] %vm5942, %v6362
      %6429 = vst.msk [vmem:[#allocation4 + $0x12a] sm:$0xff] %vm5942, %v6363
      %6430 = vst.msk [vmem:[#allocation4 + $0x132] sm:$0xff] %vm5942, %v6364
      %6431 = vst.msk [vmem:[#allocation4 + $0x13a] sm:$0xff] %vm5942, %v6365
      %6432 = vst.msk [vmem:[#allocation4 + $0x142] sm:$0xff] %vm5942, %v6366
      %6433 = vst.msk [vmem:[#allocation4 + $0x14a] sm:$0xff] %vm5942, %v6367
      %6434 = vst.msk [vmem:[#allocation4 + $0x152] sm:$0xff] %vm5942, %v6368
      %6435 = vst.msk [vmem:[#allocation4 + $0x15a] sm:$0xff] %vm5942, %v6369
      %6436 = vst.msk [vmem:[#allocation4 + $0x162] sm:$0xff] %vm5942, %v6370
      %6437 = vst.msk [vmem:[#allocation4 + $0x16a] sm:$0xff] %vm5942, %v6371
      %6438 = vst.msk [vmem:[#allocation4 + $0x172] sm:$0xff] %vm5942, %v6372
      %6439 = vst.msk [vmem:[#allocation4 + $0x17a] sm:$0xff] %vm5942, %v6373
      %6440 = vst.msk [vmem:[#allocation4 + $0x182] sm:$0xff] %vm5942, %v6374
      %6441 = vst.msk [vmem:[#allocation4 + $0x18a] sm:$0xff] %vm5942, %v6375
      %6442 = vst.msk [vmem:[#allocation4 + $0x192] sm:$0xff] %vm5942, %v6376
      %6443 = vst.msk [vmem:[#allocation4 + $0x19a] sm:$0xff] %vm5942, %v6377
      %6444 = vst.msk [vmem:[#allocation4 + $0x1a2] sm:$0xff] %vm5942, %v6378
      %6445 = vst.msk [vmem:[#allocation4 + $0x1aa] sm:$0xff] %vm5942, %v6379
      %6446 = vst.msk [vmem:[#allocation4 + $0x1b2] sm:$0xff] %vm5942, %v6380
      %6447 = vst.msk [vmem:[#allocation4 + $0x1ba] sm:$0xff] %vm5942, %v6381
      %6448 = vst.msk [vmem:[#allocation4 + $0x1c2] sm:$0xff] %vm5942, %v6382
      %6449 = vst.msk [vmem:[#allocation4 + $0x1ca] sm:$0xff] %vm5942, %v6383
      %6450 = vst.msk [vmem:[#allocation4 + $0x1d2] sm:$0xff] %vm5942, %v6384
      %6451 = vst.msk [vmem:[#allocation4 + $0x1da] sm:$0xff] %vm5942, %v6385
      %6452 = vst.msk [vmem:[#allocation4 + $0x1e2] sm:$0xff] %vm5942, %v6386
      %6453 = vst.msk [vmem:[#allocation4 + $0x1ea] sm:$0xff] %vm5942, %v6387
      %6454 = vst.msk [vmem:[#allocation4 + $0x1f2] sm:$0xff] %vm5942, %v6388
      %6455 = vst.msk [vmem:[#allocation4 + $0x1fa] sm:$0xff] %vm5942, %v6389
      %v6456 = vld [vmem:[#allocation4] sm:$0xff]
      %v6457 = vld [vmem:[#allocation4 + $0x8] sm:$0xff]
      %v6458 = vld [vmem:[#allocation4 + $0x10] sm:$0xff]
      %v6459 = vld [vmem:[#allocation4 + $0x18] sm:$0xff]
      %v6460 = vld [vmem:[#allocation4 + $0x20] sm:$0xff]
      %v6461 = vld [vmem:[#allocation4 + $0x28] sm:$0xff]
      %v6462 = vld [vmem:[#allocation4 + $0x30] sm:$0xff]
      %v6463 = vld [vmem:[#allocation4 + $0x38] sm:$0xff]
      %v6464 = vld [vmem:[#allocation4 + $0x40] sm:$0xff]
      %v6465 = vld [vmem:[#allocation4 + $0x48] sm:$0xff]
      %v6466 = vld [vmem:[#allocation4 + $0x50] sm:$0xff]
      %v6467 = vld [vmem:[#allocation4 + $0x58] sm:$0xff]
      %v6468 = vld [vmem:[#allocation4 + $0x60] sm:$0xff]
      %v6469 = vld [vmem:[#allocation4 + $0x68] sm:$0xff]
      %v6470 = vld [vmem:[#allocation4 + $0x70] sm:$0xff]
      %v6471 = vld [vmem:[#allocation4 + $0x78] sm:$0xff]
      %v6472 = vld [vmem:[#allocation4 + $0x80] sm:$0xff]
      %v6473 = vld [vmem:[#allocation4 + $0x88] sm:$0xff]
      %v6474 = vld [vmem:[#allocation4 + $0x90] sm:$0xff]
      %v6475 = vld [vmem:[#allocation4 + $0x98] sm:$0xff]
      %v6476 = vld [vmem:[#allocation4 + $0xa0] sm:$0xff]
      %v6477 = vld [vmem:[#allocation4 + $0xa8] sm:$0xff]
      %v6478 = vld [vmem:[#allocation4 + $0xb0] sm:$0xff]
      %v6479 = vld [vmem:[#allocation4 + $0xb8] sm:$0xff]
      %v6480 = vld [vmem:[#allocation4 + $0xc0] sm:$0xff]
      %v6481 = vld [vmem:[#allocation4 + $0xc8] sm:$0xff]
      %v6482 = vld [vmem:[#allocation4 + $0xd0] sm:$0xff]
      %v6483 = vld [vmem:[#allocation4 + $0xd8] sm:$0xff]
      %v6484 = vld [vmem:[#allocation4 + $0xe0] sm:$0xff]
      %v6485 = vld [vmem:[#allocation4 + $0xe8] sm:$0xff]
      %v6486 = vld [vmem:[#allocation4 + $0xf0] sm:$0xff]
      %v6487 = vld [vmem:[#allocation4 + $0xf8] sm:$0xff]
      %v6488 = vld [vmem:[#allocation4 + $0x100] sm:$0xff]
      %v6489 = vld [vmem:[#allocation4 + $0x108] sm:$0xff]
      %v6490 = vld [vmem:[#allocation4 + $0x110] sm:$0xff]
      %v6491 = vld [vmem:[#allocation4 + $0x118] sm:$0xff]
      %v6492 = vld [vmem:[#allocation4 + $0x120] sm:$0xff]
      %v6493 = vld [vmem:[#allocation4 + $0x128] sm:$0xff]
      %v6494 = vld [vmem:[#allocation4 + $0x130] sm:$0xff]
      %v6495 = vld [vmem:[#allocation4 + $0x138] sm:$0xff]
      %v6496 = vld [vmem:[#allocation4 + $0x140] sm:$0xff]
      %v6497 = vld [vmem:[#allocation4 + $0x148] sm:$0xff]
      %v6498 = vld [vmem:[#allocation4 + $0x150] sm:$0xff]
      %v6499 = vld [vmem:[#allocation4 + $0x158] sm:$0xff]
      %v6500 = vld [vmem:[#allocation4 + $0x160] sm:$0xff]
      %v6501 = vld [vmem:[#allocation4 + $0x168] sm:$0xff]
      %v6502 = vld [vmem:[#allocation4 + $0x170] sm:$0xff]
      %v6503 = vld [vmem:[#allocation4 + $0x178] sm:$0xff]
      %v6504 = vld [vmem:[#allocation4 + $0x180] sm:$0xff]
      %v6505 = vld [vmem:[#allocation4 + $0x188] sm:$0xff]
      %v6506 = vld [vmem:[#allocation4 + $0x190] sm:$0xff]
      %v6507 = vld [vmem:[#allocation4 + $0x198] sm:$0xff]
      %v6508 = vld [vmem:[#allocation4 + $0x1a0] sm:$0xff]
      %v6509 = vld [vmem:[#allocation4 + $0x1a8] sm:$0xff]
      %v6510 = vld [vmem:[#allocation4 + $0x1b0] sm:$0xff]
      %v6511 = vld [vmem:[#allocation4 + $0x1b8] sm:$0xff]
      %v6512 = vld [vmem:[#allocation4 + $0x1c0] sm:$0xff]
      %v6513 = vld [vmem:[#allocation4 + $0x1c8] sm:$0xff]
      %v6514 = vld [vmem:[#allocation4 + $0x1d0] sm:$0xff]
      %v6515 = vld [vmem:[#allocation4 + $0x1d8] sm:$0xff]
      %v6516 = vld [vmem:[#allocation4 + $0x1e0] sm:$0xff]
      %v6517 = vld [vmem:[#allocation4 + $0x1e8] sm:$0xff]
      %v6518 = vld [vmem:[#allocation4 + $0x1f0] sm:$0xff]
      %v6519 = vld [vmem:[#allocation4 + $0x1f8] sm:$0xff]
      %v6520 = vld [vmem:[%s3] sm:$0xff]
      %v6521 = vld [vmem:[%s3 + $0x8] sm:$0xff]
      %v6522 = vld [vmem:[#allocation4 + $0x1] sm:$0xff]
      %v6523 = vld [vmem:[#allocation4 + $0x9] sm:$0xff]
      %v6524 = vld [vmem:[#allocation4 + $0x11] sm:$0xff]
      %v6525 = vld [vmem:[#allocation4 + $0x19] sm:$0xff]
      %v6526 = vld [vmem:[#allocation4 + $0x21] sm:$0xff]
      %v6527 = vld [vmem:[#allocation4 + $0x29] sm:$0xff]
      %v6528 = vld [vmem:[#allocation4 + $0x31] sm:$0xff]
      %v6529 = vld [vmem:[#allocation4 + $0x39] sm:$0xff]
      %v6530 = vld [vmem:[#allocation4 + $0x41] sm:$0xff]
      %v6531 = vld [vmem:[#allocation4 + $0x49] sm:$0xff]
      %v6532 = vld [vmem:[#allocation4 + $0x51] sm:$0xff]
      %v6533 = vld [vmem:[#allocation4 + $0x59] sm:$0xff]
      %v6534 = vld [vmem:[#allocation4 + $0x61] sm:$0xff]
      %v6535 = vld [vmem:[#allocation4 + $0x69] sm:$0xff]
      %v6536 = vld [vmem:[#allocation4 + $0x71] sm:$0xff]
      %v6537 = vld [vmem:[#allocation4 + $0x79] sm:$0xff]
      %v6538 = vld [vmem:[#allocation4 + $0x81] sm:$0xff]
      %v6539 = vld [vmem:[#allocation4 + $0x89] sm:$0xff]
      %v6540 = vld [vmem:[#allocation4 + $0x91] sm:$0xff]
      %v6541 = vld [vmem:[#allocation4 + $0x99] sm:$0xff]
      %v6542 = vld [vmem:[#allocation4 + $0xa1] sm:$0xff]
      %v6543 = vld [vmem:[#allocation4 + $0xa9] sm:$0xff]
      %v6544 = vld [vmem:[#allocation4 + $0xb1] sm:$0xff]
      %v6545 = vld [vmem:[#allocation4 + $0xb9] sm:$0xff]
      %v6546 = vld [vmem:[#allocation4 + $0xc1] sm:$0xff]
      %v6547 = vld [vmem:[#allocation4 + $0xc9] sm:$0xff]
      %v6548 = vld [vmem:[#allocation4 + $0xd1] sm:$0xff]
      %v6549 = vld [vmem:[#allocation4 + $0xd9] sm:$0xff]
      %v6550 = vld [vmem:[#allocation4 + $0xe1] sm:$0xff]
      %v6551 = vld [vmem:[#allocation4 + $0xe9] sm:$0xff]
      %v6552 = vld [vmem:[#allocation4 + $0xf1] sm:$0xff]
      %v6553 = vld [vmem:[#allocation4 + $0xf9] sm:$0xff]
      %v6554 = vld [vmem:[#allocation4 + $0x101] sm:$0xff]
      %v6555 = vld [vmem:[#allocation4 + $0x109] sm:$0xff]
      %v6556 = vld [vmem:[#allocation4 + $0x111] sm:$0xff]
      %v6557 = vld [vmem:[#allocation4 + $0x119] sm:$0xff]
      %v6558 = vld [vmem:[#allocation4 + $0x121] sm:$0xff]
      %v6559 = vld [vmem:[#allocation4 + $0x129] sm:$0xff]
      %v6560 = vld [vmem:[#allocation4 + $0x131] sm:$0xff]
      %v6561 = vld [vmem:[#allocation4 + $0x139] sm:$0xff]
      %v6562 = vld [vmem:[#allocation4 + $0x141] sm:$0xff]
      %v6563 = vld [vmem:[#allocation4 + $0x149] sm:$0xff]
      %v6564 = vld [vmem:[#allocation4 + $0x151] sm:$0xff]
      %v6565 = vld [vmem:[#allocation4 + $0x159] sm:$0xff]
      %v6566 = vld [vmem:[#allocation4 + $0x161] sm:$0xff]
      %v6567 = vld [vmem:[#allocation4 + $0x169] sm:$0xff]
      %v6568 = vld [vmem:[#allocation4 + $0x171] sm:$0xff]
      %v6569 = vld [vmem:[#allocation4 + $0x179] sm:$0xff]
      %v6570 = vld [vmem:[#allocation4 + $0x181] sm:$0xff]
      %v6571 = vld [vmem:[#allocation4 + $0x189] sm:$0xff]
      %v6572 = vld [vmem:[#allocation4 + $0x191] sm:$0xff]
      %v6573 = vld [vmem:[#allocation4 + $0x199] sm:$0xff]
      %v6574 = vld [vmem:[#allocation4 + $0x1a1] sm:$0xff]
      %v6575 = vld [vmem:[#allocation4 + $0x1a9] sm:$0xff]
      %v6576 = vld [vmem:[#allocation4 + $0x1b1] sm:$0xff]
      %v6577 = vld [vmem:[#allocation4 + $0x1b9] sm:$0xff]
      %v6578 = vld [vmem:[#allocation4 + $0x1c1] sm:$0xff]
      %v6579 = vld [vmem:[#allocation4 + $0x1c9] sm:$0xff]
      %v6580 = vld [vmem:[#allocation4 + $0x1d1] sm:$0xff]
      %v6581 = vld [vmem:[#allocation4 + $0x1d9] sm:$0xff]
      %v6582 = vld [vmem:[#allocation4 + $0x1e1] sm:$0xff]
      %v6583 = vld [vmem:[#allocation4 + $0x1e9] sm:$0xff]
      %v6584 = vld [vmem:[#allocation4 + $0x1f1] sm:$0xff]
      %v6585 = vld [vmem:[#allocation4 + $0x1f9] sm:$0xff]
      %s6586 = scalar_lea.vmem %s3, 16
      %v6587 = vld [vmem:[%s6586] sm:$0xff]
      %v6588 = vld [vmem:[%s6586 + $0x8] sm:$0xff]
      %v6590 = vsel %vm5942, %v6522, 0
      %v6593 = vsel %vm5942, %v6523, 0
      %v6596 = vsel %vm5942, %v6524, 0
      %v6599 = vsel %vm5942, %v6525, 0
      %v6602 = vsel %vm5942, %v6526, 0
      %v6605 = vsel %vm5942, %v6527, 0
      %v6608 = vsel %vm5942, %v6528, 0
      %v6611 = vsel %vm5942, %v6529, 0
      %v6614 = vsel %vm5942, %v6530, 0
      %v6617 = vsel %vm5942, %v6531, 0
      %v6620 = vsel %vm5942, %v6532, 0
      %v6623 = vsel %vm5942, %v6533, 0
      %v6626 = vsel %vm5942, %v6534, 0
      %v6629 = vsel %vm5942, %v6535, 0
      %v6632 = vsel %vm5942, %v6536, 0
      %v6635 = vsel %vm5942, %v6537, 0
      %v6638 = vsel %vm5942, %v6538, 0
      %v6641 = vsel %vm5942, %v6539, 0
      %v6644 = vsel %vm5942, %v6540, 0
      %v6647 = vsel %vm5942, %v6541, 0
      %v6650 = vsel %vm5942, %v6542, 0
      %v6653 = vsel %vm5942, %v6543, 0
      %v6656 = vsel %vm5942, %v6544, 0
      %v6659 = vsel %vm5942, %v6545, 0
      %v6662 = vsel %vm5942, %v6546, 0
      %v6665 = vsel %vm5942, %v6547, 0
      %v6668 = vsel %vm5942, %v6548, 0
      %v6671 = vsel %vm5942, %v6549, 0
      %v6674 = vsel %vm5942, %v6550, 0
      %v6677 = vsel %vm5942, %v6551, 0
      %v6680 = vsel %vm5942, %v6552, 0
      %v6683 = vsel %vm5942, %v6553, 0
      %v6686 = vsel %vm5942, %v6554, 0
      %v6689 = vsel %vm5942, %v6555, 0
      %v6692 = vsel %vm5942, %v6556, 0
      %v6695 = vsel %vm5942, %v6557, 0
      %v6698 = vsel %vm5942, %v6558, 0
      %v6701 = vsel %vm5942, %v6559, 0
      %v6704 = vsel %vm5942, %v6560, 0
      %v6707 = vsel %vm5942, %v6561, 0
      %v6710 = vsel %vm5942, %v6562, 0
      %v6713 = vsel %vm5942, %v6563, 0
      %v6716 = vsel %vm5942, %v6564, 0
      %v6719 = vsel %vm5942, %v6565, 0
      %v6722 = vsel %vm5942, %v6566, 0
      %v6725 = vsel %vm5942, %v6567, 0
      %v6728 = vsel %vm5942, %v6568, 0
      %v6731 = vsel %vm5942, %v6569, 0
      %v6734 = vsel %vm5942, %v6570, 0
      %v6737 = vsel %vm5942, %v6571, 0
      %v6740 = vsel %vm5942, %v6572, 0
      %v6743 = vsel %vm5942, %v6573, 0
      %v6746 = vsel %vm5942, %v6574, 0
      %v6749 = vsel %vm5942, %v6575, 0
      %v6752 = vsel %vm5942, %v6576, 0
      %v6755 = vsel %vm5942, %v6577, 0
      %v6758 = vsel %vm5942, %v6578, 0
      %v6761 = vsel %vm5942, %v6579, 0
      %v6764 = vsel %vm5942, %v6580, 0
      %v6767 = vsel %vm5942, %v6581, 0
      %v6770 = vsel %vm5942, %v6582, 0
      %v6773 = vsel %vm5942, %v6583, 0
      %v6776 = vsel %vm5942, %v6584, 0
      %v6779 = vsel %vm5942, %v6585, 0
      %6781 = vmatpush.msra.mxu0 0.0
      %6782 = vmatpush.msra.mxu0 0.0
      %6783 = vmatpush.msra.mxu0 0.0
      %6784 = vmatpush.msra.mxu0 0.0
      %6785 = vmatpush.msra.mxu0 0.0
      %6786 = vmatpush.msra.mxu0 0.0
      %6787 = vmatpush.msra.mxu0 0.0
      %6788 = vmatpush.msra.mxu0 0.0
      %6789 = vmatpush.msra.mxu0 0.0
      %6790 = vmatpush.msra.mxu0 0.0
      %6791 = vmatpush.msra.mxu0 0.0
      %6792 = vmatpush.msra.mxu0 0.0
      %6793 = vmatpush.msra.mxu0 0.0
      %6794 = vmatpush.msra.mxu0 0.0
      %6795 = vmatpush.msra.mxu0 %v6588
      %6796 = vmatpush.msra.mxu0 %v6587
      %6797 = vmatmul.f32.gmra.mxu0 %v6590
      %v6798 = vpop.f32.mrf.mxu0
      %v6799 = vadd.f32 0.0, %v6798
      %6800 = vmatmul.f32.gmra.mxu0 %v6593
      %v6801 = vpop.f32.mrf.mxu0
      %v6802 = vadd.f32 0.0, %v6801
      %6803 = vmatmul.f32.gmra.mxu0 %v6596
      %v6804 = vpop.f32.mrf.mxu0
      %v6805 = vadd.f32 0.0, %v6804
      %6806 = vmatmul.f32.gmra.mxu0 %v6599
      %v6807 = vpop.f32.mrf.mxu0
      %v6808 = vadd.f32 0.0, %v6807
      %6809 = vmatmul.f32.gmra.mxu0 %v6602
      %v6810 = vpop.f32.mrf.mxu0
      %v6811 = vadd.f32 0.0, %v6810
      %6812 = vmatmul.f32.gmra.mxu0 %v6605
      %v6813 = vpop.f32.mrf.mxu0
      %v6814 = vadd.f32 0.0, %v6813
      %6815 = vmatmul.f32.gmra.mxu0 %v6608
      %v6816 = vpop.f32.mrf.mxu0
      %v6817 = vadd.f32 0.0, %v6816
      %6818 = vmatmul.f32.gmra.mxu0 %v6611
      %v6819 = vpop.f32.mrf.mxu0
      %v6820 = vadd.f32 0.0, %v6819
      %6821 = vmatmul.f32.gmra.mxu0 %v6614
      %v6822 = vpop.f32.mrf.mxu0
      %v6823 = vadd.f32 0.0, %v6822
      %6824 = vmatmul.f32.gmra.mxu0 %v6617
      %v6825 = vpop.f32.mrf.mxu0
      %v6826 = vadd.f32 0.0, %v6825
      %6827 = vmatmul.f32.gmra.mxu0 %v6620
      %v6828 = vpop.f32.mrf.mxu0
      %v6829 = vadd.f32 0.0, %v6828
      %6830 = vmatmul.f32.gmra.mxu0 %v6623
      %v6831 = vpop.f32.mrf.mxu0
      %v6832 = vadd.f32 0.0, %v6831
      %6833 = vmatmul.f32.gmra.mxu0 %v6626
      %v6834 = vpop.f32.mrf.mxu0
      %v6835 = vadd.f32 0.0, %v6834
      %6836 = vmatmul.f32.gmra.mxu0 %v6629
      %v6837 = vpop.f32.mrf.mxu0
      %v6838 = vadd.f32 0.0, %v6837
      %6839 = vmatmul.f32.gmra.mxu0 %v6632
      %v6840 = vpop.f32.mrf.mxu0
      %v6841 = vadd.f32 0.0, %v6840
      %6842 = vmatmul.f32.gmra.mxu0 %v6635
      %v6843 = vpop.f32.mrf.mxu0
      %v6844 = vadd.f32 0.0, %v6843
      %6845 = vmatmul.f32.gmra.mxu0 %v6638
      %v6846 = vpop.f32.mrf.mxu0
      %v6847 = vadd.f32 0.0, %v6846
      %6848 = vmatmul.f32.gmra.mxu0 %v6641
      %v6849 = vpop.f32.mrf.mxu0
      %v6850 = vadd.f32 0.0, %v6849
      %6851 = vmatmul.f32.gmra.mxu0 %v6644
      %v6852 = vpop.f32.mrf.mxu0
      %v6853 = vadd.f32 0.0, %v6852
      %6854 = vmatmul.f32.gmra.mxu0 %v6647
      %v6855 = vpop.f32.mrf.mxu0
      %v6856 = vadd.f32 0.0, %v6855
      %6857 = vmatmul.f32.gmra.mxu0 %v6650
      %v6858 = vpop.f32.mrf.mxu0
      %v6859 = vadd.f32 0.0, %v6858
      %6860 = vmatmul.f32.gmra.mxu0 %v6653
      %v6861 = vpop.f32.mrf.mxu0
      %v6862 = vadd.f32 0.0, %v6861
      %6863 = vmatmul.f32.gmra.mxu0 %v6656
      %v6864 = vpop.f32.mrf.mxu0
      %v6865 = vadd.f32 0.0, %v6864
      %6866 = vmatmul.f32.gmra.mxu0 %v6659
      %v6867 = vpop.f32.mrf.mxu0
      %v6868 = vadd.f32 0.0, %v6867
      %6869 = vmatmul.f32.gmra.mxu0 %v6662
      %v6870 = vpop.f32.mrf.mxu0
      %v6871 = vadd.f32 0.0, %v6870
      %6872 = vmatmul.f32.gmra.mxu0 %v6665
      %v6873 = vpop.f32.mrf.mxu0
      %v6874 = vadd.f32 0.0, %v6873
      %6875 = vmatmul.f32.gmra.mxu0 %v6668
      %v6876 = vpop.f32.mrf.mxu0
      %v6877 = vadd.f32 0.0, %v6876
      %6878 = vmatmul.f32.gmra.mxu0 %v6671
      %v6879 = vpop.f32.mrf.mxu0
      %v6880 = vadd.f32 0.0, %v6879
      %6881 = vmatmul.f32.gmra.mxu0 %v6674
      %v6882 = vpop.f32.mrf.mxu0
      %v6883 = vadd.f32 0.0, %v6882
      %6884 = vmatmul.f32.gmra.mxu0 %v6677
      %v6885 = vpop.f32.mrf.mxu0
      %v6886 = vadd.f32 0.0, %v6885
      %6887 = vmatmul.f32.gmra.mxu0 %v6680
      %v6888 = vpop.f32.mrf.mxu0
      %v6889 = vadd.f32 0.0, %v6888
      %6890 = vmatmul.f32.gmra.mxu0 %v6683
      %v6891 = vpop.f32.mrf.mxu0
      %v6892 = vadd.f32 0.0, %v6891
      %6893 = vmatmul.f32.gmra.mxu0 %v6686
      %v6894 = vpop.f32.mrf.mxu0
      %v6895 = vadd.f32 0.0, %v6894
      %6896 = vmatmul.f32.gmra.mxu0 %v6689
      %v6897 = vpop.f32.mrf.mxu0
      %v6898 = vadd.f32 0.0, %v6897
      %6899 = vmatmul.f32.gmra.mxu0 %v6692
      %v6900 = vpop.f32.mrf.mxu0
      %v6901 = vadd.f32 0.0, %v6900
      %6902 = vmatmul.f32.gmra.mxu0 %v6695
      %v6903 = vpop.f32.mrf.mxu0
      %v6904 = vadd.f32 0.0, %v6903
      %6905 = vmatmul.f32.gmra.mxu0 %v6698
      %v6906 = vpop.f32.mrf.mxu0
      %v6907 = vadd.f32 0.0, %v6906
      %6908 = vmatmul.f32.gmra.mxu0 %v6701
      %v6909 = vpop.f32.mrf.mxu0
      %v6910 = vadd.f32 0.0, %v6909
      %6911 = vmatmul.f32.gmra.mxu0 %v6704
      %v6912 = vpop.f32.mrf.mxu0
      %v6913 = vadd.f32 0.0, %v6912
      %6914 = vmatmul.f32.gmra.mxu0 %v6707
      %v6915 = vpop.f32.mrf.mxu0
      %v6916 = vadd.f32 0.0, %v6915
      %6917 = vmatmul.f32.gmra.mxu0 %v6710
      %v6918 = vpop.f32.mrf.mxu0
      %v6919 = vadd.f32 0.0, %v6918
      %6920 = vmatmul.f32.gmra.mxu0 %v6713
      %v6921 = vpop.f32.mrf.mxu0
      %v6922 = vadd.f32 0.0, %v6921
      %6923 = vmatmul.f32.gmra.mxu0 %v6716
      %v6924 = vpop.f32.mrf.mxu0
      %v6925 = vadd.f32 0.0, %v6924
      %6926 = vmatmul.f32.gmra.mxu0 %v6719
      %v6927 = vpop.f32.mrf.mxu0
      %v6928 = vadd.f32 0.0, %v6927
      %6929 = vmatmul.f32.gmra.mxu0 %v6722
      %v6930 = vpop.f32.mrf.mxu0
      %v6931 = vadd.f32 0.0, %v6930
      %6932 = vmatmul.f32.gmra.mxu0 %v6725
      %v6933 = vpop.f32.mrf.mxu0
      %v6934 = vadd.f32 0.0, %v6933
      %6935 = vmatmul.f32.gmra.mxu0 %v6728
      %v6936 = vpop.f32.mrf.mxu0
      %v6937 = vadd.f32 0.0, %v6936
      %6938 = vmatmul.f32.gmra.mxu0 %v6731
      %v6939 = vpop.f32.mrf.mxu0
      %v6940 = vadd.f32 0.0, %v6939
      %6941 = vmatmul.f32.gmra.mxu0 %v6734
      %v6942 = vpop.f32.mrf.mxu0
      %v6943 = vadd.f32 0.0, %v6942
      %6944 = vmatmul.f32.gmra.mxu0 %v6737
      %v6945 = vpop.f32.mrf.mxu0
      %v6946 = vadd.f32 0.0, %v6945
      %6947 = vmatmul.f32.gmra.mxu0 %v6740
      %v6948 = vpop.f32.mrf.mxu0
      %v6949 = vadd.f32 0.0, %v6948
      %6950 = vmatmul.f32.gmra.mxu0 %v6743
      %v6951 = vpop.f32.mrf.mxu0
      %v6952 = vadd.f32 0.0, %v6951
      %6953 = vmatmul.f32.gmra.mxu0 %v6746
      %v6954 = vpop.f32.mrf.mxu0
      %v6955 = vadd.f32 0.0, %v6954
      %6956 = vmatmul.f32.gmra.mxu0 %v6749
      %v6957 = vpop.f32.mrf.mxu0
      %v6958 = vadd.f32 0.0, %v6957
      %6959 = vmatmul.f32.gmra.mxu0 %v6752
      %v6960 = vpop.f32.mrf.mxu0
      %v6961 = vadd.f32 0.0, %v6960
      %6962 = vmatmul.f32.gmra.mxu0 %v6755
      %v6963 = vpop.f32.mrf.mxu0
      %v6964 = vadd.f32 0.0, %v6963
      %6965 = vmatmul.f32.gmra.mxu0 %v6758
      %v6966 = vpop.f32.mrf.mxu0
      %v6967 = vadd.f32 0.0, %v6966
      %6968 = vmatmul.f32.gmra.mxu0 %v6761
      %v6969 = vpop.f32.mrf.mxu0
      %v6970 = vadd.f32 0.0, %v6969
      %6971 = vmatmul.f32.gmra.mxu0 %v6764
      %v6972 = vpop.f32.mrf.mxu0
      %v6973 = vadd.f32 0.0, %v6972
      %6974 = vmatmul.f32.gmra.mxu0 %v6767
      %v6975 = vpop.f32.mrf.mxu0
      %v6976 = vadd.f32 0.0, %v6975
      %6977 = vmatmul.f32.gmra.mxu0 %v6770
      %v6978 = vpop.f32.mrf.mxu0
      %v6979 = vadd.f32 0.0, %v6978
      %6980 = vmatmul.f32.gmra.mxu0 %v6773
      %v6981 = vpop.f32.mrf.mxu0
      %v6982 = vadd.f32 0.0, %v6981
      %6983 = vmatmul.f32.gmra.mxu0 %v6776
      %v6984 = vpop.f32.mrf.mxu0
      %v6985 = vadd.f32 0.0, %v6984
      %6986 = vmatmul.f32.gmra.mxu0 %v6779
      %v6987 = vpop.f32.mrf.mxu0
      %v6988 = vadd.f32 0.0, %v6987
      %6989 = vdwg.mxu0
      %v6991 = vsel %vm5942, %v6456, 0
      %v6994 = vsel %vm5942, %v6457, 0
      %v6997 = vsel %vm5942, %v6458, 0
      %v7000 = vsel %vm5942, %v6459, 0
      %v7003 = vsel %vm5942, %v6460, 0
      %v7006 = vsel %vm5942, %v6461, 0
      %v7009 = vsel %vm5942, %v6462, 0
      %v7012 = vsel %vm5942, %v6463, 0
      %v7015 = vsel %vm5942, %v6464, 0
      %v7018 = vsel %vm5942, %v6465, 0
      %v7021 = vsel %vm5942, %v6466, 0
      %v7024 = vsel %vm5942, %v6467, 0
      %v7027 = vsel %vm5942, %v6468, 0
      %v7030 = vsel %vm5942, %v6469, 0
      %v7033 = vsel %vm5942, %v6470, 0
      %v7036 = vsel %vm5942, %v6471, 0
      %v7039 = vsel %vm5942, %v6472, 0
      %v7042 = vsel %vm5942, %v6473, 0
      %v7045 = vsel %vm5942, %v6474, 0
      %v7048 = vsel %vm5942, %v6475, 0
      %v7051 = vsel %vm5942, %v6476, 0
      %v7054 = vsel %vm5942, %v6477, 0
      %v7057 = vsel %vm5942, %v6478, 0
      %v7060 = vsel %vm5942, %v6479, 0
      %v7063 = vsel %vm5942, %v6480, 0
      %v7066 = vsel %vm5942, %v6481, 0
      %v7069 = vsel %vm5942, %v6482, 0
      %v7072 = vsel %vm5942, %v6483, 0
      %v7075 = vsel %vm5942, %v6484, 0
      %v7078 = vsel %vm5942, %v6485, 0
      %v7081 = vsel %vm5942, %v6486, 0
      %v7084 = vsel %vm5942, %v6487, 0
      %v7087 = vsel %vm5942, %v6488, 0
      %v7090 = vsel %vm5942, %v6489, 0
      %v7093 = vsel %vm5942, %v6490, 0
      %v7096 = vsel %vm5942, %v6491, 0
      %v7099 = vsel %vm5942, %v6492, 0
      %v7102 = vsel %vm5942, %v6493, 0
      %v7105 = vsel %vm5942, %v6494, 0
      %v7108 = vsel %vm5942, %v6495, 0
      %v7111 = vsel %vm5942, %v6496, 0
      %v7114 = vsel %vm5942, %v6497, 0
      %v7117 = vsel %vm5942, %v6498, 0
      %v7120 = vsel %vm5942, %v6499, 0
      %v7123 = vsel %vm5942, %v6500, 0
      %v7126 = vsel %vm5942, %v6501, 0
      %v7129 = vsel %vm5942, %v6502, 0
      %v7132 = vsel %vm5942, %v6503, 0
      %v7135 = vsel %vm5942, %v6504, 0
      %v7138 = vsel %vm5942, %v6505, 0
      %v7141 = vsel %vm5942, %v6506, 0
      %v7144 = vsel %vm5942, %v6507, 0
      %v7147 = vsel %vm5942, %v6508, 0
      %v7150 = vsel %vm5942, %v6509, 0
      %v7153 = vsel %vm5942, %v6510, 0
      %v7156 = vsel %vm5942, %v6511, 0
      %v7159 = vsel %vm5942, %v6512, 0
      %v7162 = vsel %vm5942, %v6513, 0
      %v7165 = vsel %vm5942, %v6514, 0
      %v7168 = vsel %vm5942, %v6515, 0
      %v7171 = vsel %vm5942, %v6516, 0
      %v7174 = vsel %vm5942, %v6517, 0
      %v7177 = vsel %vm5942, %v6518, 0
      %v7180 = vsel %vm5942, %v6519, 0
      %7182 = vmatpush.msra.mxu0 0.0
      %7183 = vmatpush.msra.mxu0 0.0
      %7184 = vmatpush.msra.mxu0 0.0
      %7185 = vmatpush.msra.mxu0 0.0
      %7186 = vmatpush.msra.mxu0 0.0
      %7187 = vmatpush.msra.mxu0 0.0
      %7188 = vmatpush.msra.mxu0 0.0
      %7189 = vmatpush.msra.mxu0 0.0
      %7190 = vmatpush.msra.mxu0 0.0
      %7191 = vmatpush.msra.mxu0 0.0
      %7192 = vmatpush.msra.mxu0 0.0
      %7193 = vmatpush.msra.mxu0 0.0
      %7194 = vmatpush.msra.mxu0 0.0
      %7195 = vmatpush.msra.mxu0 0.0
      %7196 = vmatpush.msra.mxu0 %v6521
      %7197 = vmatpush.msra.mxu0 %v6520
      %7198 = vmatmul.f32.gmra.mxu0 %v6991
      %v7199 = vpop.f32.mrf.mxu0
      %v7200 = vadd.f32 %v6799, %v7199
      %7201 = vmatmul.f32.gmra.mxu0 %v6994
      %v7202 = vpop.f32.mrf.mxu0
      %v7203 = vadd.f32 %v6802, %v7202
      %7204 = vmatmul.f32.gmra.mxu0 %v6997
      %v7205 = vpop.f32.mrf.mxu0
      %v7206 = vadd.f32 %v6805, %v7205
      %7207 = vmatmul.f32.gmra.mxu0 %v7000
      %v7208 = vpop.f32.mrf.mxu0
      %v7209 = vadd.f32 %v6808, %v7208
      %7210 = vmatmul.f32.gmra.mxu0 %v7003
      %v7211 = vpop.f32.mrf.mxu0
      %v7212 = vadd.f32 %v6811, %v7211
      %7213 = vmatmul.f32.gmra.mxu0 %v7006
      %v7214 = vpop.f32.mrf.mxu0
      %v7215 = vadd.f32 %v6814, %v7214
      %7216 = vmatmul.f32.gmra.mxu0 %v7009
      %v7217 = vpop.f32.mrf.mxu0
      %v7218 = vadd.f32 %v6817, %v7217
      %7219 = vmatmul.f32.gmra.mxu0 %v7012
      %v7220 = vpop.f32.mrf.mxu0
      %v7221 = vadd.f32 %v6820, %v7220
      %7222 = vmatmul.f32.gmra.mxu0 %v7015
      %v7223 = vpop.f32.mrf.mxu0
      %v7224 = vadd.f32 %v6823, %v7223
      %7225 = vmatmul.f32.gmra.mxu0 %v7018
      %v7226 = vpop.f32.mrf.mxu0
      %v7227 = vadd.f32 %v6826, %v7226
      %7228 = vmatmul.f32.gmra.mxu0 %v7021
      %v7229 = vpop.f32.mrf.mxu0
      %v7230 = vadd.f32 %v6829, %v7229
      %7231 = vmatmul.f32.gmra.mxu0 %v7024
      %v7232 = vpop.f32.mrf.mxu0
      %v7233 = vadd.f32 %v6832, %v7232
      %7234 = vmatmul.f32.gmra.mxu0 %v7027
      %v7235 = vpop.f32.mrf.mxu0
      %v7236 = vadd.f32 %v6835, %v7235
      %7237 = vmatmul.f32.gmra.mxu0 %v7030
      %v7238 = vpop.f32.mrf.mxu0
      %v7239 = vadd.f32 %v6838, %v7238
      %7240 = vmatmul.f32.gmra.mxu0 %v7033
      %v7241 = vpop.f32.mrf.mxu0
      %v7242 = vadd.f32 %v6841, %v7241
      %7243 = vmatmul.f32.gmra.mxu0 %v7036
      %v7244 = vpop.f32.mrf.mxu0
      %v7245 = vadd.f32 %v6844, %v7244
      %7246 = vmatmul.f32.gmra.mxu0 %v7039
      %v7247 = vpop.f32.mrf.mxu0
      %v7248 = vadd.f32 %v6847, %v7247
      %7249 = vmatmul.f32.gmra.mxu0 %v7042
      %v7250 = vpop.f32.mrf.mxu0
      %v7251 = vadd.f32 %v6850, %v7250
      %7252 = vmatmul.f32.gmra.mxu0 %v7045
      %v7253 = vpop.f32.mrf.mxu0
      %v7254 = vadd.f32 %v6853, %v7253
      %7255 = vmatmul.f32.gmra.mxu0 %v7048
      %v7256 = vpop.f32.mrf.mxu0
      %v7257 = vadd.f32 %v6856, %v7256
      %7258 = vmatmul.f32.gmra.mxu0 %v7051
      %v7259 = vpop.f32.mrf.mxu0
      %v7260 = vadd.f32 %v6859, %v7259
      %7261 = vmatmul.f32.gmra.mxu0 %v7054
      %v7262 = vpop.f32.mrf.mxu0
      %v7263 = vadd.f32 %v6862, %v7262
      %7264 = vmatmul.f32.gmra.mxu0 %v7057
      %v7265 = vpop.f32.mrf.mxu0
      %v7266 = vadd.f32 %v6865, %v7265
      %7267 = vmatmul.f32.gmra.mxu0 %v7060
      %v7268 = vpop.f32.mrf.mxu0
      %v7269 = vadd.f32 %v6868, %v7268
      %7270 = vmatmul.f32.gmra.mxu0 %v7063
      %v7271 = vpop.f32.mrf.mxu0
      %v7272 = vadd.f32 %v6871, %v7271
      %7273 = vmatmul.f32.gmra.mxu0 %v7066
      %v7274 = vpop.f32.mrf.mxu0
      %v7275 = vadd.f32 %v6874, %v7274
      %7276 = vmatmul.f32.gmra.mxu0 %v7069
      %v7277 = vpop.f32.mrf.mxu0
      %v7278 = vadd.f32 %v6877, %v7277
      %7279 = vmatmul.f32.gmra.mxu0 %v7072
      %v7280 = vpop.f32.mrf.mxu0
      %v7281 = vadd.f32 %v6880, %v7280
      %7282 = vmatmul.f32.gmra.mxu0 %v7075
      %v7283 = vpop.f32.mrf.mxu0
      %v7284 = vadd.f32 %v6883, %v7283
      %7285 = vmatmul.f32.gmra.mxu0 %v7078
      %v7286 = vpop.f32.mrf.mxu0
      %v7287 = vadd.f32 %v6886, %v7286
      %7288 = vmatmul.f32.gmra.mxu0 %v7081
      %v7289 = vpop.f32.mrf.mxu0
      %v7290 = vadd.f32 %v6889, %v7289
      %7291 = vmatmul.f32.gmra.mxu0 %v7084
      %v7292 = vpop.f32.mrf.mxu0
      %v7293 = vadd.f32 %v6892, %v7292
      %7294 = vmatmul.f32.gmra.mxu0 %v7087
      %v7295 = vpop.f32.mrf.mxu0
      %v7296 = vadd.f32 %v6895, %v7295
      %7297 = vmatmul.f32.gmra.mxu0 %v7090
      %v7298 = vpop.f32.mrf.mxu0
      %v7299 = vadd.f32 %v6898, %v7298
      %7300 = vmatmul.f32.gmra.mxu0 %v7093
      %v7301 = vpop.f32.mrf.mxu0
      %v7302 = vadd.f32 %v6901, %v7301
      %7303 = vmatmul.f32.gmra.mxu0 %v7096
      %v7304 = vpop.f32.mrf.mxu0
      %v7305 = vadd.f32 %v6904, %v7304
      %7306 = vmatmul.f32.gmra.mxu0 %v7099
      %v7307 = vpop.f32.mrf.mxu0
      %v7308 = vadd.f32 %v6907, %v7307
      %7309 = vmatmul.f32.gmra.mxu0 %v7102
      %v7310 = vpop.f32.mrf.mxu0
      %v7311 = vadd.f32 %v6910, %v7310
      %7312 = vmatmul.f32.gmra.mxu0 %v7105
      %v7313 = vpop.f32.mrf.mxu0
      %v7314 = vadd.f32 %v6913, %v7313
      %7315 = vmatmul.f32.gmra.mxu0 %v7108
      %v7316 = vpop.f32.mrf.mxu0
      %v7317 = vadd.f32 %v6916, %v7316
      %7318 = vmatmul.f32.gmra.mxu0 %v7111
      %v7319 = vpop.f32.mrf.mxu0
      %v7320 = vadd.f32 %v6919, %v7319
      %7321 = vmatmul.f32.gmra.mxu0 %v7114
      %v7322 = vpop.f32.mrf.mxu0
      %v7323 = vadd.f32 %v6922, %v7322
      %7324 = vmatmul.f32.gmra.mxu0 %v7117
      %v7325 = vpop.f32.mrf.mxu0
      %v7326 = vadd.f32 %v6925, %v7325
      %7327 = vmatmul.f32.gmra.mxu0 %v7120
      %v7328 = vpop.f32.mrf.mxu0
      %v7329 = vadd.f32 %v6928, %v7328
      %7330 = vmatmul.f32.gmra.mxu0 %v7123
      %v7331 = vpop.f32.mrf.mxu0
      %v7332 = vadd.f32 %v6931, %v7331
      %7333 = vmatmul.f32.gmra.mxu0 %v7126
      %v7334 = vpop.f32.mrf.mxu0
      %v7335 = vadd.f32 %v6934, %v7334
      %7336 = vmatmul.f32.gmra.mxu0 %v7129
      %v7337 = vpop.f32.mrf.mxu0
      %v7338 = vadd.f32 %v6937, %v7337
      %7339 = vmatmul.f32.gmra.mxu0 %v7132
      %v7340 = vpop.f32.mrf.mxu0
      %v7341 = vadd.f32 %v6940, %v7340
      %7342 = vmatmul.f32.gmra.mxu0 %v7135
      %v7343 = vpop.f32.mrf.mxu0
      %v7344 = vadd.f32 %v6943, %v7343
      %7345 = vmatmul.f32.gmra.mxu0 %v7138
      %v7346 = vpop.f32.mrf.mxu0
      %v7347 = vadd.f32 %v6946, %v7346
      %7348 = vmatmul.f32.gmra.mxu0 %v7141
      %v7349 = vpop.f32.mrf.mxu0
      %v7350 = vadd.f32 %v6949, %v7349
      %7351 = vmatmul.f32.gmra.mxu0 %v7144
      %v7352 = vpop.f32.mrf.mxu0
      %v7353 = vadd.f32 %v6952, %v7352
      %7354 = vmatmul.f32.gmra.mxu0 %v7147
      %v7355 = vpop.f32.mrf.mxu0
      %v7356 = vadd.f32 %v6955, %v7355
      %7357 = vmatmul.f32.gmra.mxu0 %v7150
      %v7358 = vpop.f32.mrf.mxu0
      %v7359 = vadd.f32 %v6958, %v7358
      %7360 = vmatmul.f32.gmra.mxu0 %v7153
      %v7361 = vpop.f32.mrf.mxu0
      %v7362 = vadd.f32 %v6961, %v7361
      %7363 = vmatmul.f32.gmra.mxu0 %v7156
      %v7364 = vpop.f32.mrf.mxu0
      %v7365 = vadd.f32 %v6964, %v7364
      %7366 = vmatmul.f32.gmra.mxu0 %v7159
      %v7367 = vpop.f32.mrf.mxu0
      %v7368 = vadd.f32 %v6967, %v7367
      %7369 = vmatmul.f32.gmra.mxu0 %v7162
      %v7370 = vpop.f32.mrf.mxu0
      %v7371 = vadd.f32 %v6970, %v7370
      %7372 = vmatmul.f32.gmra.mxu0 %v7165
      %v7373 = vpop.f32.mrf.mxu0
      %v7374 = vadd.f32 %v6973, %v7373
      %7375 = vmatmul.f32.gmra.mxu0 %v7168
      %v7376 = vpop.f32.mrf.mxu0
      %v7377 = vadd.f32 %v6976, %v7376
      %7378 = vmatmul.f32.gmra.mxu0 %v7171
      %v7379 = vpop.f32.mrf.mxu0
      %v7380 = vadd.f32 %v6979, %v7379
      %7381 = vmatmul.f32.gmra.mxu0 %v7174
      %v7382 = vpop.f32.mrf.mxu0
      %v7383 = vadd.f32 %v6982, %v7382
      %7384 = vmatmul.f32.gmra.mxu0 %v7177
      %v7385 = vpop.f32.mrf.mxu0
      %v7386 = vadd.f32 %v6985, %v7385
      %7387 = vmatmul.f32.gmra.mxu0 %v7180
      %v7388 = vpop.f32.mrf.mxu0
      %v7389 = vadd.f32 %v6988, %v7388
      %7390 = vdwg.mxu0
      %v7391 = vld [vmem:[#allocation4 + $0x2] sm:$0xff]
      %v7392 = vld [vmem:[#allocation4 + $0xa] sm:$0xff]
      %v7393 = vld [vmem:[#allocation4 + $0x12] sm:$0xff]
      %v7394 = vld [vmem:[#allocation4 + $0x1a] sm:$0xff]
      %v7395 = vld [vmem:[#allocation4 + $0x22] sm:$0xff]
      %v7396 = vld [vmem:[#allocation4 + $0x2a] sm:$0xff]
      %v7397 = vld [vmem:[#allocation4 + $0x32] sm:$0xff]
      %v7398 = vld [vmem:[#allocation4 + $0x3a] sm:$0xff]
      %v7399 = vld [vmem:[#allocation4 + $0x42] sm:$0xff]
      %v7400 = vld [vmem:[#allocation4 + $0x4a] sm:$0xff]
      %v7401 = vld [vmem:[#allocation4 + $0x52] sm:$0xff]
      %v7402 = vld [vmem:[#allocation4 + $0x5a] sm:$0xff]
      %v7403 = vld [vmem:[#allocation4 + $0x62] sm:$0xff]
      %v7404 = vld [vmem:[#allocation4 + $0x6a] sm:$0xff]
      %v7405 = vld [vmem:[#allocation4 + $0x72] sm:$0xff]
      %v7406 = vld [vmem:[#allocation4 + $0x7a] sm:$0xff]
      %v7407 = vld [vmem:[#allocation4 + $0x82] sm:$0xff]
      %v7408 = vld [vmem:[#allocation4 + $0x8a] sm:$0xff]
      %v7409 = vld [vmem:[#allocation4 + $0x92] sm:$0xff]
      %v7410 = vld [vmem:[#allocation4 + $0x9a] sm:$0xff]
      %v7411 = vld [vmem:[#allocation4 + $0xa2] sm:$0xff]
      %v7412 = vld [vmem:[#allocation4 + $0xaa] sm:$0xff]
      %v7413 = vld [vmem:[#allocation4 + $0xb2] sm:$0xff]
      %v7414 = vld [vmem:[#allocation4 + $0xba] sm:$0xff]
      %v7415 = vld [vmem:[#allocation4 + $0xc2] sm:$0xff]
      %v7416 = vld [vmem:[#allocation4 + $0xca] sm:$0xff]
      %v7417 = vld [vmem:[#allocation4 + $0xd2] sm:$0xff]
      %v7418 = vld [vmem:[#allocation4 + $0xda] sm:$0xff]
      %v7419 = vld [vmem:[#allocation4 + $0xe2] sm:$0xff]
      %v7420 = vld [vmem:[#allocation4 + $0xea] sm:$0xff]
      %v7421 = vld [vmem:[#allocation4 + $0xf2] sm:$0xff]
      %v7422 = vld [vmem:[#allocation4 + $0xfa] sm:$0xff]
      %v7423 = vld [vmem:[#allocation4 + $0x102] sm:$0xff]
      %v7424 = vld [vmem:[#allocation4 + $0x10a] sm:$0xff]
      %v7425 = vld [vmem:[#allocation4 + $0x112] sm:$0xff]
      %v7426 = vld [vmem:[#allocation4 + $0x11a] sm:$0xff]
      %v7427 = vld [vmem:[#allocation4 + $0x122] sm:$0xff]
      %v7428 = vld [vmem:[#allocation4 + $0x12a] sm:$0xff]
      %v7429 = vld [vmem:[#allocation4 + $0x132] sm:$0xff]
      %v7430 = vld [vmem:[#allocation4 + $0x13a] sm:$0xff]
      %v7431 = vld [vmem:[#allocation4 + $0x142] sm:$0xff]
      %v7432 = vld [vmem:[#allocation4 + $0x14a] sm:$0xff]
      %v7433 = vld [vmem:[#allocation4 + $0x152] sm:$0xff]
      %v7434 = vld [vmem:[#allocation4 + $0x15a] sm:$0xff]
      %v7435 = vld [vmem:[#allocation4 + $0x162] sm:$0xff]
      %v7436 = vld [vmem:[#allocation4 + $0x16a] sm:$0xff]
      %v7437 = vld [vmem:[#allocation4 + $0x172] sm:$0xff]
      %v7438 = vld [vmem:[#allocation4 + $0x17a] sm:$0xff]
      %v7439 = vld [vmem:[#allocation4 + $0x182] sm:$0xff]
      %v7440 = vld [vmem:[#allocation4 + $0x18a] sm:$0xff]
      %v7441 = vld [vmem:[#allocation4 + $0x192] sm:$0xff]
      %v7442 = vld [vmem:[#allocation4 + $0x19a] sm:$0xff]
      %v7443 = vld [vmem:[#allocation4 + $0x1a2] sm:$0xff]
      %v7444 = vld [vmem:[#allocation4 + $0x1aa] sm:$0xff]
      %v7445 = vld [vmem:[#allocation4 + $0x1b2] sm:$0xff]
      %v7446 = vld [vmem:[#allocation4 + $0x1ba] sm:$0xff]
      %v7447 = vld [vmem:[#allocation4 + $0x1c2] sm:$0xff]
      %v7448 = vld [vmem:[#allocation4 + $0x1ca] sm:$0xff]
      %v7449 = vld [vmem:[#allocation4 + $0x1d2] sm:$0xff]
      %v7450 = vld [vmem:[#allocation4 + $0x1da] sm:$0xff]
      %v7451 = vld [vmem:[#allocation4 + $0x1e2] sm:$0xff]
      %v7452 = vld [vmem:[#allocation4 + $0x1ea] sm:$0xff]
      %v7453 = vld [vmem:[#allocation4 + $0x1f2] sm:$0xff]
      %v7454 = vld [vmem:[#allocation4 + $0x1fa] sm:$0xff]
      %s7455 = scalar_lea.vmem %s3, 32
      %v7456 = vld [vmem:[%s7455] sm:$0xff]
      %v7457 = vld [vmem:[%s7455 + $0x8] sm:$0xff]
      %v7459 = vsel %vm5942, %v7391, 0
      %v7462 = vsel %vm5942, %v7392, 0
      %v7465 = vsel %vm5942, %v7393, 0
      %v7468 = vsel %vm5942, %v7394, 0
      %v7471 = vsel %vm5942, %v7395, 0
      %v7474 = vsel %vm5942, %v7396, 0
      %v7477 = vsel %vm5942, %v7397, 0
      %v7480 = vsel %vm5942, %v7398, 0
      %v7483 = vsel %vm5942, %v7399, 0
      %v7486 = vsel %vm5942, %v7400, 0
      %v7489 = vsel %vm5942, %v7401, 0
      %v7492 = vsel %vm5942, %v7402, 0
      %v7495 = vsel %vm5942, %v7403, 0
      %v7498 = vsel %vm5942, %v7404, 0
      %v7501 = vsel %vm5942, %v7405, 0
      %v7504 = vsel %vm5942, %v7406, 0
      %v7507 = vsel %vm5942, %v7407, 0
      %v7510 = vsel %vm5942, %v7408, 0
      %v7513 = vsel %vm5942, %v7409, 0
      %v7516 = vsel %vm5942, %v7410, 0
      %v7519 = vsel %vm5942, %v7411, 0
      %v7522 = vsel %vm5942, %v7412, 0
      %v7525 = vsel %vm5942, %v7413, 0
      %v7528 = vsel %vm5942, %v7414, 0
      %v7531 = vsel %vm5942, %v7415, 0
      %v7534 = vsel %vm5942, %v7416, 0
      %v7537 = vsel %vm5942, %v7417, 0
      %v7540 = vsel %vm5942, %v7418, 0
      %v7543 = vsel %vm5942, %v7419, 0
      %v7546 = vsel %vm5942, %v7420, 0
      %v7549 = vsel %vm5942, %v7421, 0
      %v7552 = vsel %vm5942, %v7422, 0
      %v7555 = vsel %vm5942, %v7423, 0
      %v7558 = vsel %vm5942, %v7424, 0
      %v7561 = vsel %vm5942, %v7425, 0
      %v7564 = vsel %vm5942, %v7426, 0
      %v7567 = vsel %vm5942, %v7427, 0
      %v7570 = vsel %vm5942, %v7428, 0
      %v7573 = vsel %vm5942, %v7429, 0
      %v7576 = vsel %vm5942, %v7430, 0
      %v7579 = vsel %vm5942, %v7431, 0
      %v7582 = vsel %vm5942, %v7432, 0
      %v7585 = vsel %vm5942, %v7433, 0
      %v7588 = vsel %vm5942, %v7434, 0
      %v7591 = vsel %vm5942, %v7435, 0
      %v7594 = vsel %vm5942, %v7436, 0
      %v7597 = vsel %vm5942, %v7437, 0
      %v7600 = vsel %vm5942, %v7438, 0
      %v7603 = vsel %vm5942, %v7439, 0
      %v7606 = vsel %vm5942, %v7440, 0
      %v7609 = vsel %vm5942, %v7441, 0
      %v7612 = vsel %vm5942, %v7442, 0
      %v7615 = vsel %vm5942, %v7443, 0
      %v7618 = vsel %vm5942, %v7444, 0
      %v7621 = vsel %vm5942, %v7445, 0
      %v7624 = vsel %vm5942, %v7446, 0
      %v7627 = vsel %vm5942, %v7447, 0
      %v7630 = vsel %vm5942, %v7448, 0
      %v7633 = vsel %vm5942, %v7449, 0
      %v7636 = vsel %vm5942, %v7450, 0
      %v7639 = vsel %vm5942, %v7451, 0
      %v7642 = vsel %vm5942, %v7452, 0
      %v7645 = vsel %vm5942, %v7453, 0
      %v7648 = vsel %vm5942, %v7454, 0
      %7650 = vmatpush.msra.mxu0 0.0
      %7651 = vmatpush.msra.mxu0 0.0
      %7652 = vmatpush.msra.mxu0 0.0
      %7653 = vmatpush.msra.mxu0 0.0
      %7654 = vmatpush.msra.mxu0 0.0
      %7655 = vmatpush.msra.mxu0 0.0
      %7656 = vmatpush.msra.mxu0 0.0
      %7657 = vmatpush.msra.mxu0 0.0
      %7658 = vmatpush.msra.mxu0 0.0
      %7659 = vmatpush.msra.mxu0 0.0
      %7660 = vmatpush.msra.mxu0 0.0
      %7661 = vmatpush.msra.mxu0 0.0
      %7662 = vmatpush.msra.mxu0 0.0
      %7663 = vmatpush.msra.mxu0 0.0
      %7664 = vmatpush.msra.mxu0 %v7457
      %7665 = vmatpush.msra.mxu0 %v7456
      %7666 = vmatmul.f32.gmra.mxu0 %v7459
      %v7667 = vpop.f32.mrf.mxu0
      %v7668 = vadd.f32 0.0, %v7667
      %7669 = vmatmul.f32.gmra.mxu0 %v7462
      %v7670 = vpop.f32.mrf.mxu0
      %v7671 = vadd.f32 0.0, %v7670
      %7672 = vmatmul.f32.gmra.mxu0 %v7465
      %v7673 = vpop.f32.mrf.mxu0
      %v7674 = vadd.f32 0.0, %v7673
      %7675 = vmatmul.f32.gmra.mxu0 %v7468
      %v7676 = vpop.f32.mrf.mxu0
      %v7677 = vadd.f32 0.0, %v7676
      %7678 = vmatmul.f32.gmra.mxu0 %v7471
      %v7679 = vpop.f32.mrf.mxu0
      %v7680 = vadd.f32 0.0, %v7679
      %7681 = vmatmul.f32.gmra.mxu0 %v7474
      %v7682 = vpop.f32.mrf.mxu0
      %v7683 = vadd.f32 0.0, %v7682
      %7684 = vmatmul.f32.gmra.mxu0 %v7477
      %v7685 = vpop.f32.mrf.mxu0
      %v7686 = vadd.f32 0.0, %v7685
      %7687 = vmatmul.f32.gmra.mxu0 %v7480
      %v7688 = vpop.f32.mrf.mxu0
      %v7689 = vadd.f32 0.0, %v7688
      %7690 = vmatmul.f32.gmra.mxu0 %v7483
      %v7691 = vpop.f32.mrf.mxu0
      %v7692 = vadd.f32 0.0, %v7691
      %7693 = vmatmul.f32.gmra.mxu0 %v7486
      %v7694 = vpop.f32.mrf.mxu0
      %v7695 = vadd.f32 0.0, %v7694
      %7696 = vmatmul.f32.gmra.mxu0 %v7489
      %v7697 = vpop.f32.mrf.mxu0
      %v7698 = vadd.f32 0.0, %v7697
      %7699 = vmatmul.f32.gmra.mxu0 %v7492
      %v7700 = vpop.f32.mrf.mxu0
      %v7701 = vadd.f32 0.0, %v7700
      %7702 = vmatmul.f32.gmra.mxu0 %v7495
      %v7703 = vpop.f32.mrf.mxu0
      %v7704 = vadd.f32 0.0, %v7703
      %7705 = vmatmul.f32.gmra.mxu0 %v7498
      %v7706 = vpop.f32.mrf.mxu0
      %v7707 = vadd.f32 0.0, %v7706
      %7708 = vmatmul.f32.gmra.mxu0 %v7501
      %v7709 = vpop.f32.mrf.mxu0
      %v7710 = vadd.f32 0.0, %v7709
      %7711 = vmatmul.f32.gmra.mxu0 %v7504
      %v7712 = vpop.f32.mrf.mxu0
      %v7713 = vadd.f32 0.0, %v7712
      %7714 = vmatmul.f32.gmra.mxu0 %v7507
      %v7715 = vpop.f32.mrf.mxu0
      %v7716 = vadd.f32 0.0, %v7715
      %7717 = vmatmul.f32.gmra.mxu0 %v7510
      %v7718 = vpop.f32.mrf.mxu0
      %v7719 = vadd.f32 0.0, %v7718
      %7720 = vmatmul.f32.gmra.mxu0 %v7513
      %v7721 = vpop.f32.mrf.mxu0
      %v7722 = vadd.f32 0.0, %v7721
      %7723 = vmatmul.f32.gmra.mxu0 %v7516
      %v7724 = vpop.f32.mrf.mxu0
      %v7725 = vadd.f32 0.0, %v7724
      %7726 = vmatmul.f32.gmra.mxu0 %v7519
      %v7727 = vpop.f32.mrf.mxu0
      %v7728 = vadd.f32 0.0, %v7727
      %7729 = vmatmul.f32.gmra.mxu0 %v7522
      %v7730 = vpop.f32.mrf.mxu0
      %v7731 = vadd.f32 0.0, %v7730
      %7732 = vmatmul.f32.gmra.mxu0 %v7525
      %v7733 = vpop.f32.mrf.mxu0
      %v7734 = vadd.f32 0.0, %v7733
      %7735 = vmatmul.f32.gmra.mxu0 %v7528
      %v7736 = vpop.f32.mrf.mxu0
      %v7737 = vadd.f32 0.0, %v7736
      %7738 = vmatmul.f32.gmra.mxu0 %v7531
      %v7739 = vpop.f32.mrf.mxu0
      %v7740 = vadd.f32 0.0, %v7739
      %7741 = vmatmul.f32.gmra.mxu0 %v7534
      %v7742 = vpop.f32.mrf.mxu0
      %v7743 = vadd.f32 0.0, %v7742
      %7744 = vmatmul.f32.gmra.mxu0 %v7537
      %v7745 = vpop.f32.mrf.mxu0
      %v7746 = vadd.f32 0.0, %v7745
      %7747 = vmatmul.f32.gmra.mxu0 %v7540
      %v7748 = vpop.f32.mrf.mxu0
      %v7749 = vadd.f32 0.0, %v7748
      %7750 = vmatmul.f32.gmra.mxu0 %v7543
      %v7751 = vpop.f32.mrf.mxu0
      %v7752 = vadd.f32 0.0, %v7751
      %7753 = vmatmul.f32.gmra.mxu0 %v7546
      %v7754 = vpop.f32.mrf.mxu0
      %v7755 = vadd.f32 0.0, %v7754
      %7756 = vmatmul.f32.gmra.mxu0 %v7549
      %v7757 = vpop.f32.mrf.mxu0
      %v7758 = vadd.f32 0.0, %v7757
      %7759 = vmatmul.f32.gmra.mxu0 %v7552
      %v7760 = vpop.f32.mrf.mxu0
      %v7761 = vadd.f32 0.0, %v7760
      %7762 = vmatmul.f32.gmra.mxu0 %v7555
      %v7763 = vpop.f32.mrf.mxu0
      %v7764 = vadd.f32 0.0, %v7763
      %7765 = vmatmul.f32.gmra.mxu0 %v7558
      %v7766 = vpop.f32.mrf.mxu0
      %v7767 = vadd.f32 0.0, %v7766
      %7768 = vmatmul.f32.gmra.mxu0 %v7561
      %v7769 = vpop.f32.mrf.mxu0
      %v7770 = vadd.f32 0.0, %v7769
      %7771 = vmatmul.f32.gmra.mxu0 %v7564
      %v7772 = vpop.f32.mrf.mxu0
      %v7773 = vadd.f32 0.0, %v7772
      %7774 = vmatmul.f32.gmra.mxu0 %v7567
      %v7775 = vpop.f32.mrf.mxu0
      %v7776 = vadd.f32 0.0, %v7775
      %7777 = vmatmul.f32.gmra.mxu0 %v7570
      %v7778 = vpop.f32.mrf.mxu0
      %v7779 = vadd.f32 0.0, %v7778
      %7780 = vmatmul.f32.gmra.mxu0 %v7573
      %v7781 = vpop.f32.mrf.mxu0
      %v7782 = vadd.f32 0.0, %v7781
      %7783 = vmatmul.f32.gmra.mxu0 %v7576
      %v7784 = vpop.f32.mrf.mxu0
      %v7785 = vadd.f32 0.0, %v7784
      %7786 = vmatmul.f32.gmra.mxu0 %v7579
      %v7787 = vpop.f32.mrf.mxu0
      %v7788 = vadd.f32 0.0, %v7787
      %7789 = vmatmul.f32.gmra.mxu0 %v7582
      %v7790 = vpop.f32.mrf.mxu0
      %v7791 = vadd.f32 0.0, %v7790
      %7792 = vmatmul.f32.gmra.mxu0 %v7585
      %v7793 = vpop.f32.mrf.mxu0
      %v7794 = vadd.f32 0.0, %v7793
      %7795 = vmatmul.f32.gmra.mxu0 %v7588
      %v7796 = vpop.f32.mrf.mxu0
      %v7797 = vadd.f32 0.0, %v7796
      %7798 = vmatmul.f32.gmra.mxu0 %v7591
      %v7799 = vpop.f32.mrf.mxu0
      %v7800 = vadd.f32 0.0, %v7799
      %7801 = vmatmul.f32.gmra.mxu0 %v7594
      %v7802 = vpop.f32.mrf.mxu0
      %v7803 = vadd.f32 0.0, %v7802
      %7804 = vmatmul.f32.gmra.mxu0 %v7597
      %v7805 = vpop.f32.mrf.mxu0
      %v7806 = vadd.f32 0.0, %v7805
      %7807 = vmatmul.f32.gmra.mxu0 %v7600
      %v7808 = vpop.f32.mrf.mxu0
      %v7809 = vadd.f32 0.0, %v7808
      %7810 = vmatmul.f32.gmra.mxu0 %v7603
      %v7811 = vpop.f32.mrf.mxu0
      %v7812 = vadd.f32 0.0, %v7811
      %7813 = vmatmul.f32.gmra.mxu0 %v7606
      %v7814 = vpop.f32.mrf.mxu0
      %v7815 = vadd.f32 0.0, %v7814
      %7816 = vmatmul.f32.gmra.mxu0 %v7609
      %v7817 = vpop.f32.mrf.mxu0
      %v7818 = vadd.f32 0.0, %v7817
      %7819 = vmatmul.f32.gmra.mxu0 %v7612
      %v7820 = vpop.f32.mrf.mxu0
      %v7821 = vadd.f32 0.0, %v7820
      %7822 = vmatmul.f32.gmra.mxu0 %v7615
      %v7823 = vpop.f32.mrf.mxu0
      %v7824 = vadd.f32 0.0, %v7823
      %7825 = vmatmul.f32.gmra.mxu0 %v7618
      %v7826 = vpop.f32.mrf.mxu0
      %v7827 = vadd.f32 0.0, %v7826
      %7828 = vmatmul.f32.gmra.mxu0 %v7621
      %v7829 = vpop.f32.mrf.mxu0
      %v7830 = vadd.f32 0.0, %v7829
      %7831 = vmatmul.f32.gmra.mxu0 %v7624
      %v7832 = vpop.f32.mrf.mxu0
      %v7833 = vadd.f32 0.0, %v7832
      %7834 = vmatmul.f32.gmra.mxu0 %v7627
      %v7835 = vpop.f32.mrf.mxu0
      %v7836 = vadd.f32 0.0, %v7835
      %7837 = vmatmul.f32.gmra.mxu0 %v7630
      %v7838 = vpop.f32.mrf.mxu0
      %v7839 = vadd.f32 0.0, %v7838
      %7840 = vmatmul.f32.gmra.mxu0 %v7633
      %v7841 = vpop.f32.mrf.mxu0
      %v7842 = vadd.f32 0.0, %v7841
      %7843 = vmatmul.f32.gmra.mxu0 %v7636
      %v7844 = vpop.f32.mrf.mxu0
      %v7845 = vadd.f32 0.0, %v7844
      %7846 = vmatmul.f32.gmra.mxu0 %v7639
      %v7847 = vpop.f32.mrf.mxu0
      %v7848 = vadd.f32 0.0, %v7847
      %7849 = vmatmul.f32.gmra.mxu0 %v7642
      %v7850 = vpop.f32.mrf.mxu0
      %v7851 = vadd.f32 0.0, %v7850
      %7852 = vmatmul.f32.gmra.mxu0 %v7645
      %v7853 = vpop.f32.mrf.mxu0
      %v7854 = vadd.f32 0.0, %v7853
      %7855 = vmatmul.f32.gmra.mxu0 %v7648
      %v7856 = vpop.f32.mrf.mxu0
      %v7857 = vadd.f32 0.0, %v7856
      %7858 = vdwg.mxu0
      %v7859 = vadd.f32 %v7200, %v7668
      %v7860 = vadd.f32 %v7203, %v7671
      %v7861 = vadd.f32 %v7206, %v7674
      %v7862 = vadd.f32 %v7209, %v7677
      %v7863 = vadd.f32 %v7212, %v7680
      %v7864 = vadd.f32 %v7215, %v7683
      %v7865 = vadd.f32 %v7218, %v7686
      %v7866 = vadd.f32 %v7221, %v7689
      %v7867 = vadd.f32 %v7224, %v7692
      %v7868 = vadd.f32 %v7227, %v7695
      %v7869 = vadd.f32 %v7230, %v7698
      %v7870 = vadd.f32 %v7233, %v7701
      %v7871 = vadd.f32 %v7236, %v7704
      %v7872 = vadd.f32 %v7239, %v7707
      %v7873 = vadd.f32 %v7242, %v7710
      %v7874 = vadd.f32 %v7245, %v7713
      %v7875 = vadd.f32 %v7248, %v7716
      %v7876 = vadd.f32 %v7251, %v7719
      %v7877 = vadd.f32 %v7254, %v7722
      %v7878 = vadd.f32 %v7257, %v7725
      %v7879 = vadd.f32 %v7260, %v7728
      %v7880 = vadd.f32 %v7263, %v7731
      %v7881 = vadd.f32 %v7266, %v7734
      %v7882 = vadd.f32 %v7269, %v7737
      %v7883 = vadd.f32 %v7272, %v7740
      %v7884 = vadd.f32 %v7275, %v7743
      %v7885 = vadd.f32 %v7278, %v7746
      %v7886 = vadd.f32 %v7281, %v7749
      %v7887 = vadd.f32 %v7284, %v7752
      %v7888 = vadd.f32 %v7287, %v7755
      %v7889 = vadd.f32 %v7290, %v7758
      %v7890 = vadd.f32 %v7293, %v7761
      %v7891 = vadd.f32 %v7296, %v7764
      %v7892 = vadd.f32 %v7299, %v7767
      %v7893 = vadd.f32 %v7302, %v7770
      %v7894 = vadd.f32 %v7305, %v7773
      %v7895 = vadd.f32 %v7308, %v7776
      %v7896 = vadd.f32 %v7311, %v7779
      %v7897 = vadd.f32 %v7314, %v7782
      %v7898 = vadd.f32 %v7317, %v7785
      %v7899 = vadd.f32 %v7320, %v7788
      %v7900 = vadd.f32 %v7323, %v7791
      %v7901 = vadd.f32 %v7326, %v7794
      %v7902 = vadd.f32 %v7329, %v7797
      %v7903 = vadd.f32 %v7332, %v7800
      %v7904 = vadd.f32 %v7335, %v7803
      %v7905 = vadd.f32 %v7338, %v7806
      %v7906 = vadd.f32 %v7341, %v7809
      %v7907 = vadd.f32 %v7344, %v7812
      %v7908 = vadd.f32 %v7347, %v7815
      %v7909 = vadd.f32 %v7350, %v7818
      %v7910 = vadd.f32 %v7353, %v7821
      %v7911 = vadd.f32 %v7356, %v7824
      %v7912 = vadd.f32 %v7359, %v7827
      %v7913 = vadd.f32 %v7362, %v7830
      %v7914 = vadd.f32 %v7365, %v7833
      %v7915 = vadd.f32 %v7368, %v7836
      %v7916 = vadd.f32 %v7371, %v7839
      %v7917 = vadd.f32 %v7374, %v7842
      %v7918 = vadd.f32 %v7377, %v7845
      %v7919 = vadd.f32 %v7380, %v7848
      %v7920 = vadd.f32 %v7383, %v7851
      %v7921 = vadd.f32 %v7386, %v7854
      %v7922 = vadd.f32 %v7389, %v7857
      %v7923 = vld [vmem:[#allocation4 + $0x3] sm:$0xff]
      %v7924 = vld [vmem:[#allocation4 + $0xb] sm:$0xff]
      %v7925 = vld [vmem:[#allocation4 + $0x13] sm:$0xff]
      %v7926 = vld [vmem:[#allocation4 + $0x1b] sm:$0xff]
      %v7927 = vld [vmem:[#allocation4 + $0x23] sm:$0xff]
      %v7928 = vld [vmem:[#allocation4 + $0x2b] sm:$0xff]
      %v7929 = vld [vmem:[#allocation4 + $0x33] sm:$0xff]
      %v7930 = vld [vmem:[#allocation4 + $0x3b] sm:$0xff]
      %v7931 = vld [vmem:[#allocation4 + $0x43] sm:$0xff]
      %v7932 = vld [vmem:[#allocation4 + $0x4b] sm:$0xff]
      %v7933 = vld [vmem:[#allocation4 + $0x53] sm:$0xff]
      %v7934 = vld [vmem:[#allocation4 + $0x5b] sm:$0xff]
      %v7935 = vld [vmem:[#allocation4 + $0x63] sm:$0xff]
      %v7936 = vld [vmem:[#allocation4 + $0x6b] sm:$0xff]
      %v7937 = vld [vmem:[#allocation4 + $0x73] sm:$0xff]
      %v7938 = vld [vmem:[#allocation4 + $0x7b] sm:$0xff]
      %v7939 = vld [vmem:[#allocation4 + $0x83] sm:$0xff]
      %v7940 = vld [vmem:[#allocation4 + $0x8b] sm:$0xff]
      %v7941 = vld [vmem:[#allocation4 + $0x93] sm:$0xff]
      %v7942 = vld [vmem:[#allocation4 + $0x9b] sm:$0xff]
      %v7943 = vld [vmem:[#allocation4 + $0xa3] sm:$0xff]
      %v7944 = vld [vmem:[#allocation4 + $0xab] sm:$0xff]
      %v7945 = vld [vmem:[#allocation4 + $0xb3] sm:$0xff]
      %v7946 = vld [vmem:[#allocation4 + $0xbb] sm:$0xff]
      %v7947 = vld [vmem:[#allocation4 + $0xc3] sm:$0xff]
      %v7948 = vld [vmem:[#allocation4 + $0xcb] sm:$0xff]
      %v7949 = vld [vmem:[#allocation4 + $0xd3] sm:$0xff]
      %v7950 = vld [vmem:[#allocation4 + $0xdb] sm:$0xff]
      %v7951 = vld [vmem:[#allocation4 + $0xe3] sm:$0xff]
      %v7952 = vld [vmem:[#allocation4 + $0xeb] sm:$0xff]
      %v7953 = vld [vmem:[#allocation4 + $0xf3] sm:$0xff]
      %v7954 = vld [vmem:[#allocation4 + $0xfb] sm:$0xff]
      %v7955 = vld [vmem:[#allocation4 + $0x103] sm:$0xff]
      %v7956 = vld [vmem:[#allocation4 + $0x10b] sm:$0xff]
      %v7957 = vld [vmem:[#allocation4 + $0x113] sm:$0xff]
      %v7958 = vld [vmem:[#allocation4 + $0x11b] sm:$0xff]
      %v7959 = vld [vmem:[#allocation4 + $0x123] sm:$0xff]
      %v7960 = vld [vmem:[#allocation4 + $0x12b] sm:$0xff]
      %v7961 = vld [vmem:[#allocation4 + $0x133] sm:$0xff]
      %v7962 = vld [vmem:[#allocation4 + $0x13b] sm:$0xff]
      %v7963 = vld [vmem:[#allocation4 + $0x143] sm:$0xff]
      %v7964 = vld [vmem:[#allocation4 + $0x14b] sm:$0xff]
      %v7965 = vld [vmem:[#allocation4 + $0x153] sm:$0xff]
      %v7966 = vld [vmem:[#allocation4 + $0x15b] sm:$0xff]
      %v7967 = vld [vmem:[#allocation4 + $0x163] sm:$0xff]
      %v7968 = vld [vmem:[#allocation4 + $0x16b] sm:$0xff]
      %v7969 = vld [vmem:[#allocation4 + $0x173] sm:$0xff]
      %v7970 = vld [vmem:[#allocation4 + $0x17b] sm:$0xff]
      %v7971 = vld [vmem:[#allocation4 + $0x183] sm:$0xff]
      %v7972 = vld [vmem:[#allocation4 + $0x18b] sm:$0xff]
      %v7973 = vld [vmem:[#allocation4 + $0x193] sm:$0xff]
      %v7974 = vld [vmem:[#allocation4 + $0x19b] sm:$0xff]
      %v7975 = vld [vmem:[#allocation4 + $0x1a3] sm:$0xff]
      %v7976 = vld [vmem:[#allocation4 + $0x1ab] sm:$0xff]
      %v7977 = vld [vmem:[#allocation4 + $0x1b3] sm:$0xff]
      %v7978 = vld [vmem:[#allocation4 + $0x1bb] sm:$0xff]
      %v7979 = vld [vmem:[#allocation4 + $0x1c3] sm:$0xff]
      %v7980 = vld [vmem:[#allocation4 + $0x1cb] sm:$0xff]
      %v7981 = vld [vmem:[#allocation4 + $0x1d3] sm:$0xff]
      %v7982 = vld [vmem:[#allocation4 + $0x1db] sm:$0xff]
      %v7983 = vld [vmem:[#allocation4 + $0x1e3] sm:$0xff]
      %v7984 = vld [vmem:[#allocation4 + $0x1eb] sm:$0xff]
      %v7985 = vld [vmem:[#allocation4 + $0x1f3] sm:$0xff]
      %v7986 = vld [vmem:[#allocation4 + $0x1fb] sm:$0xff]
      %s7987 = scalar_lea.vmem %s3, 48
      %v7988 = vld [vmem:[%s7987] sm:$0xff]
      %v7989 = vld [vmem:[%s7987 + $0x8] sm:$0xff]
      %v7991 = vsel %vm5942, %v7923, 0
      %v7994 = vsel %vm5942, %v7924, 0
      %v7997 = vsel %vm5942, %v7925, 0
      %v8000 = vsel %vm5942, %v7926, 0
      %v8003 = vsel %vm5942, %v7927, 0
      %v8006 = vsel %vm5942, %v7928, 0
      %v8009 = vsel %vm5942, %v7929, 0
      %v8012 = vsel %vm5942, %v7930, 0
      %v8015 = vsel %vm5942, %v7931, 0
      %v8018 = vsel %vm5942, %v7932, 0
      %v8021 = vsel %vm5942, %v7933, 0
      %v8024 = vsel %vm5942, %v7934, 0
      %v8027 = vsel %vm5942, %v7935, 0
      %v8030 = vsel %vm5942, %v7936, 0
      %v8033 = vsel %vm5942, %v7937, 0
      %v8036 = vsel %vm5942, %v7938, 0
      %v8039 = vsel %vm5942, %v7939, 0
      %v8042 = vsel %vm5942, %v7940, 0
      %v8045 = vsel %vm5942, %v7941, 0
      %v8048 = vsel %vm5942, %v7942, 0
      %v8051 = vsel %vm5942, %v7943, 0
      %v8054 = vsel %vm5942, %v7944, 0
      %v8057 = vsel %vm5942, %v7945, 0
      %v8060 = vsel %vm5942, %v7946, 0
      %v8063 = vsel %vm5942, %v7947, 0
      %v8066 = vsel %vm5942, %v7948, 0
      %v8069 = vsel %vm5942, %v7949, 0
      %v8072 = vsel %vm5942, %v7950, 0
      %v8075 = vsel %vm5942, %v7951, 0
      %v8078 = vsel %vm5942, %v7952, 0
      %v8081 = vsel %vm5942, %v7953, 0
      %v8084 = vsel %vm5942, %v7954, 0
      %v8087 = vsel %vm5942, %v7955, 0
      %v8090 = vsel %vm5942, %v7956, 0
      %v8093 = vsel %vm5942, %v7957, 0
      %v8096 = vsel %vm5942, %v7958, 0
      %v8099 = vsel %vm5942, %v7959, 0
      %v8102 = vsel %vm5942, %v7960, 0
      %v8105 = vsel %vm5942, %v7961, 0
      %v8108 = vsel %vm5942, %v7962, 0
      %v8111 = vsel %vm5942, %v7963, 0
      %v8114 = vsel %vm5942, %v7964, 0
      %v8117 = vsel %vm5942, %v7965, 0
      %v8120 = vsel %vm5942, %v7966, 0
      %v8123 = vsel %vm5942, %v7967, 0
      %v8126 = vsel %vm5942, %v7968, 0
      %v8129 = vsel %vm5942, %v7969, 0
      %v8132 = vsel %vm5942, %v7970, 0
      %v8135 = vsel %vm5942, %v7971, 0
      %v8138 = vsel %vm5942, %v7972, 0
      %v8141 = vsel %vm5942, %v7973, 0
      %v8144 = vsel %vm5942, %v7974, 0
      %v8147 = vsel %vm5942, %v7975, 0
      %v8150 = vsel %vm5942, %v7976, 0
      %v8153 = vsel %vm5942, %v7977, 0
      %v8156 = vsel %vm5942, %v7978, 0
      %v8159 = vsel %vm5942, %v7979, 0
      %v8162 = vsel %vm5942, %v7980, 0
      %v8165 = vsel %vm5942, %v7981, 0
      %v8168 = vsel %vm5942, %v7982, 0
      %v8171 = vsel %vm5942, %v7983, 0
      %v8174 = vsel %vm5942, %v7984, 0
      %v8177 = vsel %vm5942, %v7985, 0
      %v8180 = vsel %vm5942, %v7986, 0
      %8182 = vmatpush.msra.mxu0 0.0
      %8183 = vmatpush.msra.mxu0 0.0
      %8184 = vmatpush.msra.mxu0 0.0
      %8185 = vmatpush.msra.mxu0 0.0
      %8186 = vmatpush.msra.mxu0 0.0
      %8187 = vmatpush.msra.mxu0 0.0
      %8188 = vmatpush.msra.mxu0 0.0
      %8189 = vmatpush.msra.mxu0 0.0
      %8190 = vmatpush.msra.mxu0 0.0
      %8191 = vmatpush.msra.mxu0 0.0
      %8192 = vmatpush.msra.mxu0 0.0
      %8193 = vmatpush.msra.mxu0 0.0
      %8194 = vmatpush.msra.mxu0 0.0
      %8195 = vmatpush.msra.mxu0 0.0
      %8196 = vmatpush.msra.mxu0 %v7989
      %8197 = vmatpush.msra.mxu0 %v7988
      %8198 = vmatmul.f32.gmra.mxu0 %v7991
      %v8199 = vpop.f32.mrf.mxu0
      %v8200 = vadd.f32 0.0, %v8199
      %8201 = vmatmul.f32.gmra.mxu0 %v7994
      %v8202 = vpop.f32.mrf.mxu0
      %v8203 = vadd.f32 0.0, %v8202
      %8204 = vmatmul.f32.gmra.mxu0 %v7997
      %v8205 = vpop.f32.mrf.mxu0
      %v8206 = vadd.f32 0.0, %v8205
      %8207 = vmatmul.f32.gmra.mxu0 %v8000
      %v8208 = vpop.f32.mrf.mxu0
      %v8209 = vadd.f32 0.0, %v8208
      %8210 = vmatmul.f32.gmra.mxu0 %v8003
      %v8211 = vpop.f32.mrf.mxu0
      %v8212 = vadd.f32 0.0, %v8211
      %8213 = vmatmul.f32.gmra.mxu0 %v8006
      %v8214 = vpop.f32.mrf.mxu0
      %v8215 = vadd.f32 0.0, %v8214
      %8216 = vmatmul.f32.gmra.mxu0 %v8009
      %v8217 = vpop.f32.mrf.mxu0
      %v8218 = vadd.f32 0.0, %v8217
      %8219 = vmatmul.f32.gmra.mxu0 %v8012
      %v8220 = vpop.f32.mrf.mxu0
      %v8221 = vadd.f32 0.0, %v8220
      %8222 = vmatmul.f32.gmra.mxu0 %v8015
      %v8223 = vpop.f32.mrf.mxu0
      %v8224 = vadd.f32 0.0, %v8223
      %8225 = vmatmul.f32.gmra.mxu0 %v8018
      %v8226 = vpop.f32.mrf.mxu0
      %v8227 = vadd.f32 0.0, %v8226
      %8228 = vmatmul.f32.gmra.mxu0 %v8021
      %v8229 = vpop.f32.mrf.mxu0
      %v8230 = vadd.f32 0.0, %v8229
      %8231 = vmatmul.f32.gmra.mxu0 %v8024
      %v8232 = vpop.f32.mrf.mxu0
      %v8233 = vadd.f32 0.0, %v8232
      %8234 = vmatmul.f32.gmra.mxu0 %v8027
      %v8235 = vpop.f32.mrf.mxu0
      %v8236 = vadd.f32 0.0, %v8235
      %8237 = vmatmul.f32.gmra.mxu0 %v8030
      %v8238 = vpop.f32.mrf.mxu0
      %v8239 = vadd.f32 0.0, %v8238
      %8240 = vmatmul.f32.gmra.mxu0 %v8033
      %v8241 = vpop.f32.mrf.mxu0
      %v8242 = vadd.f32 0.0, %v8241
      %8243 = vmatmul.f32.gmra.mxu0 %v8036
      %v8244 = vpop.f32.mrf.mxu0
      %v8245 = vadd.f32 0.0, %v8244
      %8246 = vmatmul.f32.gmra.mxu0 %v8039
      %v8247 = vpop.f32.mrf.mxu0
      %v8248 = vadd.f32 0.0, %v8247
      %8249 = vmatmul.f32.gmra.mxu0 %v8042
      %v8250 = vpop.f32.mrf.mxu0
      %v8251 = vadd.f32 0.0, %v8250
      %8252 = vmatmul.f32.gmra.mxu0 %v8045
      %v8253 = vpop.f32.mrf.mxu0
      %v8254 = vadd.f32 0.0, %v8253
      %8255 = vmatmul.f32.gmra.mxu0 %v8048
      %v8256 = vpop.f32.mrf.mxu0
      %v8257 = vadd.f32 0.0, %v8256
      %8258 = vmatmul.f32.gmra.mxu0 %v8051
      %v8259 = vpop.f32.mrf.mxu0
      %v8260 = vadd.f32 0.0, %v8259
      %8261 = vmatmul.f32.gmra.mxu0 %v8054
      %v8262 = vpop.f32.mrf.mxu0
      %v8263 = vadd.f32 0.0, %v8262
      %8264 = vmatmul.f32.gmra.mxu0 %v8057
      %v8265 = vpop.f32.mrf.mxu0
      %v8266 = vadd.f32 0.0, %v8265
      %8267 = vmatmul.f32.gmra.mxu0 %v8060
      %v8268 = vpop.f32.mrf.mxu0
      %v8269 = vadd.f32 0.0, %v8268
      %8270 = vmatmul.f32.gmra.mxu0 %v8063
      %v8271 = vpop.f32.mrf.mxu0
      %v8272 = vadd.f32 0.0, %v8271
      %8273 = vmatmul.f32.gmra.mxu0 %v8066
      %v8274 = vpop.f32.mrf.mxu0
      %v8275 = vadd.f32 0.0, %v8274
      %8276 = vmatmul.f32.gmra.mxu0 %v8069
      %v8277 = vpop.f32.mrf.mxu0
      %v8278 = vadd.f32 0.0, %v8277
      %8279 = vmatmul.f32.gmra.mxu0 %v8072
      %v8280 = vpop.f32.mrf.mxu0
      %v8281 = vadd.f32 0.0, %v8280
      %8282 = vmatmul.f32.gmra.mxu0 %v8075
      %v8283 = vpop.f32.mrf.mxu0
      %v8284 = vadd.f32 0.0, %v8283
      %8285 = vmatmul.f32.gmra.mxu0 %v8078
      %v8286 = vpop.f32.mrf.mxu0
      %v8287 = vadd.f32 0.0, %v8286
      %8288 = vmatmul.f32.gmra.mxu0 %v8081
      %v8289 = vpop.f32.mrf.mxu0
      %v8290 = vadd.f32 0.0, %v8289
      %8291 = vmatmul.f32.gmra.mxu0 %v8084
      %v8292 = vpop.f32.mrf.mxu0
      %v8293 = vadd.f32 0.0, %v8292
      %8294 = vmatmul.f32.gmra.mxu0 %v8087
      %v8295 = vpop.f32.mrf.mxu0
      %v8296 = vadd.f32 0.0, %v8295
      %8297 = vmatmul.f32.gmra.mxu0 %v8090
      %v8298 = vpop.f32.mrf.mxu0
      %v8299 = vadd.f32 0.0, %v8298
      %8300 = vmatmul.f32.gmra.mxu0 %v8093
      %v8301 = vpop.f32.mrf.mxu0
      %v8302 = vadd.f32 0.0, %v8301
      %8303 = vmatmul.f32.gmra.mxu0 %v8096
      %v8304 = vpop.f32.mrf.mxu0
      %v8305 = vadd.f32 0.0, %v8304
      %8306 = vmatmul.f32.gmra.mxu0 %v8099
      %v8307 = vpop.f32.mrf.mxu0
      %v8308 = vadd.f32 0.0, %v8307
      %8309 = vmatmul.f32.gmra.mxu0 %v8102
      %v8310 = vpop.f32.mrf.mxu0
      %v8311 = vadd.f32 0.0, %v8310
      %8312 = vmatmul.f32.gmra.mxu0 %v8105
      %v8313 = vpop.f32.mrf.mxu0
      %v8314 = vadd.f32 0.0, %v8313
      %8315 = vmatmul.f32.gmra.mxu0 %v8108
      %v8316 = vpop.f32.mrf.mxu0
      %v8317 = vadd.f32 0.0, %v8316
      %8318 = vmatmul.f32.gmra.mxu0 %v8111
      %v8319 = vpop.f32.mrf.mxu0
      %v8320 = vadd.f32 0.0, %v8319
      %8321 = vmatmul.f32.gmra.mxu0 %v8114
      %v8322 = vpop.f32.mrf.mxu0
      %v8323 = vadd.f32 0.0, %v8322
      %8324 = vmatmul.f32.gmra.mxu0 %v8117
      %v8325 = vpop.f32.mrf.mxu0
      %v8326 = vadd.f32 0.0, %v8325
      %8327 = vmatmul.f32.gmra.mxu0 %v8120
      %v8328 = vpop.f32.mrf.mxu0
      %v8329 = vadd.f32 0.0, %v8328
      %8330 = vmatmul.f32.gmra.mxu0 %v8123
      %v8331 = vpop.f32.mrf.mxu0
      %v8332 = vadd.f32 0.0, %v8331
      %8333 = vmatmul.f32.gmra.mxu0 %v8126
      %v8334 = vpop.f32.mrf.mxu0
      %v8335 = vadd.f32 0.0, %v8334
      %8336 = vmatmul.f32.gmra.mxu0 %v8129
      %v8337 = vpop.f32.mrf.mxu0
      %v8338 = vadd.f32 0.0, %v8337
      %8339 = vmatmul.f32.gmra.mxu0 %v8132
      %v8340 = vpop.f32.mrf.mxu0
      %v8341 = vadd.f32 0.0, %v8340
      %8342 = vmatmul.f32.gmra.mxu0 %v8135
      %v8343 = vpop.f32.mrf.mxu0
      %v8344 = vadd.f32 0.0, %v8343
      %8345 = vmatmul.f32.gmra.mxu0 %v8138
      %v8346 = vpop.f32.mrf.mxu0
      %v8347 = vadd.f32 0.0, %v8346
      %8348 = vmatmul.f32.gmra.mxu0 %v8141
      %v8349 = vpop.f32.mrf.mxu0
      %v8350 = vadd.f32 0.0, %v8349
      %8351 = vmatmul.f32.gmra.mxu0 %v8144
      %v8352 = vpop.f32.mrf.mxu0
      %v8353 = vadd.f32 0.0, %v8352
      %8354 = vmatmul.f32.gmra.mxu0 %v8147
      %v8355 = vpop.f32.mrf.mxu0
      %v8356 = vadd.f32 0.0, %v8355
      %8357 = vmatmul.f32.gmra.mxu0 %v8150
      %v8358 = vpop.f32.mrf.mxu0
      %v8359 = vadd.f32 0.0, %v8358
      %8360 = vmatmul.f32.gmra.mxu0 %v8153
      %v8361 = vpop.f32.mrf.mxu0
      %v8362 = vadd.f32 0.0, %v8361
      %8363 = vmatmul.f32.gmra.mxu0 %v8156
      %v8364 = vpop.f32.mrf.mxu0
      %v8365 = vadd.f32 0.0, %v8364
      %8366 = vmatmul.f32.gmra.mxu0 %v8159
      %v8367 = vpop.f32.mrf.mxu0
      %v8368 = vadd.f32 0.0, %v8367
      %8369 = vmatmul.f32.gmra.mxu0 %v8162
      %v8370 = vpop.f32.mrf.mxu0
      %v8371 = vadd.f32 0.0, %v8370
      %8372 = vmatmul.f32.gmra.mxu0 %v8165
      %v8373 = vpop.f32.mrf.mxu0
      %v8374 = vadd.f32 0.0, %v8373
      %8375 = vmatmul.f32.gmra.mxu0 %v8168
      %v8376 = vpop.f32.mrf.mxu0
      %v8377 = vadd.f32 0.0, %v8376
      %8378 = vmatmul.f32.gmra.mxu0 %v8171
      %v8379 = vpop.f32.mrf.mxu0
      %v8380 = vadd.f32 0.0, %v8379
      %8381 = vmatmul.f32.gmra.mxu0 %v8174
      %v8382 = vpop.f32.mrf.mxu0
      %v8383 = vadd.f32 0.0, %v8382
      %8384 = vmatmul.f32.gmra.mxu0 %v8177
      %v8385 = vpop.f32.mrf.mxu0
      %v8386 = vadd.f32 0.0, %v8385
      %8387 = vmatmul.f32.gmra.mxu0 %v8180
      %v8388 = vpop.f32.mrf.mxu0
      %v8389 = vadd.f32 0.0, %v8388
      %8390 = vdwg.mxu0
      %v8391 = vadd.f32 %v7859, %v8200
      %v8392 = vadd.f32 %v7860, %v8203
      %v8393 = vadd.f32 %v7861, %v8206
      %v8394 = vadd.f32 %v7862, %v8209
      %v8395 = vadd.f32 %v7863, %v8212
      %v8396 = vadd.f32 %v7864, %v8215
      %v8397 = vadd.f32 %v7865, %v8218
      %v8398 = vadd.f32 %v7866, %v8221
      %v8399 = vadd.f32 %v7867, %v8224
      %v8400 = vadd.f32 %v7868, %v8227
      %v8401 = vadd.f32 %v7869, %v8230
      %v8402 = vadd.f32 %v7870, %v8233
      %v8403 = vadd.f32 %v7871, %v8236
      %v8404 = vadd.f32 %v7872, %v8239
      %v8405 = vadd.f32 %v7873, %v8242
      %v8406 = vadd.f32 %v7874, %v8245
      %v8407 = vadd.f32 %v7875, %v8248
      %v8408 = vadd.f32 %v7876, %v8251
      %v8409 = vadd.f32 %v7877, %v8254
      %v8410 = vadd.f32 %v7878, %v8257
      %v8411 = vadd.f32 %v7879, %v8260
      %v8412 = vadd.f32 %v7880, %v8263
      %v8413 = vadd.f32 %v7881, %v8266
      %v8414 = vadd.f32 %v7882, %v8269
      %v8415 = vadd.f32 %v7883, %v8272
      %v8416 = vadd.f32 %v7884, %v8275
      %v8417 = vadd.f32 %v7885, %v8278
      %v8418 = vadd.f32 %v7886, %v8281
      %v8419 = vadd.f32 %v7887, %v8284
      %v8420 = vadd.f32 %v7888, %v8287
      %v8421 = vadd.f32 %v7889, %v8290
      %v8422 = vadd.f32 %v7890, %v8293
      %v8423 = vadd.f32 %v7891, %v8296
      %v8424 = vadd.f32 %v7892, %v8299
      %v8425 = vadd.f32 %v7893, %v8302
      %v8426 = vadd.f32 %v7894, %v8305
      %v8427 = vadd.f32 %v7895, %v8308
      %v8428 = vadd.f32 %v7896, %v8311
      %v8429 = vadd.f32 %v7897, %v8314
      %v8430 = vadd.f32 %v7898, %v8317
      %v8431 = vadd.f32 %v7899, %v8320
      %v8432 = vadd.f32 %v7900, %v8323
      %v8433 = vadd.f32 %v7901, %v8326
      %v8434 = vadd.f32 %v7902, %v8329
      %v8435 = vadd.f32 %v7903, %v8332
      %v8436 = vadd.f32 %v7904, %v8335
      %v8437 = vadd.f32 %v7905, %v8338
      %v8438 = vadd.f32 %v7906, %v8341
      %v8439 = vadd.f32 %v7907, %v8344
      %v8440 = vadd.f32 %v7908, %v8347
      %v8441 = vadd.f32 %v7909, %v8350
      %v8442 = vadd.f32 %v7910, %v8353
      %v8443 = vadd.f32 %v7911, %v8356
      %v8444 = vadd.f32 %v7912, %v8359
      %v8445 = vadd.f32 %v7913, %v8362
      %v8446 = vadd.f32 %v7914, %v8365
      %v8447 = vadd.f32 %v7915, %v8368
      %v8448 = vadd.f32 %v7916, %v8371
      %v8449 = vadd.f32 %v7917, %v8374
      %v8450 = vadd.f32 %v7918, %v8377
      %v8451 = vadd.f32 %v7919, %v8380
      %v8452 = vadd.f32 %v7920, %v8383
      %v8453 = vadd.f32 %v7921, %v8386
      %v8454 = vadd.f32 %v7922, %v8389
      %v8455 = vld [vmem:[#allocation4 + $0x4] sm:$0xff]
      %v8456 = vld [vmem:[#allocation4 + $0xc] sm:$0xff]
      %v8457 = vld [vmem:[#allocation4 + $0x14] sm:$0xff]
      %v8458 = vld [vmem:[#allocation4 + $0x1c] sm:$0xff]
      %v8459 = vld [vmem:[#allocation4 + $0x24] sm:$0xff]
      %v8460 = vld [vmem:[#allocation4 + $0x2c] sm:$0xff]
      %v8461 = vld [vmem:[#allocation4 + $0x34] sm:$0xff]
      %v8462 = vld [vmem:[#allocation4 + $0x3c] sm:$0xff]
      %v8463 = vld [vmem:[#allocation4 + $0x44] sm:$0xff]
      %v8464 = vld [vmem:[#allocation4 + $0x4c] sm:$0xff]
      %v8465 = vld [vmem:[#allocation4 + $0x54] sm:$0xff]
      %v8466 = vld [vmem:[#allocation4 + $0x5c] sm:$0xff]
      %v8467 = vld [vmem:[#allocation4 + $0x64] sm:$0xff]
      %v8468 = vld [vmem:[#allocation4 + $0x6c] sm:$0xff]
      %v8469 = vld [vmem:[#allocation4 + $0x74] sm:$0xff]
      %v8470 = vld [vmem:[#allocation4 + $0x7c] sm:$0xff]
      %v8471 = vld [vmem:[#allocation4 + $0x84] sm:$0xff]
      %v8472 = vld [vmem:[#allocation4 + $0x8c] sm:$0xff]
      %v8473 = vld [vmem:[#allocation4 + $0x94] sm:$0xff]
      %v8474 = vld [vmem:[#allocation4 + $0x9c] sm:$0xff]
      %v8475 = vld [vmem:[#allocation4 + $0xa4] sm:$0xff]
      %v8476 = vld [vmem:[#allocation4 + $0xac] sm:$0xff]
      %v8477 = vld [vmem:[#allocation4 + $0xb4] sm:$0xff]
      %v8478 = vld [vmem:[#allocation4 + $0xbc] sm:$0xff]
      %v8479 = vld [vmem:[#allocation4 + $0xc4] sm:$0xff]
      %v8480 = vld [vmem:[#allocation4 + $0xcc] sm:$0xff]
      %v8481 = vld [vmem:[#allocation4 + $0xd4] sm:$0xff]
      %v8482 = vld [vmem:[#allocation4 + $0xdc] sm:$0xff]
      %v8483 = vld [vmem:[#allocation4 + $0xe4] sm:$0xff]
      %v8484 = vld [vmem:[#allocation4 + $0xec] sm:$0xff]
      %v8485 = vld [vmem:[#allocation4 + $0xf4] sm:$0xff]
      %v8486 = vld [vmem:[#allocation4 + $0xfc] sm:$0xff]
      %v8487 = vld [vmem:[#allocation4 + $0x104] sm:$0xff]
      %v8488 = vld [vmem:[#allocation4 + $0x10c] sm:$0xff]
      %v8489 = vld [vmem:[#allocation4 + $0x114] sm:$0xff]
      %v8490 = vld [vmem:[#allocation4 + $0x11c] sm:$0xff]
      %v8491 = vld [vmem:[#allocation4 + $0x124] sm:$0xff]
      %v8492 = vld [vmem:[#allocation4 + $0x12c] sm:$0xff]
      %v8493 = vld [vmem:[#allocation4 + $0x134] sm:$0xff]
      %v8494 = vld [vmem:[#allocation4 + $0x13c] sm:$0xff]
      %v8495 = vld [vmem:[#allocation4 + $0x144] sm:$0xff]
      %v8496 = vld [vmem:[#allocation4 + $0x14c] sm:$0xff]
      %v8497 = vld [vmem:[#allocation4 + $0x154] sm:$0xff]
      %v8498 = vld [vmem:[#allocation4 + $0x15c] sm:$0xff]
      %v8499 = vld [vmem:[#allocation4 + $0x164] sm:$0xff]
      %v8500 = vld [vmem:[#allocation4 + $0x16c] sm:$0xff]
      %v8501 = vld [vmem:[#allocation4 + $0x174] sm:$0xff]
      %v8502 = vld [vmem:[#allocation4 + $0x17c] sm:$0xff]
      %v8503 = vld [vmem:[#allocation4 + $0x184] sm:$0xff]
      %v8504 = vld [vmem:[#allocation4 + $0x18c] sm:$0xff]
      %v8505 = vld [vmem:[#allocation4 + $0x194] sm:$0xff]
      %v8506 = vld [vmem:[#allocation4 + $0x19c] sm:$0xff]
      %v8507 = vld [vmem:[#allocation4 + $0x1a4] sm:$0xff]
      %v8508 = vld [vmem:[#allocation4 + $0x1ac] sm:$0xff]
      %v8509 = vld [vmem:[#allocation4 + $0x1b4] sm:$0xff]
      %v8510 = vld [vmem:[#allocation4 + $0x1bc] sm:$0xff]
      %v8511 = vld [vmem:[#allocation4 + $0x1c4] sm:$0xff]
      %v8512 = vld [vmem:[#allocation4 + $0x1cc] sm:$0xff]
      %v8513 = vld [vmem:[#allocation4 + $0x1d4] sm:$0xff]
      %v8514 = vld [vmem:[#allocation4 + $0x1dc] sm:$0xff]
      %v8515 = vld [vmem:[#allocation4 + $0x1e4] sm:$0xff]
      %v8516 = vld [vmem:[#allocation4 + $0x1ec] sm:$0xff]
      %v8517 = vld [vmem:[#allocation4 + $0x1f4] sm:$0xff]
      %v8518 = vld [vmem:[#allocation4 + $0x1fc] sm:$0xff]
      %s8519 = scalar_lea.vmem %s3, 64
      %v8520 = vld [vmem:[%s8519] sm:$0xff]
      %v8521 = vld [vmem:[%s8519 + $0x8] sm:$0xff]
      %v8523 = vsel %vm5942, %v8455, 0
      %v8526 = vsel %vm5942, %v8456, 0
      %v8529 = vsel %vm5942, %v8457, 0
      %v8532 = vsel %vm5942, %v8458, 0
      %v8535 = vsel %vm5942, %v8459, 0
      %v8538 = vsel %vm5942, %v8460, 0
      %v8541 = vsel %vm5942, %v8461, 0
      %v8544 = vsel %vm5942, %v8462, 0
      %v8547 = vsel %vm5942, %v8463, 0
      %v8550 = vsel %vm5942, %v8464, 0
      %v8553 = vsel %vm5942, %v8465, 0
      %v8556 = vsel %vm5942, %v8466, 0
      %v8559 = vsel %vm5942, %v8467, 0
      %v8562 = vsel %vm5942, %v8468, 0
      %v8565 = vsel %vm5942, %v8469, 0
      %v8568 = vsel %vm5942, %v8470, 0
      %v8571 = vsel %vm5942, %v8471, 0
      %v8574 = vsel %vm5942, %v8472, 0
      %v8577 = vsel %vm5942, %v8473, 0
      %v8580 = vsel %vm5942, %v8474, 0
      %v8583 = vsel %vm5942, %v8475, 0
      %v8586 = vsel %vm5942, %v8476, 0
      %v8589 = vsel %vm5942, %v8477, 0
      %v8592 = vsel %vm5942, %v8478, 0
      %v8595 = vsel %vm5942, %v8479, 0
      %v8598 = vsel %vm5942, %v8480, 0
      %v8601 = vsel %vm5942, %v8481, 0
      %v8604 = vsel %vm5942, %v8482, 0
      %v8607 = vsel %vm5942, %v8483, 0
      %v8610 = vsel %vm5942, %v8484, 0
      %v8613 = vsel %vm5942, %v8485, 0
      %v8616 = vsel %vm5942, %v8486, 0
      %v8619 = vsel %vm5942, %v8487, 0
      %v8622 = vsel %vm5942, %v8488, 0
      %v8625 = vsel %vm5942, %v8489, 0
      %v8628 = vsel %vm5942, %v8490, 0
      %v8631 = vsel %vm5942, %v8491, 0
      %v8634 = vsel %vm5942, %v8492, 0
      %v8637 = vsel %vm5942, %v8493, 0
      %v8640 = vsel %vm5942, %v8494, 0
      %v8643 = vsel %vm5942, %v8495, 0
      %v8646 = vsel %vm5942, %v8496, 0
      %v8649 = vsel %vm5942, %v8497, 0
      %v8652 = vsel %vm5942, %v8498, 0
      %v8655 = vsel %vm5942, %v8499, 0
      %v8658 = vsel %vm5942, %v8500, 0
      %v8661 = vsel %vm5942, %v8501, 0
      %v8664 = vsel %vm5942, %v8502, 0
      %v8667 = vsel %vm5942, %v8503, 0
      %v8670 = vsel %vm5942, %v8504, 0
      %v8673 = vsel %vm5942, %v8505, 0
      %v8676 = vsel %vm5942, %v8506, 0
      %v8679 = vsel %vm5942, %v8507, 0
      %v8682 = vsel %vm5942, %v8508, 0
      %v8685 = vsel %vm5942, %v8509, 0
      %v8688 = vsel %vm5942, %v8510, 0
      %v8691 = vsel %vm5942, %v8511, 0
      %v8694 = vsel %vm5942, %v8512, 0
      %v8697 = vsel %vm5942, %v8513, 0
      %v8700 = vsel %vm5942, %v8514, 0
      %v8703 = vsel %vm5942, %v8515, 0
      %v8706 = vsel %vm5942, %v8516, 0
      %v8709 = vsel %vm5942, %v8517, 0
      %v8712 = vsel %vm5942, %v8518, 0
      %8714 = vmatpush.msra.mxu0 0.0
      %8715 = vmatpush.msra.mxu0 0.0
      %8716 = vmatpush.msra.mxu0 0.0
      %8717 = vmatpush.msra.mxu0 0.0
      %8718 = vmatpush.msra.mxu0 0.0
      %8719 = vmatpush.msra.mxu0 0.0
      %8720 = vmatpush.msra.mxu0 0.0
      %8721 = vmatpush.msra.mxu0 0.0
      %8722 = vmatpush.msra.mxu0 0.0
      %8723 = vmatpush.msra.mxu0 0.0
      %8724 = vmatpush.msra.mxu0 0.0
      %8725 = vmatpush.msra.mxu0 0.0
      %8726 = vmatpush.msra.mxu0 0.0
      %8727 = vmatpush.msra.mxu0 0.0
      %8728 = vmatpush.msra.mxu0 %v8521
      %8729 = vmatpush.msra.mxu0 %v8520
      %8730 = vmatmul.f32.gmra.mxu0 %v8523
      %v8731 = vpop.f32.mrf.mxu0
      %v8732 = vadd.f32 0.0, %v8731
      %8733 = vmatmul.f32.gmra.mxu0 %v8526
      %v8734 = vpop.f32.mrf.mxu0
      %v8735 = vadd.f32 0.0, %v8734
      %8736 = vmatmul.f32.gmra.mxu0 %v8529
      %v8737 = vpop.f32.mrf.mxu0
      %v8738 = vadd.f32 0.0, %v8737
      %8739 = vmatmul.f32.gmra.mxu0 %v8532
      %v8740 = vpop.f32.mrf.mxu0
      %v8741 = vadd.f32 0.0, %v8740
      %8742 = vmatmul.f32.gmra.mxu0 %v8535
      %v8743 = vpop.f32.mrf.mxu0
      %v8744 = vadd.f32 0.0, %v8743
      %8745 = vmatmul.f32.gmra.mxu0 %v8538
      %v8746 = vpop.f32.mrf.mxu0
      %v8747 = vadd.f32 0.0, %v8746
      %8748 = vmatmul.f32.gmra.mxu0 %v8541
      %v8749 = vpop.f32.mrf.mxu0
      %v8750 = vadd.f32 0.0, %v8749
      %8751 = vmatmul.f32.gmra.mxu0 %v8544
      %v8752 = vpop.f32.mrf.mxu0
      %v8753 = vadd.f32 0.0, %v8752
      %8754 = vmatmul.f32.gmra.mxu0 %v8547
      %v8755 = vpop.f32.mrf.mxu0
      %v8756 = vadd.f32 0.0, %v8755
      %8757 = vmatmul.f32.gmra.mxu0 %v8550
      %v8758 = vpop.f32.mrf.mxu0
      %v8759 = vadd.f32 0.0, %v8758
      %8760 = vmatmul.f32.gmra.mxu0 %v8553
      %v8761 = vpop.f32.mrf.mxu0
      %v8762 = vadd.f32 0.0, %v8761
      %8763 = vmatmul.f32.gmra.mxu0 %v8556
      %v8764 = vpop.f32.mrf.mxu0
      %v8765 = vadd.f32 0.0, %v8764
      %8766 = vmatmul.f32.gmra.mxu0 %v8559
      %v8767 = vpop.f32.mrf.mxu0
      %v8768 = vadd.f32 0.0, %v8767
      %8769 = vmatmul.f32.gmra.mxu0 %v8562
      %v8770 = vpop.f32.mrf.mxu0
      %v8771 = vadd.f32 0.0, %v8770
      %8772 = vmatmul.f32.gmra.mxu0 %v8565
      %v8773 = vpop.f32.mrf.mxu0
      %v8774 = vadd.f32 0.0, %v8773
      %8775 = vmatmul.f32.gmra.mxu0 %v8568
      %v8776 = vpop.f32.mrf.mxu0
      %v8777 = vadd.f32 0.0, %v8776
      %8778 = vmatmul.f32.gmra.mxu0 %v8571
      %v8779 = vpop.f32.mrf.mxu0
      %v8780 = vadd.f32 0.0, %v8779
      %8781 = vmatmul.f32.gmra.mxu0 %v8574
      %v8782 = vpop.f32.mrf.mxu0
      %v8783 = vadd.f32 0.0, %v8782
      %8784 = vmatmul.f32.gmra.mxu0 %v8577
      %v8785 = vpop.f32.mrf.mxu0
      %v8786 = vadd.f32 0.0, %v8785
      %8787 = vmatmul.f32.gmra.mxu0 %v8580
      %v8788 = vpop.f32.mrf.mxu0
      %v8789 = vadd.f32 0.0, %v8788
      %8790 = vmatmul.f32.gmra.mxu0 %v8583
      %v8791 = vpop.f32.mrf.mxu0
      %v8792 = vadd.f32 0.0, %v8791
      %8793 = vmatmul.f32.gmra.mxu0 %v8586
      %v8794 = vpop.f32.mrf.mxu0
      %v8795 = vadd.f32 0.0, %v8794
      %8796 = vmatmul.f32.gmra.mxu0 %v8589
      %v8797 = vpop.f32.mrf.mxu0
      %v8798 = vadd.f32 0.0, %v8797
      %8799 = vmatmul.f32.gmra.mxu0 %v8592
      %v8800 = vpop.f32.mrf.mxu0
      %v8801 = vadd.f32 0.0, %v8800
      %8802 = vmatmul.f32.gmra.mxu0 %v8595
      %v8803 = vpop.f32.mrf.mxu0
      %v8804 = vadd.f32 0.0, %v8803
      %8805 = vmatmul.f32.gmra.mxu0 %v8598
      %v8806 = vpop.f32.mrf.mxu0
      %v8807 = vadd.f32 0.0, %v8806
      %8808 = vmatmul.f32.gmra.mxu0 %v8601
      %v8809 = vpop.f32.mrf.mxu0
      %v8810 = vadd.f32 0.0, %v8809
      %8811 = vmatmul.f32.gmra.mxu0 %v8604
      %v8812 = vpop.f32.mrf.mxu0
      %v8813 = vadd.f32 0.0, %v8812
      %8814 = vmatmul.f32.gmra.mxu0 %v8607
      %v8815 = vpop.f32.mrf.mxu0
      %v8816 = vadd.f32 0.0, %v8815
      %8817 = vmatmul.f32.gmra.mxu0 %v8610
      %v8818 = vpop.f32.mrf.mxu0
      %v8819 = vadd.f32 0.0, %v8818
      %8820 = vmatmul.f32.gmra.mxu0 %v8613
      %v8821 = vpop.f32.mrf.mxu0
      %v8822 = vadd.f32 0.0, %v8821
      %8823 = vmatmul.f32.gmra.mxu0 %v8616
      %v8824 = vpop.f32.mrf.mxu0
      %v8825 = vadd.f32 0.0, %v8824
      %8826 = vmatmul.f32.gmra.mxu0 %v8619
      %v8827 = vpop.f32.mrf.mxu0
      %v8828 = vadd.f32 0.0, %v8827
      %8829 = vmatmul.f32.gmra.mxu0 %v8622
      %v8830 = vpop.f32.mrf.mxu0
      %v8831 = vadd.f32 0.0, %v8830
      %8832 = vmatmul.f32.gmra.mxu0 %v8625
      %v8833 = vpop.f32.mrf.mxu0
      %v8834 = vadd.f32 0.0, %v8833
      %8835 = vmatmul.f32.gmra.mxu0 %v8628
      %v8836 = vpop.f32.mrf.mxu0
      %v8837 = vadd.f32 0.0, %v8836
      %8838 = vmatmul.f32.gmra.mxu0 %v8631
      %v8839 = vpop.f32.mrf.mxu0
      %v8840 = vadd.f32 0.0, %v8839
      %8841 = vmatmul.f32.gmra.mxu0 %v8634
      %v8842 = vpop.f32.mrf.mxu0
      %v8843 = vadd.f32 0.0, %v8842
      %8844 = vmatmul.f32.gmra.mxu0 %v8637
      %v8845 = vpop.f32.mrf.mxu0
      %v8846 = vadd.f32 0.0, %v8845
      %8847 = vmatmul.f32.gmra.mxu0 %v8640
      %v8848 = vpop.f32.mrf.mxu0
      %v8849 = vadd.f32 0.0, %v8848
      %8850 = vmatmul.f32.gmra.mxu0 %v8643
      %v8851 = vpop.f32.mrf.mxu0
      %v8852 = vadd.f32 0.0, %v8851
      %8853 = vmatmul.f32.gmra.mxu0 %v8646
      %v8854 = vpop.f32.mrf.mxu0
      %v8855 = vadd.f32 0.0, %v8854
      %8856 = vmatmul.f32.gmra.mxu0 %v8649
      %v8857 = vpop.f32.mrf.mxu0
      %v8858 = vadd.f32 0.0, %v8857
      %8859 = vmatmul.f32.gmra.mxu0 %v8652
      %v8860 = vpop.f32.mrf.mxu0
      %v8861 = vadd.f32 0.0, %v8860
      %8862 = vmatmul.f32.gmra.mxu0 %v8655
      %v8863 = vpop.f32.mrf.mxu0
      %v8864 = vadd.f32 0.0, %v8863
      %8865 = vmatmul.f32.gmra.mxu0 %v8658
      %v8866 = vpop.f32.mrf.mxu0
      %v8867 = vadd.f32 0.0, %v8866
      %8868 = vmatmul.f32.gmra.mxu0 %v8661
      %v8869 = vpop.f32.mrf.mxu0
      %v8870 = vadd.f32 0.0, %v8869
      %8871 = vmatmul.f32.gmra.mxu0 %v8664
      %v8872 = vpop.f32.mrf.mxu0
      %v8873 = vadd.f32 0.0, %v8872
      %8874 = vmatmul.f32.gmra.mxu0 %v8667
      %v8875 = vpop.f32.mrf.mxu0
      %v8876 = vadd.f32 0.0, %v8875
      %8877 = vmatmul.f32.gmra.mxu0 %v8670
      %v8878 = vpop.f32.mrf.mxu0
      %v8879 = vadd.f32 0.0, %v8878
      %8880 = vmatmul.f32.gmra.mxu0 %v8673
      %v8881 = vpop.f32.mrf.mxu0
      %v8882 = vadd.f32 0.0, %v8881
      %8883 = vmatmul.f32.gmra.mxu0 %v8676
      %v8884 = vpop.f32.mrf.mxu0
      %v8885 = vadd.f32 0.0, %v8884
      %8886 = vmatmul.f32.gmra.mxu0 %v8679
      %v8887 = vpop.f32.mrf.mxu0
      %v8888 = vadd.f32 0.0, %v8887
      %8889 = vmatmul.f32.gmra.mxu0 %v8682
      %v8890 = vpop.f32.mrf.mxu0
      %v8891 = vadd.f32 0.0, %v8890
      %8892 = vmatmul.f32.gmra.mxu0 %v8685
      %v8893 = vpop.f32.mrf.mxu0
      %v8894 = vadd.f32 0.0, %v8893
      %8895 = vmatmul.f32.gmra.mxu0 %v8688
      %v8896 = vpop.f32.mrf.mxu0
      %v8897 = vadd.f32 0.0, %v8896
      %8898 = vmatmul.f32.gmra.mxu0 %v8691
      %v8899 = vpop.f32.mrf.mxu0
      %v8900 = vadd.f32 0.0, %v8899
      %8901 = vmatmul.f32.gmra.mxu0 %v8694
      %v8902 = vpop.f32.mrf.mxu0
      %v8903 = vadd.f32 0.0, %v8902
      %8904 = vmatmul.f32.gmra.mxu0 %v8697
      %v8905 = vpop.f32.mrf.mxu0
      %v8906 = vadd.f32 0.0, %v8905
      %8907 = vmatmul.f32.gmra.mxu0 %v8700
      %v8908 = vpop.f32.mrf.mxu0
      %v8909 = vadd.f32 0.0, %v8908
      %8910 = vmatmul.f32.gmra.mxu0 %v8703
      %v8911 = vpop.f32.mrf.mxu0
      %v8912 = vadd.f32 0.0, %v8911
      %8913 = vmatmul.f32.gmra.mxu0 %v8706
      %v8914 = vpop.f32.mrf.mxu0
      %v8915 = vadd.f32 0.0, %v8914
      %8916 = vmatmul.f32.gmra.mxu0 %v8709
      %v8917 = vpop.f32.mrf.mxu0
      %v8918 = vadd.f32 0.0, %v8917
      %8919 = vmatmul.f32.gmra.mxu0 %v8712
      %v8920 = vpop.f32.mrf.mxu0
      %v8921 = vadd.f32 0.0, %v8920
      %8922 = vdwg.mxu0
      %v8923 = vadd.f32 %v8391, %v8732
      %v8924 = vadd.f32 %v8392, %v8735
      %v8925 = vadd.f32 %v8393, %v8738
      %v8926 = vadd.f32 %v8394, %v8741
      %v8927 = vadd.f32 %v8395, %v8744
      %v8928 = vadd.f32 %v8396, %v8747
      %v8929 = vadd.f32 %v8397, %v8750
      %v8930 = vadd.f32 %v8398, %v8753
      %v8931 = vadd.f32 %v8399, %v8756
      %v8932 = vadd.f32 %v8400, %v8759
      %v8933 = vadd.f32 %v8401, %v8762
      %v8934 = vadd.f32 %v8402, %v8765
      %v8935 = vadd.f32 %v8403, %v8768
      %v8936 = vadd.f32 %v8404, %v8771
      %v8937 = vadd.f32 %v8405, %v8774
      %v8938 = vadd.f32 %v8406, %v8777
      %v8939 = vadd.f32 %v8407, %v8780
      %v8940 = vadd.f32 %v8408, %v8783
      %v8941 = vadd.f32 %v8409, %v8786
      %v8942 = vadd.f32 %v8410, %v8789
      %v8943 = vadd.f32 %v8411, %v8792
      %v8944 = vadd.f32 %v8412, %v8795
      %v8945 = vadd.f32 %v8413, %v8798
      %v8946 = vadd.f32 %v8414, %v8801
      %v8947 = vadd.f32 %v8415, %v8804
      %v8948 = vadd.f32 %v8416, %v8807
      %v8949 = vadd.f32 %v8417, %v8810
      %v8950 = vadd.f32 %v8418, %v8813
      %v8951 = vadd.f32 %v8419, %v8816
      %v8952 = vadd.f32 %v8420, %v8819
      %v8953 = vadd.f32 %v8421, %v8822
      %v8954 = vadd.f32 %v8422, %v8825
      %v8955 = vadd.f32 %v8423, %v8828
      %v8956 = vadd.f32 %v8424, %v8831
      %v8957 = vadd.f32 %v8425, %v8834
      %v8958 = vadd.f32 %v8426, %v8837
      %v8959 = vadd.f32 %v8427, %v8840
      %v8960 = vadd.f32 %v8428, %v8843
      %v8961 = vadd.f32 %v8429, %v8846
      %v8962 = vadd.f32 %v8430, %v8849
      %v8963 = vadd.f32 %v8431, %v8852
      %v8964 = vadd.f32 %v8432, %v8855
      %v8965 = vadd.f32 %v8433, %v8858
      %v8966 = vadd.f32 %v8434, %v8861
      %v8967 = vadd.f32 %v8435, %v8864
      %v8968 = vadd.f32 %v8436, %v8867
      %v8969 = vadd.f32 %v8437, %v8870
      %v8970 = vadd.f32 %v8438, %v8873
      %v8971 = vadd.f32 %v8439, %v8876
      %v8972 = vadd.f32 %v8440, %v8879
      %v8973 = vadd.f32 %v8441, %v8882
      %v8974 = vadd.f32 %v8442, %v8885
      %v8975 = vadd.f32 %v8443, %v8888
      %v8976 = vadd.f32 %v8444, %v8891
      %v8977 = vadd.f32 %v8445, %v8894
      %v8978 = vadd.f32 %v8446, %v8897
      %v8979 = vadd.f32 %v8447, %v8900
      %v8980 = vadd.f32 %v8448, %v8903
      %v8981 = vadd.f32 %v8449, %v8906
      %v8982 = vadd.f32 %v8450, %v8909
      %v8983 = vadd.f32 %v8451, %v8912
      %v8984 = vadd.f32 %v8452, %v8915
      %v8985 = vadd.f32 %v8453, %v8918
      %v8986 = vadd.f32 %v8454, %v8921
      %v8987 = vld [vmem:[%s4] sm:$0x1]
      %v8989 = vperm.slane %v8987, 0
      %v8991 = vadd.f32 %v8923, %v8989
      %v8992 = vadd.f32 %v8924, %v8989
      %v8993 = vadd.f32 %v8925, %v8989
      %v8994 = vadd.f32 %v8926, %v8989
      %v8995 = vadd.f32 %v8927, %v8989
      %v8996 = vadd.f32 %v8928, %v8989
      %v8997 = vadd.f32 %v8929, %v8989
      %v8998 = vadd.f32 %v8930, %v8989
      %v8999 = vadd.f32 %v8931, %v8989
      %v9000 = vadd.f32 %v8932, %v8989
      %v9001 = vadd.f32 %v8933, %v8989
      %v9002 = vadd.f32 %v8934, %v8989
      %v9003 = vadd.f32 %v8935, %v8989
      %v9004 = vadd.f32 %v8936, %v8989
      %v9005 = vadd.f32 %v8937, %v8989
      %v9006 = vadd.f32 %v8938, %v8989
      %v9007 = vadd.f32 %v8939, %v8989
      %v9008 = vadd.f32 %v8940, %v8989
      %v9009 = vadd.f32 %v8941, %v8989
      %v9010 = vadd.f32 %v8942, %v8989
      %v9011 = vadd.f32 %v8943, %v8989
      %v9012 = vadd.f32 %v8944, %v8989
      %v9013 = vadd.f32 %v8945, %v8989
      %v9014 = vadd.f32 %v8946, %v8989
      %v9015 = vadd.f32 %v8947, %v8989
      %v9016 = vadd.f32 %v8948, %v8989
      %v9017 = vadd.f32 %v8949, %v8989
      %v9018 = vadd.f32 %v8950, %v8989
      %v9019 = vadd.f32 %v8951, %v8989
      %v9020 = vadd.f32 %v8952, %v8989
      %v9021 = vadd.f32 %v8953, %v8989
      %v9022 = vadd.f32 %v8954, %v8989
      %v9023 = vadd.f32 %v8955, %v8989
      %v9024 = vadd.f32 %v8956, %v8989
      %v9025 = vadd.f32 %v8957, %v8989
      %v9026 = vadd.f32 %v8958, %v8989
      %v9027 = vadd.f32 %v8959, %v8989
      %v9028 = vadd.f32 %v8960, %v8989
      %v9029 = vadd.f32 %v8961, %v8989
      %v9030 = vadd.f32 %v8962, %v8989
      %v9031 = vadd.f32 %v8963, %v8989
      %v9032 = vadd.f32 %v8964, %v8989
      %v9033 = vadd.f32 %v8965, %v8989
      %v9034 = vadd.f32 %v8966, %v8989
      %v9035 = vadd.f32 %v8967, %v8989
      %v9036 = vadd.f32 %v8968, %v8989
      %v9037 = vadd.f32 %v8969, %v8989
      %v9038 = vadd.f32 %v8970, %v8989
      %v9039 = vadd.f32 %v8971, %v8989
      %v9040 = vadd.f32 %v8972, %v8989
      %v9041 = vadd.f32 %v8973, %v8989
      %v9042 = vadd.f32 %v8974, %v8989
      %v9043 = vadd.f32 %v8975, %v8989
      %v9044 = vadd.f32 %v8976, %v8989
      %v9045 = vadd.f32 %v8977, %v8989
      %v9046 = vadd.f32 %v8978, %v8989
      %v9047 = vadd.f32 %v8979, %v8989
      %v9048 = vadd.f32 %v8980, %v8989
      %v9049 = vadd.f32 %v8981, %v8989
      %v9050 = vadd.f32 %v8982, %v8989
      %v9051 = vadd.f32 %v8983, %v8989
      %v9052 = vadd.f32 %v8984, %v8989
      %v9053 = vadd.f32 %v8985, %v8989
      %v9054 = vadd.f32 %v8986, %v8989
      %v9055 = vmax.f32 %v8991, 0.0
      %v9056 = vmax.f32 %v8992, 0.0
      %v9057 = vmax.f32 %v8993, 0.0
      %v9058 = vmax.f32 %v8994, 0.0
      %v9059 = vmax.f32 %v8995, 0.0
      %v9060 = vmax.f32 %v8996, 0.0
      %v9061 = vmax.f32 %v8997, 0.0
      %v9062 = vmax.f32 %v8998, 0.0
      %v9063 = vmax.f32 %v8999, 0.0
      %v9064 = vmax.f32 %v9000, 0.0
      %v9065 = vmax.f32 %v9001, 0.0
      %v9066 = vmax.f32 %v9002, 0.0
      %v9067 = vmax.f32 %v9003, 0.0
      %v9068 = vmax.f32 %v9004, 0.0
      %v9069 = vmax.f32 %v9005, 0.0
      %v9070 = vmax.f32 %v9006, 0.0
      %v9071 = vmax.f32 %v9007, 0.0
      %v9072 = vmax.f32 %v9008, 0.0
      %v9073 = vmax.f32 %v9009, 0.0
      %v9074 = vmax.f32 %v9010, 0.0
      %v9075 = vmax.f32 %v9011, 0.0
      %v9076 = vmax.f32 %v9012, 0.0
      %v9077 = vmax.f32 %v9013, 0.0
      %v9078 = vmax.f32 %v9014, 0.0
      %v9079 = vmax.f32 %v9015, 0.0
      %v9080 = vmax.f32 %v9016, 0.0
      %v9081 = vmax.f32 %v9017, 0.0
      %v9082 = vmax.f32 %v9018, 0.0
      %v9083 = vmax.f32 %v9019, 0.0
      %v9084 = vmax.f32 %v9020, 0.0
      %v9085 = vmax.f32 %v9021, 0.0
      %v9086 = vmax.f32 %v9022, 0.0
      %v9087 = vmax.f32 %v9023, 0.0
      %v9088 = vmax.f32 %v9024, 0.0
      %v9089 = vmax.f32 %v9025, 0.0
      %v9090 = vmax.f32 %v9026, 0.0
      %v9091 = vmax.f32 %v9027, 0.0
      %v9092 = vmax.f32 %v9028, 0.0
      %v9093 = vmax.f32 %v9029, 0.0
      %v9094 = vmax.f32 %v9030, 0.0
      %v9095 = vmax.f32 %v9031, 0.0
      %v9096 = vmax.f32 %v9032, 0.0
      %v9097 = vmax.f32 %v9033, 0.0
      %v9098 = vmax.f32 %v9034, 0.0
      %v9099 = vmax.f32 %v9035, 0.0
      %v9100 = vmax.f32 %v9036, 0.0
      %v9101 = vmax.f32 %v9037, 0.0
      %v9102 = vmax.f32 %v9038, 0.0
      %v9103 = vmax.f32 %v9039, 0.0
      %v9104 = vmax.f32 %v9040, 0.0
      %v9105 = vmax.f32 %v9041, 0.0
      %v9106 = vmax.f32 %v9042, 0.0
      %v9107 = vmax.f32 %v9043, 0.0
      %v9108 = vmax.f32 %v9044, 0.0
      %v9109 = vmax.f32 %v9045, 0.0
      %v9110 = vmax.f32 %v9046, 0.0
      %v9111 = vmax.f32 %v9047, 0.0
      %v9112 = vmax.f32 %v9048, 0.0
      %v9113 = vmax.f32 %v9049, 0.0
      %v9114 = vmax.f32 %v9050, 0.0
      %v9115 = vmax.f32 %v9051, 0.0
      %v9116 = vmax.f32 %v9052, 0.0
      %v9117 = vmax.f32 %v9053, 0.0
      %v9118 = vmax.f32 %v9054, 0.0
      %vm9119 = vcmask 261120
      %9120 = vst.msk [vmem:[#allocation5] sm:$0xff] %vm9119, %v9055
      %9121 = vst.msk [vmem:[#allocation5 + $0x8] sm:$0xff] %vm9119, %v9056
      %9122 = vst.msk [vmem:[#allocation5 + $0x10] sm:$0xff] %vm9119, %v9057
      %9123 = vst.msk [vmem:[#allocation5 + $0x18] sm:$0xff] %vm9119, %v9058
      %9124 = vst.msk [vmem:[#allocation5 + $0x20] sm:$0xff] %vm9119, %v9059
      %9125 = vst.msk [vmem:[#allocation5 + $0x28] sm:$0xff] %vm9119, %v9060
      %9126 = vst.msk [vmem:[#allocation5 + $0x30] sm:$0xff] %vm9119, %v9061
      %9127 = vst.msk [vmem:[#allocation5 + $0x38] sm:$0xff] %vm9119, %v9062
      %9128 = vst.msk [vmem:[#allocation5 + $0x40] sm:$0xff] %vm9119, %v9063
      %9129 = vst.msk [vmem:[#allocation5 + $0x48] sm:$0xff] %vm9119, %v9064
      %9130 = vst.msk [vmem:[#allocation5 + $0x50] sm:$0xff] %vm9119, %v9065
      %9131 = vst.msk [vmem:[#allocation5 + $0x58] sm:$0xff] %vm9119, %v9066
      %9132 = vst.msk [vmem:[#allocation5 + $0x60] sm:$0xff] %vm9119, %v9067
      %9133 = vst.msk [vmem:[#allocation5 + $0x68] sm:$0xff] %vm9119, %v9068
      %9134 = vst.msk [vmem:[#allocation5 + $0x70] sm:$0xff] %vm9119, %v9069
      %9135 = vst.msk [vmem:[#allocation5 + $0x78] sm:$0xff] %vm9119, %v9070
      %9136 = vst.msk [vmem:[#allocation5 + $0x80] sm:$0xff] %vm9119, %v9071
      %9137 = vst.msk [vmem:[#allocation5 + $0x88] sm:$0xff] %vm9119, %v9072
      %9138 = vst.msk [vmem:[#allocation5 + $0x90] sm:$0xff] %vm9119, %v9073
      %9139 = vst.msk [vmem:[#allocation5 + $0x98] sm:$0xff] %vm9119, %v9074
      %9140 = vst.msk [vmem:[#allocation5 + $0xa0] sm:$0xff] %vm9119, %v9075
      %9141 = vst.msk [vmem:[#allocation5 + $0xa8] sm:$0xff] %vm9119, %v9076
      %9142 = vst.msk [vmem:[#allocation5 + $0xb0] sm:$0xff] %vm9119, %v9077
      %9143 = vst.msk [vmem:[#allocation5 + $0xb8] sm:$0xff] %vm9119, %v9078
      %9144 = vst.msk [vmem:[#allocation5 + $0xc0] sm:$0xff] %vm9119, %v9079
      %9145 = vst.msk [vmem:[#allocation5 + $0xc8] sm:$0xff] %vm9119, %v9080
      %9146 = vst.msk [vmem:[#allocation5 + $0xd0] sm:$0xff] %vm9119, %v9081
      %9147 = vst.msk [vmem:[#allocation5 + $0xd8] sm:$0xff] %vm9119, %v9082
      %9148 = vst.msk [vmem:[#allocation5 + $0xe0] sm:$0xff] %vm9119, %v9083
      %9149 = vst.msk [vmem:[#allocation5 + $0xe8] sm:$0xff] %vm9119, %v9084
      %9150 = vst.msk [vmem:[#allocation5 + $0xf0] sm:$0xff] %vm9119, %v9085
      %9151 = vst.msk [vmem:[#allocation5 + $0xf8] sm:$0xff] %vm9119, %v9086
      %9152 = vst.msk [vmem:[#allocation5 + $0x100] sm:$0xff] %vm9119, %v9087
      %9153 = vst.msk [vmem:[#allocation5 + $0x108] sm:$0xff] %vm9119, %v9088
      %9154 = vst.msk [vmem:[#allocation5 + $0x110] sm:$0xff] %vm9119, %v9089
      %9155 = vst.msk [vmem:[#allocation5 + $0x118] sm:$0xff] %vm9119, %v9090
      %9156 = vst.msk [vmem:[#allocation5 + $0x120] sm:$0xff] %vm9119, %v9091
      %9157 = vst.msk [vmem:[#allocation5 + $0x128] sm:$0xff] %vm9119, %v9092
      %9158 = vst.msk [vmem:[#allocation5 + $0x130] sm:$0xff] %vm9119, %v9093
      %9159 = vst.msk [vmem:[#allocation5 + $0x138] sm:$0xff] %vm9119, %v9094
      %9160 = vst.msk [vmem:[#allocation5 + $0x140] sm:$0xff] %vm9119, %v9095
      %9161 = vst.msk [vmem:[#allocation5 + $0x148] sm:$0xff] %vm9119, %v9096
      %9162 = vst.msk [vmem:[#allocation5 + $0x150] sm:$0xff] %vm9119, %v9097
      %9163 = vst.msk [vmem:[#allocation5 + $0x158] sm:$0xff] %vm9119, %v9098
      %9164 = vst.msk [vmem:[#allocation5 + $0x160] sm:$0xff] %vm9119, %v9099
      %9165 = vst.msk [vmem:[#allocation5 + $0x168] sm:$0xff] %vm9119, %v9100
      %9166 = vst.msk [vmem:[#allocation5 + $0x170] sm:$0xff] %vm9119, %v9101
      %9167 = vst.msk [vmem:[#allocation5 + $0x178] sm:$0xff] %vm9119, %v9102
      %9168 = vst.msk [vmem:[#allocation5 + $0x180] sm:$0xff] %vm9119, %v9103
      %9169 = vst.msk [vmem:[#allocation5 + $0x188] sm:$0xff] %vm9119, %v9104
      %9170 = vst.msk [vmem:[#allocation5 + $0x190] sm:$0xff] %vm9119, %v9105
      %9171 = vst.msk [vmem:[#allocation5 + $0x198] sm:$0xff] %vm9119, %v9106
      %9172 = vst.msk [vmem:[#allocation5 + $0x1a0] sm:$0xff] %vm9119, %v9107
      %9173 = vst.msk [vmem:[#allocation5 + $0x1a8] sm:$0xff] %vm9119, %v9108
      %9174 = vst.msk [vmem:[#allocation5 + $0x1b0] sm:$0xff] %vm9119, %v9109
      %9175 = vst.msk [vmem:[#allocation5 + $0x1b8] sm:$0xff] %vm9119, %v9110
      %9176 = vst.msk [vmem:[#allocation5 + $0x1c0] sm:$0xff] %vm9119, %v9111
      %9177 = vst.msk [vmem:[#allocation5 + $0x1c8] sm:$0xff] %vm9119, %v9112
      %9178 = vst.msk [vmem:[#allocation5 + $0x1d0] sm:$0xff] %vm9119, %v9113
      %9179 = vst.msk [vmem:[#allocation5 + $0x1d8] sm:$0xff] %vm9119, %v9114
      %9180 = vst.msk [vmem:[#allocation5 + $0x1e0] sm:$0xff] %vm9119, %v9115
      %9181 = vst.msk [vmem:[#allocation5 + $0x1e8] sm:$0xff] %vm9119, %v9116
      %9182 = vst.msk [vmem:[#allocation5 + $0x1f0] sm:$0xff] %vm9119, %v9117
      %9183 = vst.msk [vmem:[#allocation5 + $0x1f8] sm:$0xff] %vm9119, %v9118
      %v9184 = vld [vmem:[#allocation5] ss:$2 sm:$0xff]
      %s9185 = scalar_lea.vmem [#allocation5], 16
      %v9186 = vld [vmem:[%s9185] ss:$2 sm:$0xff]
      %s9187 = scalar_lea.vmem [#allocation5], 32
      %v9188 = vld [vmem:[%s9187] ss:$2 sm:$0xff]
      %s9189 = scalar_lea.vmem [#allocation5], 48
      %v9190 = vld [vmem:[%s9189] ss:$2 sm:$0xff]
      %s9191 = scalar_lea.vmem [#allocation5], 64
      %v9192 = vld [vmem:[%s9191] ss:$2 sm:$0xff]
      %s9193 = scalar_lea.vmem [#allocation5], 80
      %v9194 = vld [vmem:[%s9193] ss:$2 sm:$0xff]
      %s9195 = scalar_lea.vmem [#allocation5], 96
      %v9196 = vld [vmem:[%s9195] ss:$2 sm:$0xff]
      %s9197 = scalar_lea.vmem [#allocation5], 112
      %v9198 = vld [vmem:[%s9197] ss:$2 sm:$0xff]
      %s9199 = scalar_lea.vmem [#allocation5], 128
      %v9200 = vld [vmem:[%s9199] ss:$2 sm:$0xff]
      %s9201 = scalar_lea.vmem [#allocation5], 144
      %v9202 = vld [vmem:[%s9201] ss:$2 sm:$0xff]
      %s9203 = scalar_lea.vmem [#allocation5], 160
      %v9204 = vld [vmem:[%s9203] ss:$2 sm:$0xff]
      %s9205 = scalar_lea.vmem [#allocation5], 176
      %v9206 = vld [vmem:[%s9205] ss:$2 sm:$0xff]
      %s9207 = scalar_lea.vmem [#allocation5], 192
      %v9208 = vld [vmem:[%s9207] ss:$2 sm:$0xff]
      %s9209 = scalar_lea.vmem [#allocation5], 208
      %v9210 = vld [vmem:[%s9209] ss:$2 sm:$0xff]
      %s9211 = scalar_lea.vmem [#allocation5], 224
      %v9212 = vld [vmem:[%s9211] ss:$2 sm:$0xff]
      %s9213 = scalar_lea.vmem [#allocation5], 240
      %v9214 = vld [vmem:[%s9213] ss:$2 sm:$0xff]
      %s9215 = scalar_lea.vmem [#allocation5], 256
      %v9216 = vld [vmem:[%s9215] ss:$2 sm:$0xff]
      %s9217 = scalar_lea.vmem [#allocation5], 272
      %v9218 = vld [vmem:[%s9217] ss:$2 sm:$0xff]
      %s9219 = scalar_lea.vmem [#allocation5], 288
      %v9220 = vld [vmem:[%s9219] ss:$2 sm:$0xff]
      %s9221 = scalar_lea.vmem [#allocation5], 304
      %v9222 = vld [vmem:[%s9221] ss:$2 sm:$0xff]
      %s9223 = scalar_lea.vmem [#allocation5], 320
      %v9224 = vld [vmem:[%s9223] ss:$2 sm:$0xff]
      %s9225 = scalar_lea.vmem [#allocation5], 336
      %v9226 = vld [vmem:[%s9225] ss:$2 sm:$0xff]
      %s9227 = scalar_lea.vmem [#allocation5], 352
      %v9228 = vld [vmem:[%s9227] ss:$2 sm:$0xff]
      %s9229 = scalar_lea.vmem [#allocation5], 368
      %v9230 = vld [vmem:[%s9229] ss:$2 sm:$0xff]
      %s9231 = scalar_lea.vmem [#allocation5], 384
      %v9232 = vld [vmem:[%s9231] ss:$2 sm:$0xff]
      %s9233 = scalar_lea.vmem [#allocation5], 400
      %v9234 = vld [vmem:[%s9233] ss:$2 sm:$0xff]
      %s9235 = scalar_lea.vmem [#allocation5], 416
      %v9236 = vld [vmem:[%s9235] ss:$2 sm:$0xff]
      %s9237 = scalar_lea.vmem [#allocation5], 432
      %v9238 = vld [vmem:[%s9237] ss:$2 sm:$0xff]
      %s9239 = scalar_lea.vmem [#allocation5], 448
      %v9240 = vld [vmem:[%s9239] ss:$2 sm:$0xff]
      %s9241 = scalar_lea.vmem [#allocation5], 464
      %v9242 = vld [vmem:[%s9241] ss:$2 sm:$0xff]
      %s9243 = scalar_lea.vmem [#allocation5], 480
      %v9244 = vld [vmem:[%s9243] ss:$2 sm:$0xff]
      %s9245 = scalar_lea.vmem [#allocation5], 496
      %v9246 = vld [vmem:[%s9245] ss:$2 sm:$0xff]
      %s9247 = scalar_lea.vmem [#allocation5], 1
      %v9248 = vld [vmem:[%s9247] ss:$2 sm:$0xff]
      %s9249 = scalar_lea.vmem [#allocation5], 17
      %v9250 = vld [vmem:[%s9249] ss:$2 sm:$0xff]
      %s9251 = scalar_lea.vmem [#allocation5], 33
      %v9252 = vld [vmem:[%s9251] ss:$2 sm:$0xff]
      %s9253 = scalar_lea.vmem [#allocation5], 49
      %v9254 = vld [vmem:[%s9253] ss:$2 sm:$0xff]
      %s9255 = scalar_lea.vmem [#allocation5], 65
      %v9256 = vld [vmem:[%s9255] ss:$2 sm:$0xff]
      %s9257 = scalar_lea.vmem [#allocation5], 81
      %v9258 = vld [vmem:[%s9257] ss:$2 sm:$0xff]
      %s9259 = scalar_lea.vmem [#allocation5], 97
      %v9260 = vld [vmem:[%s9259] ss:$2 sm:$0xff]
      %s9261 = scalar_lea.vmem [#allocation5], 113
      %v9262 = vld [vmem:[%s9261] ss:$2 sm:$0xff]
      %s9263 = scalar_lea.vmem [#allocation5], 129
      %v9264 = vld [vmem:[%s9263] ss:$2 sm:$0xff]
      %s9265 = scalar_lea.vmem [#allocation5], 145
      %v9266 = vld [vmem:[%s9265] ss:$2 sm:$0xff]
      %s9267 = scalar_lea.vmem [#allocation5], 161
      %v9268 = vld [vmem:[%s9267] ss:$2 sm:$0xff]
      %s9269 = scalar_lea.vmem [#allocation5], 177
      %v9270 = vld [vmem:[%s9269] ss:$2 sm:$0xff]
      %s9271 = scalar_lea.vmem [#allocation5], 193
      %v9272 = vld [vmem:[%s9271] ss:$2 sm:$0xff]
      %s9273 = scalar_lea.vmem [#allocation5], 209
      %v9274 = vld [vmem:[%s9273] ss:$2 sm:$0xff]
      %s9275 = scalar_lea.vmem [#allocation5], 225
      %v9276 = vld [vmem:[%s9275] ss:$2 sm:$0xff]
      %s9277 = scalar_lea.vmem [#allocation5], 241
      %v9278 = vld [vmem:[%s9277] ss:$2 sm:$0xff]
      %s9279 = scalar_lea.vmem [#allocation5], 257
      %v9280 = vld [vmem:[%s9279] ss:$2 sm:$0xff]
      %s9281 = scalar_lea.vmem [#allocation5], 273
      %v9282 = vld [vmem:[%s9281] ss:$2 sm:$0xff]
      %s9283 = scalar_lea.vmem [#allocation5], 289
      %v9284 = vld [vmem:[%s9283] ss:$2 sm:$0xff]
      %s9285 = scalar_lea.vmem [#allocation5], 305
      %v9286 = vld [vmem:[%s9285] ss:$2 sm:$0xff]
      %s9287 = scalar_lea.vmem [#allocation5], 321
      %v9288 = vld [vmem:[%s9287] ss:$2 sm:$0xff]
      %s9289 = scalar_lea.vmem [#allocation5], 337
      %v9290 = vld [vmem:[%s9289] ss:$2 sm:$0xff]
      %s9291 = scalar_lea.vmem [#allocation5], 353
      %v9292 = vld [vmem:[%s9291] ss:$2 sm:$0xff]
      %s9293 = scalar_lea.vmem [#allocation5], 369
      %v9294 = vld [vmem:[%s9293] ss:$2 sm:$0xff]
      %s9295 = scalar_lea.vmem [#allocation5], 385
      %v9296 = vld [vmem:[%s9295] ss:$2 sm:$0xff]
      %s9297 = scalar_lea.vmem [#allocation5], 401
      %v9298 = vld [vmem:[%s9297] ss:$2 sm:$0xff]
      %s9299 = scalar_lea.vmem [#allocation5], 417
      %v9300 = vld [vmem:[%s9299] ss:$2 sm:$0xff]
      %s9301 = scalar_lea.vmem [#allocation5], 433
      %v9302 = vld [vmem:[%s9301] ss:$2 sm:$0xff]
      %s9303 = scalar_lea.vmem [#allocation5], 449
      %v9304 = vld [vmem:[%s9303] ss:$2 sm:$0xff]
      %s9305 = scalar_lea.vmem [#allocation5], 465
      %v9306 = vld [vmem:[%s9305] ss:$2 sm:$0xff]
      %s9307 = scalar_lea.vmem [#allocation5], 481
      %v9308 = vld [vmem:[%s9307] ss:$2 sm:$0xff]
      %s9309 = scalar_lea.vmem [#allocation5], 497
      %v9310 = vld [vmem:[%s9309] ss:$2 sm:$0xff]
      %v9311 = vmax.f32 %v9184, %v9248
      %v9312 = vmax.f32 %v9186, %v9250
      %v9313 = vmax.f32 %v9188, %v9252
      %v9314 = vmax.f32 %v9190, %v9254
      %v9315 = vmax.f32 %v9192, %v9256
      %v9316 = vmax.f32 %v9194, %v9258
      %v9317 = vmax.f32 %v9196, %v9260
      %v9318 = vmax.f32 %v9198, %v9262
      %v9319 = vmax.f32 %v9200, %v9264
      %v9320 = vmax.f32 %v9202, %v9266
      %v9321 = vmax.f32 %v9204, %v9268
      %v9322 = vmax.f32 %v9206, %v9270
      %v9323 = vmax.f32 %v9208, %v9272
      %v9324 = vmax.f32 %v9210, %v9274
      %v9325 = vmax.f32 %v9212, %v9276
      %v9326 = vmax.f32 %v9214, %v9278
      %v9327 = vmax.f32 %v9216, %v9280
      %v9328 = vmax.f32 %v9218, %v9282
      %v9329 = vmax.f32 %v9220, %v9284
      %v9330 = vmax.f32 %v9222, %v9286
      %v9331 = vmax.f32 %v9224, %v9288
      %v9332 = vmax.f32 %v9226, %v9290
      %v9333 = vmax.f32 %v9228, %v9292
      %v9334 = vmax.f32 %v9230, %v9294
      %v9335 = vmax.f32 %v9232, %v9296
      %v9336 = vmax.f32 %v9234, %v9298
      %v9337 = vmax.f32 %v9236, %v9300
      %v9338 = vmax.f32 %v9238, %v9302
      %v9339 = vmax.f32 %v9240, %v9304
      %v9340 = vmax.f32 %v9242, %v9306
      %v9341 = vmax.f32 %v9244, %v9308
      %v9342 = vmax.f32 %v9246, %v9310
      %9343 = vst.msk [vmem:[#allocation6] sm:$0xff] %vm9119, 0.0
      %9344 = vst.msk [vmem:[#allocation6 + $0x100] sm:$0xff] %vm9119, 0.0
      %9345 = vst.msk [vmem:[#allocation6 + $0x2] sm:$0xff] %vm9119, %v9311
      %9346 = vst.msk [vmem:[#allocation6 + $0xa] sm:$0xff] %vm9119, %v9312
      %9347 = vst.msk [vmem:[#allocation6 + $0x12] sm:$0xff] %vm9119, %v9313
      %9348 = vst.msk [vmem:[#allocation6 + $0x1a] sm:$0xff] %vm9119, %v9314
      %9349 = vst.msk [vmem:[#allocation6 + $0x22] sm:$0xff] %vm9119, %v9315
      %9350 = vst.msk [vmem:[#allocation6 + $0x2a] sm:$0xff] %vm9119, %v9316
      %9351 = vst.msk [vmem:[#allocation6 + $0x32] sm:$0xff] %vm9119, %v9317
      %9352 = vst.msk [vmem:[#allocation6 + $0x3a] sm:$0xff] %vm9119, %v9318
      %9353 = vst.msk [vmem:[#allocation6 + $0x42] sm:$0xff] %vm9119, %v9319
      %9354 = vst.msk [vmem:[#allocation6 + $0x4a] sm:$0xff] %vm9119, %v9320
      %9355 = vst.msk [vmem:[#allocation6 + $0x52] sm:$0xff] %vm9119, %v9321
      %9356 = vst.msk [vmem:[#allocation6 + $0x5a] sm:$0xff] %vm9119, %v9322
      %9357 = vst.msk [vmem:[#allocation6 + $0x62] sm:$0xff] %vm9119, %v9323
      %9358 = vst.msk [vmem:[#allocation6 + $0x6a] sm:$0xff] %vm9119, %v9324
      %9359 = vst.msk [vmem:[#allocation6 + $0x72] sm:$0xff] %vm9119, %v9325
      %9360 = vst.msk [vmem:[#allocation6 + $0x7a] sm:$0xff] %vm9119, %v9326
      %9361 = vst.msk [vmem:[#allocation6 + $0x82] sm:$0xff] %vm9119, %v9327
      %9362 = vst.msk [vmem:[#allocation6 + $0x8a] sm:$0xff] %vm9119, %v9328
      %9363 = vst.msk [vmem:[#allocation6 + $0x92] sm:$0xff] %vm9119, %v9329
      %9364 = vst.msk [vmem:[#allocation6 + $0x9a] sm:$0xff] %vm9119, %v9330
      %9365 = vst.msk [vmem:[#allocation6 + $0xa2] sm:$0xff] %vm9119, %v9331
      %9366 = vst.msk [vmem:[#allocation6 + $0xaa] sm:$0xff] %vm9119, %v9332
      %9367 = vst.msk [vmem:[#allocation6 + $0xb2] sm:$0xff] %vm9119, %v9333
      %9368 = vst.msk [vmem:[#allocation6 + $0xba] sm:$0xff] %vm9119, %v9334
      %9369 = vst.msk [vmem:[#allocation6 + $0xc2] sm:$0xff] %vm9119, %v9335
      %9370 = vst.msk [vmem:[#allocation6 + $0xca] sm:$0xff] %vm9119, %v9336
      %9371 = vst.msk [vmem:[#allocation6 + $0xd2] sm:$0xff] %vm9119, %v9337
      %9372 = vst.msk [vmem:[#allocation6 + $0xda] sm:$0xff] %vm9119, %v9338
      %9373 = vst.msk [vmem:[#allocation6 + $0xe2] sm:$0xff] %vm9119, %v9339
      %9374 = vst.msk [vmem:[#allocation6 + $0xea] sm:$0xff] %vm9119, %v9340
      %9375 = vst.msk [vmem:[#allocation6 + $0xf2] sm:$0xff] %vm9119, %v9341
      %9376 = vst.msk [vmem:[#allocation6 + $0xfa] sm:$0xff] %vm9119, %v9342
      %v9377 = vld [vmem:[#allocation6] sm:$0xff]
      %v9378 = vld [vmem:[#allocation6 + $0x8] sm:$0xff]
      %v9379 = vld [vmem:[#allocation6 + $0x10] sm:$0xff]
      %v9380 = vld [vmem:[#allocation6 + $0x18] sm:$0xff]
      %v9381 = vld [vmem:[#allocation6 + $0x20] sm:$0xff]
      %v9382 = vld [vmem:[#allocation6 + $0x28] sm:$0xff]
      %v9383 = vld [vmem:[#allocation6 + $0x30] sm:$0xff]
      %v9384 = vld [vmem:[#allocation6 + $0x38] sm:$0xff]
      %v9385 = vld [vmem:[#allocation6 + $0x40] sm:$0xff]
      %v9386 = vld [vmem:[#allocation6 + $0x48] sm:$0xff]
      %v9387 = vld [vmem:[#allocation6 + $0x50] sm:$0xff]
      %v9388 = vld [vmem:[#allocation6 + $0x58] sm:$0xff]
      %v9389 = vld [vmem:[#allocation6 + $0x60] sm:$0xff]
      %v9390 = vld [vmem:[#allocation6 + $0x68] sm:$0xff]
      %v9391 = vld [vmem:[#allocation6 + $0x70] sm:$0xff]
      %v9392 = vld [vmem:[#allocation6 + $0x78] sm:$0xff]
      %v9393 = vld [vmem:[#allocation6 + $0x80] sm:$0xff]
      %v9394 = vld [vmem:[#allocation6 + $0x88] sm:$0xff]
      %v9395 = vld [vmem:[#allocation6 + $0x90] sm:$0xff]
      %v9396 = vld [vmem:[#allocation6 + $0x98] sm:$0xff]
      %v9397 = vld [vmem:[#allocation6 + $0xa0] sm:$0xff]
      %v9398 = vld [vmem:[#allocation6 + $0xa8] sm:$0xff]
      %v9399 = vld [vmem:[#allocation6 + $0xb0] sm:$0xff]
      %v9400 = vld [vmem:[#allocation6 + $0xb8] sm:$0xff]
      %v9401 = vld [vmem:[#allocation6 + $0xc0] sm:$0xff]
      %v9402 = vld [vmem:[#allocation6 + $0xc8] sm:$0xff]
      %v9403 = vld [vmem:[#allocation6 + $0xd0] sm:$0xff]
      %v9404 = vld [vmem:[#allocation6 + $0xd8] sm:$0xff]
      %v9405 = vld [vmem:[#allocation6 + $0xe0] sm:$0xff]
      %v9406 = vld [vmem:[#allocation6 + $0xe8] sm:$0xff]
      %v9407 = vld [vmem:[#allocation6 + $0xf0] sm:$0xff]
      %v9408 = vld [vmem:[#allocation6 + $0xf8] sm:$0xff]
      %v9409 = vld [vmem:[%s5] sm:$0xff]
      %v9410 = vld [vmem:[%s5 + $0x8] sm:$0xff]
      %v9411 = vld [vmem:[%s5 + $0x10] sm:$0xff]
      %v9412 = vld [vmem:[%s5 + $0x18] sm:$0xff]
      %v9413 = vld [vmem:[#allocation6 + $0x1] sm:$0xff]
      %v9414 = vld [vmem:[#allocation6 + $0x9] sm:$0xff]
      %v9415 = vld [vmem:[#allocation6 + $0x11] sm:$0xff]
      %v9416 = vld [vmem:[#allocation6 + $0x19] sm:$0xff]
      %v9417 = vld [vmem:[#allocation6 + $0x21] sm:$0xff]
      %v9418 = vld [vmem:[#allocation6 + $0x29] sm:$0xff]
      %v9419 = vld [vmem:[#allocation6 + $0x31] sm:$0xff]
      %v9420 = vld [vmem:[#allocation6 + $0x39] sm:$0xff]
      %v9421 = vld [vmem:[#allocation6 + $0x41] sm:$0xff]
      %v9422 = vld [vmem:[#allocation6 + $0x49] sm:$0xff]
      %v9423 = vld [vmem:[#allocation6 + $0x51] sm:$0xff]
      %v9424 = vld [vmem:[#allocation6 + $0x59] sm:$0xff]
      %v9425 = vld [vmem:[#allocation6 + $0x61] sm:$0xff]
      %v9426 = vld [vmem:[#allocation6 + $0x69] sm:$0xff]
      %v9427 = vld [vmem:[#allocation6 + $0x71] sm:$0xff]
      %v9428 = vld [vmem:[#allocation6 + $0x79] sm:$0xff]
      %v9429 = vld [vmem:[#allocation6 + $0x81] sm:$0xff]
      %v9430 = vld [vmem:[#allocation6 + $0x89] sm:$0xff]
      %v9431 = vld [vmem:[#allocation6 + $0x91] sm:$0xff]
      %v9432 = vld [vmem:[#allocation6 + $0x99] sm:$0xff]
      %v9433 = vld [vmem:[#allocation6 + $0xa1] sm:$0xff]
      %v9434 = vld [vmem:[#allocation6 + $0xa9] sm:$0xff]
      %v9435 = vld [vmem:[#allocation6 + $0xb1] sm:$0xff]
      %v9436 = vld [vmem:[#allocation6 + $0xb9] sm:$0xff]
      %v9437 = vld [vmem:[#allocation6 + $0xc1] sm:$0xff]
      %v9438 = vld [vmem:[#allocation6 + $0xc9] sm:$0xff]
      %v9439 = vld [vmem:[#allocation6 + $0xd1] sm:$0xff]
      %v9440 = vld [vmem:[#allocation6 + $0xd9] sm:$0xff]
      %v9441 = vld [vmem:[#allocation6 + $0xe1] sm:$0xff]
      %v9442 = vld [vmem:[#allocation6 + $0xe9] sm:$0xff]
      %v9443 = vld [vmem:[#allocation6 + $0xf1] sm:$0xff]
      %v9444 = vld [vmem:[#allocation6 + $0xf9] sm:$0xff]
      %s9445 = scalar_lea.vmem %s5, 32
      %v9446 = vld [vmem:[%s9445] sm:$0xff]
      %v9447 = vld [vmem:[%s9445 + $0x8] sm:$0xff]
      %v9448 = vld [vmem:[%s9445 + $0x10] sm:$0xff]
      %v9449 = vld [vmem:[%s9445 + $0x18] sm:$0xff]
      %v9451 = vsel %vm9119, %v9413, 0
      %v9454 = vsel %vm9119, %v9414, 0
      %v9457 = vsel %vm9119, %v9415, 0
      %v9460 = vsel %vm9119, %v9416, 0
      %v9463 = vsel %vm9119, %v9417, 0
      %v9466 = vsel %vm9119, %v9418, 0
      %v9469 = vsel %vm9119, %v9419, 0
      %v9472 = vsel %vm9119, %v9420, 0
      %v9475 = vsel %vm9119, %v9421, 0
      %v9478 = vsel %vm9119, %v9422, 0
      %v9481 = vsel %vm9119, %v9423, 0
      %v9484 = vsel %vm9119, %v9424, 0
      %v9487 = vsel %vm9119, %v9425, 0
      %v9490 = vsel %vm9119, %v9426, 0
      %v9493 = vsel %vm9119, %v9427, 0
      %v9496 = vsel %vm9119, %v9428, 0
      %v9499 = vsel %vm9119, %v9429, 0
      %v9502 = vsel %vm9119, %v9430, 0
      %v9505 = vsel %vm9119, %v9431, 0
      %v9508 = vsel %vm9119, %v9432, 0
      %v9511 = vsel %vm9119, %v9433, 0
      %v9514 = vsel %vm9119, %v9434, 0
      %v9517 = vsel %vm9119, %v9435, 0
      %v9520 = vsel %vm9119, %v9436, 0
      %v9523 = vsel %vm9119, %v9437, 0
      %v9526 = vsel %vm9119, %v9438, 0
      %v9529 = vsel %vm9119, %v9439, 0
      %v9532 = vsel %vm9119, %v9440, 0
      %v9535 = vsel %vm9119, %v9441, 0
      %v9538 = vsel %vm9119, %v9442, 0
      %v9541 = vsel %vm9119, %v9443, 0
      %v9544 = vsel %vm9119, %v9444, 0
      %9546 = vmatpush.msra.mxu0 0.0
      %9547 = vmatpush.msra.mxu0 0.0
      %9548 = vmatpush.msra.mxu0 0.0
      %9549 = vmatpush.msra.mxu0 0.0
      %9550 = vmatpush.msra.mxu0 0.0
      %9551 = vmatpush.msra.mxu0 0.0
      %9552 = vmatpush.msra.mxu0 0.0
      %9553 = vmatpush.msra.mxu0 0.0
      %9554 = vmatpush.msra.mxu0 0.0
      %9555 = vmatpush.msra.mxu0 0.0
      %9556 = vmatpush.msra.mxu0 0.0
      %9557 = vmatpush.msra.mxu0 0.0
      %9558 = vmatpush.msra.mxu0 %v9449
      %9559 = vmatpush.msra.mxu0 %v9448
      %9560 = vmatpush.msra.mxu0 %v9447
      %9561 = vmatpush.msra.mxu0 %v9446
      %9562 = vmatmul.f32.gmra.mxu0 %v9451
      %v9563 = vpop.f32.mrf.mxu0
      %v9564 = vadd.f32 0.0, %v9563
      %9565 = vmatmul.f32.gmra.mxu0 %v9454
      %v9566 = vpop.f32.mrf.mxu0
      %v9567 = vadd.f32 0.0, %v9566
      %9568 = vmatmul.f32.gmra.mxu0 %v9457
      %v9569 = vpop.f32.mrf.mxu0
      %v9570 = vadd.f32 0.0, %v9569
      %9571 = vmatmul.f32.gmra.mxu0 %v9460
      %v9572 = vpop.f32.mrf.mxu0
      %v9573 = vadd.f32 0.0, %v9572
      %9574 = vmatmul.f32.gmra.mxu0 %v9463
      %v9575 = vpop.f32.mrf.mxu0
      %v9576 = vadd.f32 0.0, %v9575
      %9577 = vmatmul.f32.gmra.mxu0 %v9466
      %v9578 = vpop.f32.mrf.mxu0
      %v9579 = vadd.f32 0.0, %v9578
      %9580 = vmatmul.f32.gmra.mxu0 %v9469
      %v9581 = vpop.f32.mrf.mxu0
      %v9582 = vadd.f32 0.0, %v9581
      %9583 = vmatmul.f32.gmra.mxu0 %v9472
      %v9584 = vpop.f32.mrf.mxu0
      %v9585 = vadd.f32 0.0, %v9584
      %9586 = vmatmul.f32.gmra.mxu0 %v9475
      %v9587 = vpop.f32.mrf.mxu0
      %v9588 = vadd.f32 0.0, %v9587
      %9589 = vmatmul.f32.gmra.mxu0 %v9478
      %v9590 = vpop.f32.mrf.mxu0
      %v9591 = vadd.f32 0.0, %v9590
      %9592 = vmatmul.f32.gmra.mxu0 %v9481
      %v9593 = vpop.f32.mrf.mxu0
      %v9594 = vadd.f32 0.0, %v9593
      %9595 = vmatmul.f32.gmra.mxu0 %v9484
      %v9596 = vpop.f32.mrf.mxu0
      %v9597 = vadd.f32 0.0, %v9596
      %9598 = vmatmul.f32.gmra.mxu0 %v9487
      %v9599 = vpop.f32.mrf.mxu0
      %v9600 = vadd.f32 0.0, %v9599
      %9601 = vmatmul.f32.gmra.mxu0 %v9490
      %v9602 = vpop.f32.mrf.mxu0
      %v9603 = vadd.f32 0.0, %v9602
      %9604 = vmatmul.f32.gmra.mxu0 %v9493
      %v9605 = vpop.f32.mrf.mxu0
      %v9606 = vadd.f32 0.0, %v9605
      %9607 = vmatmul.f32.gmra.mxu0 %v9496
      %v9608 = vpop.f32.mrf.mxu0
      %v9609 = vadd.f32 0.0, %v9608
      %9610 = vmatmul.f32.gmra.mxu0 %v9499
      %v9611 = vpop.f32.mrf.mxu0
      %v9612 = vadd.f32 0.0, %v9611
      %9613 = vmatmul.f32.gmra.mxu0 %v9502
      %v9614 = vpop.f32.mrf.mxu0
      %v9615 = vadd.f32 0.0, %v9614
      %9616 = vmatmul.f32.gmra.mxu0 %v9505
      %v9617 = vpop.f32.mrf.mxu0
      %v9618 = vadd.f32 0.0, %v9617
      %9619 = vmatmul.f32.gmra.mxu0 %v9508
      %v9620 = vpop.f32.mrf.mxu0
      %v9621 = vadd.f32 0.0, %v9620
      %9622 = vmatmul.f32.gmra.mxu0 %v9511
      %v9623 = vpop.f32.mrf.mxu0
      %v9624 = vadd.f32 0.0, %v9623
      %9625 = vmatmul.f32.gmra.mxu0 %v9514
      %v9626 = vpop.f32.mrf.mxu0
      %v9627 = vadd.f32 0.0, %v9626
      %9628 = vmatmul.f32.gmra.mxu0 %v9517
      %v9629 = vpop.f32.mrf.mxu0
      %v9630 = vadd.f32 0.0, %v9629
      %9631 = vmatmul.f32.gmra.mxu0 %v9520
      %v9632 = vpop.f32.mrf.mxu0
      %v9633 = vadd.f32 0.0, %v9632
      %9634 = vmatmul.f32.gmra.mxu0 %v9523
      %v9635 = vpop.f32.mrf.mxu0
      %v9636 = vadd.f32 0.0, %v9635
      %9637 = vmatmul.f32.gmra.mxu0 %v9526
      %v9638 = vpop.f32.mrf.mxu0
      %v9639 = vadd.f32 0.0, %v9638
      %9640 = vmatmul.f32.gmra.mxu0 %v9529
      %v9641 = vpop.f32.mrf.mxu0
      %v9642 = vadd.f32 0.0, %v9641
      %9643 = vmatmul.f32.gmra.mxu0 %v9532
      %v9644 = vpop.f32.mrf.mxu0
      %v9645 = vadd.f32 0.0, %v9644
      %9646 = vmatmul.f32.gmra.mxu0 %v9535
      %v9647 = vpop.f32.mrf.mxu0
      %v9648 = vadd.f32 0.0, %v9647
      %9649 = vmatmul.f32.gmra.mxu0 %v9538
      %v9650 = vpop.f32.mrf.mxu0
      %v9651 = vadd.f32 0.0, %v9650
      %9652 = vmatmul.f32.gmra.mxu0 %v9541
      %v9653 = vpop.f32.mrf.mxu0
      %v9654 = vadd.f32 0.0, %v9653
      %9655 = vmatmul.f32.gmra.mxu0 %v9544
      %v9656 = vpop.f32.mrf.mxu0
      %v9657 = vadd.f32 0.0, %v9656
      %9658 = vdwg.mxu0
      %v9660 = vsel %vm9119, %v9377, 0
      %v9663 = vsel %vm9119, %v9378, 0
      %v9666 = vsel %vm9119, %v9379, 0
      %v9669 = vsel %vm9119, %v9380, 0
      %v9672 = vsel %vm9119, %v9381, 0
      %v9675 = vsel %vm9119, %v9382, 0
      %v9678 = vsel %vm9119, %v9383, 0
      %v9681 = vsel %vm9119, %v9384, 0
      %v9684 = vsel %vm9119, %v9385, 0
      %v9687 = vsel %vm9119, %v9386, 0
      %v9690 = vsel %vm9119, %v9387, 0
      %v9693 = vsel %vm9119, %v9388, 0
      %v9696 = vsel %vm9119, %v9389, 0
      %v9699 = vsel %vm9119, %v9390, 0
      %v9702 = vsel %vm9119, %v9391, 0
      %v9705 = vsel %vm9119, %v9392, 0
      %v9708 = vsel %vm9119, %v9393, 0
      %v9711 = vsel %vm9119, %v9394, 0
      %v9714 = vsel %vm9119, %v9395, 0
      %v9717 = vsel %vm9119, %v9396, 0
      %v9720 = vsel %vm9119, %v9397, 0
      %v9723 = vsel %vm9119, %v9398, 0
      %v9726 = vsel %vm9119, %v9399, 0
      %v9729 = vsel %vm9119, %v9400, 0
      %v9732 = vsel %vm9119, %v9401, 0
      %v9735 = vsel %vm9119, %v9402, 0
      %v9738 = vsel %vm9119, %v9403, 0
      %v9741 = vsel %vm9119, %v9404, 0
      %v9744 = vsel %vm9119, %v9405, 0
      %v9747 = vsel %vm9119, %v9406, 0
      %v9750 = vsel %vm9119, %v9407, 0
      %v9753 = vsel %vm9119, %v9408, 0
      %9755 = vmatpush.msra.mxu0 0.0
      %9756 = vmatpush.msra.mxu0 0.0
      %9757 = vmatpush.msra.mxu0 0.0
      %9758 = vmatpush.msra.mxu0 0.0
      %9759 = vmatpush.msra.mxu0 0.0
      %9760 = vmatpush.msra.mxu0 0.0
      %9761 = vmatpush.msra.mxu0 0.0
      %9762 = vmatpush.msra.mxu0 0.0
      %9763 = vmatpush.msra.mxu0 0.0
      %9764 = vmatpush.msra.mxu0 0.0
      %9765 = vmatpush.msra.mxu0 0.0
      %9766 = vmatpush.msra.mxu0 0.0
      %9767 = vmatpush.msra.mxu0 %v9412
      %9768 = vmatpush.msra.mxu0 %v9411
      %9769 = vmatpush.msra.mxu0 %v9410
      %9770 = vmatpush.msra.mxu0 %v9409
      %9771 = vmatmul.f32.gmra.mxu0 %v9660
      %v9772 = vpop.f32.mrf.mxu0
      %v9773 = vadd.f32 %v9564, %v9772
      %9774 = vmatmul.f32.gmra.mxu0 %v9663
      %v9775 = vpop.f32.mrf.mxu0
      %v9776 = vadd.f32 %v9567, %v9775
      %9777 = vmatmul.f32.gmra.mxu0 %v9666
      %v9778 = vpop.f32.mrf.mxu0
      %v9779 = vadd.f32 %v9570, %v9778
      %9780 = vmatmul.f32.gmra.mxu0 %v9669
      %v9781 = vpop.f32.mrf.mxu0
      %v9782 = vadd.f32 %v9573, %v9781
      %9783 = vmatmul.f32.gmra.mxu0 %v9672
      %v9784 = vpop.f32.mrf.mxu0
      %v9785 = vadd.f32 %v9576, %v9784
      %9786 = vmatmul.f32.gmra.mxu0 %v9675
      %v9787 = vpop.f32.mrf.mxu0
      %v9788 = vadd.f32 %v9579, %v9787
      %9789 = vmatmul.f32.gmra.mxu0 %v9678
      %v9790 = vpop.f32.mrf.mxu0
      %v9791 = vadd.f32 %v9582, %v9790
      %9792 = vmatmul.f32.gmra.mxu0 %v9681
      %v9793 = vpop.f32.mrf.mxu0
      %v9794 = vadd.f32 %v9585, %v9793
      %9795 = vmatmul.f32.gmra.mxu0 %v9684
      %v9796 = vpop.f32.mrf.mxu0
      %v9797 = vadd.f32 %v9588, %v9796
      %9798 = vmatmul.f32.gmra.mxu0 %v9687
      %v9799 = vpop.f32.mrf.mxu0
      %v9800 = vadd.f32 %v9591, %v9799
      %9801 = vmatmul.f32.gmra.mxu0 %v9690
      %v9802 = vpop.f32.mrf.mxu0
      %v9803 = vadd.f32 %v9594, %v9802
      %9804 = vmatmul.f32.gmra.mxu0 %v9693
      %v9805 = vpop.f32.mrf.mxu0
      %v9806 = vadd.f32 %v9597, %v9805
      %9807 = vmatmul.f32.gmra.mxu0 %v9696
      %v9808 = vpop.f32.mrf.mxu0
      %v9809 = vadd.f32 %v9600, %v9808
      %9810 = vmatmul.f32.gmra.mxu0 %v9699
      %v9811 = vpop.f32.mrf.mxu0
      %v9812 = vadd.f32 %v9603, %v9811
      %9813 = vmatmul.f32.gmra.mxu0 %v9702
      %v9814 = vpop.f32.mrf.mxu0
      %v9815 = vadd.f32 %v9606, %v9814
      %9816 = vmatmul.f32.gmra.mxu0 %v9705
      %v9817 = vpop.f32.mrf.mxu0
      %v9818 = vadd.f32 %v9609, %v9817
      %9819 = vmatmul.f32.gmra.mxu0 %v9708
      %v9820 = vpop.f32.mrf.mxu0
      %v9821 = vadd.f32 %v9612, %v9820
      %9822 = vmatmul.f32.gmra.mxu0 %v9711
      %v9823 = vpop.f32.mrf.mxu0
      %v9824 = vadd.f32 %v9615, %v9823
      %9825 = vmatmul.f32.gmra.mxu0 %v9714
      %v9826 = vpop.f32.mrf.mxu0
      %v9827 = vadd.f32 %v9618, %v9826
      %9828 = vmatmul.f32.gmra.mxu0 %v9717
      %v9829 = vpop.f32.mrf.mxu0
      %v9830 = vadd.f32 %v9621, %v9829
      %9831 = vmatmul.f32.gmra.mxu0 %v9720
      %v9832 = vpop.f32.mrf.mxu0
      %v9833 = vadd.f32 %v9624, %v9832
      %9834 = vmatmul.f32.gmra.mxu0 %v9723
      %v9835 = vpop.f32.mrf.mxu0
      %v9836 = vadd.f32 %v9627, %v9835
      %9837 = vmatmul.f32.gmra.mxu0 %v9726
      %v9838 = vpop.f32.mrf.mxu0
      %v9839 = vadd.f32 %v9630, %v9838
      %9840 = vmatmul.f32.gmra.mxu0 %v9729
      %v9841 = vpop.f32.mrf.mxu0
      %v9842 = vadd.f32 %v9633, %v9841
      %9843 = vmatmul.f32.gmra.mxu0 %v9732
      %v9844 = vpop.f32.mrf.mxu0
      %v9845 = vadd.f32 %v9636, %v9844
      %9846 = vmatmul.f32.gmra.mxu0 %v9735
      %v9847 = vpop.f32.mrf.mxu0
      %v9848 = vadd.f32 %v9639, %v9847
      %9849 = vmatmul.f32.gmra.mxu0 %v9738
      %v9850 = vpop.f32.mrf.mxu0
      %v9851 = vadd.f32 %v9642, %v9850
      %9852 = vmatmul.f32.gmra.mxu0 %v9741
      %v9853 = vpop.f32.mrf.mxu0
      %v9854 = vadd.f32 %v9645, %v9853
      %9855 = vmatmul.f32.gmra.mxu0 %v9744
      %v9856 = vpop.f32.mrf.mxu0
      %v9857 = vadd.f32 %v9648, %v9856
      %9858 = vmatmul.f32.gmra.mxu0 %v9747
      %v9859 = vpop.f32.mrf.mxu0
      %v9860 = vadd.f32 %v9651, %v9859
      %9861 = vmatmul.f32.gmra.mxu0 %v9750
      %v9862 = vpop.f32.mrf.mxu0
      %v9863 = vadd.f32 %v9654, %v9862
      %9864 = vmatmul.f32.gmra.mxu0 %v9753
      %v9865 = vpop.f32.mrf.mxu0
      %v9866 = vadd.f32 %v9657, %v9865
      %9867 = vdwg.mxu0
      %v9868 = vld [vmem:[#allocation6 + $0x2] sm:$0xff]
      %v9869 = vld [vmem:[#allocation6 + $0xa] sm:$0xff]
      %v9870 = vld [vmem:[#allocation6 + $0x12] sm:$0xff]
      %v9871 = vld [vmem:[#allocation6 + $0x1a] sm:$0xff]
      %v9872 = vld [vmem:[#allocation6 + $0x22] sm:$0xff]
      %v9873 = vld [vmem:[#allocation6 + $0x2a] sm:$0xff]
      %v9874 = vld [vmem:[#allocation6 + $0x32] sm:$0xff]
      %v9875 = vld [vmem:[#allocation6 + $0x3a] sm:$0xff]
      %v9876 = vld [vmem:[#allocation6 + $0x42] sm:$0xff]
      %v9877 = vld [vmem:[#allocation6 + $0x4a] sm:$0xff]
      %v9878 = vld [vmem:[#allocation6 + $0x52] sm:$0xff]
      %v9879 = vld [vmem:[#allocation6 + $0x5a] sm:$0xff]
      %v9880 = vld [vmem:[#allocation6 + $0x62] sm:$0xff]
      %v9881 = vld [vmem:[#allocation6 + $0x6a] sm:$0xff]
      %v9882 = vld [vmem:[#allocation6 + $0x72] sm:$0xff]
      %v9883 = vld [vmem:[#allocation6 + $0x7a] sm:$0xff]
      %v9884 = vld [vmem:[#allocation6 + $0x82] sm:$0xff]
      %v9885 = vld [vmem:[#allocation6 + $0x8a] sm:$0xff]
      %v9886 = vld [vmem:[#allocation6 + $0x92] sm:$0xff]
      %v9887 = vld [vmem:[#allocation6 + $0x9a] sm:$0xff]
      %v9888 = vld [vmem:[#allocation6 + $0xa2] sm:$0xff]
      %v9889 = vld [vmem:[#allocation6 + $0xaa] sm:$0xff]
      %v9890 = vld [vmem:[#allocation6 + $0xb2] sm:$0xff]
      %v9891 = vld [vmem:[#allocation6 + $0xba] sm:$0xff]
      %v9892 = vld [vmem:[#allocation6 + $0xc2] sm:$0xff]
      %v9893 = vld [vmem:[#allocation6 + $0xca] sm:$0xff]
      %v9894 = vld [vmem:[#allocation6 + $0xd2] sm:$0xff]
      %v9895 = vld [vmem:[#allocation6 + $0xda] sm:$0xff]
      %v9896 = vld [vmem:[#allocation6 + $0xe2] sm:$0xff]
      %v9897 = vld [vmem:[#allocation6 + $0xea] sm:$0xff]
      %v9898 = vld [vmem:[#allocation6 + $0xf2] sm:$0xff]
      %v9899 = vld [vmem:[#allocation6 + $0xfa] sm:$0xff]
      %s9900 = scalar_lea.vmem %s5, 64
      %v9901 = vld [vmem:[%s9900] sm:$0xff]
      %v9902 = vld [vmem:[%s9900 + $0x8] sm:$0xff]
      %v9903 = vld [vmem:[%s9900 + $0x10] sm:$0xff]
      %v9904 = vld [vmem:[%s9900 + $0x18] sm:$0xff]
      %v9906 = vsel %vm9119, %v9868, 0
      %v9909 = vsel %vm9119, %v9869, 0
      %v9912 = vsel %vm9119, %v9870, 0
      %v9915 = vsel %vm9119, %v9871, 0
      %v9918 = vsel %vm9119, %v9872, 0
      %v9921 = vsel %vm9119, %v9873, 0
      %v9924 = vsel %vm9119, %v9874, 0
      %v9927 = vsel %vm9119, %v9875, 0
      %v9930 = vsel %vm9119, %v9876, 0
      %v9933 = vsel %vm9119, %v9877, 0
      %v9936 = vsel %vm9119, %v9878, 0
      %v9939 = vsel %vm9119, %v9879, 0
      %v9942 = vsel %vm9119, %v9880, 0
      %v9945 = vsel %vm9119, %v9881, 0
      %v9948 = vsel %vm9119, %v9882, 0
      %v9951 = vsel %vm9119, %v9883, 0
      %v9954 = vsel %vm9119, %v9884, 0
      %v9957 = vsel %vm9119, %v9885, 0
      %v9960 = vsel %vm9119, %v9886, 0
      %v9963 = vsel %vm9119, %v9887, 0
      %v9966 = vsel %vm9119, %v9888, 0
      %v9969 = vsel %vm9119, %v9889, 0
      %v9972 = vsel %vm9119, %v9890, 0
      %v9975 = vsel %vm9119, %v9891, 0
      %v9978 = vsel %vm9119, %v9892, 0
      %v9981 = vsel %vm9119, %v9893, 0
      %v9984 = vsel %vm9119, %v9894, 0
      %v9987 = vsel %vm9119, %v9895, 0
      %v9990 = vsel %vm9119, %v9896, 0
      %v9993 = vsel %vm9119, %v9897, 0
      %v9996 = vsel %vm9119, %v9898, 0
      %v9999 = vsel %vm9119, %v9899, 0
      %10001 = vmatpush.msra.mxu0 0.0
      %10002 = vmatpush.msra.mxu0 0.0
      %10003 = vmatpush.msra.mxu0 0.0
      %10004 = vmatpush.msra.mxu0 0.0
      %10005 = vmatpush.msra.mxu0 0.0
      %10006 = vmatpush.msra.mxu0 0.0
      %10007 = vmatpush.msra.mxu0 0.0
      %10008 = vmatpush.msra.mxu0 0.0
      %10009 = vmatpush.msra.mxu0 0.0
      %10010 = vmatpush.msra.mxu0 0.0
      %10011 = vmatpush.msra.mxu0 0.0
      %10012 = vmatpush.msra.mxu0 0.0
      %10013 = vmatpush.msra.mxu0 %v9904
      %10014 = vmatpush.msra.mxu0 %v9903
      %10015 = vmatpush.msra.mxu0 %v9902
      %10016 = vmatpush.msra.mxu0 %v9901
      %10017 = vmatmul.f32.gmra.mxu0 %v9906
      %v10018 = vpop.f32.mrf.mxu0
      %v10019 = vadd.f32 0.0, %v10018
      %10020 = vmatmul.f32.gmra.mxu0 %v9909
      %v10021 = vpop.f32.mrf.mxu0
      %v10022 = vadd.f32 0.0, %v10021
      %10023 = vmatmul.f32.gmra.mxu0 %v9912
      %v10024 = vpop.f32.mrf.mxu0
      %v10025 = vadd.f32 0.0, %v10024
      %10026 = vmatmul.f32.gmra.mxu0 %v9915
      %v10027 = vpop.f32.mrf.mxu0
      %v10028 = vadd.f32 0.0, %v10027
      %10029 = vmatmul.f32.gmra.mxu0 %v9918
      %v10030 = vpop.f32.mrf.mxu0
      %v10031 = vadd.f32 0.0, %v10030
      %10032 = vmatmul.f32.gmra.mxu0 %v9921
      %v10033 = vpop.f32.mrf.mxu0
      %v10034 = vadd.f32 0.0, %v10033
      %10035 = vmatmul.f32.gmra.mxu0 %v9924
      %v10036 = vpop.f32.mrf.mxu0
      %v10037 = vadd.f32 0.0, %v10036
      %10038 = vmatmul.f32.gmra.mxu0 %v9927
      %v10039 = vpop.f32.mrf.mxu0
      %v10040 = vadd.f32 0.0, %v10039
      %10041 = vmatmul.f32.gmra.mxu0 %v9930
      %v10042 = vpop.f32.mrf.mxu0
      %v10043 = vadd.f32 0.0, %v10042
      %10044 = vmatmul.f32.gmra.mxu0 %v9933
      %v10045 = vpop.f32.mrf.mxu0
      %v10046 = vadd.f32 0.0, %v10045
      %10047 = vmatmul.f32.gmra.mxu0 %v9936
      %v10048 = vpop.f32.mrf.mxu0
      %v10049 = vadd.f32 0.0, %v10048
      %10050 = vmatmul.f32.gmra.mxu0 %v9939
      %v10051 = vpop.f32.mrf.mxu0
      %v10052 = vadd.f32 0.0, %v10051
      %10053 = vmatmul.f32.gmra.mxu0 %v9942
      %v10054 = vpop.f32.mrf.mxu0
      %v10055 = vadd.f32 0.0, %v10054
      %10056 = vmatmul.f32.gmra.mxu0 %v9945
      %v10057 = vpop.f32.mrf.mxu0
      %v10058 = vadd.f32 0.0, %v10057
      %10059 = vmatmul.f32.gmra.mxu0 %v9948
      %v10060 = vpop.f32.mrf.mxu0
      %v10061 = vadd.f32 0.0, %v10060
      %10062 = vmatmul.f32.gmra.mxu0 %v9951
      %v10063 = vpop.f32.mrf.mxu0
      %v10064 = vadd.f32 0.0, %v10063
      %10065 = vmatmul.f32.gmra.mxu0 %v9954
      %v10066 = vpop.f32.mrf.mxu0
      %v10067 = vadd.f32 0.0, %v10066
      %10068 = vmatmul.f32.gmra.mxu0 %v9957
      %v10069 = vpop.f32.mrf.mxu0
      %v10070 = vadd.f32 0.0, %v10069
      %10071 = vmatmul.f32.gmra.mxu0 %v9960
      %v10072 = vpop.f32.mrf.mxu0
      %v10073 = vadd.f32 0.0, %v10072
      %10074 = vmatmul.f32.gmra.mxu0 %v9963
      %v10075 = vpop.f32.mrf.mxu0
      %v10076 = vadd.f32 0.0, %v10075
      %10077 = vmatmul.f32.gmra.mxu0 %v9966
      %v10078 = vpop.f32.mrf.mxu0
      %v10079 = vadd.f32 0.0, %v10078
      %10080 = vmatmul.f32.gmra.mxu0 %v9969
      %v10081 = vpop.f32.mrf.mxu0
      %v10082 = vadd.f32 0.0, %v10081
      %10083 = vmatmul.f32.gmra.mxu0 %v9972
      %v10084 = vpop.f32.mrf.mxu0
      %v10085 = vadd.f32 0.0, %v10084
      %10086 = vmatmul.f32.gmra.mxu0 %v9975
      %v10087 = vpop.f32.mrf.mxu0
      %v10088 = vadd.f32 0.0, %v10087
      %10089 = vmatmul.f32.gmra.mxu0 %v9978
      %v10090 = vpop.f32.mrf.mxu0
      %v10091 = vadd.f32 0.0, %v10090
      %10092 = vmatmul.f32.gmra.mxu0 %v9981
      %v10093 = vpop.f32.mrf.mxu0
      %v10094 = vadd.f32 0.0, %v10093
      %10095 = vmatmul.f32.gmra.mxu0 %v9984
      %v10096 = vpop.f32.mrf.mxu0
      %v10097 = vadd.f32 0.0, %v10096
      %10098 = vmatmul.f32.gmra.mxu0 %v9987
      %v10099 = vpop.f32.mrf.mxu0
      %v10100 = vadd.f32 0.0, %v10099
      %10101 = vmatmul.f32.gmra.mxu0 %v9990
      %v10102 = vpop.f32.mrf.mxu0
      %v10103 = vadd.f32 0.0, %v10102
      %10104 = vmatmul.f32.gmra.mxu0 %v9993
      %v10105 = vpop.f32.mrf.mxu0
      %v10106 = vadd.f32 0.0, %v10105
      %10107 = vmatmul.f32.gmra.mxu0 %v9996
      %v10108 = vpop.f32.mrf.mxu0
      %v10109 = vadd.f32 0.0, %v10108
      %10110 = vmatmul.f32.gmra.mxu0 %v9999
      %v10111 = vpop.f32.mrf.mxu0
      %v10112 = vadd.f32 0.0, %v10111
      %10113 = vdwg.mxu0
      %v10114 = vadd.f32 %v9773, %v10019
      %v10115 = vadd.f32 %v9776, %v10022
      %v10116 = vadd.f32 %v9779, %v10025
      %v10117 = vadd.f32 %v9782, %v10028
      %v10118 = vadd.f32 %v9785, %v10031
      %v10119 = vadd.f32 %v9788, %v10034
      %v10120 = vadd.f32 %v9791, %v10037
      %v10121 = vadd.f32 %v9794, %v10040
      %v10122 = vadd.f32 %v9797, %v10043
      %v10123 = vadd.f32 %v9800, %v10046
      %v10124 = vadd.f32 %v9803, %v10049
      %v10125 = vadd.f32 %v9806, %v10052
      %v10126 = vadd.f32 %v9809, %v10055
      %v10127 = vadd.f32 %v9812, %v10058
      %v10128 = vadd.f32 %v9815, %v10061
      %v10129 = vadd.f32 %v9818, %v10064
      %v10130 = vadd.f32 %v9821, %v10067
      %v10131 = vadd.f32 %v9824, %v10070
      %v10132 = vadd.f32 %v9827, %v10073
      %v10133 = vadd.f32 %v9830, %v10076
      %v10134 = vadd.f32 %v9833, %v10079
      %v10135 = vadd.f32 %v9836, %v10082
      %v10136 = vadd.f32 %v9839, %v10085
      %v10137 = vadd.f32 %v9842, %v10088
      %v10138 = vadd.f32 %v9845, %v10091
      %v10139 = vadd.f32 %v9848, %v10094
      %v10140 = vadd.f32 %v9851, %v10097
      %v10141 = vadd.f32 %v9854, %v10100
      %v10142 = vadd.f32 %v9857, %v10103
      %v10143 = vadd.f32 %v9860, %v10106
      %v10144 = vadd.f32 %v9863, %v10109
      %v10145 = vadd.f32 %v9866, %v10112
      %v10146 = vld [vmem:[#allocation6 + $0x3] sm:$0xff]
      %v10147 = vld [vmem:[#allocation6 + $0xb] sm:$0xff]
      %v10148 = vld [vmem:[#allocation6 + $0x13] sm:$0xff]
      %v10149 = vld [vmem:[#allocation6 + $0x1b] sm:$0xff]
      %v10150 = vld [vmem:[#allocation6 + $0x23] sm:$0xff]
      %v10151 = vld [vmem:[#allocation6 + $0x2b] sm:$0xff]
      %v10152 = vld [vmem:[#allocation6 + $0x33] sm:$0xff]
      %v10153 = vld [vmem:[#allocation6 + $0x3b] sm:$0xff]
      %v10154 = vld [vmem:[#allocation6 + $0x43] sm:$0xff]
      %v10155 = vld [vmem:[#allocation6 + $0x4b] sm:$0xff]
      %v10156 = vld [vmem:[#allocation6 + $0x53] sm:$0xff]
      %v10157 = vld [vmem:[#allocation6 + $0x5b] sm:$0xff]
      %v10158 = vld [vmem:[#allocation6 + $0x63] sm:$0xff]
      %v10159 = vld [vmem:[#allocation6 + $0x6b] sm:$0xff]
      %v10160 = vld [vmem:[#allocation6 + $0x73] sm:$0xff]
      %v10161 = vld [vmem:[#allocation6 + $0x7b] sm:$0xff]
      %v10162 = vld [vmem:[#allocation6 + $0x83] sm:$0xff]
      %v10163 = vld [vmem:[#allocation6 + $0x8b] sm:$0xff]
      %v10164 = vld [vmem:[#allocation6 + $0x93] sm:$0xff]
      %v10165 = vld [vmem:[#allocation6 + $0x9b] sm:$0xff]
      %v10166 = vld [vmem:[#allocation6 + $0xa3] sm:$0xff]
      %v10167 = vld [vmem:[#allocation6 + $0xab] sm:$0xff]
      %v10168 = vld [vmem:[#allocation6 + $0xb3] sm:$0xff]
      %v10169 = vld [vmem:[#allocation6 + $0xbb] sm:$0xff]
      %v10170 = vld [vmem:[#allocation6 + $0xc3] sm:$0xff]
      %v10171 = vld [vmem:[#allocation6 + $0xcb] sm:$0xff]
      %v10172 = vld [vmem:[#allocation6 + $0xd3] sm:$0xff]
      %v10173 = vld [vmem:[#allocation6 + $0xdb] sm:$0xff]
      %v10174 = vld [vmem:[#allocation6 + $0xe3] sm:$0xff]
      %v10175 = vld [vmem:[#allocation6 + $0xeb] sm:$0xff]
      %v10176 = vld [vmem:[#allocation6 + $0xf3] sm:$0xff]
      %v10177 = vld [vmem:[#allocation6 + $0xfb] sm:$0xff]
      %s10178 = scalar_lea.vmem %s5, 96
      %v10179 = vld [vmem:[%s10178] sm:$0xff]
      %v10180 = vld [vmem:[%s10178 + $0x8] sm:$0xff]
      %v10181 = vld [vmem:[%s10178 + $0x10] sm:$0xff]
      %v10182 = vld [vmem:[%s10178 + $0x18] sm:$0xff]
      %v10184 = vsel %vm9119, %v10146, 0
      %v10187 = vsel %vm9119, %v10147, 0
      %v10190 = vsel %vm9119, %v10148, 0
      %v10193 = vsel %vm9119, %v10149, 0
      %v10196 = vsel %vm9119, %v10150, 0
      %v10199 = vsel %vm9119, %v10151, 0
      %v10202 = vsel %vm9119, %v10152, 0
      %v10205 = vsel %vm9119, %v10153, 0
      %v10208 = vsel %vm9119, %v10154, 0
      %v10211 = vsel %vm9119, %v10155, 0
      %v10214 = vsel %vm9119, %v10156, 0
      %v10217 = vsel %vm9119, %v10157, 0
      %v10220 = vsel %vm9119, %v10158, 0
      %v10223 = vsel %vm9119, %v10159, 0
      %v10226 = vsel %vm9119, %v10160, 0
      %v10229 = vsel %vm9119, %v10161, 0
      %v10232 = vsel %vm9119, %v10162, 0
      %v10235 = vsel %vm9119, %v10163, 0
      %v10238 = vsel %vm9119, %v10164, 0
      %v10241 = vsel %vm9119, %v10165, 0
      %v10244 = vsel %vm9119, %v10166, 0
      %v10247 = vsel %vm9119, %v10167, 0
      %v10250 = vsel %vm9119, %v10168, 0
      %v10253 = vsel %vm9119, %v10169, 0
      %v10256 = vsel %vm9119, %v10170, 0
      %v10259 = vsel %vm9119, %v10171, 0
      %v10262 = vsel %vm9119, %v10172, 0
      %v10265 = vsel %vm9119, %v10173, 0
      %v10268 = vsel %vm9119, %v10174, 0
      %v10271 = vsel %vm9119, %v10175, 0
      %v10274 = vsel %vm9119, %v10176, 0
      %v10277 = vsel %vm9119, %v10177, 0
      %10279 = vmatpush.msra.mxu0 0.0
      %10280 = vmatpush.msra.mxu0 0.0
      %10281 = vmatpush.msra.mxu0 0.0
      %10282 = vmatpush.msra.mxu0 0.0
      %10283 = vmatpush.msra.mxu0 0.0
      %10284 = vmatpush.msra.mxu0 0.0
      %10285 = vmatpush.msra.mxu0 0.0
      %10286 = vmatpush.msra.mxu0 0.0
      %10287 = vmatpush.msra.mxu0 0.0
      %10288 = vmatpush.msra.mxu0 0.0
      %10289 = vmatpush.msra.mxu0 0.0
      %10290 = vmatpush.msra.mxu0 0.0
      %10291 = vmatpush.msra.mxu0 %v10182
      %10292 = vmatpush.msra.mxu0 %v10181
      %10293 = vmatpush.msra.mxu0 %v10180
      %10294 = vmatpush.msra.mxu0 %v10179
      %10295 = vmatmul.f32.gmra.mxu0 %v10184
      %v10296 = vpop.f32.mrf.mxu0
      %v10297 = vadd.f32 0.0, %v10296
      %10298 = vmatmul.f32.gmra.mxu0 %v10187
      %v10299 = vpop.f32.mrf.mxu0
      %v10300 = vadd.f32 0.0, %v10299
      %10301 = vmatmul.f32.gmra.mxu0 %v10190
      %v10302 = vpop.f32.mrf.mxu0
      %v10303 = vadd.f32 0.0, %v10302
      %10304 = vmatmul.f32.gmra.mxu0 %v10193
      %v10305 = vpop.f32.mrf.mxu0
      %v10306 = vadd.f32 0.0, %v10305
      %10307 = vmatmul.f32.gmra.mxu0 %v10196
      %v10308 = vpop.f32.mrf.mxu0
      %v10309 = vadd.f32 0.0, %v10308
      %10310 = vmatmul.f32.gmra.mxu0 %v10199
      %v10311 = vpop.f32.mrf.mxu0
      %v10312 = vadd.f32 0.0, %v10311
      %10313 = vmatmul.f32.gmra.mxu0 %v10202
      %v10314 = vpop.f32.mrf.mxu0
      %v10315 = vadd.f32 0.0, %v10314
      %10316 = vmatmul.f32.gmra.mxu0 %v10205
      %v10317 = vpop.f32.mrf.mxu0
      %v10318 = vadd.f32 0.0, %v10317
      %10319 = vmatmul.f32.gmra.mxu0 %v10208
      %v10320 = vpop.f32.mrf.mxu0
      %v10321 = vadd.f32 0.0, %v10320
      %10322 = vmatmul.f32.gmra.mxu0 %v10211
      %v10323 = vpop.f32.mrf.mxu0
      %v10324 = vadd.f32 0.0, %v10323
      %10325 = vmatmul.f32.gmra.mxu0 %v10214
      %v10326 = vpop.f32.mrf.mxu0
      %v10327 = vadd.f32 0.0, %v10326
      %10328 = vmatmul.f32.gmra.mxu0 %v10217
      %v10329 = vpop.f32.mrf.mxu0
      %v10330 = vadd.f32 0.0, %v10329
      %10331 = vmatmul.f32.gmra.mxu0 %v10220
      %v10332 = vpop.f32.mrf.mxu0
      %v10333 = vadd.f32 0.0, %v10332
      %10334 = vmatmul.f32.gmra.mxu0 %v10223
      %v10335 = vpop.f32.mrf.mxu0
      %v10336 = vadd.f32 0.0, %v10335
      %10337 = vmatmul.f32.gmra.mxu0 %v10226
      %v10338 = vpop.f32.mrf.mxu0
      %v10339 = vadd.f32 0.0, %v10338
      %10340 = vmatmul.f32.gmra.mxu0 %v10229
      %v10341 = vpop.f32.mrf.mxu0
      %v10342 = vadd.f32 0.0, %v10341
      %10343 = vmatmul.f32.gmra.mxu0 %v10232
      %v10344 = vpop.f32.mrf.mxu0
      %v10345 = vadd.f32 0.0, %v10344
      %10346 = vmatmul.f32.gmra.mxu0 %v10235
      %v10347 = vpop.f32.mrf.mxu0
      %v10348 = vadd.f32 0.0, %v10347
      %10349 = vmatmul.f32.gmra.mxu0 %v10238
      %v10350 = vpop.f32.mrf.mxu0
      %v10351 = vadd.f32 0.0, %v10350
      %10352 = vmatmul.f32.gmra.mxu0 %v10241
      %v10353 = vpop.f32.mrf.mxu0
      %v10354 = vadd.f32 0.0, %v10353
      %10355 = vmatmul.f32.gmra.mxu0 %v10244
      %v10356 = vpop.f32.mrf.mxu0
      %v10357 = vadd.f32 0.0, %v10356
      %10358 = vmatmul.f32.gmra.mxu0 %v10247
      %v10359 = vpop.f32.mrf.mxu0
      %v10360 = vadd.f32 0.0, %v10359
      %10361 = vmatmul.f32.gmra.mxu0 %v10250
      %v10362 = vpop.f32.mrf.mxu0
      %v10363 = vadd.f32 0.0, %v10362
      %10364 = vmatmul.f32.gmra.mxu0 %v10253
      %v10365 = vpop.f32.mrf.mxu0
      %v10366 = vadd.f32 0.0, %v10365
      %10367 = vmatmul.f32.gmra.mxu0 %v10256
      %v10368 = vpop.f32.mrf.mxu0
      %v10369 = vadd.f32 0.0, %v10368
      %10370 = vmatmul.f32.gmra.mxu0 %v10259
      %v10371 = vpop.f32.mrf.mxu0
      %v10372 = vadd.f32 0.0, %v10371
      %10373 = vmatmul.f32.gmra.mxu0 %v10262
      %v10374 = vpop.f32.mrf.mxu0
      %v10375 = vadd.f32 0.0, %v10374
      %10376 = vmatmul.f32.gmra.mxu0 %v10265
      %v10377 = vpop.f32.mrf.mxu0
      %v10378 = vadd.f32 0.0, %v10377
      %10379 = vmatmul.f32.gmra.mxu0 %v10268
      %v10380 = vpop.f32.mrf.mxu0
      %v10381 = vadd.f32 0.0, %v10380
      %10382 = vmatmul.f32.gmra.mxu0 %v10271
      %v10383 = vpop.f32.mrf.mxu0
      %v10384 = vadd.f32 0.0, %v10383
      %10385 = vmatmul.f32.gmra.mxu0 %v10274
      %v10386 = vpop.f32.mrf.mxu0
      %v10387 = vadd.f32 0.0, %v10386
      %10388 = vmatmul.f32.gmra.mxu0 %v10277
      %v10389 = vpop.f32.mrf.mxu0
      %v10390 = vadd.f32 0.0, %v10389
      %10391 = vdwg.mxu0
      %v10392 = vadd.f32 %v10114, %v10297
      %v10393 = vadd.f32 %v10115, %v10300
      %v10394 = vadd.f32 %v10116, %v10303
      %v10395 = vadd.f32 %v10117, %v10306
      %v10396 = vadd.f32 %v10118, %v10309
      %v10397 = vadd.f32 %v10119, %v10312
      %v10398 = vadd.f32 %v10120, %v10315
      %v10399 = vadd.f32 %v10121, %v10318
      %v10400 = vadd.f32 %v10122, %v10321
      %v10401 = vadd.f32 %v10123, %v10324
      %v10402 = vadd.f32 %v10124, %v10327
      %v10403 = vadd.f32 %v10125, %v10330
      %v10404 = vadd.f32 %v10126, %v10333
      %v10405 = vadd.f32 %v10127, %v10336
      %v10406 = vadd.f32 %v10128, %v10339
      %v10407 = vadd.f32 %v10129, %v10342
      %v10408 = vadd.f32 %v10130, %v10345
      %v10409 = vadd.f32 %v10131, %v10348
      %v10410 = vadd.f32 %v10132, %v10351
      %v10411 = vadd.f32 %v10133, %v10354
      %v10412 = vadd.f32 %v10134, %v10357
      %v10413 = vadd.f32 %v10135, %v10360
      %v10414 = vadd.f32 %v10136, %v10363
      %v10415 = vadd.f32 %v10137, %v10366
      %v10416 = vadd.f32 %v10138, %v10369
      %v10417 = vadd.f32 %v10139, %v10372
      %v10418 = vadd.f32 %v10140, %v10375
      %v10419 = vadd.f32 %v10141, %v10378
      %v10420 = vadd.f32 %v10142, %v10381
      %v10421 = vadd.f32 %v10143, %v10384
      %v10422 = vadd.f32 %v10144, %v10387
      %v10423 = vadd.f32 %v10145, %v10390
      %v10424 = vld [vmem:[#allocation6 + $0x4] sm:$0xff]
      %v10425 = vld [vmem:[#allocation6 + $0xc] sm:$0xff]
      %v10426 = vld [vmem:[#allocation6 + $0x14] sm:$0xff]
      %v10427 = vld [vmem:[#allocation6 + $0x1c] sm:$0xff]
      %v10428 = vld [vmem:[#allocation6 + $0x24] sm:$0xff]
      %v10429 = vld [vmem:[#allocation6 + $0x2c] sm:$0xff]
      %v10430 = vld [vmem:[#allocation6 + $0x34] sm:$0xff]
      %v10431 = vld [vmem:[#allocation6 + $0x3c] sm:$0xff]
      %v10432 = vld [vmem:[#allocation6 + $0x44] sm:$0xff]
      %v10433 = vld [vmem:[#allocation6 + $0x4c] sm:$0xff]
      %v10434 = vld [vmem:[#allocation6 + $0x54] sm:$0xff]
      %v10435 = vld [vmem:[#allocation6 + $0x5c] sm:$0xff]
      %v10436 = vld [vmem:[#allocation6 + $0x64] sm:$0xff]
      %v10437 = vld [vmem:[#allocation6 + $0x6c] sm:$0xff]
      %v10438 = vld [vmem:[#allocation6 + $0x74] sm:$0xff]
      %v10439 = vld [vmem:[#allocation6 + $0x7c] sm:$0xff]
      %v10440 = vld [vmem:[#allocation6 + $0x84] sm:$0xff]
      %v10441 = vld [vmem:[#allocation6 + $0x8c] sm:$0xff]
      %v10442 = vld [vmem:[#allocation6 + $0x94] sm:$0xff]
      %v10443 = vld [vmem:[#allocation6 + $0x9c] sm:$0xff]
      %v10444 = vld [vmem:[#allocation6 + $0xa4] sm:$0xff]
      %v10445 = vld [vmem:[#allocation6 + $0xac] sm:$0xff]
      %v10446 = vld [vmem:[#allocation6 + $0xb4] sm:$0xff]
      %v10447 = vld [vmem:[#allocation6 + $0xbc] sm:$0xff]
      %v10448 = vld [vmem:[#allocation6 + $0xc4] sm:$0xff]
      %v10449 = vld [vmem:[#allocation6 + $0xcc] sm:$0xff]
      %v10450 = vld [vmem:[#allocation6 + $0xd4] sm:$0xff]
      %v10451 = vld [vmem:[#allocation6 + $0xdc] sm:$0xff]
      %v10452 = vld [vmem:[#allocation6 + $0xe4] sm:$0xff]
      %v10453 = vld [vmem:[#allocation6 + $0xec] sm:$0xff]
      %v10454 = vld [vmem:[#allocation6 + $0xf4] sm:$0xff]
      %v10455 = vld [vmem:[#allocation6 + $0xfc] sm:$0xff]
      %s10456 = scalar_lea.vmem %s5, 128
      %v10457 = vld [vmem:[%s10456] sm:$0xff]
      %v10458 = vld [vmem:[%s10456 + $0x8] sm:$0xff]
      %v10459 = vld [vmem:[%s10456 + $0x10] sm:$0xff]
      %v10460 = vld [vmem:[%s10456 + $0x18] sm:$0xff]
      %v10462 = vsel %vm9119, %v10424, 0
      %v10465 = vsel %vm9119, %v10425, 0
      %v10468 = vsel %vm9119, %v10426, 0
      %v10471 = vsel %vm9119, %v10427, 0
      %v10474 = vsel %vm9119, %v10428, 0
      %v10477 = vsel %vm9119, %v10429, 0
      %v10480 = vsel %vm9119, %v10430, 0
      %v10483 = vsel %vm9119, %v10431, 0
      %v10486 = vsel %vm9119, %v10432, 0
      %v10489 = vsel %vm9119, %v10433, 0
      %v10492 = vsel %vm9119, %v10434, 0
      %v10495 = vsel %vm9119, %v10435, 0
      %v10498 = vsel %vm9119, %v10436, 0
      %v10501 = vsel %vm9119, %v10437, 0
      %v10504 = vsel %vm9119, %v10438, 0
      %v10507 = vsel %vm9119, %v10439, 0
      %v10510 = vsel %vm9119, %v10440, 0
      %v10513 = vsel %vm9119, %v10441, 0
      %v10516 = vsel %vm9119, %v10442, 0
      %v10519 = vsel %vm9119, %v10443, 0
      %v10522 = vsel %vm9119, %v10444, 0
      %v10525 = vsel %vm9119, %v10445, 0
      %v10528 = vsel %vm9119, %v10446, 0
      %v10531 = vsel %vm9119, %v10447, 0
      %v10534 = vsel %vm9119, %v10448, 0
      %v10537 = vsel %vm9119, %v10449, 0
      %v10540 = vsel %vm9119, %v10450, 0
      %v10543 = vsel %vm9119, %v10451, 0
      %v10546 = vsel %vm9119, %v10452, 0
      %v10549 = vsel %vm9119, %v10453, 0
      %v10552 = vsel %vm9119, %v10454, 0
      %v10555 = vsel %vm9119, %v10455, 0
      %10557 = vmatpush.msra.mxu0 0.0
      %10558 = vmatpush.msra.mxu0 0.0
      %10559 = vmatpush.msra.mxu0 0.0
      %10560 = vmatpush.msra.mxu0 0.0
      %10561 = vmatpush.msra.mxu0 0.0
      %10562 = vmatpush.msra.mxu0 0.0
      %10563 = vmatpush.msra.mxu0 0.0
      %10564 = vmatpush.msra.mxu0 0.0
      %10565 = vmatpush.msra.mxu0 0.0
      %10566 = vmatpush.msra.mxu0 0.0
      %10567 = vmatpush.msra.mxu0 0.0
      %10568 = vmatpush.msra.mxu0 0.0
      %10569 = vmatpush.msra.mxu0 %v10460
      %10570 = vmatpush.msra.mxu0 %v10459
      %10571 = vmatpush.msra.mxu0 %v10458
      %10572 = vmatpush.msra.mxu0 %v10457
      %10573 = vmatmul.f32.gmra.mxu0 %v10462
      %v10574 = vpop.f32.mrf.mxu0
      %v10575 = vadd.f32 0.0, %v10574
      %10576 = vmatmul.f32.gmra.mxu0 %v10465
      %v10577 = vpop.f32.mrf.mxu0
      %v10578 = vadd.f32 0.0, %v10577
      %10579 = vmatmul.f32.gmra.mxu0 %v10468
      %v10580 = vpop.f32.mrf.mxu0
      %v10581 = vadd.f32 0.0, %v10580
      %10582 = vmatmul.f32.gmra.mxu0 %v10471
      %v10583 = vpop.f32.mrf.mxu0
      %v10584 = vadd.f32 0.0, %v10583
      %10585 = vmatmul.f32.gmra.mxu0 %v10474
      %v10586 = vpop.f32.mrf.mxu0
      %v10587 = vadd.f32 0.0, %v10586
      %10588 = vmatmul.f32.gmra.mxu0 %v10477
      %v10589 = vpop.f32.mrf.mxu0
      %v10590 = vadd.f32 0.0, %v10589
      %10591 = vmatmul.f32.gmra.mxu0 %v10480
      %v10592 = vpop.f32.mrf.mxu0
      %v10593 = vadd.f32 0.0, %v10592
      %10594 = vmatmul.f32.gmra.mxu0 %v10483
      %v10595 = vpop.f32.mrf.mxu0
      %v10596 = vadd.f32 0.0, %v10595
      %10597 = vmatmul.f32.gmra.mxu0 %v10486
      %v10598 = vpop.f32.mrf.mxu0
      %v10599 = vadd.f32 0.0, %v10598
      %10600 = vmatmul.f32.gmra.mxu0 %v10489
      %v10601 = vpop.f32.mrf.mxu0
      %v10602 = vadd.f32 0.0, %v10601
      %10603 = vmatmul.f32.gmra.mxu0 %v10492
      %v10604 = vpop.f32.mrf.mxu0
      %v10605 = vadd.f32 0.0, %v10604
      %10606 = vmatmul.f32.gmra.mxu0 %v10495
      %v10607 = vpop.f32.mrf.mxu0
      %v10608 = vadd.f32 0.0, %v10607
      %10609 = vmatmul.f32.gmra.mxu0 %v10498
      %v10610 = vpop.f32.mrf.mxu0
      %v10611 = vadd.f32 0.0, %v10610
      %10612 = vmatmul.f32.gmra.mxu0 %v10501
      %v10613 = vpop.f32.mrf.mxu0
      %v10614 = vadd.f32 0.0, %v10613
      %10615 = vmatmul.f32.gmra.mxu0 %v10504
      %v10616 = vpop.f32.mrf.mxu0
      %v10617 = vadd.f32 0.0, %v10616
      %10618 = vmatmul.f32.gmra.mxu0 %v10507
      %v10619 = vpop.f32.mrf.mxu0
      %v10620 = vadd.f32 0.0, %v10619
      %10621 = vmatmul.f32.gmra.mxu0 %v10510
      %v10622 = vpop.f32.mrf.mxu0
      %v10623 = vadd.f32 0.0, %v10622
      %10624 = vmatmul.f32.gmra.mxu0 %v10513
      %v10625 = vpop.f32.mrf.mxu0
      %v10626 = vadd.f32 0.0, %v10625
      %10627 = vmatmul.f32.gmra.mxu0 %v10516
      %v10628 = vpop.f32.mrf.mxu0
      %v10629 = vadd.f32 0.0, %v10628
      %10630 = vmatmul.f32.gmra.mxu0 %v10519
      %v10631 = vpop.f32.mrf.mxu0
      %v10632 = vadd.f32 0.0, %v10631
      %10633 = vmatmul.f32.gmra.mxu0 %v10522
      %v10634 = vpop.f32.mrf.mxu0
      %v10635 = vadd.f32 0.0, %v10634
      %10636 = vmatmul.f32.gmra.mxu0 %v10525
      %v10637 = vpop.f32.mrf.mxu0
      %v10638 = vadd.f32 0.0, %v10637
      %10639 = vmatmul.f32.gmra.mxu0 %v10528
      %v10640 = vpop.f32.mrf.mxu0
      %v10641 = vadd.f32 0.0, %v10640
      %10642 = vmatmul.f32.gmra.mxu0 %v10531
      %v10643 = vpop.f32.mrf.mxu0
      %v10644 = vadd.f32 0.0, %v10643
      %10645 = vmatmul.f32.gmra.mxu0 %v10534
      %v10646 = vpop.f32.mrf.mxu0
      %v10647 = vadd.f32 0.0, %v10646
      %10648 = vmatmul.f32.gmra.mxu0 %v10537
      %v10649 = vpop.f32.mrf.mxu0
      %v10650 = vadd.f32 0.0, %v10649
      %10651 = vmatmul.f32.gmra.mxu0 %v10540
      %v10652 = vpop.f32.mrf.mxu0
      %v10653 = vadd.f32 0.0, %v10652
      %10654 = vmatmul.f32.gmra.mxu0 %v10543
      %v10655 = vpop.f32.mrf.mxu0
      %v10656 = vadd.f32 0.0, %v10655
      %10657 = vmatmul.f32.gmra.mxu0 %v10546
      %v10658 = vpop.f32.mrf.mxu0
      %v10659 = vadd.f32 0.0, %v10658
      %10660 = vmatmul.f32.gmra.mxu0 %v10549
      %v10661 = vpop.f32.mrf.mxu0
      %v10662 = vadd.f32 0.0, %v10661
      %10663 = vmatmul.f32.gmra.mxu0 %v10552
      %v10664 = vpop.f32.mrf.mxu0
      %v10665 = vadd.f32 0.0, %v10664
      %10666 = vmatmul.f32.gmra.mxu0 %v10555
      %v10667 = vpop.f32.mrf.mxu0
      %v10668 = vadd.f32 0.0, %v10667
      %10669 = vdwg.mxu0
      %v10670 = vadd.f32 %v10392, %v10575
      %v10671 = vadd.f32 %v10393, %v10578
      %v10672 = vadd.f32 %v10394, %v10581
      %v10673 = vadd.f32 %v10395, %v10584
      %v10674 = vadd.f32 %v10396, %v10587
      %v10675 = vadd.f32 %v10397, %v10590
      %v10676 = vadd.f32 %v10398, %v10593
      %v10677 = vadd.f32 %v10399, %v10596
      %v10678 = vadd.f32 %v10400, %v10599
      %v10679 = vadd.f32 %v10401, %v10602
      %v10680 = vadd.f32 %v10402, %v10605
      %v10681 = vadd.f32 %v10403, %v10608
      %v10682 = vadd.f32 %v10404, %v10611
      %v10683 = vadd.f32 %v10405, %v10614
      %v10684 = vadd.f32 %v10406, %v10617
      %v10685 = vadd.f32 %v10407, %v10620
      %v10686 = vadd.f32 %v10408, %v10623
      %v10687 = vadd.f32 %v10409, %v10626
      %v10688 = vadd.f32 %v10410, %v10629
      %v10689 = vadd.f32 %v10411, %v10632
      %v10690 = vadd.f32 %v10412, %v10635
      %v10691 = vadd.f32 %v10413, %v10638
      %v10692 = vadd.f32 %v10414, %v10641
      %v10693 = vadd.f32 %v10415, %v10644
      %v10694 = vadd.f32 %v10416, %v10647
      %v10695 = vadd.f32 %v10417, %v10650
      %v10696 = vadd.f32 %v10418, %v10653
      %v10697 = vadd.f32 %v10419, %v10656
      %v10698 = vadd.f32 %v10420, %v10659
      %v10699 = vadd.f32 %v10421, %v10662
      %v10700 = vadd.f32 %v10422, %v10665
      %v10701 = vadd.f32 %v10423, %v10668
      %v10702 = vld [vmem:[%s6] sm:$0x1]
      %v10704 = vperm.slane %v10702, 0
      %v10706 = vadd.f32 %v10670, %v10704
      %v10707 = vadd.f32 %v10671, %v10704
      %v10708 = vadd.f32 %v10672, %v10704
      %v10709 = vadd.f32 %v10673, %v10704
      %v10710 = vadd.f32 %v10674, %v10704
      %v10711 = vadd.f32 %v10675, %v10704
      %v10712 = vadd.f32 %v10676, %v10704
      %v10713 = vadd.f32 %v10677, %v10704
      %v10714 = vadd.f32 %v10678, %v10704
      %v10715 = vadd.f32 %v10679, %v10704
      %v10716 = vadd.f32 %v10680, %v10704
      %v10717 = vadd.f32 %v10681, %v10704
      %v10718 = vadd.f32 %v10682, %v10704
      %v10719 = vadd.f32 %v10683, %v10704
      %v10720 = vadd.f32 %v10684, %v10704
      %v10721 = vadd.f32 %v10685, %v10704
      %v10722 = vadd.f32 %v10686, %v10704
      %v10723 = vadd.f32 %v10687, %v10704
      %v10724 = vadd.f32 %v10688, %v10704
      %v10725 = vadd.f32 %v10689, %v10704
      %v10726 = vadd.f32 %v10690, %v10704
      %v10727 = vadd.f32 %v10691, %v10704
      %v10728 = vadd.f32 %v10692, %v10704
      %v10729 = vadd.f32 %v10693, %v10704
      %v10730 = vadd.f32 %v10694, %v10704
      %v10731 = vadd.f32 %v10695, %v10704
      %v10732 = vadd.f32 %v10696, %v10704
      %v10733 = vadd.f32 %v10697, %v10704
      %v10734 = vadd.f32 %v10698, %v10704
      %v10735 = vadd.f32 %v10699, %v10704
      %v10736 = vadd.f32 %v10700, %v10704
      %v10737 = vadd.f32 %v10701, %v10704
      %v10738 = vmax.f32 %v10706, 0.0
      %v10739 = vmax.f32 %v10707, 0.0
      %v10740 = vmax.f32 %v10708, 0.0
      %v10741 = vmax.f32 %v10709, 0.0
      %v10742 = vmax.f32 %v10710, 0.0
      %v10743 = vmax.f32 %v10711, 0.0
      %v10744 = vmax.f32 %v10712, 0.0
      %v10745 = vmax.f32 %v10713, 0.0
      %v10746 = vmax.f32 %v10714, 0.0
      %v10747 = vmax.f32 %v10715, 0.0
      %v10748 = vmax.f32 %v10716, 0.0
      %v10749 = vmax.f32 %v10717, 0.0
      %v10750 = vmax.f32 %v10718, 0.0
      %v10751 = vmax.f32 %v10719, 0.0
      %v10752 = vmax.f32 %v10720, 0.0
      %v10753 = vmax.f32 %v10721, 0.0
      %v10754 = vmax.f32 %v10722, 0.0
      %v10755 = vmax.f32 %v10723, 0.0
      %v10756 = vmax.f32 %v10724, 0.0
      %v10757 = vmax.f32 %v10725, 0.0
      %v10758 = vmax.f32 %v10726, 0.0
      %v10759 = vmax.f32 %v10727, 0.0
      %v10760 = vmax.f32 %v10728, 0.0
      %v10761 = vmax.f32 %v10729, 0.0
      %v10762 = vmax.f32 %v10730, 0.0
      %v10763 = vmax.f32 %v10731, 0.0
      %v10764 = vmax.f32 %v10732, 0.0
      %v10765 = vmax.f32 %v10733, 0.0
      %v10766 = vmax.f32 %v10734, 0.0
      %v10767 = vmax.f32 %v10735, 0.0
      %v10768 = vmax.f32 %v10736, 0.0
      %v10769 = vmax.f32 %v10737, 0.0
      %vm10770 = vcmask 523264
      %10771 = vst.msk [vmem:[#allocation7] sm:$0xff] %vm10770, %v10738
      %10772 = vst.msk [vmem:[#allocation7 + $0x8] sm:$0xff] %vm10770, %v10739
      %10773 = vst.msk [vmem:[#allocation7 + $0x10] sm:$0xff] %vm10770, %v10740
      %10774 = vst.msk [vmem:[#allocation7 + $0x18] sm:$0xff] %vm10770, %v10741
      %10775 = vst.msk [vmem:[#allocation7 + $0x20] sm:$0xff] %vm10770, %v10742
      %10776 = vst.msk [vmem:[#allocation7 + $0x28] sm:$0xff] %vm10770, %v10743
      %10777 = vst.msk [vmem:[#allocation7 + $0x30] sm:$0xff] %vm10770, %v10744
      %10778 = vst.msk [vmem:[#allocation7 + $0x38] sm:$0xff] %vm10770, %v10745
      %10779 = vst.msk [vmem:[#allocation7 + $0x40] sm:$0xff] %vm10770, %v10746
      %10780 = vst.msk [vmem:[#allocation7 + $0x48] sm:$0xff] %vm10770, %v10747
      %10781 = vst.msk [vmem:[#allocation7 + $0x50] sm:$0xff] %vm10770, %v10748
      %10782 = vst.msk [vmem:[#allocation7 + $0x58] sm:$0xff] %vm10770, %v10749
      %10783 = vst.msk [vmem:[#allocation7 + $0x60] sm:$0xff] %vm10770, %v10750
      %10784 = vst.msk [vmem:[#allocation7 + $0x68] sm:$0xff] %vm10770, %v10751
      %10785 = vst.msk [vmem:[#allocation7 + $0x70] sm:$0xff] %vm10770, %v10752
      %10786 = vst.msk [vmem:[#allocation7 + $0x78] sm:$0xff] %vm10770, %v10753
      %10787 = vst.msk [vmem:[#allocation7 + $0x80] sm:$0xff] %vm10770, %v10754
      %10788 = vst.msk [vmem:[#allocation7 + $0x88] sm:$0xff] %vm10770, %v10755
      %10789 = vst.msk [vmem:[#allocation7 + $0x90] sm:$0xff] %vm10770, %v10756
      %10790 = vst.msk [vmem:[#allocation7 + $0x98] sm:$0xff] %vm10770, %v10757
      %10791 = vst.msk [vmem:[#allocation7 + $0xa0] sm:$0xff] %vm10770, %v10758
      %10792 = vst.msk [vmem:[#allocation7 + $0xa8] sm:$0xff] %vm10770, %v10759
      %10793 = vst.msk [vmem:[#allocation7 + $0xb0] sm:$0xff] %vm10770, %v10760
      %10794 = vst.msk [vmem:[#allocation7 + $0xb8] sm:$0xff] %vm10770, %v10761
      %10795 = vst.msk [vmem:[#allocation7 + $0xc0] sm:$0xff] %vm10770, %v10762
      %10796 = vst.msk [vmem:[#allocation7 + $0xc8] sm:$0xff] %vm10770, %v10763
      %10797 = vst.msk [vmem:[#allocation7 + $0xd0] sm:$0xff] %vm10770, %v10764
      %10798 = vst.msk [vmem:[#allocation7 + $0xd8] sm:$0xff] %vm10770, %v10765
      %10799 = vst.msk [vmem:[#allocation7 + $0xe0] sm:$0xff] %vm10770, %v10766
      %10800 = vst.msk [vmem:[#allocation7 + $0xe8] sm:$0xff] %vm10770, %v10767
      %10801 = vst.msk [vmem:[#allocation7 + $0xf0] sm:$0xff] %vm10770, %v10768
      %10802 = vst.msk [vmem:[#allocation7 + $0xf8] sm:$0xff] %vm10770, %v10769
      %v10803 = vld [vmem:[#allocation7] ss:$2 sm:$0xff]
      %s10804 = scalar_lea.vmem [#allocation7], 16
      %v10805 = vld [vmem:[%s10804] ss:$2 sm:$0xff]
      %s10806 = scalar_lea.vmem [#allocation7], 32
      %v10807 = vld [vmem:[%s10806] ss:$2 sm:$0xff]
      %s10808 = scalar_lea.vmem [#allocation7], 48
      %v10809 = vld [vmem:[%s10808] ss:$2 sm:$0xff]
      %s10810 = scalar_lea.vmem [#allocation7], 64
      %v10811 = vld [vmem:[%s10810] ss:$2 sm:$0xff]
      %s10812 = scalar_lea.vmem [#allocation7], 80
      %v10813 = vld [vmem:[%s10812] ss:$2 sm:$0xff]
      %s10814 = scalar_lea.vmem [#allocation7], 96
      %v10815 = vld [vmem:[%s10814] ss:$2 sm:$0xff]
      %s10816 = scalar_lea.vmem [#allocation7], 112
      %v10817 = vld [vmem:[%s10816] ss:$2 sm:$0xff]
      %s10818 = scalar_lea.vmem [#allocation7], 128
      %v10819 = vld [vmem:[%s10818] ss:$2 sm:$0xff]
      %s10820 = scalar_lea.vmem [#allocation7], 144
      %v10821 = vld [vmem:[%s10820] ss:$2 sm:$0xff]
      %s10822 = scalar_lea.vmem [#allocation7], 160
      %v10823 = vld [vmem:[%s10822] ss:$2 sm:$0xff]
      %s10824 = scalar_lea.vmem [#allocation7], 176
      %v10825 = vld [vmem:[%s10824] ss:$2 sm:$0xff]
      %s10826 = scalar_lea.vmem [#allocation7], 192
      %v10827 = vld [vmem:[%s10826] ss:$2 sm:$0xff]
      %s10828 = scalar_lea.vmem [#allocation7], 208
      %v10829 = vld [vmem:[%s10828] ss:$2 sm:$0xff]
      %s10830 = scalar_lea.vmem [#allocation7], 224
      %v10831 = vld [vmem:[%s10830] ss:$2 sm:$0xff]
      %s10832 = scalar_lea.vmem [#allocation7], 240
      %v10833 = vld [vmem:[%s10832] ss:$2 sm:$0xff]
      %s10834 = scalar_lea.vmem [#allocation7], 1
      %v10835 = vld [vmem:[%s10834] ss:$2 sm:$0xff]
      %s10836 = scalar_lea.vmem [#allocation7], 17
      %v10837 = vld [vmem:[%s10836] ss:$2 sm:$0xff]
      %s10838 = scalar_lea.vmem [#allocation7], 33
      %v10839 = vld [vmem:[%s10838] ss:$2 sm:$0xff]
      %s10840 = scalar_lea.vmem [#allocation7], 49
      %v10841 = vld [vmem:[%s10840] ss:$2 sm:$0xff]
      %s10842 = scalar_lea.vmem [#allocation7], 65
      %v10843 = vld [vmem:[%s10842] ss:$2 sm:$0xff]
      %s10844 = scalar_lea.vmem [#allocation7], 81
      %v10845 = vld [vmem:[%s10844] ss:$2 sm:$0xff]
      %s10846 = scalar_lea.vmem [#allocation7], 97
      %v10847 = vld [vmem:[%s10846] ss:$2 sm:$0xff]
      %s10848 = scalar_lea.vmem [#allocation7], 113
      %v10849 = vld [vmem:[%s10848] ss:$2 sm:$0xff]
      %s10850 = scalar_lea.vmem [#allocation7], 129
      %v10851 = vld [vmem:[%s10850] ss:$2 sm:$0xff]
      %s10852 = scalar_lea.vmem [#allocation7], 145
      %v10853 = vld [vmem:[%s10852] ss:$2 sm:$0xff]
      %s10854 = scalar_lea.vmem [#allocation7], 161
      %v10855 = vld [vmem:[%s10854] ss:$2 sm:$0xff]
      %s10856 = scalar_lea.vmem [#allocation7], 177
      %v10857 = vld [vmem:[%s10856] ss:$2 sm:$0xff]
      %s10858 = scalar_lea.vmem [#allocation7], 193
      %v10859 = vld [vmem:[%s10858] ss:$2 sm:$0xff]
      %s10860 = scalar_lea.vmem [#allocation7], 209
      %v10861 = vld [vmem:[%s10860] ss:$2 sm:$0xff]
      %s10862 = scalar_lea.vmem [#allocation7], 225
      %v10863 = vld [vmem:[%s10862] ss:$2 sm:$0xff]
      %s10864 = scalar_lea.vmem [#allocation7], 241
      %v10865 = vld [vmem:[%s10864] ss:$2 sm:$0xff]
      %v10866 = vmax.f32 %v10803, %v10835
      %v10867 = vmax.f32 %v10805, %v10837
      %v10868 = vmax.f32 %v10807, %v10839
      %v10869 = vmax.f32 %v10809, %v10841
      %v10870 = vmax.f32 %v10811, %v10843
      %v10871 = vmax.f32 %v10813, %v10845
      %v10872 = vmax.f32 %v10815, %v10847
      %v10873 = vmax.f32 %v10817, %v10849
      %v10874 = vmax.f32 %v10819, %v10851
      %v10875 = vmax.f32 %v10821, %v10853
      %v10876 = vmax.f32 %v10823, %v10855
      %v10877 = vmax.f32 %v10825, %v10857
      %v10878 = vmax.f32 %v10827, %v10859
      %v10879 = vmax.f32 %v10829, %v10861
      %v10880 = vmax.f32 %v10831, %v10863
      %v10881 = vmax.f32 %v10833, %v10865
      %v10882 = vpack.c.bf16 %v10866, %v10866
      %v10883 = vpack.c.bf16 %v10867, %v10867
      %v10884 = vpack.c.bf16 %v10868, %v10868
      %v10885 = vpack.c.bf16 %v10869, %v10869
      %v10886 = vpack.c.bf16 %v10870, %v10870
      %v10887 = vpack.c.bf16 %v10871, %v10871
      %v10888 = vpack.c.bf16 %v10872, %v10872
      %v10889 = vpack.c.bf16 %v10873, %v10873
      %v10890 = vpack.c.bf16 %v10874, %v10874
      %v10891 = vpack.c.bf16 %v10875, %v10875
      %v10892 = vpack.c.bf16 %v10876, %v10876
      %v10893 = vpack.c.bf16 %v10877, %v10877
      %v10894 = vpack.c.bf16 %v10878, %v10878
      %v10895 = vpack.c.bf16 %v10879, %v10879
      %v10896 = vpack.c.bf16 %v10880, %v10880
      %v10897 = vpack.c.bf16 %v10881, %v10881
      %vm10898 = vcmask 519168
      %10899 = vst.msk [vmem:[%s278] sm:$0xf] %vm10898, %v10882
      %10900 = vst.msk [vmem:[%s278 + $0x4] sm:$0xf] %vm10898, %v10883
      %10901 = vst.msk [vmem:[%s278 + $0x8] sm:$0xf] %vm10898, %v10884
      %10902 = vst.msk [vmem:[%s278 + $0xc] sm:$0xf] %vm10898, %v10885
      %10903 = vst.msk [vmem:[%s278 + $0x10] sm:$0xf] %vm10898, %v10886
      %10904 = vst.msk [vmem:[%s278 + $0x14] sm:$0xf] %vm10898, %v10887
      %10905 = vst.msk [vmem:[%s278 + $0x18] sm:$0xf] %vm10898, %v10888
      %10906 = vst.msk [vmem:[%s278 + $0x1c] sm:$0xf] %vm10898, %v10889
      %10907 = vst.msk [vmem:[%s278 + $0x20] sm:$0xf] %vm10898, %v10890
      %10908 = vst.msk [vmem:[%s278 + $0x24] sm:$0xf] %vm10898, %v10891
      %10909 = vst.msk [vmem:[%s278 + $0x28] sm:$0xf] %vm10898, %v10892
      %10910 = vst.msk [vmem:[%s278 + $0x2c] sm:$0xf] %vm10898, %v10893
      %10911 = vst.msk [vmem:[%s278 + $0x30] sm:$0xf] %vm10898, %v10894
      %10912 = vst.msk [vmem:[%s278 + $0x34] sm:$0xf] %vm10898, %v10895
      %10913 = vst.msk [vmem:[%s278 + $0x38] sm:$0xf] %vm10898, %v10896
      %10914 = vst.msk [vmem:[%s278 + $0x3c] sm:$0xf] %vm10898, %v10897
      %p10915 = scmp.lt.s32.totalorder %s18, 1
      %s10916 = scalar_select %p10915, %s18, 1
      %s10917 = smul.addr %s10916, 16
      %s10918 = smul.addr %s10917, 4
      %s10919 = scalar_lea.vmem %s7, %s10918
      // Predicated region
      $region49: #{tpu_custom_call.1} parent=47 // pred_check
        %p10920 = pneg %p188
      $region50: #{tpu_custom_call.1} parent=47 // pred_check_branch
        %10922 = sbr.rel (%p10920) target = $region52
      $region51: #{tpu_custom_call.1} parent=47 // pred_region
        _
      $region52: #{tpu_custom_call.1} parent=47 // pred_fallthru
        _
    $region48: #{tpu_custom_call.1} parent=5 // pred_fallthru
      _
    %p10923 = scmp.le.s32.totalorder 2, %s13
    // Predicated region
    $region53: #{tpu_custom_call.1} parent=5 // pred_check
      %p10924 = pneg %p10923
    $region54: #{tpu_custom_call.1} parent=5 // pred_check_branch
      %10926 = sbr.rel (%p10924) target = $region56
    $region55: #{tpu_custom_call.1} parent=5 // pred_region
      %s10927 = ssub.s32 %s13, 2
      // Predicated region
      $region57: #{tpu_custom_call.1} parent=55 // pred_check
        %p10928 = pneg %p194
      $region58: #{tpu_custom_call.1} parent=55 // pred_check_branch
        %10930 = sbr.rel (%p10928) target = $region60
      $region59: #{tpu_custom_call.1} parent=55 // pred_region
        %p10931 = scmp.lt.s32.totalorder %s19, 1
        %s10932 = scalar_select %p10931, %s19, 1
        %s10933 = smul.addr %s10932, 16
        %s10934 = smul.addr %s10933, 4
        %s10935 = scalar_lea.vmem %s7, %s10934
      $region60: #{tpu_custom_call.1} parent=55 // pred_fallthru
        _
    $region56: #{tpu_custom_call.1} parent=5 // pred_fallthru
      _
  $region6: #{tpu_custom_call.1} parent=0 // loop_footer
    %s17 = sadd.s32 1, %s13
  $region7: #{tpu_custom_call.1} parent=0 // loop_footer_branch
    %12 = sbr.rel target = $region3
  $region8: #{tpu_custom_call.1} parent=0 // loop_exit
    _

</llo_original>
